<compile_context>
chip_gen: v7x
topology: tpu7x:2x2x1
jax: 0.10.0
libtpu: 0.0.40
codegen_flags: <defaults>
</compile_context>

<pallas_src>
import functools

import jax
import jax.numpy as jnp
import numpy as np
from jax.experimental import pallas as pl
from jax.experimental.pallas import tpu as pltpu


# ----------------------------- Pallas kernels ------------------------------

def _conv_bn_kernel(x_ref, w_ref, scale_ref, shift_ref, o_ref, *, relu_in, relu_out):
    # 1x1 conv (channel matmul, bf16 operands / f32 accumulation) + folded BN
    # (+ optional ReLUs).
    x = x_ref[...]
    if relu_in:
        x = jnp.maximum(x, 0.0)
    y = jnp.dot(x.astype(jnp.bfloat16), w_ref[...],
                preferred_element_type=jnp.float32)
    y = y * scale_ref[...] + shift_ref[...]
    if relu_out:
        y = jnp.maximum(y, 0.0)
    o_ref[...] = y.astype(o_ref.dtype)


def _conv_bn_res_kernel(x_ref, w_ref, scale_ref, shift_ref, res_ref, o_ref, *, relu_in):
    # 1x1 conv + folded BN + residual add + final ReLU (fused).
    x = x_ref[...]
    if relu_in:
        x = jnp.maximum(x, 0.0)
    y = jnp.dot(x.astype(jnp.bfloat16), w_ref[...],
                preferred_element_type=jnp.float32)
    y = y * scale_ref[...] + shift_ref[...]
    y = y + res_ref[...].astype(jnp.float32)
    y = jnp.maximum(y, 0.0)
    o_ref[...] = y.astype(o_ref.dtype)


def _axial_attn_kernel(x_ref, w_ref, qs_ref, qb_ref, os_ref, ob_ref, o_ref, *,
                       groups, gp):
    """A batch of Bb sequences of AxialAttention_wopos.

    x_ref: (Bb, L, C).  w_ref: (C, 2C) bf16 with columns reordered to
    [all-q | all-k | all-v] (group-major inside each section).  qs/qb: folded
    bn_qkv scale/shift in the same column order, with the per-group
    bn_similarity scale pre-folded into the q columns (its shift is constant
    along the softmax axis and therefore dropped).  os/ob: folded bn_output.
    """
    bb, L, C = x_ref.shape
    half = gp // 2
    qsec = groups * half                       # == C // 2

    # qkv transform: one (Bb*L, C) @ (C, 2C) matmul -> fills the MXU and
    # amortises the weight / BN vector loads over the whole block.
    x = x_ref[...].reshape(bb * L, C)
    qkv = jnp.dot(x.astype(jnp.bfloat16), w_ref[...],
                  preferred_element_type=jnp.float32)
    qkv = qkv * qs_ref[...] + qb_ref[...]      # folded bn_qkv (f32)
    qkv16 = qkv.reshape(bb, L, 2 * C).astype(jnp.bfloat16)

    # Static unroll over the (small, compile-time) number of groups; each
    # group's result is written straight into o_ref (no concatenate), so the
    # per-group (L, L) / (L, gp) temporaries die immediately.
    for g in range(groups):
        q = qkv16[:, :, g * half:(g + 1) * half]
        k = qkv16[:, :, qsec + g * half:qsec + (g + 1) * half]
        v = qkv16[:, :, C + g * gp:C + (g + 1) * gp]
        # qk[b, i, j] = sum_c q[b, i, c] * k[b, j, c]  (similarity scale already in q)
        qk = jnp.einsum('bic,bjc->bij', q, k, preferred_element_type=jnp.float32)
        m = jnp.max(qk, axis=-1, keepdims=True)
        e = jnp.exp(qk - m)
        sim = e * pl.reciprocal(jnp.sum(e, axis=-1, keepdims=True), approx=True)
        # sv[b, i, c] = sum_j sim[b, i, j] * v[b, j, c]
        sv = jnp.einsum('bij,bjc->bic', sim.astype(jnp.bfloat16), v,
                        preferred_element_type=jnp.float32)
        sv = sv * os_ref[:, g * gp:(g + 1) * gp] + ob_ref[:, g * gp:(g + 1) * gp]
        o_ref[:, :, g * gp:(g + 1) * gp] = sv.astype(o_ref.dtype)


# ------------------------------ JAX wrappers --------------------------------

def bn_fold(gamma, beta, mean, var, eps=1e-5):
    scale = gamma / jnp.sqrt(var + eps)
    shift = beta - mean * scale
    return scale, shift


def _pick_rows_block(M, cin, cout, *, max_rows=1024, vmem_budget=12 * 1024 * 1024):
    """Row tile for the conv kernels: divides M, multiple of 8 (sublane), fits a
    double-buffered f32 in/out/residual estimate, and leaves >=2 grid steps when
    possible (v7x megacore)."""
    per_row = 4 * 2 * (cin + 2 * cout)
    cap = max(8, min(max_rows, vmem_budget // max(per_row, 1)))
    divisors = [d for d in range(8, M + 1, 8) if M % d == 0 and d <= cap]
    if not divisors:
        return M                               # tiny M: one full block
    tm = max(divisors)
    if M // tm < 2:
        smaller = [d for d in divisors if d <= M // 2]
        if smaller:
            tm = max(smaller)
    return tm


def _pick_batch_block(B, L, C, *, max_rows=2048, vmem_budget=12 * 1024 * 1024):
    """How many sequences to batch per grid step of the attention kernel."""
    per_seq = 4 * (6 * L * C + 3 * L * L)
    cap = max(1, min(max_rows // max(L, 1), vmem_budget // max(per_seq, 1)))
    divisors = [d for d in range(1, B + 1) if B % d == 0 and d <= cap]
    bb = max(divisors)
    if B // bb < 2:
        smaller = [d for d in divisors if d <= B // 2]
        if smaller:
            bb = max(smaller)
    return bb


def pointwise_conv_bn(x2d, w_t, scale, shift, *, relu_in=False, relu_out=False,
                      residual=None):
    M, cin = x2d.shape
    cout = w_t.shape[1]
    tm = _pick_rows_block(M, cin, cout)
    grid = (M // tm,)
    in_specs = [
        pl.BlockSpec((tm, cin), lambda i: (i, 0)),
        pl.BlockSpec((cin, cout), lambda i: (0, 0)),
        pl.BlockSpec((1, cout), lambda i: (0, 0)),
        pl.BlockSpec((1, cout), lambda i: (0, 0)),
    ]
    args = [x2d, w_t.astype(jnp.bfloat16),
            scale.reshape(1, cout), shift.reshape(1, cout)]
    io_aliases = {}
    if residual is None:
        kernel = functools.partial(_conv_bn_kernel, relu_in=relu_in, relu_out=relu_out)
    else:
        in_specs.append(pl.BlockSpec((tm, cout), lambda i: (i, 0)))
        args.append(residual)
        kernel = functools.partial(_conv_bn_res_kernel, relu_in=relu_in)
        io_aliases = {4: 0}     # reuse the residual's HBM buffer for the output
    return pl.pallas_call(
        kernel,
        out_shape=jax.ShapeDtypeStruct((M, cout), x2d.dtype),
        grid=grid,
        in_specs=in_specs,
        out_specs=pl.BlockSpec((tm, cout), lambda i: (i, 0)),
        input_output_aliases=io_aliases,
        compiler_params=pltpu.CompilerParams(dimension_semantics=("parallel",)),
    )(*args)


def _qkv_permutation(C, groups):
    """Column permutation taking the per-group [q|k|v] interleaving of the
    PyTorch qkv_transform output to a contiguous [all-q | all-k | all-v] layout
    (group-major inside each section)."""
    gp = C // groups
    half = gp // 2
    q_idx, k_idx, v_idx = [], [], []
    for g in range(groups):
        base = g * 2 * gp
        q_idx += list(range(base, base + half))
        k_idx += list(range(base + half, base + gp))
        v_idx += list(range(base + gp, base + 2 * gp))
    return np.asarray(q_idx + k_idx + v_idx, dtype=np.int32)


def axial_attention(xb, w_qkv_t, bn_qkv, bn_sim, bn_out, *, groups):
    B, L, C = xb.shape
    gp = C // groups
    half = gp // 2

    qs, qb = bn_fold(*bn_qkv)
    ss, _ = bn_fold(*bn_sim)      # similarity shift is constant over softmax axis -> no-op
    os_, ob = bn_fold(*bn_out)

    perm = _qkv_permutation(C, groups)
    w_r = w_qkv_t[:, perm].astype(jnp.bfloat16)   # (C, 2C), [Q | K | V] contiguous
    qs_r = qs[perm]
    qb_r = qb[perm]
    # Fold the per-group bn_similarity scale into the q columns (exact, since
    # qk is linear in q).
    ssq = jnp.repeat(ss, half)
    qs_r = qs_r.at[:C // 2].multiply(ssq)
    qb_r = qb_r.at[:C // 2].multiply(ssq)

    bb = _pick_batch_block(B, L, C)
    kernel = functools.partial(_axial_attn_kernel, groups=groups, gp=gp)
    return pl.pallas_call(
        kernel,
        out_shape=jax.ShapeDtypeStruct((B, L, C), xb.dtype),
        grid=(B // bb,),
        in_specs=[
            pl.BlockSpec((bb, L, C), lambda b: (b, 0, 0)),
            pl.BlockSpec((C, 2 * C), lambda b: (0, 0)),
            pl.BlockSpec((1, 2 * C), lambda b: (0, 0)),
            pl.BlockSpec((1, 2 * C), lambda b: (0, 0)),
            pl.BlockSpec((1, C), lambda b: (0, 0)),
            pl.BlockSpec((1, C), lambda b: (0, 0)),
        ],
        out_specs=pl.BlockSpec((bb, L, C), lambda b: (b, 0, 0)),
        compiler_params=pltpu.CompilerParams(dimension_semantics=("parallel",)),
    )(xb, w_r,
      qs_r.reshape(1, 2 * C), qb_r.reshape(1, 2 * C),
      os_.reshape(1, C), ob.reshape(1, C))


def axial_block_wopos_forward(x, params, *, groups):
    """Forward pass of AxialBlock_wopos. x is NCHW."""
    N, cin, H, W = x.shape
    x_nhwc = jnp.transpose(x, (0, 2, 3, 1))       # boundary layout change (NCHW contract)
    x2d = x_nhwc.reshape(N * H * W, cin)

    # conv_down (1x1) + bn1 + relu
    s1, b1 = bn_fold(*params["bn1"])
    h2d = pointwise_conv_bn(x2d, params["conv_down_w_t"], s1, b1, relu_out=True)
    width = h2d.shape[-1]
    h = h2d.reshape(N, H, W, width)

    # hight_block: attention along H for every (n, w) column
    hb = params["hight"]
    xb = jnp.transpose(h, (0, 2, 1, 3)).reshape(N * W, H, width)
    yb = axial_attention(xb, hb["w_qkv_t"], hb["bn_qkv"], hb["bn_sim"], hb["bn_out"],
                         groups=groups)
    h = jnp.transpose(yb.reshape(N, W, H, width), (0, 2, 1, 3))

    # width_block: attention along W for every (n, h) row (pure reshape, no transpose)
    wb = params["width"]
    xb = h.reshape(N * H, W, width)
    yb = axial_attention(xb, wb["w_qkv_t"], wb["bn_qkv"], wb["bn_sim"], wb["bn_out"],
                         groups=groups)
    h = yb.reshape(N, H, W, width)

    # relu -> conv_up (1x1) + bn2 + residual add + final relu (fused kernel,
    # output aliased onto the residual buffer)
    s2, b2 = bn_fold(*params["bn2"])
    out2d = pointwise_conv_bn(h.reshape(N * H * W, width), params["conv_up_w_t"],
                              s2, b2, relu_in=True, residual=x2d)
    cout = out2d.shape[-1]
    return jnp.transpose(out2d.reshape(N, H, W, cout), (0, 3, 1, 2))


# --------------------------- parameter initialization -----------------------

def _init_bn(key, n):
    k1, k2, k3, k4 = jax.random.split(key, 4)
    gamma = 1.0 + 0.1 * jax.random.normal(k1, (n,), jnp.float32)
    beta = 0.1 * jax.random.normal(k2, (n,), jnp.float32)
    mean = 0.1 * jax.random.normal(k3, (n,), jnp.float32)
    var = 0.5 + jax.random.uniform(k4, (n,), jnp.float32)
    return gamma, beta, mean, var


def _init_axial_attn(key, in_planes, out_planes, groups):
    k1, k2, k3, k4 = jax.random.split(key, 4)
    # qkv_transform.weight ~ N(0, sqrt(1/in_planes)), shape (2*out, in)
    w_qkv = jax.random.normal(k1, (out_planes * 2, in_planes), jnp.float32) \
        * (1.0 / in_planes) ** 0.5
    return {
        "w_qkv_t": jnp.transpose(w_qkv),            # (C, 2C) for channel-last matmul
        "bn_qkv": _init_bn(k2, out_planes * 2),
        "bn_sim": _init_bn(k3, groups),
        "bn_out": _init_bn(k4, out_planes),
    }


def init_axial_block_params(key, inplanes, planes, groups, base_width=64):
    width = int(planes * (base_width / 64.0))
    out_planes = planes * 2                          # expansion = 2
    keys = jax.random.split(key, 6)
    conv_down_w = jax.random.normal(keys[0], (width, inplanes), jnp.float32) \
        * (2.0 / inplanes) ** 0.5
    conv_up_w = jax.random.normal(keys[1], (out_planes, width), jnp.float32) \
        * (2.0 / width) ** 0.5
    return {
        "conv_down_w_t": jnp.transpose(conv_down_w),  # (Cin, width)
        "bn1": _init_bn(keys[2], width),
        "hight": _init_axial_attn(keys[3], width, width, groups),
        "width": _init_axial_attn(keys[4], width, width, groups),
        "conv_up_w_t": jnp.transpose(conv_up_w),      # (width, planes*2)
        "bn2": _init_bn(keys[5], out_planes),
    }


# ----------------------------------- main ------------------------------------

if __name__ == "__main__":
    N, H, W = 2, 16, 16
    planes = 4
    base_width = 128            # -> width = planes * (base_width / 64) = 8
    groups = 2                  # group_planes = width // groups = 4
    inplanes = planes * 2       # = 8, so the identity residual add is shape-compatible

    key = jax.random.PRNGKey(0)
    kx, kp = jax.random.split(key)
    x = jax.random.normal(kx, (N, inplanes, H, W), jnp.float32)
    params = init_axial_block_params(kp, inplanes, planes, groups, base_width)

    fwd = jax.jit(functools.partial(axial_block_wopos_forward, groups=groups))
    out = fwd(x, params)
    jax.block_until_ready(out)
    assert out.shape == (N, planes * 2, H, W), out.shape
    print("KERNEL_OK")
</pallas_src>

<mosaic_0001>
module attributes {stable_mosaic.version = 11 : i64} {
  func.func @_conv_bn_kernel(%arg0: i32, %arg1: memref<256x8xf32, #tpu.memory_space<vmem>>, %arg2: memref<8x8xbf16, #tpu.memory_space<vmem>>, %arg3: memref<1x8xf32, #tpu.memory_space<vmem>>, %arg4: memref<1x8xf32, #tpu.memory_space<vmem>>, %arg5: memref<256x8xf32, #tpu.memory_space<vmem>>) attributes {dimension_semantics = [#tpu.dimension_semantics<parallel>], iteration_bounds = array<i64: 2>, scalar_prefetch = 0 : i64, scratch_operands = 0 : i64, tpu.core_type = #tpu.core_type<tc>, window_params = [{transform_indices = @transform_0, window_bounds = array<i64: 256, 8>}, {pipeline_mode = #tpu.pipeline_mode<synchronous>, transform_indices = @transform_1, window_bounds = array<i64: 8, 8>}, {pipeline_mode = #tpu.pipeline_mode<synchronous>, transform_indices = @transform_2, window_bounds = array<i64: 1, 8>}, {pipeline_mode = #tpu.pipeline_mode<synchronous>, transform_indices = @transform_3, window_bounds = array<i64: 1, 8>}, {transform_indices = @transform_4, window_bounds = array<i64: 256, 8>}]} {
    %c0 = arith.constant 0 : index
    %c0_0 = arith.constant 0 : index
    %0 = vector.load %arg1[%c0, %c0_0] : memref<256x8xf32, #tpu.memory_space<vmem>>, vector<256x8xf32>
    %1 = arith.truncf %0 : vector<256x8xf32> to vector<256x8xbf16>
    %c0_1 = arith.constant 0 : index
    %c0_2 = arith.constant 0 : index
    %2 = vector.load %arg2[%c0_1, %c0_2] : memref<8x8xbf16, #tpu.memory_space<vmem>>, vector<8x8xbf16>
    %cst = arith.constant dense<0.000000e+00> : vector<256x8xf32>
    %3 = tpu.matmul %1, %2, %cst {dimension_numbers = #tpu.dot_dimension_numbers<[1], [0], [0], [1], [0, 0, 1, 1], [], []>} : vector<256x8xbf16>, vector<8x8xbf16>, vector<256x8xf32> -> vector<256x8xf32>
    %c0_3 = arith.constant 0 : index
    %c0_4 = arith.constant 0 : index
    %4 = vector.load %arg3[%c0_3, %c0_4] : memref<1x8xf32, #tpu.memory_space<vmem>>, vector<1x8xf32>
    %5 = vector.broadcast %4 : vector<1x8xf32> to vector<256x8xf32>
    %6 = arith.mulf %3, %5 : vector<256x8xf32>
    %c0_5 = arith.constant 0 : index
    %c0_6 = arith.constant 0 : index
    %7 = vector.load %arg4[%c0_5, %c0_6] : memref<1x8xf32, #tpu.memory_space<vmem>>, vector<1x8xf32>
    %8 = vector.broadcast %7 : vector<1x8xf32> to vector<256x8xf32>
    %9 = arith.addf %6, %8 : vector<256x8xf32>
    %cst_7 = arith.constant 0.000000e+00 : f32
    %10 = vector.broadcast %cst_7 : f32 to vector<256x8xf32>
    %11 = arith.maximumf %9, %10 : vector<256x8xf32>
    %c0_8 = arith.constant 0 : index
    %c0_9 = arith.constant 0 : index
    %12 = vector.load %arg5[%c0_8, %c0_9] : memref<256x8xf32, #tpu.memory_space<vmem>>, vector<256x8xf32>
    tpu.vector_store %arg5[%c0_8, %c0_9], %11 {strides = array<i32>} : memref<256x8xf32, #tpu.memory_space<vmem>>, vector<256x8xf32>,
    return
  }
  func.func @transform_0(%arg0: i32) -> (i32, i32) {
    %c0_i32 = arith.constant 0 : i32
    %c0_i32_0 = arith.constant 0 : i32
    return %arg0, %c0_i32 : i32, i32
  }
  func.func @transform_1(%arg0: i32) -> (i32, i32) {
    %c0_i32 = arith.constant 0 : i32
    %c0_i32_0 = arith.constant 0 : i32
    %c0_i32_1 = arith.constant 0 : i32
    return %c0_i32, %c0_i32_0 : i32, i32
  }
  func.func @transform_2(%arg0: i32) -> (i32, i32) {
    %c0_i32 = arith.constant 0 : i32
    %c0_i32_0 = arith.constant 0 : i32
    %c0_i32_1 = arith.constant 0 : i32
    return %c0_i32, %c0_i32_0 : i32, i32
  }
  func.func @transform_3(%arg0: i32) -> (i32, i32) {
    %c0_i32 = arith.constant 0 : i32
    %c0_i32_0 = arith.constant 0 : i32
    %c0_i32_1 = arith.constant 0 : i32
    return %c0_i32, %c0_i32_0 : i32, i32
  }
  func.func @transform_4(%arg0: i32) -> (i32, i32) {
    %c0_i32 = arith.constant 0 : i32
    %c0_i32_0 = arith.constant 0 : i32
    return %arg0, %c0_i32 : i32, i32
  }
}

module attributes {stable_mosaic.version = 11 : i64} {
  func.func @_conv_bn_res_kernel(%arg0: i32, %arg1: memref<256x8xf32, #tpu.memory_space<vmem>>, %arg2: memref<8x8xbf16, #tpu.memory_space<vmem>>, %arg3: memref<1x8xf32, #tpu.memory_space<vmem>>, %arg4: memref<1x8xf32, #tpu.memory_space<vmem>>, %arg5: memref<256x8xf32, #tpu.memory_space<vmem>>, %arg6: memref<256x8xf32, #tpu.memory_space<vmem>>) attributes {dimension_semantics = [#tpu.dimension_semantics<parallel>], iteration_bounds = array<i64: 2>, scalar_prefetch = 0 : i64, scratch_operands = 0 : i64, tpu.core_type = #tpu.core_type<tc>, window_params = [{transform_indices = @transform_0, window_bounds = array<i64: 256, 8>}, {pipeline_mode = #tpu.pipeline_mode<synchronous>, transform_indices = @transform_1, window_bounds = array<i64: 8, 8>}, {pipeline_mode = #tpu.pipeline_mode<synchronous>, transform_indices = @transform_2, window_bounds = array<i64: 1, 8>}, {pipeline_mode = #tpu.pipeline_mode<synchronous>, transform_indices = @transform_3, window_bounds = array<i64: 1, 8>}, {transform_indices = @transform_4, window_bounds = array<i64: 256, 8>}, {transform_indices = @transform_5, window_bounds = array<i64: 256, 8>}]} {
    %c0 = arith.constant 0 : index
    %c0_0 = arith.constant 0 : index
    %0 = vector.load %arg1[%c0, %c0_0] : memref<256x8xf32, #tpu.memory_space<vmem>>, vector<256x8xf32>
    %cst = arith.constant 0.000000e+00 : f32
    %1 = vector.broadcast %cst : f32 to vector<256x8xf32>
    %2 = arith.maximumf %0, %1 : vector<256x8xf32>
    %3 = arith.truncf %2 : vector<256x8xf32> to vector<256x8xbf16>
    %c0_1 = arith.constant 0 : index
    %c0_2 = arith.constant 0 : index
    %4 = vector.load %arg2[%c0_1, %c0_2] : memref<8x8xbf16, #tpu.memory_space<vmem>>, vector<8x8xbf16>
    %cst_3 = arith.constant dense<0.000000e+00> : vector<256x8xf32>
    %5 = tpu.matmul %3, %4, %cst_3 {dimension_numbers = #tpu.dot_dimension_numbers<[1], [0], [0], [1], [0, 0, 1, 1], [], []>} : vector<256x8xbf16>, vector<8x8xbf16>, vector<256x8xf32> -> vector<256x8xf32>
    %c0_4 = arith.constant 0 : index
    %c0_5 = arith.constant 0 : index
    %6 = vector.load %arg3[%c0_4, %c0_5] : memref<1x8xf32, #tpu.memory_space<vmem>>, vector<1x8xf32>
    %7 = vector.broadcast %6 : vector<1x8xf32> to vector<256x8xf32>
    %8 = arith.mulf %5, %7 : vector<256x8xf32>
    %c0_6 = arith.constant 0 : index
    %c0_7 = arith.constant 0 : index
    %9 = vector.load %arg4[%c0_6, %c0_7] : memref<1x8xf32, #tpu.memory_space<vmem>>, vector<1x8xf32>
    %10 = vector.broadcast %9 : vector<1x8xf32> to vector<256x8xf32>
    %11 = arith.addf %8, %10 : vector<256x8xf32>
    %c0_8 = arith.constant 0 : index
    %c0_9 = arith.constant 0 : index
    %12 = vector.load %arg5[%c0_8, %c0_9] : memref<256x8xf32, #tpu.memory_space<vmem>>, vector<256x8xf32>
    %13 = arith.addf %11, %12 : vector<256x8xf32>
    %cst_10 = arith.constant 0.000000e+00 : f32
    %14 = vector.broadcast %cst_10 : f32 to vector<256x8xf32>
    %15 = arith.maximumf %13, %14 : vector<256x8xf32>
    %c0_11 = arith.constant 0 : index
    %c0_12 = arith.constant 0 : index
    %16 = vector.load %arg6[%c0_11, %c0_12] : memref<256x8xf32, #tpu.memory_space<vmem>>, vector<256x8xf32>
    tpu.vector_store %arg6[%c0_11, %c0_12], %15 {strides = array<i32>} : memref<256x8xf32, #tpu.memory_space<vmem>>, vector<256x8xf32>,
    return
  }
  func.func @transform_0(%arg0: i32) -> (i32, i32) {
    %c0_i32 = arith.constant 0 : i32
    %c0_i32_0 = arith.constant 0 : i32
    return %arg0, %c0_i32 : i32, i32
  }
  func.func @transform_1(%arg0: i32) -> (i32, i32) {
    %c0_i32 = arith.constant 0 : i32
    %c0_i32_0 = arith.constant 0 : i32
    %c0_i32_1 = arith.constant 0 : i32
    return %c0_i32, %c0_i32_0 : i32, i32
  }
  func.func @transform_2(%arg0: i32) -> (i32, i32) {
    %c0_i32 = arith.constant 0 : i32
    %c0_i32_0 = arith.constant 0 : i32
    %c0_i32_1 = arith.constant 0 : i32
    return %c0_i32, %c0_i32_0 : i32, i32
  }
  func.func @transform_3(%arg0: i32) -> (i32, i32) {
    %c0_i32 = arith.constant 0 : i32
    %c0_i32_0 = arith.constant 0 : i32
    %c0_i32_1 = arith.constant 0 : i32
    return %c0_i32, %c0_i32_0 : i32, i32
  }
  func.func @transform_4(%arg0: i32) -> (i32, i32) {
    %c0_i32 = arith.constant 0 : i32
    %c0_i32_0 = arith.constant 0 : i32
    return %arg0, %c0_i32 : i32, i32
  }
  func.func @transform_5(%arg0: i32) -> (i32, i32) {
    %c0_i32 = arith.constant 0 : i32
    %c0_i32_0 = arith.constant 0 : i32
    return %arg0, %c0_i32 : i32, i32
  }
}

module attributes {stable_mosaic.version = 11 : i64} {
  func.func @_axial_attn_kernel(%arg0: i32, %arg1: memref<16x16x8xf32, #tpu.memory_space<vmem>>, %arg2: memref<8x16xbf16, #tpu.memory_space<vmem>>, %arg3: memref<1x16xf32, #tpu.memory_space<vmem>>, %arg4: memref<1x16xf32, #tpu.memory_space<vmem>>, %arg5: memref<1x8xf32, #tpu.memory_space<vmem>>, %arg6: memref<1x8xf32, #tpu.memory_space<vmem>>, %arg7: memref<16x16x8xf32, #tpu.memory_space<vmem>>) attributes {dimension_semantics = [#tpu.dimension_semantics<parallel>], iteration_bounds = array<i64: 2>, scalar_prefetch = 0 : i64, scratch_operands = 0 : i64, tpu.core_type = #tpu.core_type<tc>, window_params = [{transform_indices = @transform_0, window_bounds = array<i64: 16, 16, 8>}, {pipeline_mode = #tpu.pipeline_mode<synchronous>, transform_indices = @transform_1, window_bounds = array<i64: 8, 16>}, {pipeline_mode = #tpu.pipeline_mode<synchronous>, transform_indices = @transform_2, window_bounds = array<i64: 1, 16>}, {pipeline_mode = #tpu.pipeline_mode<synchronous>, transform_indices = @transform_3, window_bounds = array<i64: 1, 16>}, {pipeline_mode = #tpu.pipeline_mode<synchronous>, transform_indices = @transform_4, window_bounds = array<i64: 1, 8>}, {pipeline_mode = #tpu.pipeline_mode<synchronous>, transform_indices = @transform_5, window_bounds = array<i64: 1, 8>}, {transform_indices = @transform_6, window_bounds = array<i64: 16, 16, 8>}]} {
    %c0 = arith.constant 0 : index
    %c0_0 = arith.constant 0 : index
    %c0_1 = arith.constant 0 : index
    %0 = vector.load %arg1[%c0, %c0_0, %c0_1] : memref<16x16x8xf32, #tpu.memory_space<vmem>>, vector<16x16x8xf32>
    %1 = vector.shape_cast %0 : vector<16x16x8xf32> to vector<256x8xf32>
    %2 = arith.truncf %1 : vector<256x8xf32> to vector<256x8xbf16>
    %c0_2 = arith.constant 0 : index
    %c0_3 = arith.constant 0 : index
    %3 = vector.load %arg2[%c0_2, %c0_3] : memref<8x16xbf16, #tpu.memory_space<vmem>>, vector<8x16xbf16>
    %cst = arith.constant dense<0.000000e+00> : vector<256x16xf32>
    %4 = tpu.matmul %2, %3, %cst {dimension_numbers = #tpu.dot_dimension_numbers<[1], [0], [0], [1], [0, 0, 1, 1], [], []>} : vector<256x8xbf16>, vector<8x16xbf16>, vector<256x16xf32> -> vector<256x16xf32>
    %c0_4 = arith.constant 0 : index
    %c0_5 = arith.constant 0 : index
    %5 = vector.load %arg3[%c0_4, %c0_5] : memref<1x16xf32, #tpu.memory_space<vmem>>, vector<1x16xf32>
    %6 = vector.broadcast %5 : vector<1x16xf32> to vector<256x16xf32>
    %7 = arith.mulf %4, %6 : vector<256x16xf32>
    %c0_6 = arith.constant 0 : index
    %c0_7 = arith.constant 0 : index
    %8 = vector.load %arg4[%c0_6, %c0_7] : memref<1x16xf32, #tpu.memory_space<vmem>>, vector<1x16xf32>
    %9 = vector.broadcast %8 : vector<1x16xf32> to vector<256x16xf32>
    %10 = arith.addf %7, %9 : vector<256x16xf32>
    %11 = vector.shape_cast %10 : vector<256x16xf32> to vector<16x16x16xf32>
    %12 = arith.truncf %11 : vector<16x16x16xf32> to vector<16x16x16xbf16>
    %13 = vector.extract_strided_slice %12 {offsets = [0, 0, 0], sizes = [16, 16, 2], strides = [1, 1, 1]} : vector<16x16x16xbf16> to vector<16x16x2xbf16>
    %14 = vector.extract_strided_slice %12 {offsets = [0, 0, 4], sizes = [16, 16, 2], strides = [1, 1, 1]} : vector<16x16x16xbf16> to vector<16x16x2xbf16>
    %15 = vector.extract_strided_slice %12 {offsets = [0, 0, 8], sizes = [16, 16, 4], strides = [1, 1, 1]} : vector<16x16x16xbf16> to vector<16x16x4xbf16>
    "tpu.trace_start"() <{level = 10 : i32, message = "bic,bjc->bij"}> : () -> ()
    %cst_8 = arith.constant dense<0.000000e+00> : vector<16x16x16xf32>
    %16 = tpu.matmul %13, %14, %cst_8 {dimension_numbers = #tpu.dot_dimension_numbers<[2], [2], [1], [1], [0, 0, 0, 1, 1, 1], [0], [0]>} : vector<16x16x2xbf16>, vector<16x16x2xbf16>, vector<16x16x16xf32> -> vector<16x16x16xf32>
    "tpu.trace_stop"() : () -> ()
    %cst_9 = arith.constant dense<0xFF800000> : vector<16x16xf32>
    %17 = vector.multi_reduction <maximumf>, %16, %cst_9 [2] : vector<16x16x16xf32> to vector<16x16xf32>
    %18 = vector.shape_cast %17 : vector<16x16xf32> to vector<16x16x1xf32>
    %19 = vector.broadcast %18 : vector<16x16x1xf32> to vector<16x16x16xf32>
    %20 = arith.subf %16, %19 : vector<16x16x16xf32>
    %21 = math.exp %20 : vector<16x16x16xf32>
    %cst_10 = arith.constant dense<0.000000e+00> : vector<16x16xf32>
    %22 = vector.multi_reduction <add>, %21, %cst_10 [2] : vector<16x16x16xf32> to vector<16x16xf32>
    %23 = vector.shape_cast %22 : vector<16x16xf32> to vector<16x16x1xf32>
    %24 = tpu.reciprocal %23 {approx = true} : vector<16x16x1xf32> -> vector<16x16x1xf32>
    %25 = vector.broadcast %24 : vector<16x16x1xf32> to vector<16x16x16xf32>
    %26 = arith.mulf %21, %25 : vector<16x16x16xf32>
    %27 = arith.truncf %26 : vector<16x16x16xf32> to vector<16x16x16xbf16>
    "tpu.trace_start"() <{level = 10 : i32, message = "bij,bjc->bic"}> : () -> ()
    %cst_11 = arith.constant dense<0.000000e+00> : vector<16x16x4xf32>
    %28 = tpu.matmul %27, %15, %cst_11 {dimension_numbers = #tpu.dot_dimension_numbers<[2], [1], [1], [2], [0, 0, 0, 1, 1, 2], [0], [0]>} : vector<16x16x16xbf16>, vector<16x16x4xbf16>, vector<16x16x4xf32> -> vector<16x16x4xf32>
    "tpu.trace_stop"() : () -> ()
    %c0_12 = arith.constant 0 : index
    %c0_13 = arith.constant 0 : index
    %29 = vector.load %arg5[%c0_12, %c0_13] : memref<1x8xf32, #tpu.memory_space<vmem>>, vector<1x4xf32>
    %30 = vector.shape_cast %29 : vector<1x4xf32> to vector<1x1x4xf32>
    %31 = vector.broadcast %30 : vector<1x1x4xf32> to vector<16x16x4xf32>
    %32 = arith.mulf %28, %31 : vector<16x16x4xf32>
    %c0_14 = arith.constant 0 : index
    %c0_15 = arith.constant 0 : index
    %33 = vector.load %arg6[%c0_14, %c0_15] : memref<1x8xf32, #tpu.memory_space<vmem>>, vector<1x4xf32>
    %34 = vector.shape_cast %33 : vector<1x4xf32> to vector<1x1x4xf32>
    %35 = vector.broadcast %34 : vector<1x1x4xf32> to vector<16x16x4xf32>
    %36 = arith.addf %32, %35 : vector<16x16x4xf32>
    %c0_16 = arith.constant 0 : index
    %c0_17 = arith.constant 0 : index
    %c0_18 = arith.constant 0 : index
    %37 = vector.load %arg7[%c0_16, %c0_17, %c0_18] : memref<16x16x8xf32, #tpu.memory_space<vmem>>, vector<16x16x4xf32>
    tpu.vector_store %arg7[%c0_16, %c0_17, %c0_18], %36 {strides = array<i32>} : memref<16x16x8xf32, #tpu.memory_space<vmem>>, vector<16x16x4xf32>,
    %38 = vector.extract_strided_slice %12 {offsets = [0, 0, 2], sizes = [16, 16, 2], strides = [1, 1, 1]} : vector<16x16x16xbf16> to vector<16x16x2xbf16>
    %39 = vector.extract_strided_slice %12 {offsets = [0, 0, 6], sizes = [16, 16, 2], strides = [1, 1, 1]} : vector<16x16x16xbf16> to vector<16x16x2xbf16>
    %40 = vector.extract_strided_slice %12 {offsets = [0, 0, 12], sizes = [16, 16, 4], strides = [1, 1, 1]} : vector<16x16x16xbf16> to vector<16x16x4xbf16>
    "tpu.trace_start"() <{level = 10 : i32, message = "bic,bjc->bij"}> : () -> ()
    %cst_19 = arith.constant dense<0.000000e+00> : vector<16x16x16xf32>
    %41 = tpu.matmul %38, %39, %cst_19 {dimension_numbers = #tpu.dot_dimension_numbers<[2], [2], [1], [1], [0, 0, 0, 1, 1, 1], [0], [0]>} : vector<16x16x2xbf16>, vector<16x16x2xbf16>, vector<16x16x16xf32> -> vector<16x16x16xf32>
    "tpu.trace_stop"() : () -> ()
    %cst_20 = arith.constant dense<0xFF800000> : vector<16x16xf32>
    %42 = vector.multi_reduction <maximumf>, %41, %cst_20 [2] : vector<16x16x16xf32> to vector<16x16xf32>
    %43 = vector.shape_cast %42 : vector<16x16xf32> to vector<16x16x1xf32>
    %44 = vector.broadcast %43 : vector<16x16x1xf32> to vector<16x16x16xf32>
    %45 = arith.subf %41, %44 : vector<16x16x16xf32>
    %46 = math.exp %45 : vector<16x16x16xf32>
    %cst_21 = arith.constant dense<0.000000e+00> : vector<16x16xf32>
    %47 = vector.multi_reduction <add>, %46, %cst_21 [2] : vector<16x16x16xf32> to vector<16x16xf32>
    %48 = vector.shape_cast %47 : vector<16x16xf32> to vector<16x16x1xf32>
    %49 = tpu.reciprocal %48 {approx = true} : vector<16x16x1xf32> -> vector<16x16x1xf32>
    %50 = vector.broadcast %49 : vector<16x16x1xf32> to vector<16x16x16xf32>
    %51 = arith.mulf %46, %50 : vector<16x16x16xf32>
    %52 = arith.truncf %51 : vector<16x16x16xf32> to vector<16x16x16xbf16>
    "tpu.trace_start"() <{level = 10 : i32, message = "bij,bjc->bic"}> : () -> ()
    %cst_22 = arith.constant dense<0.000000e+00> : vector<16x16x4xf32>
    %53 = tpu.matmul %52, %40, %cst_22 {dimension_numbers = #tpu.dot_dimension_numbers<[2], [1], [1], [2], [0, 0, 0, 1, 1, 2], [0], [0]>} : vector<16x16x16xbf16>, vector<16x16x4xbf16>, vector<16x16x4xf32> -> vector<16x16x4xf32>
    "tpu.trace_stop"() : () -> ()
    %c0_23 = arith.constant 0 : index
    %c4 = arith.constant 4 : index
    %54 = vector.load %arg5[%c0_23, %c4] : memref<1x8xf32, #tpu.memory_space<vmem>>, vector<1x4xf32>
    %55 = vector.shape_cast %54 : vector<1x4xf32> to vector<1x1x4xf32>
    %56 = vector.broadcast %55 : vector<1x1x4xf32> to vector<16x16x4xf32>
    %57 = arith.mulf %53, %56 : vector<16x16x4xf32>
    %c0_24 = arith.constant 0 : index
    %c4_25 = arith.constant 4 : index
    %58 = vector.load %arg6[%c0_24, %c4_25] : memref<1x8xf32, #tpu.memory_space<vmem>>, vector<1x4xf32>
    %59 = vector.shape_cast %58 : vector<1x4xf32> to vector<1x1x4xf32>
    %60 = vector.broadcast %59 : vector<1x1x4xf32> to vector<16x16x4xf32>
    %61 = arith.addf %57, %60 : vector<16x16x4xf32>
    %c0_26 = arith.constant 0 : index
    %c0_27 = arith.constant 0 : index
    %c4_28 = arith.constant 4 : index
    %62 = vector.load %arg7[%c0_26, %c0_27, %c4_28] : memref<16x16x8xf32, #tpu.memory_space<vmem>>, vector<16x16x4xf32>
    tpu.vector_store %arg7[%c0_26, %c0_27, %c4_28], %61 {strides = array<i32>} : memref<16x16x8xf32, #tpu.memory_space<vmem>>, vector<16x16x4xf32>,
    return
  }
  func.func @transform_0(%arg0: i32) -> (i32, i32, i32) {
    %c0_i32 = arith.constant 0 : i32
    %c0_i32_0 = arith.constant 0 : i32
    %c0_i32_1 = arith.constant 0 : i32
    return %arg0, %c0_i32, %c0_i32_0 : i32, i32, i32
  }
  func.func @transform_1(%arg0: i32) -> (i32, i32) {
    %c0_i32 = arith.constant 0 : i32
    %c0_i32_0 = arith.constant 0 : i32
    %c0_i32_1 = arith.constant 0 : i32
    return %c0_i32, %c0_i32_0 : i32, i32
  }
  func.func @transform_2(%arg0: i32) -> (i32, i32) {
    %c0_i32 = arith.constant 0 : i32
    %c0_i32_0 = arith.constant 0 : i32
    %c0_i32_1 = arith.constant 0 : i32
    return %c0_i32, %c0_i32_0 : i32, i32
  }
  func.func @transform_3(%arg0: i32) -> (i32, i32) {
    %c0_i32 = arith.constant 0 : i32
    %c0_i32_0 = arith.constant 0 : i32
    %c0_i32_1 = arith.constant 0 : i32
    return %c0_i32, %c0_i32_0 : i32, i32
  }
  func.func @transform_4(%arg0: i32) -> (i32, i32) {
    %c0_i32 = arith.constant 0 : i32
    %c0_i32_0 = arith.constant 0 : i32
    %c0_i32_1 = arith.constant 0 : i32
    return %c0_i32, %c0_i32_0 : i32, i32
  }
  func.func @transform_5(%arg0: i32) -> (i32, i32) {
    %c0_i32 = arith.constant 0 : i32
    %c0_i32_0 = arith.constant 0 : i32
    %c0_i32_1 = arith.constant 0 : i32
    return %c0_i32, %c0_i32_0 : i32, i32
  }
  func.func @transform_6(%arg0: i32) -> (i32, i32, i32) {
    %c0_i32 = arith.constant 0 : i32
    %c0_i32_0 = arith.constant 0 : i32
    %c0_i32_1 = arith.constant 0 : i32
    return %arg0, %c0_i32, %c0_i32_0 : i32, i32, i32
  }
}

</mosaic_0001>

<llo_original>
// kernel: axial_block_wopos_forward.4
$region0: #{axial_block_wopos_forward.4}
  #allocation0 [shape = 'u32[]', space=smem, size = 0x4, offset = 0x4, fixed_abs, tag = 'smem constant byte address 0x4 - core index']
  #allocation1 [shape = 'u32[144,128]{1,0:T(1,128)}', space=vmem, size = 0x12000, scoped, tag = 'internal scratch']
  %s0 = inlined_call_operand.vmem [shape: f32[512,8], index: 0, kind: input, shape index: {}]
  %s1 = inlined_call_operand.vmem [shape: bf16[8,8], index: 1, kind: input, shape index: {}]
  %s2 = inlined_call_operand.vmem [shape: f32[1,8], index: 2, kind: input, shape index: {}]
  %s3 = inlined_call_operand.vmem [shape: f32[1,8], index: 3, kind: input, shape index: {}]
  %s4 = inlined_call_operand.vmem [shape: f32[512,8], index: 4, kind: output, shape index: {}]
  %s5 = sld [smem:[#allocation0]]
  $region49: #{axial_block_wopos_forward.4} parent=0
    _
  %s7 = ssub.s32 1, %s5
  %s8 = scalar_select 0, %s7, %s5
  loop: start=0, step=1, limit=4
  $region2: #{axial_block_wopos_forward.4} parent=0 // loop_pre_header
    _
  $region3: #{axial_block_wopos_forward.4} parent=0 // loop_header
    %s10 = sphi 0, %s14
    %p11 = scmp.ge.s32.totalorder %s10, 4
    %s20 = sphi 0, %s22
    %s23 = sphi 0, %s20
    %s24 = sphi 0, %s23
    %s40 = sphi 0, %s24
    %s44 = sphi 0, %s44
    %s46 = sphi 0, %s44
    %s47 = sphi 0, %s46
    %s61 = sphi 0, %s47
    %s65 = sphi 0, %s65
    %s67 = sphi 0, %s65
    %s68 = sphi 0, %s67
    %s82 = sphi 0, %s68
    %s86 = sphi 0, %s86
    %s88 = sphi 0, %s86
    %s89 = sphi 0, %s88
    %s103 = sphi 0, %s89
    %s109 = sphi 0, %s111
    %s112 = sphi 0, %s109
    %s113 = sphi 0, %s112
    %s129 = sphi 0, %s113
  $region4: #{axial_block_wopos_forward.4} parent=0 // loop_header_branch
    %13 = sbr.rel (%p11) target = $region8
  $region5: #{axial_block_wopos_forward.4} parent=0 // loop_body
    %s15 = ssub.s32 %s10, 1
    %s16 = ssub.s32 %s10, 2
    %s17 = sadd.s32 %s10, 1
    %s18 = ssub.s32 %s10, %s17
    %p19 = scmp.eq.s32.totalorder %s18, 0
    %s21 = sadd.s32 %s20, 1
    %s22 = scalar_select %p19, %s20, %s21
    %p25 = pneg %p19
    %p26 = scmp.eq.s32.totalorder %s10, 1
    %p27 = por %p25, %p26
    %p28 = scmp.ne.s32.totalorder %s20, %s23
    %p29 = scmp.eq.s32.totalorder %s10, 0
    %p30 = por %p28, %p29
    %p31 = scmp.ne.s32.totalorder %s20, %s23
    %p32 = scmp.eq.s32.totalorder %s15, 1
    %p33 = por %p31, %p32
    %p34 = scmp.ne.s32.totalorder %s23, %s24
    %p35 = scmp.eq.s32.totalorder %s15, 0
    %p36 = por %p34, %p35
    %p37 = scmp.ne.s32.totalorder %s23, %s24
    %p38 = scmp.eq.s32.totalorder %s16, 1
    %p39 = por %p37, %p38
    %p41 = scmp.ne.s32.totalorder %s24, %s40
    %p42 = scmp.eq.s32.totalorder %s16, 0
    %p43 = por %p41, %p42
    %s45 = sadd.s32 %s44, 1
    %p48 = scmp.eq.s32.totalorder %s10, 1
    %p49 = scmp.ne.s32.totalorder %s44, %s46
    %p50 = scmp.eq.s32.totalorder %s10, 0
    %p51 = por %p49, %p50
    %p52 = scmp.ne.s32.totalorder %s44, %s46
    %p53 = scmp.eq.s32.totalorder %s15, 1
    %p54 = por %p52, %p53
    %p55 = scmp.ne.s32.totalorder %s46, %s47
    %p56 = scmp.eq.s32.totalorder %s15, 0
    %p57 = por %p55, %p56
    %p58 = scmp.ne.s32.totalorder %s46, %s47
    %p59 = scmp.eq.s32.totalorder %s16, 1
    %p60 = por %p58, %p59
    %p62 = scmp.ne.s32.totalorder %s47, %s61
    %p63 = scmp.eq.s32.totalorder %s16, 0
    %p64 = por %p62, %p63
    %s66 = sadd.s32 %s65, 1
    %p69 = scmp.eq.s32.totalorder %s10, 1
    %p70 = scmp.ne.s32.totalorder %s65, %s67
    %p71 = scmp.eq.s32.totalorder %s10, 0
    %p72 = por %p70, %p71
    %p73 = scmp.ne.s32.totalorder %s65, %s67
    %p74 = scmp.eq.s32.totalorder %s15, 1
    %p75 = por %p73, %p74
    %p76 = scmp.ne.s32.totalorder %s67, %s68
    %p77 = scmp.eq.s32.totalorder %s15, 0
    %p78 = por %p76, %p77
    %p79 = scmp.ne.s32.totalorder %s67, %s68
    %p80 = scmp.eq.s32.totalorder %s16, 1
    %p81 = por %p79, %p80
    %p83 = scmp.ne.s32.totalorder %s68, %s82
    %p84 = scmp.eq.s32.totalorder %s16, 0
    %p85 = por %p83, %p84
    %s87 = sadd.s32 %s86, 1
    %p90 = scmp.eq.s32.totalorder %s10, 1
    %p91 = scmp.ne.s32.totalorder %s86, %s88
    %p92 = scmp.eq.s32.totalorder %s10, 0
    %p93 = por %p91, %p92
    %p94 = scmp.ne.s32.totalorder %s86, %s88
    %p95 = scmp.eq.s32.totalorder %s15, 1
    %p96 = por %p94, %p95
    %p97 = scmp.ne.s32.totalorder %s88, %s89
    %p98 = scmp.eq.s32.totalorder %s15, 0
    %p99 = por %p97, %p98
    %p100 = scmp.ne.s32.totalorder %s88, %s89
    %p101 = scmp.eq.s32.totalorder %s16, 1
    %p102 = por %p100, %p101
    %p104 = scmp.ne.s32.totalorder %s89, %s103
    %p105 = scmp.eq.s32.totalorder %s16, 0
    %p106 = por %p104, %p105
    %s107 = ssub.s32 %s10, %s17
    %p108 = scmp.eq.s32.totalorder %s107, 0
    %s110 = sadd.s32 %s109, 1
    %s111 = scalar_select %p108, %s109, %s110
    %p114 = pneg %p108
    %p115 = scmp.eq.s32.totalorder %s10, 1
    %p116 = por %p114, %p115
    %p117 = scmp.ne.s32.totalorder %s109, %s112
    %p118 = scmp.eq.s32.totalorder %s10, 0
    %p119 = por %p117, %p118
    %p120 = scmp.ne.s32.totalorder %s109, %s112
    %p121 = scmp.eq.s32.totalorder %s15, 1
    %p122 = por %p120, %p121
    %p123 = scmp.ne.s32.totalorder %s112, %s113
    %p124 = scmp.eq.s32.totalorder %s15, 0
    %p125 = por %p123, %p124
    %p126 = scmp.ne.s32.totalorder %s112, %s113
    %p127 = scmp.eq.s32.totalorder %s16, 1
    %p128 = por %p126, %p127
    %p130 = scmp.ne.s32.totalorder %s113, %s129
    %p131 = scmp.eq.s32.totalorder %s16, 0
    %p132 = por %p130, %p131
    %p133 = scmp.le.s32.totalorder 1, %s10
    %p134 = scmp.lt.s32.totalorder %s10, 3
    %p135 = pnand %p133, %p134
    %p136 = pneg %p135
    // Predicated region
    $region9: #{axial_block_wopos_forward.4} parent=5 // pred_check
      _
    $region10: #{axial_block_wopos_forward.4} parent=5 // pred_check_branch
      %138 = sbr.rel (%p135) target = $region12
    $region11: #{axial_block_wopos_forward.4} parent=5 // pred_region
      %s139 = ssub.s32 %s10, 1
      // Predicated region
      $region13: #{axial_block_wopos_forward.4} parent=11 // pred_check
        %p140 = pneg %p57
      $region14: #{axial_block_wopos_forward.4} parent=11 // pred_check_branch
        %142 = sbr.rel (%p140) target = $region16
      $region15: #{axial_block_wopos_forward.4} parent=11 // pred_region
        _
      $region16: #{axial_block_wopos_forward.4} parent=11 // pred_fallthru
        _
      // Predicated region
      $region17: #{axial_block_wopos_forward.4} parent=11 // pred_check
        %p143 = pneg %p78
      $region18: #{axial_block_wopos_forward.4} parent=11 // pred_check_branch
        %145 = sbr.rel (%p143) target = $region20
      $region19: #{axial_block_wopos_forward.4} parent=11 // pred_region
        _
      $region20: #{axial_block_wopos_forward.4} parent=11 // pred_fallthru
        _
      // Predicated region
      $region21: #{axial_block_wopos_forward.4} parent=11 // pred_check
        %p146 = pneg %p99
      $region22: #{axial_block_wopos_forward.4} parent=11 // pred_check_branch
        %148 = sbr.rel (%p146) target = $region24
      $region23: #{axial_block_wopos_forward.4} parent=11 // pred_region
        _
      $region24: #{axial_block_wopos_forward.4} parent=11 // pred_fallthru
        _
    $region12: #{axial_block_wopos_forward.4} parent=5 // pred_fallthru
      _
    %p149 = scmp.lt.s32.totalorder %s10, 2
    // Predicated region
    $region25: #{axial_block_wopos_forward.4} parent=5 // pred_check
      %p150 = pneg %p149
    $region26: #{axial_block_wopos_forward.4} parent=5 // pred_check_branch
      %152 = sbr.rel (%p150) target = $region28
    $region27: #{axial_block_wopos_forward.4} parent=5 // pred_region
      // Predicated region
      $region29: #{axial_block_wopos_forward.4} parent=27 // pred_check
        %p153 = pneg %p30
      $region30: #{axial_block_wopos_forward.4} parent=27 // pred_check_branch
        %155 = sbr.rel (%p153) target = $region32
      $region31: #{axial_block_wopos_forward.4} parent=27 // pred_region
        %s156 = smul.u32 32, %s10
        %p157 = scmp.lt.s32.totalorder %s156, 63
        %s158 = scalar_select %p157, %s156, 63
        %s159 = smul.addr %s158, 8
        %s160 = scalar_lea.vmem %s0, %s159
        %s161 = smul.u32 32, %s10
      $region32: #{axial_block_wopos_forward.4} parent=27 // pred_fallthru
        _
    $region28: #{axial_block_wopos_forward.4} parent=5 // pred_fallthru
      _
    %p162 = scmp.le.s32.totalorder 1, %s10
    %p163 = scmp.lt.s32.totalorder %s10, 3
    %p164 = pnand %p162, %p163
    %p165 = pneg %p164
    // Predicated region
    $region33: #{axial_block_wopos_forward.4} parent=5 // pred_check
      _
    $region34: #{axial_block_wopos_forward.4} parent=5 // pred_check_branch
      %167 = sbr.rel (%p164) target = $region36
    $region35: #{axial_block_wopos_forward.4} parent=5 // pred_region
      %s168 = ssub.s32 %s10, 1
      %s169 = smul.u32 32, %s15
      %p170 = scmp.lt.s32.totalorder %s169, 63
      %s171 = scalar_select %p170, %s169, 63
      %s172 = smul.addr %s171, 8
      %s173 = scalar_lea.vmem %s0, %s172
      %p174 = pneg %p36
      %p175 = pneg %p33
      %p176 = pneg %p57
      %p177 = pneg %p54
      %p178 = pneg %p78
      %p179 = pneg %p75
      %p180 = pneg %p99
      %p181 = pneg %p96
      %p182 = pneg %p125
      %p183 = pneg %p122
      %s184 = smul.u32 32, %s15
      %p185 = scmp.lt.s32.totalorder %s184, 63
      %s186 = scalar_select %p185, %s184, 63
      %s187 = smul.addr %s186, 8
      %s188 = scalar_lea.vmem %s4, %s187
      %s189 = smul.u32 32, %s15
      %p190 = scmp.lt.s32.totalorder %s189, 63
      %s191 = scalar_select %p190, %s189, 63
      %s192 = smul.addr %s191, 8
      %s193 = scalar_lea.vmem %s0, %s192
      %s194 = smul.u32 32, %s15
      %s195 = smul.u32 32, %s15
      %p196 = scmp.lt.s32.totalorder %s195, 63
      %s197 = scalar_select %p196, %s195, 63
      %s198 = smul.addr %s197, 8
      %s199 = scalar_lea.vmem %s4, %s198
      %s200 = smul.u32 32, %s15
      %v202 = vld [vmem:[%s193] sm:$0xff]
      %v203 = vld [vmem:[%s193 + $0x8] sm:$0xff]
      %v204 = vld [vmem:[%s193 + $0x10] sm:$0xff]
      %v205 = vld [vmem:[%s193 + $0x18] sm:$0xff]
      %v206 = vld [vmem:[%s193 + $0x20] sm:$0xff]
      %v207 = vld [vmem:[%s193 + $0x28] sm:$0xff]
      %v208 = vld [vmem:[%s193 + $0x30] sm:$0xff]
      %v209 = vld [vmem:[%s193 + $0x38] sm:$0xff]
      %v210 = vld [vmem:[%s193 + $0x40] sm:$0xff]
      %v211 = vld [vmem:[%s193 + $0x48] sm:$0xff]
      %v212 = vld [vmem:[%s193 + $0x50] sm:$0xff]
      %v213 = vld [vmem:[%s193 + $0x58] sm:$0xff]
      %v214 = vld [vmem:[%s193 + $0x60] sm:$0xff]
      %v215 = vld [vmem:[%s193 + $0x68] sm:$0xff]
      %v216 = vld [vmem:[%s193 + $0x70] sm:$0xff]
      %v217 = vld [vmem:[%s193 + $0x78] sm:$0xff]
      %v218 = vld [vmem:[%s193 + $0x80] sm:$0xff]
      %v219 = vld [vmem:[%s193 + $0x88] sm:$0xff]
      %v220 = vld [vmem:[%s193 + $0x90] sm:$0xff]
      %v221 = vld [vmem:[%s193 + $0x98] sm:$0xff]
      %v222 = vld [vmem:[%s193 + $0xa0] sm:$0xff]
      %v223 = vld [vmem:[%s193 + $0xa8] sm:$0xff]
      %v224 = vld [vmem:[%s193 + $0xb0] sm:$0xff]
      %v225 = vld [vmem:[%s193 + $0xb8] sm:$0xff]
      %v226 = vld [vmem:[%s193 + $0xc0] sm:$0xff]
      %v227 = vld [vmem:[%s193 + $0xc8] sm:$0xff]
      %v228 = vld [vmem:[%s193 + $0xd0] sm:$0xff]
      %v229 = vld [vmem:[%s193 + $0xd8] sm:$0xff]
      %v230 = vld [vmem:[%s193 + $0xe0] sm:$0xff]
      %v231 = vld [vmem:[%s193 + $0xe8] sm:$0xff]
      %v232 = vld [vmem:[%s193 + $0xf0] sm:$0xff]
      %v233 = vld [vmem:[%s193 + $0xf8] sm:$0xff]
      %v234 = vpack.c.bf16 %v203, %v202
      %v235 = vpack.c.bf16 %v205, %v204
      %v236 = vpack.c.bf16 %v207, %v206
      %v237 = vpack.c.bf16 %v209, %v208
      %v238 = vpack.c.bf16 %v211, %v210
      %v239 = vpack.c.bf16 %v213, %v212
      %v240 = vpack.c.bf16 %v215, %v214
      %v241 = vpack.c.bf16 %v217, %v216
      %v242 = vpack.c.bf16 %v219, %v218
      %v243 = vpack.c.bf16 %v221, %v220
      %v244 = vpack.c.bf16 %v223, %v222
      %v245 = vpack.c.bf16 %v225, %v224
      %v246 = vpack.c.bf16 %v227, %v226
      %v247 = vpack.c.bf16 %v229, %v228
      %v248 = vpack.c.bf16 %v231, %v230
      %v249 = vpack.c.bf16 %v233, %v232
      %v250 = vld [vmem:[%s1] sm:$0xf]
      %vm251 = vcmask 64512
      %v253 = vsel %vm251, %v234, 0
      %v256 = vsel %vm251, %v235, 0
      %v259 = vsel %vm251, %v236, 0
      %v262 = vsel %vm251, %v237, 0
      %v265 = vsel %vm251, %v238, 0
      %v268 = vsel %vm251, %v239, 0
      %v271 = vsel %vm251, %v240, 0
      %v274 = vsel %vm251, %v241, 0
      %v277 = vsel %vm251, %v242, 0
      %v280 = vsel %vm251, %v243, 0
      %v283 = vsel %vm251, %v244, 0
      %v286 = vsel %vm251, %v245, 0
      %v289 = vsel %vm251, %v246, 0
      %v292 = vsel %vm251, %v247, 0
      %v295 = vsel %vm251, %v248, 0
      %v298 = vsel %vm251, %v249, 0
      %vm300 = vcmask 1043456
      %v302 = vsel %vm300, %v250, 0
      %304 = vmatprep.subr.bf16.mxu0 0
      %305 = vmatpush1.bf16.msra.mxu0 %v302
      %306 = vmatprep.subr.bf16.mxu0 0
      %307 = vmatpush1.bf16.msra.mxu0 0
      %308 = vmatprep.subr.bf16.mxu0 0
      %309 = vmatpush1.bf16.msra.mxu0 0
      %310 = vmatprep.subr.bf16.mxu0 0
      %311 = vmatpush1.bf16.msra.mxu0 0
      %312 = vmatprep.subr.bf16.mxu0 0
      %313 = vmatpush1.bf16.msra.mxu0 0
      %314 = vmatprep.subr.bf16.mxu0 0
      %315 = vmatpush1.bf16.msra.mxu0 0
      %316 = vmatprep.subr.bf16.mxu0 0
      %317 = vmatpush1.bf16.msra.mxu0 0
      %318 = vmatprep.subr.bf16.mxu0 0
      %319 = vmatpush1.bf16.msra.mxu0 0
      %320 = vmatprep.subr.bf16.mxu0 0
      %321 = vmatpush1.bf16.msra.mxu0 0
      %322 = vmatprep.subr.bf16.mxu0 0
      %323 = vmatpush1.bf16.msra.mxu0 0
      %324 = vmatprep.subr.bf16.mxu0 0
      %325 = vmatpush1.bf16.msra.mxu0 0
      %326 = vmatprep.subr.bf16.mxu0 0
      %327 = vmatpush1.bf16.msra.mxu0 0
      %328 = vmatprep.subr.bf16.mxu0 0
      %329 = vmatpush1.bf16.msra.mxu0 0
      %330 = vmatprep.subr.bf16.mxu0 0
      %331 = vmatpush1.bf16.msra.mxu0 0
      %332 = vmatprep.subr.bf16.mxu0 0
      %333 = vmatpush1.bf16.msra.mxu0 0
      %334 = vmatprep.subr.bf16.mxu0 0
      %335 = vmatpush1.bf16.msra.mxu0 0
      %336 = vmatprep.mubr.bf16.mxu0 0
      %337 = vmatmul.mubr.bf16.gmra.mrb[0].mxu0 %v253
      %v338 = vpop.f32.mrb[0].mxu0
      %v339 = vadd.f32 0.0, %v338
      %v340 = vpop.f32.mrb[0].mxu0
      %v341 = vpop.f32.mrb[0].mxu0
      %v342 = vadd.f32 0.0, %v341
      %v343 = vpop.f32.mrb[0].mxu0
      %344 = vmatprep.mubr.bf16.mxu0 0
      %345 = vmatmul.mubr.bf16.gmra.mrb[0].mxu0 %v256
      %v346 = vpop.f32.mrb[0].mxu0
      %v347 = vadd.f32 0.0, %v346
      %v348 = vpop.f32.mrb[0].mxu0
      %v349 = vpop.f32.mrb[0].mxu0
      %v350 = vadd.f32 0.0, %v349
      %v351 = vpop.f32.mrb[0].mxu0
      %352 = vmatprep.mubr.bf16.mxu0 0
      %353 = vmatmul.mubr.bf16.gmra.mrb[0].mxu0 %v259
      %v354 = vpop.f32.mrb[0].mxu0
      %v355 = vadd.f32 0.0, %v354
      %v356 = vpop.f32.mrb[0].mxu0
      %v357 = vpop.f32.mrb[0].mxu0
      %v358 = vadd.f32 0.0, %v357
      %v359 = vpop.f32.mrb[0].mxu0
      %360 = vmatprep.mubr.bf16.mxu0 0
      %361 = vmatmul.mubr.bf16.gmra.mrb[0].mxu0 %v262
      %v362 = vpop.f32.mrb[0].mxu0
      %v363 = vadd.f32 0.0, %v362
      %v364 = vpop.f32.mrb[0].mxu0
      %v365 = vpop.f32.mrb[0].mxu0
      %v366 = vadd.f32 0.0, %v365
      %v367 = vpop.f32.mrb[0].mxu0
      %368 = vmatprep.mubr.bf16.mxu0 0
      %369 = vmatmul.mubr.bf16.gmra.mrb[0].mxu0 %v265
      %v370 = vpop.f32.mrb[0].mxu0
      %v371 = vadd.f32 0.0, %v370
      %v372 = vpop.f32.mrb[0].mxu0
      %v373 = vpop.f32.mrb[0].mxu0
      %v374 = vadd.f32 0.0, %v373
      %v375 = vpop.f32.mrb[0].mxu0
      %376 = vmatprep.mubr.bf16.mxu0 0
      %377 = vmatmul.mubr.bf16.gmra.mrb[0].mxu0 %v268
      %v378 = vpop.f32.mrb[0].mxu0
      %v379 = vadd.f32 0.0, %v378
      %v380 = vpop.f32.mrb[0].mxu0
      %v381 = vpop.f32.mrb[0].mxu0
      %v382 = vadd.f32 0.0, %v381
      %v383 = vpop.f32.mrb[0].mxu0
      %384 = vmatprep.mubr.bf16.mxu0 0
      %385 = vmatmul.mubr.bf16.gmra.mrb[0].mxu0 %v271
      %v386 = vpop.f32.mrb[0].mxu0
      %v387 = vadd.f32 0.0, %v386
      %v388 = vpop.f32.mrb[0].mxu0
      %v389 = vpop.f32.mrb[0].mxu0
      %v390 = vadd.f32 0.0, %v389
      %v391 = vpop.f32.mrb[0].mxu0
      %392 = vmatprep.mubr.bf16.mxu0 0
      %393 = vmatmul.mubr.bf16.gmra.mrb[0].mxu0 %v274
      %v394 = vpop.f32.mrb[0].mxu0
      %v395 = vadd.f32 0.0, %v394
      %v396 = vpop.f32.mrb[0].mxu0
      %v397 = vpop.f32.mrb[0].mxu0
      %v398 = vadd.f32 0.0, %v397
      %v399 = vpop.f32.mrb[0].mxu0
      %400 = vmatprep.mubr.bf16.mxu0 0
      %401 = vmatmul.mubr.bf16.gmra.mrb[0].mxu0 %v277
      %v402 = vpop.f32.mrb[0].mxu0
      %v403 = vadd.f32 0.0, %v402
      %v404 = vpop.f32.mrb[0].mxu0
      %v405 = vpop.f32.mrb[0].mxu0
      %v406 = vadd.f32 0.0, %v405
      %v407 = vpop.f32.mrb[0].mxu0
      %408 = vmatprep.mubr.bf16.mxu0 0
      %409 = vmatmul.mubr.bf16.gmra.mrb[0].mxu0 %v280
      %v410 = vpop.f32.mrb[0].mxu0
      %v411 = vadd.f32 0.0, %v410
      %v412 = vpop.f32.mrb[0].mxu0
      %v413 = vpop.f32.mrb[0].mxu0
      %v414 = vadd.f32 0.0, %v413
      %v415 = vpop.f32.mrb[0].mxu0
      %416 = vmatprep.mubr.bf16.mxu0 0
      %417 = vmatmul.mubr.bf16.gmra.mrb[0].mxu0 %v283
      %v418 = vpop.f32.mrb[0].mxu0
      %v419 = vadd.f32 0.0, %v418
      %v420 = vpop.f32.mrb[0].mxu0
      %v421 = vpop.f32.mrb[0].mxu0
      %v422 = vadd.f32 0.0, %v421
      %v423 = vpop.f32.mrb[0].mxu0
      %424 = vmatprep.mubr.bf16.mxu0 0
      %425 = vmatmul.mubr.bf16.gmra.mrb[0].mxu0 %v286
      %v426 = vpop.f32.mrb[0].mxu0
      %v427 = vadd.f32 0.0, %v426
      %v428 = vpop.f32.mrb[0].mxu0
      %v429 = vpop.f32.mrb[0].mxu0
      %v430 = vadd.f32 0.0, %v429
      %v431 = vpop.f32.mrb[0].mxu0
      %432 = vmatprep.mubr.bf16.mxu0 0
      %433 = vmatmul.mubr.bf16.gmra.mrb[0].mxu0 %v289
      %v434 = vpop.f32.mrb[0].mxu0
      %v435 = vadd.f32 0.0, %v434
      %v436 = vpop.f32.mrb[0].mxu0
      %v437 = vpop.f32.mrb[0].mxu0
      %v438 = vadd.f32 0.0, %v437
      %v439 = vpop.f32.mrb[0].mxu0
      %440 = vmatprep.mubr.bf16.mxu0 0
      %441 = vmatmul.mubr.bf16.gmra.mrb[0].mxu0 %v292
      %v442 = vpop.f32.mrb[0].mxu0
      %v443 = vadd.f32 0.0, %v442
      %v444 = vpop.f32.mrb[0].mxu0
      %v445 = vpop.f32.mrb[0].mxu0
      %v446 = vadd.f32 0.0, %v445
      %v447 = vpop.f32.mrb[0].mxu0
      %448 = vmatprep.mubr.bf16.mxu0 0
      %449 = vmatmul.mubr.bf16.gmra.mrb[0].mxu0 %v295
      %v450 = vpop.f32.mrb[0].mxu0
      %v451 = vadd.f32 0.0, %v450
      %v452 = vpop.f32.mrb[0].mxu0
      %v453 = vpop.f32.mrb[0].mxu0
      %v454 = vadd.f32 0.0, %v453
      %v455 = vpop.f32.mrb[0].mxu0
      %456 = vmatprep.mubr.bf16.mxu0 0
      %457 = vmatmul.mubr.bf16.gmra.mrb[0].mxu0 %v298
      %v458 = vpop.f32.mrb[0].mxu0
      %v459 = vadd.f32 0.0, %v458
      %v460 = vpop.f32.mrb[0].mxu0
      %v461 = vpop.f32.mrb[0].mxu0
      %v462 = vadd.f32 0.0, %v461
      %v463 = vpop.f32.mrb[0].mxu0
      %464 = vdwg.mxu0
      %v465 = vld [vmem:[%s2] sm:$0x1]
      %v467 = vlaneseq
      %v468 = vshrl.u32 %v467, 7
      %v469 = vsub.s32 0, %v468
      %v470 = vrot.slane %v465, %v469
      %v472 = vmul.f32 %v339, %v470
      %v473 = vmul.f32 %v342, %v470
      %v474 = vmul.f32 %v347, %v470
      %v475 = vmul.f32 %v350, %v470
      %v476 = vmul.f32 %v355, %v470
      %v477 = vmul.f32 %v358, %v470
      %v478 = vmul.f32 %v363, %v470
      %v479 = vmul.f32 %v366, %v470
      %v480 = vmul.f32 %v371, %v470
      %v481 = vmul.f32 %v374, %v470
      %v482 = vmul.f32 %v379, %v470
      %v483 = vmul.f32 %v382, %v470
      %v484 = vmul.f32 %v387, %v470
      %v485 = vmul.f32 %v390, %v470
      %v486 = vmul.f32 %v395, %v470
      %v487 = vmul.f32 %v398, %v470
      %v488 = vmul.f32 %v403, %v470
      %v489 = vmul.f32 %v406, %v470
      %v490 = vmul.f32 %v411, %v470
      %v491 = vmul.f32 %v414, %v470
      %v492 = vmul.f32 %v419, %v470
      %v493 = vmul.f32 %v422, %v470
      %v494 = vmul.f32 %v427, %v470
      %v495 = vmul.f32 %v430, %v470
      %v496 = vmul.f32 %v435, %v470
      %v497 = vmul.f32 %v438, %v470
      %v498 = vmul.f32 %v443, %v470
      %v499 = vmul.f32 %v446, %v470
      %v500 = vmul.f32 %v451, %v470
      %v501 = vmul.f32 %v454, %v470
      %v502 = vmul.f32 %v459, %v470
      %v503 = vmul.f32 %v462, %v470
      %v504 = vld [vmem:[%s3] sm:$0x1]
      %v506 = vlaneseq
      %v507 = vshrl.u32 %v506, 7
      %v508 = vsub.s32 0, %v507
      %v509 = vrot.slane %v504, %v508
      %v511 = vadd.f32 %v472, %v509
      %v512 = vadd.f32 %v473, %v509
      %v513 = vadd.f32 %v474, %v509
      %v514 = vadd.f32 %v475, %v509
      %v515 = vadd.f32 %v476, %v509
      %v516 = vadd.f32 %v477, %v509
      %v517 = vadd.f32 %v478, %v509
      %v518 = vadd.f32 %v479, %v509
      %v519 = vadd.f32 %v480, %v509
      %v520 = vadd.f32 %v481, %v509
      %v521 = vadd.f32 %v482, %v509
      %v522 = vadd.f32 %v483, %v509
      %v523 = vadd.f32 %v484, %v509
      %v524 = vadd.f32 %v485, %v509
      %v525 = vadd.f32 %v486, %v509
      %v526 = vadd.f32 %v487, %v509
      %v527 = vadd.f32 %v488, %v509
      %v528 = vadd.f32 %v489, %v509
      %v529 = vadd.f32 %v490, %v509
      %v530 = vadd.f32 %v491, %v509
      %v531 = vadd.f32 %v492, %v509
      %v532 = vadd.f32 %v493, %v509
      %v533 = vadd.f32 %v494, %v509
      %v534 = vadd.f32 %v495, %v509
      %v535 = vadd.f32 %v496, %v509
      %v536 = vadd.f32 %v497, %v509
      %v537 = vadd.f32 %v498, %v509
      %v538 = vadd.f32 %v499, %v509
      %v539 = vadd.f32 %v500, %v509
      %v540 = vadd.f32 %v501, %v509
      %v541 = vadd.f32 %v502, %v509
      %v542 = vadd.f32 %v503, %v509
      %v543 = vmax.f32 %v511, 0.0
      %v544 = vmax.f32 %v512, 0.0
      %v545 = vmax.f32 %v513, 0.0
      %v546 = vmax.f32 %v514, 0.0
      %v547 = vmax.f32 %v515, 0.0
      %v548 = vmax.f32 %v516, 0.0
      %v549 = vmax.f32 %v517, 0.0
      %v550 = vmax.f32 %v518, 0.0
      %v551 = vmax.f32 %v519, 0.0
      %v552 = vmax.f32 %v520, 0.0
      %v553 = vmax.f32 %v521, 0.0
      %v554 = vmax.f32 %v522, 0.0
      %v555 = vmax.f32 %v523, 0.0
      %v556 = vmax.f32 %v524, 0.0
      %v557 = vmax.f32 %v525, 0.0
      %v558 = vmax.f32 %v526, 0.0
      %v559 = vmax.f32 %v527, 0.0
      %v560 = vmax.f32 %v528, 0.0
      %v561 = vmax.f32 %v529, 0.0
      %v562 = vmax.f32 %v530, 0.0
      %v563 = vmax.f32 %v531, 0.0
      %v564 = vmax.f32 %v532, 0.0
      %v565 = vmax.f32 %v533, 0.0
      %v566 = vmax.f32 %v534, 0.0
      %v567 = vmax.f32 %v535, 0.0
      %v568 = vmax.f32 %v536, 0.0
      %v569 = vmax.f32 %v537, 0.0
      %v570 = vmax.f32 %v538, 0.0
      %v571 = vmax.f32 %v539, 0.0
      %v572 = vmax.f32 %v540, 0.0
      %v573 = vmax.f32 %v541, 0.0
      %v574 = vmax.f32 %v542, 0.0
      %575 = vst.msk [vmem:[%s199] sm:$0xff] %vm251, %v543
      %576 = vst.msk [vmem:[%s199 + $0x8] sm:$0xff] %vm251, %v544
      %577 = vst.msk [vmem:[%s199 + $0x10] sm:$0xff] %vm251, %v545
      %578 = vst.msk [vmem:[%s199 + $0x18] sm:$0xff] %vm251, %v546
      %579 = vst.msk [vmem:[%s199 + $0x20] sm:$0xff] %vm251, %v547
      %580 = vst.msk [vmem:[%s199 + $0x28] sm:$0xff] %vm251, %v548
      %581 = vst.msk [vmem:[%s199 + $0x30] sm:$0xff] %vm251, %v549
      %582 = vst.msk [vmem:[%s199 + $0x38] sm:$0xff] %vm251, %v550
      %583 = vst.msk [vmem:[%s199 + $0x40] sm:$0xff] %vm251, %v551
      %584 = vst.msk [vmem:[%s199 + $0x48] sm:$0xff] %vm251, %v552
      %585 = vst.msk [vmem:[%s199 + $0x50] sm:$0xff] %vm251, %v553
      %586 = vst.msk [vmem:[%s199 + $0x58] sm:$0xff] %vm251, %v554
      %587 = vst.msk [vmem:[%s199 + $0x60] sm:$0xff] %vm251, %v555
      %588 = vst.msk [vmem:[%s199 + $0x68] sm:$0xff] %vm251, %v556
      %589 = vst.msk [vmem:[%s199 + $0x70] sm:$0xff] %vm251, %v557
      %590 = vst.msk [vmem:[%s199 + $0x78] sm:$0xff] %vm251, %v558
      %591 = vst.msk [vmem:[%s199 + $0x80] sm:$0xff] %vm251, %v559
      %592 = vst.msk [vmem:[%s199 + $0x88] sm:$0xff] %vm251, %v560
      %593 = vst.msk [vmem:[%s199 + $0x90] sm:$0xff] %vm251, %v561
      %594 = vst.msk [vmem:[%s199 + $0x98] sm:$0xff] %vm251, %v562
      %595 = vst.msk [vmem:[%s199 + $0xa0] sm:$0xff] %vm251, %v563
      %596 = vst.msk [vmem:[%s199 + $0xa8] sm:$0xff] %vm251, %v564
      %597 = vst.msk [vmem:[%s199 + $0xb0] sm:$0xff] %vm251, %v565
      %598 = vst.msk [vmem:[%s199 + $0xb8] sm:$0xff] %vm251, %v566
      %599 = vst.msk [vmem:[%s199 + $0xc0] sm:$0xff] %vm251, %v567
      %600 = vst.msk [vmem:[%s199 + $0xc8] sm:$0xff] %vm251, %v568
      %601 = vst.msk [vmem:[%s199 + $0xd0] sm:$0xff] %vm251, %v569
      %602 = vst.msk [vmem:[%s199 + $0xd8] sm:$0xff] %vm251, %v570
      %603 = vst.msk [vmem:[%s199 + $0xe0] sm:$0xff] %vm251, %v571
      %604 = vst.msk [vmem:[%s199 + $0xe8] sm:$0xff] %vm251, %v572
      %605 = vst.msk [vmem:[%s199 + $0xf0] sm:$0xff] %vm251, %v573
      %606 = vst.msk [vmem:[%s199 + $0xf8] sm:$0xff] %vm251, %v574
      %s607 = smul.u32 32, %s15
      %p608 = scmp.lt.s32.totalorder %s607, 63
      %s609 = scalar_select %p608, %s607, 63
      %s610 = smul.addr %s609, 8
      %s611 = scalar_lea.vmem %s4, %s610
      // Predicated region
      $region37: #{axial_block_wopos_forward.4} parent=35 // pred_check
        %p612 = pneg %p122
      $region38: #{axial_block_wopos_forward.4} parent=35 // pred_check_branch
        %614 = sbr.rel (%p612) target = $region40
      $region39: #{axial_block_wopos_forward.4} parent=35 // pred_region
        %s615 = smul.u32 32, %s15
      $region40: #{axial_block_wopos_forward.4} parent=35 // pred_fallthru
        _
    $region36: #{axial_block_wopos_forward.4} parent=5 // pred_fallthru
      _
    %p616 = scmp.le.s32.totalorder 2, %s10
    // Predicated region
    $region41: #{axial_block_wopos_forward.4} parent=5 // pred_check
      %p617 = pneg %p616
    $region42: #{axial_block_wopos_forward.4} parent=5 // pred_check_branch
      %619 = sbr.rel (%p617) target = $region44
    $region43: #{axial_block_wopos_forward.4} parent=5 // pred_region
      %s620 = ssub.s32 %s10, 2
      // Predicated region
      $region45: #{axial_block_wopos_forward.4} parent=43 // pred_check
        %p621 = pneg %p128
      $region46: #{axial_block_wopos_forward.4} parent=43 // pred_check_branch
        %623 = sbr.rel (%p621) target = $region48
      $region47: #{axial_block_wopos_forward.4} parent=43 // pred_region
        %s624 = smul.u32 32, %s16
        %p625 = scmp.lt.s32.totalorder %s624, 63
        %s626 = scalar_select %p625, %s624, 63
        %s627 = smul.addr %s626, 8
        %s628 = scalar_lea.vmem %s4, %s627
      $region48: #{axial_block_wopos_forward.4} parent=43 // pred_fallthru
        _
    $region44: #{axial_block_wopos_forward.4} parent=5 // pred_fallthru
      _
  $region6: #{axial_block_wopos_forward.4} parent=0 // loop_footer
    %s14 = sadd.s32 1, %s10
  $region7: #{axial_block_wopos_forward.4} parent=0 // loop_footer_branch
    %9 = sbr.rel target = $region3
  $region8: #{axial_block_wopos_forward.4} parent=0 // loop_exit
    _

// kernel: axial_block_wopos_forward.7
$region0: #{axial_block_wopos_forward.7}
  #allocation0 [shape = 'u32[]', space=smem, size = 0x4, offset = 0x4, fixed_abs, tag = 'smem constant byte address 0x4 - core index']
  #allocation1 [shape = 'u32[144,128]{1,0:T(1,128)}', space=vmem, size = 0x12000, scoped, tag = 'internal scratch']
  %s0 = inlined_call_operand.vmem [shape: f32[512,8], index: 0, kind: input, shape index: {}]
  %s1 = inlined_call_operand.vmem [shape: bf16[8,8], index: 1, kind: input, shape index: {}]
  %s2 = inlined_call_operand.vmem [shape: f32[1,8], index: 2, kind: input, shape index: {}]
  %s3 = inlined_call_operand.vmem [shape: f32[1,8], index: 3, kind: input, shape index: {}]
  %s4 = inlined_call_operand.vmem [shape: f32[512,8], index: 4, kind: input, shape index: {}, may-alias: {4,5}]
  %s5 = inlined_call_operand.vmem [shape: f32[512,8], index: 5, kind: output, shape index: {}, may-alias: {4,5}]
  %s6 = sld [smem:[#allocation0]]
  $region53: #{axial_block_wopos_forward.7} parent=0
    _
  %s8 = ssub.s32 1, %s6
  %s9 = scalar_select 0, %s8, %s6
  loop: start=0, step=1, limit=4
  $region2: #{axial_block_wopos_forward.7} parent=0 // loop_pre_header
    _
  $region3: #{axial_block_wopos_forward.7} parent=0 // loop_header
    %s11 = sphi 0, %s15
    %p12 = scmp.ge.s32.totalorder %s11, 4
    %s21 = sphi 0, %s23
    %s24 = sphi 0, %s21
    %s25 = sphi 0, %s24
    %s41 = sphi 0, %s25
    %s45 = sphi 0, %s45
    %s47 = sphi 0, %s45
    %s48 = sphi 0, %s47
    %s62 = sphi 0, %s48
    %s66 = sphi 0, %s66
    %s68 = sphi 0, %s66
    %s69 = sphi 0, %s68
    %s83 = sphi 0, %s69
    %s87 = sphi 0, %s87
    %s89 = sphi 0, %s87
    %s90 = sphi 0, %s89
    %s104 = sphi 0, %s90
    %s110 = sphi 0, %s112
    %s113 = sphi 0, %s110
    %s114 = sphi 0, %s113
    %s130 = sphi 0, %s114
    %s136 = sphi 0, %s138
    %s139 = sphi 0, %s136
    %s140 = sphi 0, %s139
    %s156 = sphi 0, %s140
  $region4: #{axial_block_wopos_forward.7} parent=0 // loop_header_branch
    %14 = sbr.rel (%p12) target = $region8
  $region5: #{axial_block_wopos_forward.7} parent=0 // loop_body
    %s16 = ssub.s32 %s11, 1
    %s17 = ssub.s32 %s11, 2
    %s18 = sadd.s32 %s11, 1
    %s19 = ssub.s32 %s11, %s18
    %p20 = scmp.eq.s32.totalorder %s19, 0
    %s22 = sadd.s32 %s21, 1
    %s23 = scalar_select %p20, %s21, %s22
    %p26 = pneg %p20
    %p27 = scmp.eq.s32.totalorder %s11, 1
    %p28 = por %p26, %p27
    %p29 = scmp.ne.s32.totalorder %s21, %s24
    %p30 = scmp.eq.s32.totalorder %s11, 0
    %p31 = por %p29, %p30
    %p32 = scmp.ne.s32.totalorder %s21, %s24
    %p33 = scmp.eq.s32.totalorder %s16, 1
    %p34 = por %p32, %p33
    %p35 = scmp.ne.s32.totalorder %s24, %s25
    %p36 = scmp.eq.s32.totalorder %s16, 0
    %p37 = por %p35, %p36
    %p38 = scmp.ne.s32.totalorder %s24, %s25
    %p39 = scmp.eq.s32.totalorder %s17, 1
    %p40 = por %p38, %p39
    %p42 = scmp.ne.s32.totalorder %s25, %s41
    %p43 = scmp.eq.s32.totalorder %s17, 0
    %p44 = por %p42, %p43
    %s46 = sadd.s32 %s45, 1
    %p49 = scmp.eq.s32.totalorder %s11, 1
    %p50 = scmp.ne.s32.totalorder %s45, %s47
    %p51 = scmp.eq.s32.totalorder %s11, 0
    %p52 = por %p50, %p51
    %p53 = scmp.ne.s32.totalorder %s45, %s47
    %p54 = scmp.eq.s32.totalorder %s16, 1
    %p55 = por %p53, %p54
    %p56 = scmp.ne.s32.totalorder %s47, %s48
    %p57 = scmp.eq.s32.totalorder %s16, 0
    %p58 = por %p56, %p57
    %p59 = scmp.ne.s32.totalorder %s47, %s48
    %p60 = scmp.eq.s32.totalorder %s17, 1
    %p61 = por %p59, %p60
    %p63 = scmp.ne.s32.totalorder %s48, %s62
    %p64 = scmp.eq.s32.totalorder %s17, 0
    %p65 = por %p63, %p64
    %s67 = sadd.s32 %s66, 1
    %p70 = scmp.eq.s32.totalorder %s11, 1
    %p71 = scmp.ne.s32.totalorder %s66, %s68
    %p72 = scmp.eq.s32.totalorder %s11, 0
    %p73 = por %p71, %p72
    %p74 = scmp.ne.s32.totalorder %s66, %s68
    %p75 = scmp.eq.s32.totalorder %s16, 1
    %p76 = por %p74, %p75
    %p77 = scmp.ne.s32.totalorder %s68, %s69
    %p78 = scmp.eq.s32.totalorder %s16, 0
    %p79 = por %p77, %p78
    %p80 = scmp.ne.s32.totalorder %s68, %s69
    %p81 = scmp.eq.s32.totalorder %s17, 1
    %p82 = por %p80, %p81
    %p84 = scmp.ne.s32.totalorder %s69, %s83
    %p85 = scmp.eq.s32.totalorder %s17, 0
    %p86 = por %p84, %p85
    %s88 = sadd.s32 %s87, 1
    %p91 = scmp.eq.s32.totalorder %s11, 1
    %p92 = scmp.ne.s32.totalorder %s87, %s89
    %p93 = scmp.eq.s32.totalorder %s11, 0
    %p94 = por %p92, %p93
    %p95 = scmp.ne.s32.totalorder %s87, %s89
    %p96 = scmp.eq.s32.totalorder %s16, 1
    %p97 = por %p95, %p96
    %p98 = scmp.ne.s32.totalorder %s89, %s90
    %p99 = scmp.eq.s32.totalorder %s16, 0
    %p100 = por %p98, %p99
    %p101 = scmp.ne.s32.totalorder %s89, %s90
    %p102 = scmp.eq.s32.totalorder %s17, 1
    %p103 = por %p101, %p102
    %p105 = scmp.ne.s32.totalorder %s90, %s104
    %p106 = scmp.eq.s32.totalorder %s17, 0
    %p107 = por %p105, %p106
    %s108 = ssub.s32 %s11, %s18
    %p109 = scmp.eq.s32.totalorder %s108, 0
    %s111 = sadd.s32 %s110, 1
    %s112 = scalar_select %p109, %s110, %s111
    %p115 = pneg %p109
    %p116 = scmp.eq.s32.totalorder %s11, 1
    %p117 = por %p115, %p116
    %p118 = scmp.ne.s32.totalorder %s110, %s113
    %p119 = scmp.eq.s32.totalorder %s11, 0
    %p120 = por %p118, %p119
    %p121 = scmp.ne.s32.totalorder %s110, %s113
    %p122 = scmp.eq.s32.totalorder %s16, 1
    %p123 = por %p121, %p122
    %p124 = scmp.ne.s32.totalorder %s113, %s114
    %p125 = scmp.eq.s32.totalorder %s16, 0
    %p126 = por %p124, %p125
    %p127 = scmp.ne.s32.totalorder %s113, %s114
    %p128 = scmp.eq.s32.totalorder %s17, 1
    %p129 = por %p127, %p128
    %p131 = scmp.ne.s32.totalorder %s114, %s130
    %p132 = scmp.eq.s32.totalorder %s17, 0
    %p133 = por %p131, %p132
    %s134 = ssub.s32 %s11, %s18
    %p135 = scmp.eq.s32.totalorder %s134, 0
    %s137 = sadd.s32 %s136, 1
    %s138 = scalar_select %p135, %s136, %s137
    %p141 = pneg %p135
    %p142 = scmp.eq.s32.totalorder %s11, 1
    %p143 = por %p141, %p142
    %p144 = scmp.ne.s32.totalorder %s136, %s139
    %p145 = scmp.eq.s32.totalorder %s11, 0
    %p146 = por %p144, %p145
    %p147 = scmp.ne.s32.totalorder %s136, %s139
    %p148 = scmp.eq.s32.totalorder %s16, 1
    %p149 = por %p147, %p148
    %p150 = scmp.ne.s32.totalorder %s139, %s140
    %p151 = scmp.eq.s32.totalorder %s16, 0
    %p152 = por %p150, %p151
    %p153 = scmp.ne.s32.totalorder %s139, %s140
    %p154 = scmp.eq.s32.totalorder %s17, 1
    %p155 = por %p153, %p154
    %p157 = scmp.ne.s32.totalorder %s140, %s156
    %p158 = scmp.eq.s32.totalorder %s17, 0
    %p159 = por %p157, %p158
    %p160 = scmp.le.s32.totalorder 1, %s11
    %p161 = scmp.lt.s32.totalorder %s11, 3
    %p162 = pnand %p160, %p161
    %p163 = pneg %p162
    // Predicated region
    $region9: #{axial_block_wopos_forward.7} parent=5 // pred_check
      _
    $region10: #{axial_block_wopos_forward.7} parent=5 // pred_check_branch
      %165 = sbr.rel (%p162) target = $region12
    $region11: #{axial_block_wopos_forward.7} parent=5 // pred_region
      %s166 = ssub.s32 %s11, 1
      // Predicated region
      $region13: #{axial_block_wopos_forward.7} parent=11 // pred_check
        %p167 = pneg %p58
      $region14: #{axial_block_wopos_forward.7} parent=11 // pred_check_branch
        %169 = sbr.rel (%p167) target = $region16
      $region15: #{axial_block_wopos_forward.7} parent=11 // pred_region
        _
      $region16: #{axial_block_wopos_forward.7} parent=11 // pred_fallthru
        _
      // Predicated region
      $region17: #{axial_block_wopos_forward.7} parent=11 // pred_check
        %p170 = pneg %p79
      $region18: #{axial_block_wopos_forward.7} parent=11 // pred_check_branch
        %172 = sbr.rel (%p170) target = $region20
      $region19: #{axial_block_wopos_forward.7} parent=11 // pred_region
        _
      $region20: #{axial_block_wopos_forward.7} parent=11 // pred_fallthru
        _
      // Predicated region
      $region21: #{axial_block_wopos_forward.7} parent=11 // pred_check
        %p173 = pneg %p100
      $region22: #{axial_block_wopos_forward.7} parent=11 // pred_check_branch
        %175 = sbr.rel (%p173) target = $region24
      $region23: #{axial_block_wopos_forward.7} parent=11 // pred_region
        _
      $region24: #{axial_block_wopos_forward.7} parent=11 // pred_fallthru
        _
    $region12: #{axial_block_wopos_forward.7} parent=5 // pred_fallthru
      _
    %p176 = scmp.lt.s32.totalorder %s11, 2
    // Predicated region
    $region25: #{axial_block_wopos_forward.7} parent=5 // pred_check
      %p177 = pneg %p176
    $region26: #{axial_block_wopos_forward.7} parent=5 // pred_check_branch
      %179 = sbr.rel (%p177) target = $region28
    $region27: #{axial_block_wopos_forward.7} parent=5 // pred_region
      // Predicated region
      $region29: #{axial_block_wopos_forward.7} parent=27 // pred_check
        %p180 = pneg %p31
      $region30: #{axial_block_wopos_forward.7} parent=27 // pred_check_branch
        %182 = sbr.rel (%p180) target = $region32
      $region31: #{axial_block_wopos_forward.7} parent=27 // pred_region
        %s183 = smul.u32 32, %s11
        %p184 = scmp.lt.s32.totalorder %s183, 63
        %s185 = scalar_select %p184, %s183, 63
        %s186 = smul.addr %s185, 8
        %s187 = scalar_lea.vmem %s0, %s186
        %s188 = smul.u32 32, %s11
      $region32: #{axial_block_wopos_forward.7} parent=27 // pred_fallthru
        _
      // Predicated region
      $region33: #{axial_block_wopos_forward.7} parent=27 // pred_check
        %p189 = pneg %p120
      $region34: #{axial_block_wopos_forward.7} parent=27 // pred_check_branch
        %191 = sbr.rel (%p189) target = $region36
      $region35: #{axial_block_wopos_forward.7} parent=27 // pred_region
        %s192 = smul.u32 32, %s11
        %p193 = scmp.lt.s32.totalorder %s192, 63
        %s194 = scalar_select %p193, %s192, 63
        %s195 = smul.addr %s194, 8
        %s196 = scalar_lea.vmem %s4, %s195
        %s197 = smul.u32 32, %s11
      $region36: #{axial_block_wopos_forward.7} parent=27 // pred_fallthru
        _
    $region28: #{axial_block_wopos_forward.7} parent=5 // pred_fallthru
      _
    %p198 = scmp.le.s32.totalorder 1, %s11
    %p199 = scmp.lt.s32.totalorder %s11, 3
    %p200 = pnand %p198, %p199
    %p201 = pneg %p200
    // Predicated region
    $region37: #{axial_block_wopos_forward.7} parent=5 // pred_check
      _
    $region38: #{axial_block_wopos_forward.7} parent=5 // pred_check_branch
      %203 = sbr.rel (%p200) target = $region40
    $region39: #{axial_block_wopos_forward.7} parent=5 // pred_region
      %s204 = ssub.s32 %s11, 1
      %s205 = smul.u32 32, %s16
      %p206 = scmp.lt.s32.totalorder %s205, 63
      %s207 = scalar_select %p206, %s205, 63
      %s208 = smul.addr %s207, 8
      %s209 = scalar_lea.vmem %s0, %s208
      %p210 = pneg %p37
      %p211 = pneg %p34
      %p212 = pneg %p58
      %p213 = pneg %p55
      %p214 = pneg %p79
      %p215 = pneg %p76
      %p216 = pneg %p100
      %p217 = pneg %p97
      %s218 = smul.u32 32, %s16
      %p219 = scmp.lt.s32.totalorder %s218, 63
      %s220 = scalar_select %p219, %s218, 63
      %s221 = smul.addr %s220, 8
      %s222 = scalar_lea.vmem %s4, %s221
      %p223 = pneg %p126
      %p224 = pneg %p123
      %p225 = pneg %p152
      %p226 = pneg %p149
      %s227 = smul.u32 32, %s16
      %p228 = scmp.lt.s32.totalorder %s227, 63
      %s229 = scalar_select %p228, %s227, 63
      %s230 = smul.addr %s229, 8
      %s231 = scalar_lea.vmem %s5, %s230
      %s232 = smul.u32 32, %s16
      %p233 = scmp.lt.s32.totalorder %s232, 63
      %s234 = scalar_select %p233, %s232, 63
      %s235 = smul.addr %s234, 8
      %s236 = scalar_lea.vmem %s0, %s235
      %s237 = smul.u32 32, %s16
      %s238 = smul.u32 32, %s16
      %p239 = scmp.lt.s32.totalorder %s238, 63
      %s240 = scalar_select %p239, %s238, 63
      %s241 = smul.addr %s240, 8
      %s242 = scalar_lea.vmem %s4, %s241
      %s243 = smul.u32 32, %s16
      %s244 = smul.u32 32, %s16
      %p245 = scmp.lt.s32.totalorder %s244, 63
      %s246 = scalar_select %p245, %s244, 63
      %s247 = smul.addr %s246, 8
      %s248 = scalar_lea.vmem %s5, %s247
      %s249 = smul.u32 32, %s16
      %v251 = vld [vmem:[%s236] sm:$0xff]
      %v252 = vld [vmem:[%s236 + $0x8] sm:$0xff]
      %v253 = vld [vmem:[%s236 + $0x10] sm:$0xff]
      %v254 = vld [vmem:[%s236 + $0x18] sm:$0xff]
      %v255 = vld [vmem:[%s236 + $0x20] sm:$0xff]
      %v256 = vld [vmem:[%s236 + $0x28] sm:$0xff]
      %v257 = vld [vmem:[%s236 + $0x30] sm:$0xff]
      %v258 = vld [vmem:[%s236 + $0x38] sm:$0xff]
      %v259 = vld [vmem:[%s236 + $0x40] sm:$0xff]
      %v260 = vld [vmem:[%s236 + $0x48] sm:$0xff]
      %v261 = vld [vmem:[%s236 + $0x50] sm:$0xff]
      %v262 = vld [vmem:[%s236 + $0x58] sm:$0xff]
      %v263 = vld [vmem:[%s236 + $0x60] sm:$0xff]
      %v264 = vld [vmem:[%s236 + $0x68] sm:$0xff]
      %v265 = vld [vmem:[%s236 + $0x70] sm:$0xff]
      %v266 = vld [vmem:[%s236 + $0x78] sm:$0xff]
      %v267 = vld [vmem:[%s236 + $0x80] sm:$0xff]
      %v268 = vld [vmem:[%s236 + $0x88] sm:$0xff]
      %v269 = vld [vmem:[%s236 + $0x90] sm:$0xff]
      %v270 = vld [vmem:[%s236 + $0x98] sm:$0xff]
      %v271 = vld [vmem:[%s236 + $0xa0] sm:$0xff]
      %v272 = vld [vmem:[%s236 + $0xa8] sm:$0xff]
      %v273 = vld [vmem:[%s236 + $0xb0] sm:$0xff]
      %v274 = vld [vmem:[%s236 + $0xb8] sm:$0xff]
      %v275 = vld [vmem:[%s236 + $0xc0] sm:$0xff]
      %v276 = vld [vmem:[%s236 + $0xc8] sm:$0xff]
      %v277 = vld [vmem:[%s236 + $0xd0] sm:$0xff]
      %v278 = vld [vmem:[%s236 + $0xd8] sm:$0xff]
      %v279 = vld [vmem:[%s236 + $0xe0] sm:$0xff]
      %v280 = vld [vmem:[%s236 + $0xe8] sm:$0xff]
      %v281 = vld [vmem:[%s236 + $0xf0] sm:$0xff]
      %v282 = vld [vmem:[%s236 + $0xf8] sm:$0xff]
      %v283 = vmax.f32 %v251, 0.0
      %v284 = vmax.f32 %v252, 0.0
      %v285 = vmax.f32 %v253, 0.0
      %v286 = vmax.f32 %v254, 0.0
      %v287 = vmax.f32 %v255, 0.0
      %v288 = vmax.f32 %v256, 0.0
      %v289 = vmax.f32 %v257, 0.0
      %v290 = vmax.f32 %v258, 0.0
      %v291 = vmax.f32 %v259, 0.0
      %v292 = vmax.f32 %v260, 0.0
      %v293 = vmax.f32 %v261, 0.0
      %v294 = vmax.f32 %v262, 0.0
      %v295 = vmax.f32 %v263, 0.0
      %v296 = vmax.f32 %v264, 0.0
      %v297 = vmax.f32 %v265, 0.0
      %v298 = vmax.f32 %v266, 0.0
      %v299 = vmax.f32 %v267, 0.0
      %v300 = vmax.f32 %v268, 0.0
      %v301 = vmax.f32 %v269, 0.0
      %v302 = vmax.f32 %v270, 0.0
      %v303 = vmax.f32 %v271, 0.0
      %v304 = vmax.f32 %v272, 0.0
      %v305 = vmax.f32 %v273, 0.0
      %v306 = vmax.f32 %v274, 0.0
      %v307 = vmax.f32 %v275, 0.0
      %v308 = vmax.f32 %v276, 0.0
      %v309 = vmax.f32 %v277, 0.0
      %v310 = vmax.f32 %v278, 0.0
      %v311 = vmax.f32 %v279, 0.0
      %v312 = vmax.f32 %v280, 0.0
      %v313 = vmax.f32 %v281, 0.0
      %v314 = vmax.f32 %v282, 0.0
      %v315 = vpack.c.bf16 %v284, %v283
      %v316 = vpack.c.bf16 %v286, %v285
      %v317 = vpack.c.bf16 %v288, %v287
      %v318 = vpack.c.bf16 %v290, %v289
      %v319 = vpack.c.bf16 %v292, %v291
      %v320 = vpack.c.bf16 %v294, %v293
      %v321 = vpack.c.bf16 %v296, %v295
      %v322 = vpack.c.bf16 %v298, %v297
      %v323 = vpack.c.bf16 %v300, %v299
      %v324 = vpack.c.bf16 %v302, %v301
      %v325 = vpack.c.bf16 %v304, %v303
      %v326 = vpack.c.bf16 %v306, %v305
      %v327 = vpack.c.bf16 %v308, %v307
      %v328 = vpack.c.bf16 %v310, %v309
      %v329 = vpack.c.bf16 %v312, %v311
      %v330 = vpack.c.bf16 %v314, %v313
      %v331 = vld [vmem:[%s1] sm:$0xf]
      %vm332 = vcmask 64512
      %v334 = vsel %vm332, %v315, 0
      %v337 = vsel %vm332, %v316, 0
      %v340 = vsel %vm332, %v317, 0
      %v343 = vsel %vm332, %v318, 0
      %v346 = vsel %vm332, %v319, 0
      %v349 = vsel %vm332, %v320, 0
      %v352 = vsel %vm332, %v321, 0
      %v355 = vsel %vm332, %v322, 0
      %v358 = vsel %vm332, %v323, 0
      %v361 = vsel %vm332, %v324, 0
      %v364 = vsel %vm332, %v325, 0
      %v367 = vsel %vm332, %v326, 0
      %v370 = vsel %vm332, %v327, 0
      %v373 = vsel %vm332, %v328, 0
      %v376 = vsel %vm332, %v329, 0
      %v379 = vsel %vm332, %v330, 0
      %vm381 = vcmask 1043456
      %v383 = vsel %vm381, %v331, 0
      %385 = vmatprep.subr.bf16.mxu0 0
      %386 = vmatpush1.bf16.msra.mxu0 %v383
      %387 = vmatprep.subr.bf16.mxu0 0
      %388 = vmatpush1.bf16.msra.mxu0 0
      %389 = vmatprep.subr.bf16.mxu0 0
      %390 = vmatpush1.bf16.msra.mxu0 0
      %391 = vmatprep.subr.bf16.mxu0 0
      %392 = vmatpush1.bf16.msra.mxu0 0
      %393 = vmatprep.subr.bf16.mxu0 0
      %394 = vmatpush1.bf16.msra.mxu0 0
      %395 = vmatprep.subr.bf16.mxu0 0
      %396 = vmatpush1.bf16.msra.mxu0 0
      %397 = vmatprep.subr.bf16.mxu0 0
      %398 = vmatpush1.bf16.msra.mxu0 0
      %399 = vmatprep.subr.bf16.mxu0 0
      %400 = vmatpush1.bf16.msra.mxu0 0
      %401 = vmatprep.subr.bf16.mxu0 0
      %402 = vmatpush1.bf16.msra.mxu0 0
      %403 = vmatprep.subr.bf16.mxu0 0
      %404 = vmatpush1.bf16.msra.mxu0 0
      %405 = vmatprep.subr.bf16.mxu0 0
      %406 = vmatpush1.bf16.msra.mxu0 0
      %407 = vmatprep.subr.bf16.mxu0 0
      %408 = vmatpush1.bf16.msra.mxu0 0
      %409 = vmatprep.subr.bf16.mxu0 0
      %410 = vmatpush1.bf16.msra.mxu0 0
      %411 = vmatprep.subr.bf16.mxu0 0
      %412 = vmatpush1.bf16.msra.mxu0 0
      %413 = vmatprep.subr.bf16.mxu0 0
      %414 = vmatpush1.bf16.msra.mxu0 0
      %415 = vmatprep.subr.bf16.mxu0 0
      %416 = vmatpush1.bf16.msra.mxu0 0
      %417 = vmatprep.mubr.bf16.mxu0 0
      %418 = vmatmul.mubr.bf16.gmra.mrb[0].mxu0 %v334
      %v419 = vpop.f32.mrb[0].mxu0
      %v420 = vadd.f32 0.0, %v419
      %v421 = vpop.f32.mrb[0].mxu0
      %v422 = vpop.f32.mrb[0].mxu0
      %v423 = vadd.f32 0.0, %v422
      %v424 = vpop.f32.mrb[0].mxu0
      %425 = vmatprep.mubr.bf16.mxu0 0
      %426 = vmatmul.mubr.bf16.gmra.mrb[0].mxu0 %v337
      %v427 = vpop.f32.mrb[0].mxu0
      %v428 = vadd.f32 0.0, %v427
      %v429 = vpop.f32.mrb[0].mxu0
      %v430 = vpop.f32.mrb[0].mxu0
      %v431 = vadd.f32 0.0, %v430
      %v432 = vpop.f32.mrb[0].mxu0
      %433 = vmatprep.mubr.bf16.mxu0 0
      %434 = vmatmul.mubr.bf16.gmra.mrb[0].mxu0 %v340
      %v435 = vpop.f32.mrb[0].mxu0
      %v436 = vadd.f32 0.0, %v435
      %v437 = vpop.f32.mrb[0].mxu0
      %v438 = vpop.f32.mrb[0].mxu0
      %v439 = vadd.f32 0.0, %v438
      %v440 = vpop.f32.mrb[0].mxu0
      %441 = vmatprep.mubr.bf16.mxu0 0
      %442 = vmatmul.mubr.bf16.gmra.mrb[0].mxu0 %v343
      %v443 = vpop.f32.mrb[0].mxu0
      %v444 = vadd.f32 0.0, %v443
      %v445 = vpop.f32.mrb[0].mxu0
      %v446 = vpop.f32.mrb[0].mxu0
      %v447 = vadd.f32 0.0, %v446
      %v448 = vpop.f32.mrb[0].mxu0
      %449 = vmatprep.mubr.bf16.mxu0 0
      %450 = vmatmul.mubr.bf16.gmra.mrb[0].mxu0 %v346
      %v451 = vpop.f32.mrb[0].mxu0
      %v452 = vadd.f32 0.0, %v451
      %v453 = vpop.f32.mrb[0].mxu0
      %v454 = vpop.f32.mrb[0].mxu0
      %v455 = vadd.f32 0.0, %v454
      %v456 = vpop.f32.mrb[0].mxu0
      %457 = vmatprep.mubr.bf16.mxu0 0
      %458 = vmatmul.mubr.bf16.gmra.mrb[0].mxu0 %v349
      %v459 = vpop.f32.mrb[0].mxu0
      %v460 = vadd.f32 0.0, %v459
      %v461 = vpop.f32.mrb[0].mxu0
      %v462 = vpop.f32.mrb[0].mxu0
      %v463 = vadd.f32 0.0, %v462
      %v464 = vpop.f32.mrb[0].mxu0
      %465 = vmatprep.mubr.bf16.mxu0 0
      %466 = vmatmul.mubr.bf16.gmra.mrb[0].mxu0 %v352
      %v467 = vpop.f32.mrb[0].mxu0
      %v468 = vadd.f32 0.0, %v467
      %v469 = vpop.f32.mrb[0].mxu0
      %v470 = vpop.f32.mrb[0].mxu0
      %v471 = vadd.f32 0.0, %v470
      %v472 = vpop.f32.mrb[0].mxu0
      %473 = vmatprep.mubr.bf16.mxu0 0
      %474 = vmatmul.mubr.bf16.gmra.mrb[0].mxu0 %v355
      %v475 = vpop.f32.mrb[0].mxu0
      %v476 = vadd.f32 0.0, %v475
      %v477 = vpop.f32.mrb[0].mxu0
      %v478 = vpop.f32.mrb[0].mxu0
      %v479 = vadd.f32 0.0, %v478
      %v480 = vpop.f32.mrb[0].mxu0
      %481 = vmatprep.mubr.bf16.mxu0 0
      %482 = vmatmul.mubr.bf16.gmra.mrb[0].mxu0 %v358
      %v483 = vpop.f32.mrb[0].mxu0
      %v484 = vadd.f32 0.0, %v483
      %v485 = vpop.f32.mrb[0].mxu0
      %v486 = vpop.f32.mrb[0].mxu0
      %v487 = vadd.f32 0.0, %v486
      %v488 = vpop.f32.mrb[0].mxu0
      %489 = vmatprep.mubr.bf16.mxu0 0
      %490 = vmatmul.mubr.bf16.gmra.mrb[0].mxu0 %v361
      %v491 = vpop.f32.mrb[0].mxu0
      %v492 = vadd.f32 0.0, %v491
      %v493 = vpop.f32.mrb[0].mxu0
      %v494 = vpop.f32.mrb[0].mxu0
      %v495 = vadd.f32 0.0, %v494
      %v496 = vpop.f32.mrb[0].mxu0
      %497 = vmatprep.mubr.bf16.mxu0 0
      %498 = vmatmul.mubr.bf16.gmra.mrb[0].mxu0 %v364
      %v499 = vpop.f32.mrb[0].mxu0
      %v500 = vadd.f32 0.0, %v499
      %v501 = vpop.f32.mrb[0].mxu0
      %v502 = vpop.f32.mrb[0].mxu0
      %v503 = vadd.f32 0.0, %v502
      %v504 = vpop.f32.mrb[0].mxu0
      %505 = vmatprep.mubr.bf16.mxu0 0
      %506 = vmatmul.mubr.bf16.gmra.mrb[0].mxu0 %v367
      %v507 = vpop.f32.mrb[0].mxu0
      %v508 = vadd.f32 0.0, %v507
      %v509 = vpop.f32.mrb[0].mxu0
      %v510 = vpop.f32.mrb[0].mxu0
      %v511 = vadd.f32 0.0, %v510
      %v512 = vpop.f32.mrb[0].mxu0
      %513 = vmatprep.mubr.bf16.mxu0 0
      %514 = vmatmul.mubr.bf16.gmra.mrb[0].mxu0 %v370
      %v515 = vpop.f32.mrb[0].mxu0
      %v516 = vadd.f32 0.0, %v515
      %v517 = vpop.f32.mrb[0].mxu0
      %v518 = vpop.f32.mrb[0].mxu0
      %v519 = vadd.f32 0.0, %v518
      %v520 = vpop.f32.mrb[0].mxu0
      %521 = vmatprep.mubr.bf16.mxu0 0
      %522 = vmatmul.mubr.bf16.gmra.mrb[0].mxu0 %v373
      %v523 = vpop.f32.mrb[0].mxu0
      %v524 = vadd.f32 0.0, %v523
      %v525 = vpop.f32.mrb[0].mxu0
      %v526 = vpop.f32.mrb[0].mxu0
      %v527 = vadd.f32 0.0, %v526
      %v528 = vpop.f32.mrb[0].mxu0
      %529 = vmatprep.mubr.bf16.mxu0 0
      %530 = vmatmul.mubr.bf16.gmra.mrb[0].mxu0 %v376
      %v531 = vpop.f32.mrb[0].mxu0
      %v532 = vadd.f32 0.0, %v531
      %v533 = vpop.f32.mrb[0].mxu0
      %v534 = vpop.f32.mrb[0].mxu0
      %v535 = vadd.f32 0.0, %v534
      %v536 = vpop.f32.mrb[0].mxu0
      %537 = vmatprep.mubr.bf16.mxu0 0
      %538 = vmatmul.mubr.bf16.gmra.mrb[0].mxu0 %v379
      %v539 = vpop.f32.mrb[0].mxu0
      %v540 = vadd.f32 0.0, %v539
      %v541 = vpop.f32.mrb[0].mxu0
      %v542 = vpop.f32.mrb[0].mxu0
      %v543 = vadd.f32 0.0, %v542
      %v544 = vpop.f32.mrb[0].mxu0
      %545 = vdwg.mxu0
      %v546 = vld [vmem:[%s2] sm:$0x1]
      %v548 = vlaneseq
      %v549 = vshrl.u32 %v548, 7
      %v550 = vsub.s32 0, %v549
      %v551 = vrot.slane %v546, %v550
      %v553 = vmul.f32 %v420, %v551
      %v554 = vmul.f32 %v423, %v551
      %v555 = vmul.f32 %v428, %v551
      %v556 = vmul.f32 %v431, %v551
      %v557 = vmul.f32 %v436, %v551
      %v558 = vmul.f32 %v439, %v551
      %v559 = vmul.f32 %v444, %v551
      %v560 = vmul.f32 %v447, %v551
      %v561 = vmul.f32 %v452, %v551
      %v562 = vmul.f32 %v455, %v551
      %v563 = vmul.f32 %v460, %v551
      %v564 = vmul.f32 %v463, %v551
      %v565 = vmul.f32 %v468, %v551
      %v566 = vmul.f32 %v471, %v551
      %v567 = vmul.f32 %v476, %v551
      %v568 = vmul.f32 %v479, %v551
      %v569 = vmul.f32 %v484, %v551
      %v570 = vmul.f32 %v487, %v551
      %v571 = vmul.f32 %v492, %v551
      %v572 = vmul.f32 %v495, %v551
      %v573 = vmul.f32 %v500, %v551
      %v574 = vmul.f32 %v503, %v551
      %v575 = vmul.f32 %v508, %v551
      %v576 = vmul.f32 %v511, %v551
      %v577 = vmul.f32 %v516, %v551
      %v578 = vmul.f32 %v519, %v551
      %v579 = vmul.f32 %v524, %v551
      %v580 = vmul.f32 %v527, %v551
      %v581 = vmul.f32 %v532, %v551
      %v582 = vmul.f32 %v535, %v551
      %v583 = vmul.f32 %v540, %v551
      %v584 = vmul.f32 %v543, %v551
      %v585 = vld [vmem:[%s3] sm:$0x1]
      %v587 = vlaneseq
      %v588 = vshrl.u32 %v587, 7
      %v589 = vsub.s32 0, %v588
      %v590 = vrot.slane %v585, %v589
      %v592 = vadd.f32 %v553, %v590
      %v593 = vadd.f32 %v554, %v590
      %v594 = vadd.f32 %v555, %v590
      %v595 = vadd.f32 %v556, %v590
      %v596 = vadd.f32 %v557, %v590
      %v597 = vadd.f32 %v558, %v590
      %v598 = vadd.f32 %v559, %v590
      %v599 = vadd.f32 %v560, %v590
      %v600 = vadd.f32 %v561, %v590
      %v601 = vadd.f32 %v562, %v590
      %v602 = vadd.f32 %v563, %v590
      %v603 = vadd.f32 %v564, %v590
      %v604 = vadd.f32 %v565, %v590
      %v605 = vadd.f32 %v566, %v590
      %v606 = vadd.f32 %v567, %v590
      %v607 = vadd.f32 %v568, %v590
      %v608 = vadd.f32 %v569, %v590
      %v609 = vadd.f32 %v570, %v590
      %v610 = vadd.f32 %v571, %v590
      %v611 = vadd.f32 %v572, %v590
      %v612 = vadd.f32 %v573, %v590
      %v613 = vadd.f32 %v574, %v590
      %v614 = vadd.f32 %v575, %v590
      %v615 = vadd.f32 %v576, %v590
      %v616 = vadd.f32 %v577, %v590
      %v617 = vadd.f32 %v578, %v590
      %v618 = vadd.f32 %v579, %v590
      %v619 = vadd.f32 %v580, %v590
      %v620 = vadd.f32 %v581, %v590
      %v621 = vadd.f32 %v582, %v590
      %v622 = vadd.f32 %v583, %v590
      %v623 = vadd.f32 %v584, %v590
      %v624 = vld [vmem:[%s242] sm:$0xff]
      %v625 = vld [vmem:[%s242 + $0x8] sm:$0xff]
      %v626 = vld [vmem:[%s242 + $0x10] sm:$0xff]
      %v627 = vld [vmem:[%s242 + $0x18] sm:$0xff]
      %v628 = vld [vmem:[%s242 + $0x20] sm:$0xff]
      %v629 = vld [vmem:[%s242 + $0x28] sm:$0xff]
      %v630 = vld [vmem:[%s242 + $0x30] sm:$0xff]
      %v631 = vld [vmem:[%s242 + $0x38] sm:$0xff]
      %v632 = vld [vmem:[%s242 + $0x40] sm:$0xff]
      %v633 = vld [vmem:[%s242 + $0x48] sm:$0xff]
      %v634 = vld [vmem:[%s242 + $0x50] sm:$0xff]
      %v635 = vld [vmem:[%s242 + $0x58] sm:$0xff]
      %v636 = vld [vmem:[%s242 + $0x60] sm:$0xff]
      %v637 = vld [vmem:[%s242 + $0x68] sm:$0xff]
      %v638 = vld [vmem:[%s242 + $0x70] sm:$0xff]
      %v639 = vld [vmem:[%s242 + $0x78] sm:$0xff]
      %v640 = vld [vmem:[%s242 + $0x80] sm:$0xff]
      %v641 = vld [vmem:[%s242 + $0x88] sm:$0xff]
      %v642 = vld [vmem:[%s242 + $0x90] sm:$0xff]
      %v643 = vld [vmem:[%s242 + $0x98] sm:$0xff]
      %v644 = vld [vmem:[%s242 + $0xa0] sm:$0xff]
      %v645 = vld [vmem:[%s242 + $0xa8] sm:$0xff]
      %v646 = vld [vmem:[%s242 + $0xb0] sm:$0xff]
      %v647 = vld [vmem:[%s242 + $0xb8] sm:$0xff]
      %v648 = vld [vmem:[%s242 + $0xc0] sm:$0xff]
      %v649 = vld [vmem:[%s242 + $0xc8] sm:$0xff]
      %v650 = vld [vmem:[%s242 + $0xd0] sm:$0xff]
      %v651 = vld [vmem:[%s242 + $0xd8] sm:$0xff]
      %v652 = vld [vmem:[%s242 + $0xe0] sm:$0xff]
      %v653 = vld [vmem:[%s242 + $0xe8] sm:$0xff]
      %v654 = vld [vmem:[%s242 + $0xf0] sm:$0xff]
      %v655 = vld [vmem:[%s242 + $0xf8] sm:$0xff]
      %v656 = vadd.f32 %v592, %v624
      %v657 = vadd.f32 %v593, %v625
      %v658 = vadd.f32 %v594, %v626
      %v659 = vadd.f32 %v595, %v627
      %v660 = vadd.f32 %v596, %v628
      %v661 = vadd.f32 %v597, %v629
      %v662 = vadd.f32 %v598, %v630
      %v663 = vadd.f32 %v599, %v631
      %v664 = vadd.f32 %v600, %v632
      %v665 = vadd.f32 %v601, %v633
      %v666 = vadd.f32 %v602, %v634
      %v667 = vadd.f32 %v603, %v635
      %v668 = vadd.f32 %v604, %v636
      %v669 = vadd.f32 %v605, %v637
      %v670 = vadd.f32 %v606, %v638
      %v671 = vadd.f32 %v607, %v639
      %v672 = vadd.f32 %v608, %v640
      %v673 = vadd.f32 %v609, %v641
      %v674 = vadd.f32 %v610, %v642
      %v675 = vadd.f32 %v611, %v643
      %v676 = vadd.f32 %v612, %v644
      %v677 = vadd.f32 %v613, %v645
      %v678 = vadd.f32 %v614, %v646
      %v679 = vadd.f32 %v615, %v647
      %v680 = vadd.f32 %v616, %v648
      %v681 = vadd.f32 %v617, %v649
      %v682 = vadd.f32 %v618, %v650
      %v683 = vadd.f32 %v619, %v651
      %v684 = vadd.f32 %v620, %v652
      %v685 = vadd.f32 %v621, %v653
      %v686 = vadd.f32 %v622, %v654
      %v687 = vadd.f32 %v623, %v655
      %v688 = vmax.f32 %v656, 0.0
      %v689 = vmax.f32 %v657, 0.0
      %v690 = vmax.f32 %v658, 0.0
      %v691 = vmax.f32 %v659, 0.0
      %v692 = vmax.f32 %v660, 0.0
      %v693 = vmax.f32 %v661, 0.0
      %v694 = vmax.f32 %v662, 0.0
      %v695 = vmax.f32 %v663, 0.0
      %v696 = vmax.f32 %v664, 0.0
      %v697 = vmax.f32 %v665, 0.0
      %v698 = vmax.f32 %v666, 0.0
      %v699 = vmax.f32 %v667, 0.0
      %v700 = vmax.f32 %v668, 0.0
      %v701 = vmax.f32 %v669, 0.0
      %v702 = vmax.f32 %v670, 0.0
      %v703 = vmax.f32 %v671, 0.0
      %v704 = vmax.f32 %v672, 0.0
      %v705 = vmax.f32 %v673, 0.0
      %v706 = vmax.f32 %v674, 0.0
      %v707 = vmax.f32 %v675, 0.0
      %v708 = vmax.f32 %v676, 0.0
      %v709 = vmax.f32 %v677, 0.0
      %v710 = vmax.f32 %v678, 0.0
      %v711 = vmax.f32 %v679, 0.0
      %v712 = vmax.f32 %v680, 0.0
      %v713 = vmax.f32 %v681, 0.0
      %v714 = vmax.f32 %v682, 0.0
      %v715 = vmax.f32 %v683, 0.0
      %v716 = vmax.f32 %v684, 0.0
      %v717 = vmax.f32 %v685, 0.0
      %v718 = vmax.f32 %v686, 0.0
      %v719 = vmax.f32 %v687, 0.0
      %720 = vst.msk [vmem:[%s248] sm:$0xff] %vm332, %v688
      %721 = vst.msk [vmem:[%s248 + $0x8] sm:$0xff] %vm332, %v689
      %722 = vst.msk [vmem:[%s248 + $0x10] sm:$0xff] %vm332, %v690
      %723 = vst.msk [vmem:[%s248 + $0x18] sm:$0xff] %vm332, %v691
      %724 = vst.msk [vmem:[%s248 + $0x20] sm:$0xff] %vm332, %v692
      %725 = vst.msk [vmem:[%s248 + $0x28] sm:$0xff] %vm332, %v693
      %726 = vst.msk [vmem:[%s248 + $0x30] sm:$0xff] %vm332, %v694
      %727 = vst.msk [vmem:[%s248 + $0x38] sm:$0xff] %vm332, %v695
      %728 = vst.msk [vmem:[%s248 + $0x40] sm:$0xff] %vm332, %v696
      %729 = vst.msk [vmem:[%s248 + $0x48] sm:$0xff] %vm332, %v697
      %730 = vst.msk [vmem:[%s248 + $0x50] sm:$0xff] %vm332, %v698
      %731 = vst.msk [vmem:[%s248 + $0x58] sm:$0xff] %vm332, %v699
      %732 = vst.msk [vmem:[%s248 + $0x60] sm:$0xff] %vm332, %v700
      %733 = vst.msk [vmem:[%s248 + $0x68] sm:$0xff] %vm332, %v701
      %734 = vst.msk [vmem:[%s248 + $0x70] sm:$0xff] %vm332, %v702
      %735 = vst.msk [vmem:[%s248 + $0x78] sm:$0xff] %vm332, %v703
      %736 = vst.msk [vmem:[%s248 + $0x80] sm:$0xff] %vm332, %v704
      %737 = vst.msk [vmem:[%s248 + $0x88] sm:$0xff] %vm332, %v705
      %738 = vst.msk [vmem:[%s248 + $0x90] sm:$0xff] %vm332, %v706
      %739 = vst.msk [vmem:[%s248 + $0x98] sm:$0xff] %vm332, %v707
      %740 = vst.msk [vmem:[%s248 + $0xa0] sm:$0xff] %vm332, %v708
      %741 = vst.msk [vmem:[%s248 + $0xa8] sm:$0xff] %vm332, %v709
      %742 = vst.msk [vmem:[%s248 + $0xb0] sm:$0xff] %vm332, %v710
      %743 = vst.msk [vmem:[%s248 + $0xb8] sm:$0xff] %vm332, %v711
      %744 = vst.msk [vmem:[%s248 + $0xc0] sm:$0xff] %vm332, %v712
      %745 = vst.msk [vmem:[%s248 + $0xc8] sm:$0xff] %vm332, %v713
      %746 = vst.msk [vmem:[%s248 + $0xd0] sm:$0xff] %vm332, %v714
      %747 = vst.msk [vmem:[%s248 + $0xd8] sm:$0xff] %vm332, %v715
      %748 = vst.msk [vmem:[%s248 + $0xe0] sm:$0xff] %vm332, %v716
      %749 = vst.msk [vmem:[%s248 + $0xe8] sm:$0xff] %vm332, %v717
      %750 = vst.msk [vmem:[%s248 + $0xf0] sm:$0xff] %vm332, %v718
      %751 = vst.msk [vmem:[%s248 + $0xf8] sm:$0xff] %vm332, %v719
      %s752 = smul.u32 32, %s16
      %p753 = scmp.lt.s32.totalorder %s752, 63
      %s754 = scalar_select %p753, %s752, 63
      %s755 = smul.addr %s754, 8
      %s756 = scalar_lea.vmem %s5, %s755
      // Predicated region
      $region41: #{axial_block_wopos_forward.7} parent=39 // pred_check
        %p757 = pneg %p149
      $region42: #{axial_block_wopos_forward.7} parent=39 // pred_check_branch
        %759 = sbr.rel (%p757) target = $region44
      $region43: #{axial_block_wopos_forward.7} parent=39 // pred_region
        %s760 = smul.u32 32, %s16
      $region44: #{axial_block_wopos_forward.7} parent=39 // pred_fallthru
        _
    $region40: #{axial_block_wopos_forward.7} parent=5 // pred_fallthru
      _
    %p761 = scmp.le.s32.totalorder 2, %s11
    // Predicated region
    $region45: #{axial_block_wopos_forward.7} parent=5 // pred_check
      %p762 = pneg %p761
    $region46: #{axial_block_wopos_forward.7} parent=5 // pred_check_branch
      %764 = sbr.rel (%p762) target = $region48
    $region47: #{axial_block_wopos_forward.7} parent=5 // pred_region
      %s765 = ssub.s32 %s11, 2
      // Predicated region
      $region49: #{axial_block_wopos_forward.7} parent=47 // pred_check
        %p766 = pneg %p155
      $region50: #{axial_block_wopos_forward.7} parent=47 // pred_check_branch
        %768 = sbr.rel (%p766) target = $region52
      $region51: #{axial_block_wopos_forward.7} parent=47 // pred_region
        %s769 = smul.u32 32, %s17
        %p770 = scmp.lt.s32.totalorder %s769, 63
        %s771 = scalar_select %p770, %s769, 63
        %s772 = smul.addr %s771, 8
        %s773 = scalar_lea.vmem %s5, %s772
      $region52: #{axial_block_wopos_forward.7} parent=47 // pred_fallthru
        _
    $region48: #{axial_block_wopos_forward.7} parent=5 // pred_fallthru
      _
  $region6: #{axial_block_wopos_forward.7} parent=0 // loop_footer
    %s15 = sadd.s32 1, %s11
  $region7: #{axial_block_wopos_forward.7} parent=0 // loop_footer_branch
    %10 = sbr.rel target = $region3
  $region8: #{axial_block_wopos_forward.7} parent=0 // loop_exit
    _

// kernel: axial_block_wopos_forward.5
$region0: #{axial_block_wopos_forward.5}
  #allocation0 [shape = 'u32[]', space=smem, size = 0x4, offset = 0x4, fixed_abs, tag = 'smem constant byte address 0x4 - core index']
  #allocation1 [shape = 'u32[144,128]{1,0:T(1,128)}', space=vmem, size = 0x12000, scoped, tag = 'internal scratch']
  %s0 = inlined_call_operand.vmem [shape: f32[32,16,8], index: 0, kind: input, shape index: {}]
  %s1 = inlined_call_operand.vmem [shape: bf16[8,16], index: 1, kind: input, shape index: {}]
  %s2 = inlined_call_operand.vmem [shape: f32[1,16], index: 2, kind: input, shape index: {}]
  %s3 = inlined_call_operand.vmem [shape: f32[1,16], index: 3, kind: input, shape index: {}]
  %s4 = inlined_call_operand.vmem [shape: f32[1,8], index: 4, kind: input, shape index: {}]
  %s5 = inlined_call_operand.vmem [shape: f32[1,8], index: 5, kind: input, shape index: {}]
  %s6 = inlined_call_operand.vmem [shape: f32[32,16,8], index: 6, kind: output, shape index: {}]
  %s7 = sld [smem:[#allocation0]]
  $region57: #{axial_block_wopos_forward.5} parent=0
    _
  %s9 = ssub.s32 1, %s7
  %s10 = scalar_select 0, %s9, %s7
  loop: start=0, step=1, limit=4
  $region2: #{axial_block_wopos_forward.5} parent=0 // loop_pre_header
    _
  $region3: #{axial_block_wopos_forward.5} parent=0 // loop_header
    %s12 = sphi 0, %s16
    %p13 = scmp.ge.s32.totalorder %s12, 4
    %s22 = sphi 0, %s24
    %s25 = sphi 0, %s22
    %s26 = sphi 0, %s25
    %s42 = sphi 0, %s26
    %s46 = sphi 0, %s46
    %s48 = sphi 0, %s46
    %s49 = sphi 0, %s48
    %s63 = sphi 0, %s49
    %s67 = sphi 0, %s67
    %s69 = sphi 0, %s67
    %s70 = sphi 0, %s69
    %s84 = sphi 0, %s70
    %s88 = sphi 0, %s88
    %s90 = sphi 0, %s88
    %s91 = sphi 0, %s90
    %s105 = sphi 0, %s91
    %s109 = sphi 0, %s109
    %s111 = sphi 0, %s109
    %s112 = sphi 0, %s111
    %s126 = sphi 0, %s112
    %s130 = sphi 0, %s130
    %s132 = sphi 0, %s130
    %s133 = sphi 0, %s132
    %s147 = sphi 0, %s133
    %s153 = sphi 0, %s155
    %s156 = sphi 0, %s153
    %s157 = sphi 0, %s156
    %s173 = sphi 0, %s157
  $region4: #{axial_block_wopos_forward.5} parent=0 // loop_header_branch
    %15 = sbr.rel (%p13) target = $region8
  $region5: #{axial_block_wopos_forward.5} parent=0 // loop_body
    %s17 = ssub.s32 %s12, 1
    %s18 = ssub.s32 %s12, 2
    %s19 = sadd.s32 %s12, 1
    %s20 = ssub.s32 %s12, %s19
    %p21 = scmp.eq.s32.totalorder %s20, 0
    %s23 = sadd.s32 %s22, 1
    %s24 = scalar_select %p21, %s22, %s23
    %p27 = pneg %p21
    %p28 = scmp.eq.s32.totalorder %s12, 1
    %p29 = por %p27, %p28
    %p30 = scmp.ne.s32.totalorder %s22, %s25
    %p31 = scmp.eq.s32.totalorder %s12, 0
    %p32 = por %p30, %p31
    %p33 = scmp.ne.s32.totalorder %s22, %s25
    %p34 = scmp.eq.s32.totalorder %s17, 1
    %p35 = por %p33, %p34
    %p36 = scmp.ne.s32.totalorder %s25, %s26
    %p37 = scmp.eq.s32.totalorder %s17, 0
    %p38 = por %p36, %p37
    %p39 = scmp.ne.s32.totalorder %s25, %s26
    %p40 = scmp.eq.s32.totalorder %s18, 1
    %p41 = por %p39, %p40
    %p43 = scmp.ne.s32.totalorder %s26, %s42
    %p44 = scmp.eq.s32.totalorder %s18, 0
    %p45 = por %p43, %p44
    %s47 = sadd.s32 %s46, 1
    %p50 = scmp.eq.s32.totalorder %s12, 1
    %p51 = scmp.ne.s32.totalorder %s46, %s48
    %p52 = scmp.eq.s32.totalorder %s12, 0
    %p53 = por %p51, %p52
    %p54 = scmp.ne.s32.totalorder %s46, %s48
    %p55 = scmp.eq.s32.totalorder %s17, 1
    %p56 = por %p54, %p55
    %p57 = scmp.ne.s32.totalorder %s48, %s49
    %p58 = scmp.eq.s32.totalorder %s17, 0
    %p59 = por %p57, %p58
    %p60 = scmp.ne.s32.totalorder %s48, %s49
    %p61 = scmp.eq.s32.totalorder %s18, 1
    %p62 = por %p60, %p61
    %p64 = scmp.ne.s32.totalorder %s49, %s63
    %p65 = scmp.eq.s32.totalorder %s18, 0
    %p66 = por %p64, %p65
    %s68 = sadd.s32 %s67, 1
    %p71 = scmp.eq.s32.totalorder %s12, 1
    %p72 = scmp.ne.s32.totalorder %s67, %s69
    %p73 = scmp.eq.s32.totalorder %s12, 0
    %p74 = por %p72, %p73
    %p75 = scmp.ne.s32.totalorder %s67, %s69
    %p76 = scmp.eq.s32.totalorder %s17, 1
    %p77 = por %p75, %p76
    %p78 = scmp.ne.s32.totalorder %s69, %s70
    %p79 = scmp.eq.s32.totalorder %s17, 0
    %p80 = por %p78, %p79
    %p81 = scmp.ne.s32.totalorder %s69, %s70
    %p82 = scmp.eq.s32.totalorder %s18, 1
    %p83 = por %p81, %p82
    %p85 = scmp.ne.s32.totalorder %s70, %s84
    %p86 = scmp.eq.s32.totalorder %s18, 0
    %p87 = por %p85, %p86
    %s89 = sadd.s32 %s88, 1
    %p92 = scmp.eq.s32.totalorder %s12, 1
    %p93 = scmp.ne.s32.totalorder %s88, %s90
    %p94 = scmp.eq.s32.totalorder %s12, 0
    %p95 = por %p93, %p94
    %p96 = scmp.ne.s32.totalorder %s88, %s90
    %p97 = scmp.eq.s32.totalorder %s17, 1
    %p98 = por %p96, %p97
    %p99 = scmp.ne.s32.totalorder %s90, %s91
    %p100 = scmp.eq.s32.totalorder %s17, 0
    %p101 = por %p99, %p100
    %p102 = scmp.ne.s32.totalorder %s90, %s91
    %p103 = scmp.eq.s32.totalorder %s18, 1
    %p104 = por %p102, %p103
    %p106 = scmp.ne.s32.totalorder %s91, %s105
    %p107 = scmp.eq.s32.totalorder %s18, 0
    %p108 = por %p106, %p107
    %s110 = sadd.s32 %s109, 1
    %p113 = scmp.eq.s32.totalorder %s12, 1
    %p114 = scmp.ne.s32.totalorder %s109, %s111
    %p115 = scmp.eq.s32.totalorder %s12, 0
    %p116 = por %p114, %p115
    %p117 = scmp.ne.s32.totalorder %s109, %s111
    %p118 = scmp.eq.s32.totalorder %s17, 1
    %p119 = por %p117, %p118
    %p120 = scmp.ne.s32.totalorder %s111, %s112
    %p121 = scmp.eq.s32.totalorder %s17, 0
    %p122 = por %p120, %p121
    %p123 = scmp.ne.s32.totalorder %s111, %s112
    %p124 = scmp.eq.s32.totalorder %s18, 1
    %p125 = por %p123, %p124
    %p127 = scmp.ne.s32.totalorder %s112, %s126
    %p128 = scmp.eq.s32.totalorder %s18, 0
    %p129 = por %p127, %p128
    %s131 = sadd.s32 %s130, 1
    %p134 = scmp.eq.s32.totalorder %s12, 1
    %p135 = scmp.ne.s32.totalorder %s130, %s132
    %p136 = scmp.eq.s32.totalorder %s12, 0
    %p137 = por %p135, %p136
    %p138 = scmp.ne.s32.totalorder %s130, %s132
    %p139 = scmp.eq.s32.totalorder %s17, 1
    %p140 = por %p138, %p139
    %p141 = scmp.ne.s32.totalorder %s132, %s133
    %p142 = scmp.eq.s32.totalorder %s17, 0
    %p143 = por %p141, %p142
    %p144 = scmp.ne.s32.totalorder %s132, %s133
    %p145 = scmp.eq.s32.totalorder %s18, 1
    %p146 = por %p144, %p145
    %p148 = scmp.ne.s32.totalorder %s133, %s147
    %p149 = scmp.eq.s32.totalorder %s18, 0
    %p150 = por %p148, %p149
    %s151 = ssub.s32 %s12, %s19
    %p152 = scmp.eq.s32.totalorder %s151, 0
    %s154 = sadd.s32 %s153, 1
    %s155 = scalar_select %p152, %s153, %s154
    %p158 = pneg %p152
    %p159 = scmp.eq.s32.totalorder %s12, 1
    %p160 = por %p158, %p159
    %p161 = scmp.ne.s32.totalorder %s153, %s156
    %p162 = scmp.eq.s32.totalorder %s12, 0
    %p163 = por %p161, %p162
    %p164 = scmp.ne.s32.totalorder %s153, %s156
    %p165 = scmp.eq.s32.totalorder %s17, 1
    %p166 = por %p164, %p165
    %p167 = scmp.ne.s32.totalorder %s156, %s157
    %p168 = scmp.eq.s32.totalorder %s17, 0
    %p169 = por %p167, %p168
    %p170 = scmp.ne.s32.totalorder %s156, %s157
    %p171 = scmp.eq.s32.totalorder %s18, 1
    %p172 = por %p170, %p171
    %p174 = scmp.ne.s32.totalorder %s157, %s173
    %p175 = scmp.eq.s32.totalorder %s18, 0
    %p176 = por %p174, %p175
    %p177 = scmp.le.s32.totalorder 1, %s12
    %p178 = scmp.lt.s32.totalorder %s12, 3
    %p179 = pnand %p177, %p178
    %p180 = pneg %p179
    // Predicated region
    $region9: #{axial_block_wopos_forward.5} parent=5 // pred_check
      _
    $region10: #{axial_block_wopos_forward.5} parent=5 // pred_check_branch
      %182 = sbr.rel (%p179) target = $region12
    $region11: #{axial_block_wopos_forward.5} parent=5 // pred_region
      %s183 = ssub.s32 %s12, 1
      // Predicated region
      $region13: #{axial_block_wopos_forward.5} parent=11 // pred_check
        %p184 = pneg %p59
      $region14: #{axial_block_wopos_forward.5} parent=11 // pred_check_branch
        %186 = sbr.rel (%p184) target = $region16
      $region15: #{axial_block_wopos_forward.5} parent=11 // pred_region
        _
      $region16: #{axial_block_wopos_forward.5} parent=11 // pred_fallthru
        _
      // Predicated region
      $region17: #{axial_block_wopos_forward.5} parent=11 // pred_check
        %p187 = pneg %p80
      $region18: #{axial_block_wopos_forward.5} parent=11 // pred_check_branch
        %189 = sbr.rel (%p187) target = $region20
      $region19: #{axial_block_wopos_forward.5} parent=11 // pred_region
        _
      $region20: #{axial_block_wopos_forward.5} parent=11 // pred_fallthru
        _
      // Predicated region
      $region21: #{axial_block_wopos_forward.5} parent=11 // pred_check
        %p190 = pneg %p101
      $region22: #{axial_block_wopos_forward.5} parent=11 // pred_check_branch
        %192 = sbr.rel (%p190) target = $region24
      $region23: #{axial_block_wopos_forward.5} parent=11 // pred_region
        _
      $region24: #{axial_block_wopos_forward.5} parent=11 // pred_fallthru
        _
      // Predicated region
      $region25: #{axial_block_wopos_forward.5} parent=11 // pred_check
        %p193 = pneg %p122
      $region26: #{axial_block_wopos_forward.5} parent=11 // pred_check_branch
        %195 = sbr.rel (%p193) target = $region28
      $region27: #{axial_block_wopos_forward.5} parent=11 // pred_region
        _
      $region28: #{axial_block_wopos_forward.5} parent=11 // pred_fallthru
        _
      // Predicated region
      $region29: #{axial_block_wopos_forward.5} parent=11 // pred_check
        %p196 = pneg %p143
      $region30: #{axial_block_wopos_forward.5} parent=11 // pred_check_branch
        %198 = sbr.rel (%p196) target = $region32
      $region31: #{axial_block_wopos_forward.5} parent=11 // pred_region
        _
      $region32: #{axial_block_wopos_forward.5} parent=11 // pred_fallthru
        _
    $region12: #{axial_block_wopos_forward.5} parent=5 // pred_fallthru
      _
    %p199 = scmp.lt.s32.totalorder %s12, 2
    // Predicated region
    $region33: #{axial_block_wopos_forward.5} parent=5 // pred_check
      %p200 = pneg %p199
    $region34: #{axial_block_wopos_forward.5} parent=5 // pred_check_branch
      %202 = sbr.rel (%p200) target = $region36
    $region35: #{axial_block_wopos_forward.5} parent=5 // pred_region
      // Predicated region
      $region37: #{axial_block_wopos_forward.5} parent=35 // pred_check
        %p203 = pneg %p32
      $region38: #{axial_block_wopos_forward.5} parent=35 // pred_check_branch
        %205 = sbr.rel (%p203) target = $region40
      $region39: #{axial_block_wopos_forward.5} parent=35 // pred_region
        %s206 = smul.u32 16, %s12
        %p207 = scmp.lt.s32.totalorder %s206, 31
        %s208 = scalar_select %p207, %s206, 31
        %s209 = smul.addr %s208, 2
        %s210 = smul.addr %s209, 8
        %s211 = scalar_lea.vmem %s0, %s210
        %s212 = smul.u32 16, %s12
      $region40: #{axial_block_wopos_forward.5} parent=35 // pred_fallthru
        _
    $region36: #{axial_block_wopos_forward.5} parent=5 // pred_fallthru
      _
    %p213 = scmp.le.s32.totalorder 1, %s12
    %p214 = scmp.lt.s32.totalorder %s12, 3
    %p215 = pnand %p213, %p214
    %p216 = pneg %p215
    // Predicated region
    $region41: #{axial_block_wopos_forward.5} parent=5 // pred_check
      _
    $region42: #{axial_block_wopos_forward.5} parent=5 // pred_check_branch
      %218 = sbr.rel (%p215) target = $region44
    $region43: #{axial_block_wopos_forward.5} parent=5 // pred_region
      %s219 = ssub.s32 %s12, 1
      %s220 = smul.u32 16, %s17
      %p221 = scmp.lt.s32.totalorder %s220, 31
      %s222 = scalar_select %p221, %s220, 31
      %s223 = smul.addr %s222, 2
      %s224 = smul.addr %s223, 8
      %s225 = scalar_lea.vmem %s0, %s224
      %p226 = pneg %p38
      %p227 = pneg %p35
      %p228 = pneg %p59
      %p229 = pneg %p56
      %p230 = pneg %p80
      %p231 = pneg %p77
      %p232 = pneg %p101
      %p233 = pneg %p98
      %p234 = pneg %p122
      %p235 = pneg %p119
      %p236 = pneg %p143
      %p237 = pneg %p140
      %p238 = pneg %p169
      %p239 = pneg %p166
      %s240 = smul.u32 16, %s17
      %p241 = scmp.lt.s32.totalorder %s240, 31
      %s242 = scalar_select %p241, %s240, 31
      %s243 = smul.addr %s242, 2
      %s244 = smul.addr %s243, 8
      %s245 = scalar_lea.vmem %s6, %s244
      %s246 = smul.u32 16, %s17
      %p247 = scmp.lt.s32.totalorder %s246, 31
      %s248 = scalar_select %p247, %s246, 31
      %s249 = smul.addr %s248, 2
      %s250 = smul.addr %s249, 8
      %s251 = scalar_lea.vmem %s0, %s250
      %s252 = smul.u32 16, %s17
      %s253 = smul.u32 16, %s17
      %p254 = scmp.lt.s32.totalorder %s253, 31
      %s255 = scalar_select %p254, %s253, 31
      %s256 = smul.addr %s255, 2
      %s257 = smul.addr %s256, 8
      %s258 = scalar_lea.vmem %s6, %s257
      %s259 = smul.u32 16, %s17
      %v261 = vld [vmem:[%s251] sm:$0xff]
      %v262 = vld [vmem:[%s251 + $0x8] sm:$0xff]
      %v263 = vld [vmem:[%s251 + $0x10] sm:$0xff]
      %v264 = vld [vmem:[%s251 + $0x18] sm:$0xff]
      %v265 = vld [vmem:[%s251 + $0x20] sm:$0xff]
      %v266 = vld [vmem:[%s251 + $0x28] sm:$0xff]
      %v267 = vld [vmem:[%s251 + $0x30] sm:$0xff]
      %v268 = vld [vmem:[%s251 + $0x38] sm:$0xff]
      %v269 = vld [vmem:[%s251 + $0x40] sm:$0xff]
      %v270 = vld [vmem:[%s251 + $0x48] sm:$0xff]
      %v271 = vld [vmem:[%s251 + $0x50] sm:$0xff]
      %v272 = vld [vmem:[%s251 + $0x58] sm:$0xff]
      %v273 = vld [vmem:[%s251 + $0x60] sm:$0xff]
      %v274 = vld [vmem:[%s251 + $0x68] sm:$0xff]
      %v275 = vld [vmem:[%s251 + $0x70] sm:$0xff]
      %v276 = vld [vmem:[%s251 + $0x78] sm:$0xff]
      %v277 = vld [vmem:[%s251 + $0x80] sm:$0xff]
      %v278 = vld [vmem:[%s251 + $0x88] sm:$0xff]
      %v279 = vld [vmem:[%s251 + $0x90] sm:$0xff]
      %v280 = vld [vmem:[%s251 + $0x98] sm:$0xff]
      %v281 = vld [vmem:[%s251 + $0xa0] sm:$0xff]
      %v282 = vld [vmem:[%s251 + $0xa8] sm:$0xff]
      %v283 = vld [vmem:[%s251 + $0xb0] sm:$0xff]
      %v284 = vld [vmem:[%s251 + $0xb8] sm:$0xff]
      %v285 = vld [vmem:[%s251 + $0xc0] sm:$0xff]
      %v286 = vld [vmem:[%s251 + $0xc8] sm:$0xff]
      %v287 = vld [vmem:[%s251 + $0xd0] sm:$0xff]
      %v288 = vld [vmem:[%s251 + $0xd8] sm:$0xff]
      %v289 = vld [vmem:[%s251 + $0xe0] sm:$0xff]
      %v290 = vld [vmem:[%s251 + $0xe8] sm:$0xff]
      %v291 = vld [vmem:[%s251 + $0xf0] sm:$0xff]
      %v292 = vld [vmem:[%s251 + $0xf8] sm:$0xff]
      %v293 = vpack.c.bf16 %v262, %v261
      %v294 = vpack.c.bf16 %v264, %v263
      %v295 = vpack.c.bf16 %v266, %v265
      %v296 = vpack.c.bf16 %v268, %v267
      %v297 = vpack.c.bf16 %v270, %v269
      %v298 = vpack.c.bf16 %v272, %v271
      %v299 = vpack.c.bf16 %v274, %v273
      %v300 = vpack.c.bf16 %v276, %v275
      %v301 = vpack.c.bf16 %v278, %v277
      %v302 = vpack.c.bf16 %v280, %v279
      %v303 = vpack.c.bf16 %v282, %v281
      %v304 = vpack.c.bf16 %v284, %v283
      %v305 = vpack.c.bf16 %v286, %v285
      %v306 = vpack.c.bf16 %v288, %v287
      %v307 = vpack.c.bf16 %v290, %v289
      %v308 = vpack.c.bf16 %v292, %v291
      %v309 = vld [vmem:[%s1] sm:$0xf]
      %vm310 = vcmask 64512
      %v312 = vsel %vm310, %v293, 0
      %v315 = vsel %vm310, %v294, 0
      %v318 = vsel %vm310, %v295, 0
      %v321 = vsel %vm310, %v296, 0
      %v324 = vsel %vm310, %v297, 0
      %v327 = vsel %vm310, %v298, 0
      %v330 = vsel %vm310, %v299, 0
      %v333 = vsel %vm310, %v300, 0
      %v336 = vsel %vm310, %v301, 0
      %v339 = vsel %vm310, %v302, 0
      %v342 = vsel %vm310, %v303, 0
      %v345 = vsel %vm310, %v304, 0
      %v348 = vsel %vm310, %v305, 0
      %v351 = vsel %vm310, %v306, 0
      %v354 = vsel %vm310, %v307, 0
      %v357 = vsel %vm310, %v308, 0
      %vm359 = vcmask 1043456
      %v361 = vsel %vm359, %v309, 0
      %363 = vmatprep.subr.bf16.mxu0 0
      %364 = vmatpush1.bf16.msra.mxu0 %v361
      %365 = vmatprep.subr.bf16.mxu0 0
      %366 = vmatpush1.bf16.msra.mxu0 0
      %367 = vmatprep.subr.bf16.mxu0 0
      %368 = vmatpush1.bf16.msra.mxu0 0
      %369 = vmatprep.subr.bf16.mxu0 0
      %370 = vmatpush1.bf16.msra.mxu0 0
      %371 = vmatprep.subr.bf16.mxu0 0
      %372 = vmatpush1.bf16.msra.mxu0 0
      %373 = vmatprep.subr.bf16.mxu0 0
      %374 = vmatpush1.bf16.msra.mxu0 0
      %375 = vmatprep.subr.bf16.mxu0 0
      %376 = vmatpush1.bf16.msra.mxu0 0
      %377 = vmatprep.subr.bf16.mxu0 0
      %378 = vmatpush1.bf16.msra.mxu0 0
      %379 = vmatprep.subr.bf16.mxu0 0
      %380 = vmatpush1.bf16.msra.mxu0 0
      %381 = vmatprep.subr.bf16.mxu0 0
      %382 = vmatpush1.bf16.msra.mxu0 0
      %383 = vmatprep.subr.bf16.mxu0 0
      %384 = vmatpush1.bf16.msra.mxu0 0
      %385 = vmatprep.subr.bf16.mxu0 0
      %386 = vmatpush1.bf16.msra.mxu0 0
      %387 = vmatprep.subr.bf16.mxu0 0
      %388 = vmatpush1.bf16.msra.mxu0 0
      %389 = vmatprep.subr.bf16.mxu0 0
      %390 = vmatpush1.bf16.msra.mxu0 0
      %391 = vmatprep.subr.bf16.mxu0 0
      %392 = vmatpush1.bf16.msra.mxu0 0
      %393 = vmatprep.subr.bf16.mxu0 0
      %394 = vmatpush1.bf16.msra.mxu0 0
      %395 = vmatprep.mubr.bf16.mxu0 0
      %396 = vmatmul.mubr.bf16.gmra.mrb[0].mxu0 %v312
      %v397 = vpop.f32.mrb[0].mxu0
      %v398 = vadd.f32 0.0, %v397
      %v399 = vpop.f32.mrb[0].mxu0
      %v400 = vpop.f32.mrb[0].mxu0
      %v401 = vadd.f32 0.0, %v400
      %v402 = vpop.f32.mrb[0].mxu0
      %403 = vmatprep.mubr.bf16.mxu0 0
      %404 = vmatmul.mubr.bf16.gmra.mrb[0].mxu0 %v315
      %v405 = vpop.f32.mrb[0].mxu0
      %v406 = vadd.f32 0.0, %v405
      %v407 = vpop.f32.mrb[0].mxu0
      %v408 = vpop.f32.mrb[0].mxu0
      %v409 = vadd.f32 0.0, %v408
      %v410 = vpop.f32.mrb[0].mxu0
      %411 = vmatprep.mubr.bf16.mxu0 0
      %412 = vmatmul.mubr.bf16.gmra.mrb[0].mxu0 %v318
      %v413 = vpop.f32.mrb[0].mxu0
      %v414 = vadd.f32 0.0, %v413
      %v415 = vpop.f32.mrb[0].mxu0
      %v416 = vpop.f32.mrb[0].mxu0
      %v417 = vadd.f32 0.0, %v416
      %v418 = vpop.f32.mrb[0].mxu0
      %419 = vmatprep.mubr.bf16.mxu0 0
      %420 = vmatmul.mubr.bf16.gmra.mrb[0].mxu0 %v321
      %v421 = vpop.f32.mrb[0].mxu0
      %v422 = vadd.f32 0.0, %v421
      %v423 = vpop.f32.mrb[0].mxu0
      %v424 = vpop.f32.mrb[0].mxu0
      %v425 = vadd.f32 0.0, %v424
      %v426 = vpop.f32.mrb[0].mxu0
      %427 = vmatprep.mubr.bf16.mxu0 0
      %428 = vmatmul.mubr.bf16.gmra.mrb[0].mxu0 %v324
      %v429 = vpop.f32.mrb[0].mxu0
      %v430 = vadd.f32 0.0, %v429
      %v431 = vpop.f32.mrb[0].mxu0
      %v432 = vpop.f32.mrb[0].mxu0
      %v433 = vadd.f32 0.0, %v432
      %v434 = vpop.f32.mrb[0].mxu0
      %435 = vmatprep.mubr.bf16.mxu0 0
      %436 = vmatmul.mubr.bf16.gmra.mrb[0].mxu0 %v327
      %v437 = vpop.f32.mrb[0].mxu0
      %v438 = vadd.f32 0.0, %v437
      %v439 = vpop.f32.mrb[0].mxu0
      %v440 = vpop.f32.mrb[0].mxu0
      %v441 = vadd.f32 0.0, %v440
      %v442 = vpop.f32.mrb[0].mxu0
      %443 = vmatprep.mubr.bf16.mxu0 0
      %444 = vmatmul.mubr.bf16.gmra.mrb[0].mxu0 %v330
      %v445 = vpop.f32.mrb[0].mxu0
      %v446 = vadd.f32 0.0, %v445
      %v447 = vpop.f32.mrb[0].mxu0
      %v448 = vpop.f32.mrb[0].mxu0
      %v449 = vadd.f32 0.0, %v448
      %v450 = vpop.f32.mrb[0].mxu0
      %451 = vmatprep.mubr.bf16.mxu0 0
      %452 = vmatmul.mubr.bf16.gmra.mrb[0].mxu0 %v333
      %v453 = vpop.f32.mrb[0].mxu0
      %v454 = vadd.f32 0.0, %v453
      %v455 = vpop.f32.mrb[0].mxu0
      %v456 = vpop.f32.mrb[0].mxu0
      %v457 = vadd.f32 0.0, %v456
      %v458 = vpop.f32.mrb[0].mxu0
      %459 = vmatprep.mubr.bf16.mxu0 0
      %460 = vmatmul.mubr.bf16.gmra.mrb[0].mxu0 %v336
      %v461 = vpop.f32.mrb[0].mxu0
      %v462 = vadd.f32 0.0, %v461
      %v463 = vpop.f32.mrb[0].mxu0
      %v464 = vpop.f32.mrb[0].mxu0
      %v465 = vadd.f32 0.0, %v464
      %v466 = vpop.f32.mrb[0].mxu0
      %467 = vmatprep.mubr.bf16.mxu0 0
      %468 = vmatmul.mubr.bf16.gmra.mrb[0].mxu0 %v339
      %v469 = vpop.f32.mrb[0].mxu0
      %v470 = vadd.f32 0.0, %v469
      %v471 = vpop.f32.mrb[0].mxu0
      %v472 = vpop.f32.mrb[0].mxu0
      %v473 = vadd.f32 0.0, %v472
      %v474 = vpop.f32.mrb[0].mxu0
      %475 = vmatprep.mubr.bf16.mxu0 0
      %476 = vmatmul.mubr.bf16.gmra.mrb[0].mxu0 %v342
      %v477 = vpop.f32.mrb[0].mxu0
      %v478 = vadd.f32 0.0, %v477
      %v479 = vpop.f32.mrb[0].mxu0
      %v480 = vpop.f32.mrb[0].mxu0
      %v481 = vadd.f32 0.0, %v480
      %v482 = vpop.f32.mrb[0].mxu0
      %483 = vmatprep.mubr.bf16.mxu0 0
      %484 = vmatmul.mubr.bf16.gmra.mrb[0].mxu0 %v345
      %v485 = vpop.f32.mrb[0].mxu0
      %v486 = vadd.f32 0.0, %v485
      %v487 = vpop.f32.mrb[0].mxu0
      %v488 = vpop.f32.mrb[0].mxu0
      %v489 = vadd.f32 0.0, %v488
      %v490 = vpop.f32.mrb[0].mxu0
      %491 = vmatprep.mubr.bf16.mxu0 0
      %492 = vmatmul.mubr.bf16.gmra.mrb[0].mxu0 %v348
      %v493 = vpop.f32.mrb[0].mxu0
      %v494 = vadd.f32 0.0, %v493
      %v495 = vpop.f32.mrb[0].mxu0
      %v496 = vpop.f32.mrb[0].mxu0
      %v497 = vadd.f32 0.0, %v496
      %v498 = vpop.f32.mrb[0].mxu0
      %499 = vmatprep.mubr.bf16.mxu0 0
      %500 = vmatmul.mubr.bf16.gmra.mrb[0].mxu0 %v351
      %v501 = vpop.f32.mrb[0].mxu0
      %v502 = vadd.f32 0.0, %v501
      %v503 = vpop.f32.mrb[0].mxu0
      %v504 = vpop.f32.mrb[0].mxu0
      %v505 = vadd.f32 0.0, %v504
      %v506 = vpop.f32.mrb[0].mxu0
      %507 = vmatprep.mubr.bf16.mxu0 0
      %508 = vmatmul.mubr.bf16.gmra.mrb[0].mxu0 %v354
      %v509 = vpop.f32.mrb[0].mxu0
      %v510 = vadd.f32 0.0, %v509
      %v511 = vpop.f32.mrb[0].mxu0
      %v512 = vpop.f32.mrb[0].mxu0
      %v513 = vadd.f32 0.0, %v512
      %v514 = vpop.f32.mrb[0].mxu0
      %515 = vmatprep.mubr.bf16.mxu0 0
      %516 = vmatmul.mubr.bf16.gmra.mrb[0].mxu0 %v357
      %v517 = vpop.f32.mrb[0].mxu0
      %v518 = vadd.f32 0.0, %v517
      %v519 = vpop.f32.mrb[0].mxu0
      %v520 = vpop.f32.mrb[0].mxu0
      %v521 = vadd.f32 0.0, %v520
      %v522 = vpop.f32.mrb[0].mxu0
      %523 = vdwg.mxu0
      %v524 = vld [vmem:[%s2] sm:$0x1]
      %v526 = vlaneseq
      %v527 = vshrl.u32 %v526, 7
      %v528 = vsub.s32 0, %v527
      %v529 = vrot.slane %v524, %v528
      %v531 = vmul.f32 %v398, %v529
      %v532 = vmul.f32 %v401, %v529
      %v533 = vmul.f32 %v406, %v529
      %v534 = vmul.f32 %v409, %v529
      %v535 = vmul.f32 %v414, %v529
      %v536 = vmul.f32 %v417, %v529
      %v537 = vmul.f32 %v422, %v529
      %v538 = vmul.f32 %v425, %v529
      %v539 = vmul.f32 %v430, %v529
      %v540 = vmul.f32 %v433, %v529
      %v541 = vmul.f32 %v438, %v529
      %v542 = vmul.f32 %v441, %v529
      %v543 = vmul.f32 %v446, %v529
      %v544 = vmul.f32 %v449, %v529
      %v545 = vmul.f32 %v454, %v529
      %v546 = vmul.f32 %v457, %v529
      %v547 = vmul.f32 %v462, %v529
      %v548 = vmul.f32 %v465, %v529
      %v549 = vmul.f32 %v470, %v529
      %v550 = vmul.f32 %v473, %v529
      %v551 = vmul.f32 %v478, %v529
      %v552 = vmul.f32 %v481, %v529
      %v553 = vmul.f32 %v486, %v529
      %v554 = vmul.f32 %v489, %v529
      %v555 = vmul.f32 %v494, %v529
      %v556 = vmul.f32 %v497, %v529
      %v557 = vmul.f32 %v502, %v529
      %v558 = vmul.f32 %v505, %v529
      %v559 = vmul.f32 %v510, %v529
      %v560 = vmul.f32 %v513, %v529
      %v561 = vmul.f32 %v518, %v529
      %v562 = vmul.f32 %v521, %v529
      %v563 = vld [vmem:[%s3] sm:$0x1]
      %v565 = vlaneseq
      %v566 = vshrl.u32 %v565, 7
      %v567 = vsub.s32 0, %v566
      %v568 = vrot.slane %v563, %v567
      %v570 = vadd.f32 %v531, %v568
      %v571 = vadd.f32 %v532, %v568
      %v572 = vadd.f32 %v533, %v568
      %v573 = vadd.f32 %v534, %v568
      %v574 = vadd.f32 %v535, %v568
      %v575 = vadd.f32 %v536, %v568
      %v576 = vadd.f32 %v537, %v568
      %v577 = vadd.f32 %v538, %v568
      %v578 = vadd.f32 %v539, %v568
      %v579 = vadd.f32 %v540, %v568
      %v580 = vadd.f32 %v541, %v568
      %v581 = vadd.f32 %v542, %v568
      %v582 = vadd.f32 %v543, %v568
      %v583 = vadd.f32 %v544, %v568
      %v584 = vadd.f32 %v545, %v568
      %v585 = vadd.f32 %v546, %v568
      %v586 = vadd.f32 %v547, %v568
      %v587 = vadd.f32 %v548, %v568
      %v588 = vadd.f32 %v549, %v568
      %v589 = vadd.f32 %v550, %v568
      %v590 = vadd.f32 %v551, %v568
      %v591 = vadd.f32 %v552, %v568
      %v592 = vadd.f32 %v553, %v568
      %v593 = vadd.f32 %v554, %v568
      %v594 = vadd.f32 %v555, %v568
      %v595 = vadd.f32 %v556, %v568
      %v596 = vadd.f32 %v557, %v568
      %v597 = vadd.f32 %v558, %v568
      %v598 = vadd.f32 %v559, %v568
      %v599 = vadd.f32 %v560, %v568
      %v600 = vadd.f32 %v561, %v568
      %v601 = vadd.f32 %v562, %v568
      %v602 = vpack.c.bf16 %v571, %v570
      %v603 = vpack.c.bf16 %v573, %v572
      %v604 = vpack.c.bf16 %v575, %v574
      %v605 = vpack.c.bf16 %v577, %v576
      %v606 = vpack.c.bf16 %v579, %v578
      %v607 = vpack.c.bf16 %v581, %v580
      %v608 = vpack.c.bf16 %v583, %v582
      %v609 = vpack.c.bf16 %v585, %v584
      %v610 = vpack.c.bf16 %v587, %v586
      %v611 = vpack.c.bf16 %v589, %v588
      %v612 = vpack.c.bf16 %v591, %v590
      %v613 = vpack.c.bf16 %v593, %v592
      %v614 = vpack.c.bf16 %v595, %v594
      %v615 = vpack.c.bf16 %v597, %v596
      %v616 = vpack.c.bf16 %v599, %v598
      %v617 = vpack.c.bf16 %v601, %v600
      %619 = vrot.lane.b32.xlu0 %v602, 124
      %v620 = vpop.permute.xlu0 %619
      %vm621 = vcmask 15360
      %v623 = vsel %vm621, %v602, 0
      %v626 = vsel %vm621, %v620, 0
      %628 = vmatprep.subr.bf16.mxu0 0
      %629 = vmatpush1.bf16.xpose.msra.mxu0 %v626
      %630 = vmatprep.subr.bf16.mxu0 0
      %631 = vmatpush1.bf16.xpose.msra.mxu0 0
      %632 = vmatprep.subr.bf16.mxu0 0
      %633 = vmatpush1.bf16.xpose.msra.mxu0 0
      %634 = vmatprep.subr.bf16.mxu0 0
      %635 = vmatpush1.bf16.xpose.msra.mxu0 0
      %636 = vmatprep.subr.bf16.mxu0 0
      %637 = vmatpush1.bf16.xpose.msra.mxu0 0
      %638 = vmatprep.subr.bf16.mxu0 0
      %639 = vmatpush1.bf16.xpose.msra.mxu0 0
      %640 = vmatprep.subr.bf16.mxu0 0
      %641 = vmatpush1.bf16.xpose.msra.mxu0 0
      %642 = vmatprep.subr.bf16.mxu0 0
      %643 = vmatpush1.bf16.xpose.msra.mxu0 0
      %644 = vmatprep.subr.bf16.mxu0 0
      %645 = vmatpush1.bf16.xpose.msra.mxu0 0
      %646 = vmatprep.subr.bf16.mxu0 0
      %647 = vmatpush1.bf16.xpose.msra.mxu0 0
      %648 = vmatprep.subr.bf16.mxu0 0
      %649 = vmatpush1.bf16.xpose.msra.mxu0 0
      %650 = vmatprep.subr.bf16.mxu0 0
      %651 = vmatpush1.bf16.xpose.msra.mxu0 0
      %652 = vmatprep.subr.bf16.mxu0 0
      %653 = vmatpush1.bf16.xpose.msra.mxu0 0
      %654 = vmatprep.subr.bf16.mxu0 0
      %655 = vmatpush1.bf16.xpose.msra.mxu0 0
      %656 = vmatprep.subr.bf16.mxu0 0
      %657 = vmatpush1.bf16.xpose.msra.mxu0 0
      %658 = vmatprep.subr.bf16.mxu0 0
      %659 = vmatpush1.bf16.xpose.msra.mxu0 0
      %660 = vmatprep.mubr.bf16.mxu0 0
      %661 = vmatmul.mubr.bf16.gmra.mrb[0].mxu0 %v623
      %v662 = vpop.f32.mrb[0].mxu0
      %v663 = vadd.f32 0.0, %v662
      %v664 = vpop.f32.mrb[0].mxu0
      %v665 = vpop.f32.mrb[0].mxu0
      %v666 = vadd.f32 0.0, %v665
      %v667 = vpop.f32.mrb[0].mxu0
      %668 = vdwg.mxu0
      %670 = vrot.lane.b32.xlu0 %v603, 124
      %v671 = vpop.permute.xlu0 %670
      %v673 = vsel %vm621, %v603, 0
      %v676 = vsel %vm621, %v671, 0
      %678 = vmatprep.subr.bf16.mxu0 0
      %679 = vmatpush1.bf16.xpose.msra.mxu0 %v676
      %680 = vmatprep.subr.bf16.mxu0 0
      %681 = vmatpush1.bf16.xpose.msra.mxu0 0
      %682 = vmatprep.subr.bf16.mxu0 0
      %683 = vmatpush1.bf16.xpose.msra.mxu0 0
      %684 = vmatprep.subr.bf16.mxu0 0
      %685 = vmatpush1.bf16.xpose.msra.mxu0 0
      %686 = vmatprep.subr.bf16.mxu0 0
      %687 = vmatpush1.bf16.xpose.msra.mxu0 0
      %688 = vmatprep.subr.bf16.mxu0 0
      %689 = vmatpush1.bf16.xpose.msra.mxu0 0
      %690 = vmatprep.subr.bf16.mxu0 0
      %691 = vmatpush1.bf16.xpose.msra.mxu0 0
      %692 = vmatprep.subr.bf16.mxu0 0
      %693 = vmatpush1.bf16.xpose.msra.mxu0 0
      %694 = vmatprep.subr.bf16.mxu0 0
      %695 = vmatpush1.bf16.xpose.msra.mxu0 0
      %696 = vmatprep.subr.bf16.mxu0 0
      %697 = vmatpush1.bf16.xpose.msra.mxu0 0
      %698 = vmatprep.subr.bf16.mxu0 0
      %699 = vmatpush1.bf16.xpose.msra.mxu0 0
      %700 = vmatprep.subr.bf16.mxu0 0
      %701 = vmatpush1.bf16.xpose.msra.mxu0 0
      %702 = vmatprep.subr.bf16.mxu0 0
      %703 = vmatpush1.bf16.xpose.msra.mxu0 0
      %704 = vmatprep.subr.bf16.mxu0 0
      %705 = vmatpush1.bf16.xpose.msra.mxu0 0
      %706 = vmatprep.subr.bf16.mxu0 0
      %707 = vmatpush1.bf16.xpose.msra.mxu0 0
      %708 = vmatprep.subr.bf16.mxu0 0
      %709 = vmatpush1.bf16.xpose.msra.mxu0 0
      %710 = vmatprep.mubr.bf16.mxu0 0
      %711 = vmatmul.mubr.bf16.gmra.mrb[0].mxu0 %v673
      %v712 = vpop.f32.mrb[0].mxu0
      %v713 = vadd.f32 0.0, %v712
      %v714 = vpop.f32.mrb[0].mxu0
      %v715 = vpop.f32.mrb[0].mxu0
      %v716 = vadd.f32 0.0, %v715
      %v717 = vpop.f32.mrb[0].mxu0
      %718 = vdwg.mxu0
      %720 = vrot.lane.b32.xlu0 %v604, 124
      %v721 = vpop.permute.xlu0 %720
      %v723 = vsel %vm621, %v604, 0
      %v726 = vsel %vm621, %v721, 0
      %728 = vmatprep.subr.bf16.mxu0 0
      %729 = vmatpush1.bf16.xpose.msra.mxu0 %v726
      %730 = vmatprep.subr.bf16.mxu0 0
      %731 = vmatpush1.bf16.xpose.msra.mxu0 0
      %732 = vmatprep.subr.bf16.mxu0 0
      %733 = vmatpush1.bf16.xpose.msra.mxu0 0
      %734 = vmatprep.subr.bf16.mxu0 0
      %735 = vmatpush1.bf16.xpose.msra.mxu0 0
      %736 = vmatprep.subr.bf16.mxu0 0
      %737 = vmatpush1.bf16.xpose.msra.mxu0 0
      %738 = vmatprep.subr.bf16.mxu0 0
      %739 = vmatpush1.bf16.xpose.msra.mxu0 0
      %740 = vmatprep.subr.bf16.mxu0 0
      %741 = vmatpush1.bf16.xpose.msra.mxu0 0
      %742 = vmatprep.subr.bf16.mxu0 0
      %743 = vmatpush1.bf16.xpose.msra.mxu0 0
      %744 = vmatprep.subr.bf16.mxu0 0
      %745 = vmatpush1.bf16.xpose.msra.mxu0 0
      %746 = vmatprep.subr.bf16.mxu0 0
      %747 = vmatpush1.bf16.xpose.msra.mxu0 0
      %748 = vmatprep.subr.bf16.mxu0 0
      %749 = vmatpush1.bf16.xpose.msra.mxu0 0
      %750 = vmatprep.subr.bf16.mxu0 0
      %751 = vmatpush1.bf16.xpose.msra.mxu0 0
      %752 = vmatprep.subr.bf16.mxu0 0
      %753 = vmatpush1.bf16.xpose.msra.mxu0 0
      %754 = vmatprep.subr.bf16.mxu0 0
      %755 = vmatpush1.bf16.xpose.msra.mxu0 0
      %756 = vmatprep.subr.bf16.mxu0 0
      %757 = vmatpush1.bf16.xpose.msra.mxu0 0
      %758 = vmatprep.subr.bf16.mxu0 0
      %759 = vmatpush1.bf16.xpose.msra.mxu0 0
      %760 = vmatprep.mubr.bf16.mxu0 0
      %761 = vmatmul.mubr.bf16.gmra.mrb[0].mxu0 %v723
      %v762 = vpop.f32.mrb[0].mxu0
      %v763 = vadd.f32 0.0, %v762
      %v764 = vpop.f32.mrb[0].mxu0
      %v765 = vpop.f32.mrb[0].mxu0
      %v766 = vadd.f32 0.0, %v765
      %v767 = vpop.f32.mrb[0].mxu0
      %768 = vdwg.mxu0
      %770 = vrot.lane.b32.xlu0 %v605, 124
      %v771 = vpop.permute.xlu0 %770
      %v773 = vsel %vm621, %v605, 0
      %v776 = vsel %vm621, %v771, 0
      %778 = vmatprep.subr.bf16.mxu0 0
      %779 = vmatpush1.bf16.xpose.msra.mxu0 %v776
      %780 = vmatprep.subr.bf16.mxu0 0
      %781 = vmatpush1.bf16.xpose.msra.mxu0 0
      %782 = vmatprep.subr.bf16.mxu0 0
      %783 = vmatpush1.bf16.xpose.msra.mxu0 0
      %784 = vmatprep.subr.bf16.mxu0 0
      %785 = vmatpush1.bf16.xpose.msra.mxu0 0
      %786 = vmatprep.subr.bf16.mxu0 0
      %787 = vmatpush1.bf16.xpose.msra.mxu0 0
      %788 = vmatprep.subr.bf16.mxu0 0
      %789 = vmatpush1.bf16.xpose.msra.mxu0 0
      %790 = vmatprep.subr.bf16.mxu0 0
      %791 = vmatpush1.bf16.xpose.msra.mxu0 0
      %792 = vmatprep.subr.bf16.mxu0 0
      %793 = vmatpush1.bf16.xpose.msra.mxu0 0
      %794 = vmatprep.subr.bf16.mxu0 0
      %795 = vmatpush1.bf16.xpose.msra.mxu0 0
      %796 = vmatprep.subr.bf16.mxu0 0
      %797 = vmatpush1.bf16.xpose.msra.mxu0 0
      %798 = vmatprep.subr.bf16.mxu0 0
      %799 = vmatpush1.bf16.xpose.msra.mxu0 0
      %800 = vmatprep.subr.bf16.mxu0 0
      %801 = vmatpush1.bf16.xpose.msra.mxu0 0
      %802 = vmatprep.subr.bf16.mxu0 0
      %803 = vmatpush1.bf16.xpose.msra.mxu0 0
      %804 = vmatprep.subr.bf16.mxu0 0
      %805 = vmatpush1.bf16.xpose.msra.mxu0 0
      %806 = vmatprep.subr.bf16.mxu0 0
      %807 = vmatpush1.bf16.xpose.msra.mxu0 0
      %808 = vmatprep.subr.bf16.mxu0 0
      %809 = vmatpush1.bf16.xpose.msra.mxu0 0
      %810 = vmatprep.mubr.bf16.mxu0 0
      %811 = vmatmul.mubr.bf16.gmra.mrb[0].mxu0 %v773
      %v812 = vpop.f32.mrb[0].mxu0
      %v813 = vadd.f32 0.0, %v812
      %v814 = vpop.f32.mrb[0].mxu0
      %v815 = vpop.f32.mrb[0].mxu0
      %v816 = vadd.f32 0.0, %v815
      %v817 = vpop.f32.mrb[0].mxu0
      %818 = vdwg.mxu0
      %820 = vrot.lane.b32.xlu0 %v606, 124
      %v821 = vpop.permute.xlu0 %820
      %v823 = vsel %vm621, %v606, 0
      %v826 = vsel %vm621, %v821, 0
      %828 = vmatprep.subr.bf16.mxu0 0
      %829 = vmatpush1.bf16.xpose.msra.mxu0 %v826
      %830 = vmatprep.subr.bf16.mxu0 0
      %831 = vmatpush1.bf16.xpose.msra.mxu0 0
      %832 = vmatprep.subr.bf16.mxu0 0
      %833 = vmatpush1.bf16.xpose.msra.mxu0 0
      %834 = vmatprep.subr.bf16.mxu0 0
      %835 = vmatpush1.bf16.xpose.msra.mxu0 0
      %836 = vmatprep.subr.bf16.mxu0 0
      %837 = vmatpush1.bf16.xpose.msra.mxu0 0
      %838 = vmatprep.subr.bf16.mxu0 0
      %839 = vmatpush1.bf16.xpose.msra.mxu0 0
      %840 = vmatprep.subr.bf16.mxu0 0
      %841 = vmatpush1.bf16.xpose.msra.mxu0 0
      %842 = vmatprep.subr.bf16.mxu0 0
      %843 = vmatpush1.bf16.xpose.msra.mxu0 0
      %844 = vmatprep.subr.bf16.mxu0 0
      %845 = vmatpush1.bf16.xpose.msra.mxu0 0
      %846 = vmatprep.subr.bf16.mxu0 0
      %847 = vmatpush1.bf16.xpose.msra.mxu0 0
      %848 = vmatprep.subr.bf16.mxu0 0
      %849 = vmatpush1.bf16.xpose.msra.mxu0 0
      %850 = vmatprep.subr.bf16.mxu0 0
      %851 = vmatpush1.bf16.xpose.msra.mxu0 0
      %852 = vmatprep.subr.bf16.mxu0 0
      %853 = vmatpush1.bf16.xpose.msra.mxu0 0
      %854 = vmatprep.subr.bf16.mxu0 0
      %855 = vmatpush1.bf16.xpose.msra.mxu0 0
      %856 = vmatprep.subr.bf16.mxu0 0
      %857 = vmatpush1.bf16.xpose.msra.mxu0 0
      %858 = vmatprep.subr.bf16.mxu0 0
      %859 = vmatpush1.bf16.xpose.msra.mxu0 0
      %860 = vmatprep.mubr.bf16.mxu0 0
      %861 = vmatmul.mubr.bf16.gmra.mrb[0].mxu0 %v823
      %v862 = vpop.f32.mrb[0].mxu0
      %v863 = vadd.f32 0.0, %v862
      %v864 = vpop.f32.mrb[0].mxu0
      %v865 = vpop.f32.mrb[0].mxu0
      %v866 = vadd.f32 0.0, %v865
      %v867 = vpop.f32.mrb[0].mxu0
      %868 = vdwg.mxu0
      %870 = vrot.lane.b32.xlu0 %v607, 124
      %v871 = vpop.permute.xlu0 %870
      %v873 = vsel %vm621, %v607, 0
      %v876 = vsel %vm621, %v871, 0
      %878 = vmatprep.subr.bf16.mxu0 0
      %879 = vmatpush1.bf16.xpose.msra.mxu0 %v876
      %880 = vmatprep.subr.bf16.mxu0 0
      %881 = vmatpush1.bf16.xpose.msra.mxu0 0
      %882 = vmatprep.subr.bf16.mxu0 0
      %883 = vmatpush1.bf16.xpose.msra.mxu0 0
      %884 = vmatprep.subr.bf16.mxu0 0
      %885 = vmatpush1.bf16.xpose.msra.mxu0 0
      %886 = vmatprep.subr.bf16.mxu0 0
      %887 = vmatpush1.bf16.xpose.msra.mxu0 0
      %888 = vmatprep.subr.bf16.mxu0 0
      %889 = vmatpush1.bf16.xpose.msra.mxu0 0
      %890 = vmatprep.subr.bf16.mxu0 0
      %891 = vmatpush1.bf16.xpose.msra.mxu0 0
      %892 = vmatprep.subr.bf16.mxu0 0
      %893 = vmatpush1.bf16.xpose.msra.mxu0 0
      %894 = vmatprep.subr.bf16.mxu0 0
      %895 = vmatpush1.bf16.xpose.msra.mxu0 0
      %896 = vmatprep.subr.bf16.mxu0 0
      %897 = vmatpush1.bf16.xpose.msra.mxu0 0
      %898 = vmatprep.subr.bf16.mxu0 0
      %899 = vmatpush1.bf16.xpose.msra.mxu0 0
      %900 = vmatprep.subr.bf16.mxu0 0
      %901 = vmatpush1.bf16.xpose.msra.mxu0 0
      %902 = vmatprep.subr.bf16.mxu0 0
      %903 = vmatpush1.bf16.xpose.msra.mxu0 0
      %904 = vmatprep.subr.bf16.mxu0 0
      %905 = vmatpush1.bf16.xpose.msra.mxu0 0
      %906 = vmatprep.subr.bf16.mxu0 0
      %907 = vmatpush1.bf16.xpose.msra.mxu0 0
      %908 = vmatprep.subr.bf16.mxu0 0
      %909 = vmatpush1.bf16.xpose.msra.mxu0 0
      %910 = vmatprep.mubr.bf16.mxu0 0
      %911 = vmatmul.mubr.bf16.gmra.mrb[0].mxu0 %v873
      %v912 = vpop.f32.mrb[0].mxu0
      %v913 = vadd.f32 0.0, %v912
      %v914 = vpop.f32.mrb[0].mxu0
      %v915 = vpop.f32.mrb[0].mxu0
      %v916 = vadd.f32 0.0, %v915
      %v917 = vpop.f32.mrb[0].mxu0
      %918 = vdwg.mxu0
      %920 = vrot.lane.b32.xlu0 %v608, 124
      %v921 = vpop.permute.xlu0 %920
      %v923 = vsel %vm621, %v608, 0
      %v926 = vsel %vm621, %v921, 0
      %928 = vmatprep.subr.bf16.mxu0 0
      %929 = vmatpush1.bf16.xpose.msra.mxu0 %v926
      %930 = vmatprep.subr.bf16.mxu0 0
      %931 = vmatpush1.bf16.xpose.msra.mxu0 0
      %932 = vmatprep.subr.bf16.mxu0 0
      %933 = vmatpush1.bf16.xpose.msra.mxu0 0
      %934 = vmatprep.subr.bf16.mxu0 0
      %935 = vmatpush1.bf16.xpose.msra.mxu0 0
      %936 = vmatprep.subr.bf16.mxu0 0
      %937 = vmatpush1.bf16.xpose.msra.mxu0 0
      %938 = vmatprep.subr.bf16.mxu0 0
      %939 = vmatpush1.bf16.xpose.msra.mxu0 0
      %940 = vmatprep.subr.bf16.mxu0 0
      %941 = vmatpush1.bf16.xpose.msra.mxu0 0
      %942 = vmatprep.subr.bf16.mxu0 0
      %943 = vmatpush1.bf16.xpose.msra.mxu0 0
      %944 = vmatprep.subr.bf16.mxu0 0
      %945 = vmatpush1.bf16.xpose.msra.mxu0 0
      %946 = vmatprep.subr.bf16.mxu0 0
      %947 = vmatpush1.bf16.xpose.msra.mxu0 0
      %948 = vmatprep.subr.bf16.mxu0 0
      %949 = vmatpush1.bf16.xpose.msra.mxu0 0
      %950 = vmatprep.subr.bf16.mxu0 0
      %951 = vmatpush1.bf16.xpose.msra.mxu0 0
      %952 = vmatprep.subr.bf16.mxu0 0
      %953 = vmatpush1.bf16.xpose.msra.mxu0 0
      %954 = vmatprep.subr.bf16.mxu0 0
      %955 = vmatpush1.bf16.xpose.msra.mxu0 0
      %956 = vmatprep.subr.bf16.mxu0 0
      %957 = vmatpush1.bf16.xpose.msra.mxu0 0
      %958 = vmatprep.subr.bf16.mxu0 0
      %959 = vmatpush1.bf16.xpose.msra.mxu0 0
      %960 = vmatprep.mubr.bf16.mxu0 0
      %961 = vmatmul.mubr.bf16.gmra.mrb[0].mxu0 %v923
      %v962 = vpop.f32.mrb[0].mxu0
      %v963 = vadd.f32 0.0, %v962
      %v964 = vpop.f32.mrb[0].mxu0
      %v965 = vpop.f32.mrb[0].mxu0
      %v966 = vadd.f32 0.0, %v965
      %v967 = vpop.f32.mrb[0].mxu0
      %968 = vdwg.mxu0
      %970 = vrot.lane.b32.xlu0 %v609, 124
      %v971 = vpop.permute.xlu0 %970
      %v973 = vsel %vm621, %v609, 0
      %v976 = vsel %vm621, %v971, 0
      %978 = vmatprep.subr.bf16.mxu0 0
      %979 = vmatpush1.bf16.xpose.msra.mxu0 %v976
      %980 = vmatprep.subr.bf16.mxu0 0
      %981 = vmatpush1.bf16.xpose.msra.mxu0 0
      %982 = vmatprep.subr.bf16.mxu0 0
      %983 = vmatpush1.bf16.xpose.msra.mxu0 0
      %984 = vmatprep.subr.bf16.mxu0 0
      %985 = vmatpush1.bf16.xpose.msra.mxu0 0
      %986 = vmatprep.subr.bf16.mxu0 0
      %987 = vmatpush1.bf16.xpose.msra.mxu0 0
      %988 = vmatprep.subr.bf16.mxu0 0
      %989 = vmatpush1.bf16.xpose.msra.mxu0 0
      %990 = vmatprep.subr.bf16.mxu0 0
      %991 = vmatpush1.bf16.xpose.msra.mxu0 0
      %992 = vmatprep.subr.bf16.mxu0 0
      %993 = vmatpush1.bf16.xpose.msra.mxu0 0
      %994 = vmatprep.subr.bf16.mxu0 0
      %995 = vmatpush1.bf16.xpose.msra.mxu0 0
      %996 = vmatprep.subr.bf16.mxu0 0
      %997 = vmatpush1.bf16.xpose.msra.mxu0 0
      %998 = vmatprep.subr.bf16.mxu0 0
      %999 = vmatpush1.bf16.xpose.msra.mxu0 0
      %1000 = vmatprep.subr.bf16.mxu0 0
      %1001 = vmatpush1.bf16.xpose.msra.mxu0 0
      %1002 = vmatprep.subr.bf16.mxu0 0
      %1003 = vmatpush1.bf16.xpose.msra.mxu0 0
      %1004 = vmatprep.subr.bf16.mxu0 0
      %1005 = vmatpush1.bf16.xpose.msra.mxu0 0
      %1006 = vmatprep.subr.bf16.mxu0 0
      %1007 = vmatpush1.bf16.xpose.msra.mxu0 0
      %1008 = vmatprep.subr.bf16.mxu0 0
      %1009 = vmatpush1.bf16.xpose.msra.mxu0 0
      %1010 = vmatprep.mubr.bf16.mxu0 0
      %1011 = vmatmul.mubr.bf16.gmra.mrb[0].mxu0 %v973
      %v1012 = vpop.f32.mrb[0].mxu0
      %v1013 = vadd.f32 0.0, %v1012
      %v1014 = vpop.f32.mrb[0].mxu0
      %v1015 = vpop.f32.mrb[0].mxu0
      %v1016 = vadd.f32 0.0, %v1015
      %v1017 = vpop.f32.mrb[0].mxu0
      %1018 = vdwg.mxu0
      %1020 = vrot.lane.b32.xlu0 %v610, 124
      %v1021 = vpop.permute.xlu0 %1020
      %v1023 = vsel %vm621, %v610, 0
      %v1026 = vsel %vm621, %v1021, 0
      %1028 = vmatprep.subr.bf16.mxu0 0
      %1029 = vmatpush1.bf16.xpose.msra.mxu0 %v1026
      %1030 = vmatprep.subr.bf16.mxu0 0
      %1031 = vmatpush1.bf16.xpose.msra.mxu0 0
      %1032 = vmatprep.subr.bf16.mxu0 0
      %1033 = vmatpush1.bf16.xpose.msra.mxu0 0
      %1034 = vmatprep.subr.bf16.mxu0 0
      %1035 = vmatpush1.bf16.xpose.msra.mxu0 0
      %1036 = vmatprep.subr.bf16.mxu0 0
      %1037 = vmatpush1.bf16.xpose.msra.mxu0 0
      %1038 = vmatprep.subr.bf16.mxu0 0
      %1039 = vmatpush1.bf16.xpose.msra.mxu0 0
      %1040 = vmatprep.subr.bf16.mxu0 0
      %1041 = vmatpush1.bf16.xpose.msra.mxu0 0
      %1042 = vmatprep.subr.bf16.mxu0 0
      %1043 = vmatpush1.bf16.xpose.msra.mxu0 0
      %1044 = vmatprep.subr.bf16.mxu0 0
      %1045 = vmatpush1.bf16.xpose.msra.mxu0 0
      %1046 = vmatprep.subr.bf16.mxu0 0
      %1047 = vmatpush1.bf16.xpose.msra.mxu0 0
      %1048 = vmatprep.subr.bf16.mxu0 0
      %1049 = vmatpush1.bf16.xpose.msra.mxu0 0
      %1050 = vmatprep.subr.bf16.mxu0 0
      %1051 = vmatpush1.bf16.xpose.msra.mxu0 0
      %1052 = vmatprep.subr.bf16.mxu0 0
      %1053 = vmatpush1.bf16.xpose.msra.mxu0 0
      %1054 = vmatprep.subr.bf16.mxu0 0
      %1055 = vmatpush1.bf16.xpose.msra.mxu0 0
      %1056 = vmatprep.subr.bf16.mxu0 0
      %1057 = vmatpush1.bf16.xpose.msra.mxu0 0
      %1058 = vmatprep.subr.bf16.mxu0 0
      %1059 = vmatpush1.bf16.xpose.msra.mxu0 0
      %1060 = vmatprep.mubr.bf16.mxu0 0
      %1061 = vmatmul.mubr.bf16.gmra.mrb[0].mxu0 %v1023
      %v1062 = vpop.f32.mrb[0].mxu0
      %v1063 = vadd.f32 0.0, %v1062
      %v1064 = vpop.f32.mrb[0].mxu0
      %v1065 = vpop.f32.mrb[0].mxu0
      %v1066 = vadd.f32 0.0, %v1065
      %v1067 = vpop.f32.mrb[0].mxu0
      %1068 = vdwg.mxu0
      %1070 = vrot.lane.b32.xlu0 %v611, 124
      %v1071 = vpop.permute.xlu0 %1070
      %v1073 = vsel %vm621, %v611, 0
      %v1076 = vsel %vm621, %v1071, 0
      %1078 = vmatprep.subr.bf16.mxu0 0
      %1079 = vmatpush1.bf16.xpose.msra.mxu0 %v1076
      %1080 = vmatprep.subr.bf16.mxu0 0
      %1081 = vmatpush1.bf16.xpose.msra.mxu0 0
      %1082 = vmatprep.subr.bf16.mxu0 0
      %1083 = vmatpush1.bf16.xpose.msra.mxu0 0
      %1084 = vmatprep.subr.bf16.mxu0 0
      %1085 = vmatpush1.bf16.xpose.msra.mxu0 0
      %1086 = vmatprep.subr.bf16.mxu0 0
      %1087 = vmatpush1.bf16.xpose.msra.mxu0 0
      %1088 = vmatprep.subr.bf16.mxu0 0
      %1089 = vmatpush1.bf16.xpose.msra.mxu0 0
      %1090 = vmatprep.subr.bf16.mxu0 0
      %1091 = vmatpush1.bf16.xpose.msra.mxu0 0
      %1092 = vmatprep.subr.bf16.mxu0 0
      %1093 = vmatpush1.bf16.xpose.msra.mxu0 0
      %1094 = vmatprep.subr.bf16.mxu0 0
      %1095 = vmatpush1.bf16.xpose.msra.mxu0 0
      %1096 = vmatprep.subr.bf16.mxu0 0
      %1097 = vmatpush1.bf16.xpose.msra.mxu0 0
      %1098 = vmatprep.subr.bf16.mxu0 0
      %1099 = vmatpush1.bf16.xpose.msra.mxu0 0
      %1100 = vmatprep.subr.bf16.mxu0 0
      %1101 = vmatpush1.bf16.xpose.msra.mxu0 0
      %1102 = vmatprep.subr.bf16.mxu0 0
      %1103 = vmatpush1.bf16.xpose.msra.mxu0 0
      %1104 = vmatprep.subr.bf16.mxu0 0
      %1105 = vmatpush1.bf16.xpose.msra.mxu0 0
      %1106 = vmatprep.subr.bf16.mxu0 0
      %1107 = vmatpush1.bf16.xpose.msra.mxu0 0
      %1108 = vmatprep.subr.bf16.mxu0 0
      %1109 = vmatpush1.bf16.xpose.msra.mxu0 0
      %1110 = vmatprep.mubr.bf16.mxu0 0
      %1111 = vmatmul.mubr.bf16.gmra.mrb[0].mxu0 %v1073
      %v1112 = vpop.f32.mrb[0].mxu0
      %v1113 = vadd.f32 0.0, %v1112
      %v1114 = vpop.f32.mrb[0].mxu0
      %v1115 = vpop.f32.mrb[0].mxu0
      %v1116 = vadd.f32 0.0, %v1115
      %v1117 = vpop.f32.mrb[0].mxu0
      %1118 = vdwg.mxu0
      %1120 = vrot.lane.b32.xlu0 %v612, 124
      %v1121 = vpop.permute.xlu0 %1120
      %v1123 = vsel %vm621, %v612, 0
      %v1126 = vsel %vm621, %v1121, 0
      %1128 = vmatprep.subr.bf16.mxu0 0
      %1129 = vmatpush1.bf16.xpose.msra.mxu0 %v1126
      %1130 = vmatprep.subr.bf16.mxu0 0
      %1131 = vmatpush1.bf16.xpose.msra.mxu0 0
      %1132 = vmatprep.subr.bf16.mxu0 0
      %1133 = vmatpush1.bf16.xpose.msra.mxu0 0
      %1134 = vmatprep.subr.bf16.mxu0 0
      %1135 = vmatpush1.bf16.xpose.msra.mxu0 0
      %1136 = vmatprep.subr.bf16.mxu0 0
      %1137 = vmatpush1.bf16.xpose.msra.mxu0 0
      %1138 = vmatprep.subr.bf16.mxu0 0
      %1139 = vmatpush1.bf16.xpose.msra.mxu0 0
      %1140 = vmatprep.subr.bf16.mxu0 0
      %1141 = vmatpush1.bf16.xpose.msra.mxu0 0
      %1142 = vmatprep.subr.bf16.mxu0 0
      %1143 = vmatpush1.bf16.xpose.msra.mxu0 0
      %1144 = vmatprep.subr.bf16.mxu0 0
      %1145 = vmatpush1.bf16.xpose.msra.mxu0 0
      %1146 = vmatprep.subr.bf16.mxu0 0
      %1147 = vmatpush1.bf16.xpose.msra.mxu0 0
      %1148 = vmatprep.subr.bf16.mxu0 0
      %1149 = vmatpush1.bf16.xpose.msra.mxu0 0
      %1150 = vmatprep.subr.bf16.mxu0 0
      %1151 = vmatpush1.bf16.xpose.msra.mxu0 0
      %1152 = vmatprep.subr.bf16.mxu0 0
      %1153 = vmatpush1.bf16.xpose.msra.mxu0 0
      %1154 = vmatprep.subr.bf16.mxu0 0
      %1155 = vmatpush1.bf16.xpose.msra.mxu0 0
      %1156 = vmatprep.subr.bf16.mxu0 0
      %1157 = vmatpush1.bf16.xpose.msra.mxu0 0
      %1158 = vmatprep.subr.bf16.mxu0 0
      %1159 = vmatpush1.bf16.xpose.msra.mxu0 0
      %1160 = vmatprep.mubr.bf16.mxu0 0
      %1161 = vmatmul.mubr.bf16.gmra.mrb[0].mxu0 %v1123
      %v1162 = vpop.f32.mrb[0].mxu0
      %v1163 = vadd.f32 0.0, %v1162
      %v1164 = vpop.f32.mrb[0].mxu0
      %v1165 = vpop.f32.mrb[0].mxu0
      %v1166 = vadd.f32 0.0, %v1165
      %v1167 = vpop.f32.mrb[0].mxu0
      %1168 = vdwg.mxu0
      %1170 = vrot.lane.b32.xlu0 %v613, 124
      %v1171 = vpop.permute.xlu0 %1170
      %v1173 = vsel %vm621, %v613, 0
      %v1176 = vsel %vm621, %v1171, 0
      %1178 = vmatprep.subr.bf16.mxu0 0
      %1179 = vmatpush1.bf16.xpose.msra.mxu0 %v1176
      %1180 = vmatprep.subr.bf16.mxu0 0
      %1181 = vmatpush1.bf16.xpose.msra.mxu0 0
      %1182 = vmatprep.subr.bf16.mxu0 0
      %1183 = vmatpush1.bf16.xpose.msra.mxu0 0
      %1184 = vmatprep.subr.bf16.mxu0 0
      %1185 = vmatpush1.bf16.xpose.msra.mxu0 0
      %1186 = vmatprep.subr.bf16.mxu0 0
      %1187 = vmatpush1.bf16.xpose.msra.mxu0 0
      %1188 = vmatprep.subr.bf16.mxu0 0
      %1189 = vmatpush1.bf16.xpose.msra.mxu0 0
      %1190 = vmatprep.subr.bf16.mxu0 0
      %1191 = vmatpush1.bf16.xpose.msra.mxu0 0
      %1192 = vmatprep.subr.bf16.mxu0 0
      %1193 = vmatpush1.bf16.xpose.msra.mxu0 0
      %1194 = vmatprep.subr.bf16.mxu0 0
      %1195 = vmatpush1.bf16.xpose.msra.mxu0 0
      %1196 = vmatprep.subr.bf16.mxu0 0
      %1197 = vmatpush1.bf16.xpose.msra.mxu0 0
      %1198 = vmatprep.subr.bf16.mxu0 0
      %1199 = vmatpush1.bf16.xpose.msra.mxu0 0
      %1200 = vmatprep.subr.bf16.mxu0 0
      %1201 = vmatpush1.bf16.xpose.msra.mxu0 0
      %1202 = vmatprep.subr.bf16.mxu0 0
      %1203 = vmatpush1.bf16.xpose.msra.mxu0 0
      %1204 = vmatprep.subr.bf16.mxu0 0
      %1205 = vmatpush1.bf16.xpose.msra.mxu0 0
      %1206 = vmatprep.subr.bf16.mxu0 0
      %1207 = vmatpush1.bf16.xpose.msra.mxu0 0
      %1208 = vmatprep.subr.bf16.mxu0 0
      %1209 = vmatpush1.bf16.xpose.msra.mxu0 0
      %1210 = vmatprep.mubr.bf16.mxu0 0
      %1211 = vmatmul.mubr.bf16.gmra.mrb[0].mxu0 %v1173
      %v1212 = vpop.f32.mrb[0].mxu0
      %v1213 = vadd.f32 0.0, %v1212
      %v1214 = vpop.f32.mrb[0].mxu0
      %v1215 = vpop.f32.mrb[0].mxu0
      %v1216 = vadd.f32 0.0, %v1215
      %v1217 = vpop.f32.mrb[0].mxu0
      %1218 = vdwg.mxu0
      %1220 = vrot.lane.b32.xlu0 %v614, 124
      %v1221 = vpop.permute.xlu0 %1220
      %v1223 = vsel %vm621, %v614, 0
      %v1226 = vsel %vm621, %v1221, 0
      %1228 = vmatprep.subr.bf16.mxu0 0
      %1229 = vmatpush1.bf16.xpose.msra.mxu0 %v1226
      %1230 = vmatprep.subr.bf16.mxu0 0
      %1231 = vmatpush1.bf16.xpose.msra.mxu0 0
      %1232 = vmatprep.subr.bf16.mxu0 0
      %1233 = vmatpush1.bf16.xpose.msra.mxu0 0
      %1234 = vmatprep.subr.bf16.mxu0 0
      %1235 = vmatpush1.bf16.xpose.msra.mxu0 0
      %1236 = vmatprep.subr.bf16.mxu0 0
      %1237 = vmatpush1.bf16.xpose.msra.mxu0 0
      %1238 = vmatprep.subr.bf16.mxu0 0
      %1239 = vmatpush1.bf16.xpose.msra.mxu0 0
      %1240 = vmatprep.subr.bf16.mxu0 0
      %1241 = vmatpush1.bf16.xpose.msra.mxu0 0
      %1242 = vmatprep.subr.bf16.mxu0 0
      %1243 = vmatpush1.bf16.xpose.msra.mxu0 0
      %1244 = vmatprep.subr.bf16.mxu0 0
      %1245 = vmatpush1.bf16.xpose.msra.mxu0 0
      %1246 = vmatprep.subr.bf16.mxu0 0
      %1247 = vmatpush1.bf16.xpose.msra.mxu0 0
      %1248 = vmatprep.subr.bf16.mxu0 0
      %1249 = vmatpush1.bf16.xpose.msra.mxu0 0
      %1250 = vmatprep.subr.bf16.mxu0 0
      %1251 = vmatpush1.bf16.xpose.msra.mxu0 0
      %1252 = vmatprep.subr.bf16.mxu0 0
      %1253 = vmatpush1.bf16.xpose.msra.mxu0 0
      %1254 = vmatprep.subr.bf16.mxu0 0
      %1255 = vmatpush1.bf16.xpose.msra.mxu0 0
      %1256 = vmatprep.subr.bf16.mxu0 0
      %1257 = vmatpush1.bf16.xpose.msra.mxu0 0
      %1258 = vmatprep.subr.bf16.mxu0 0
      %1259 = vmatpush1.bf16.xpose.msra.mxu0 0
      %1260 = vmatprep.mubr.bf16.mxu0 0
      %1261 = vmatmul.mubr.bf16.gmra.mrb[0].mxu0 %v1223
      %v1262 = vpop.f32.mrb[0].mxu0
      %v1263 = vadd.f32 0.0, %v1262
      %v1264 = vpop.f32.mrb[0].mxu0
      %v1265 = vpop.f32.mrb[0].mxu0
      %v1266 = vadd.f32 0.0, %v1265
      %v1267 = vpop.f32.mrb[0].mxu0
      %1268 = vdwg.mxu0
      %1270 = vrot.lane.b32.xlu0 %v615, 124
      %v1271 = vpop.permute.xlu0 %1270
      %v1273 = vsel %vm621, %v615, 0
      %v1276 = vsel %vm621, %v1271, 0
      %1278 = vmatprep.subr.bf16.mxu0 0
      %1279 = vmatpush1.bf16.xpose.msra.mxu0 %v1276
      %1280 = vmatprep.subr.bf16.mxu0 0
      %1281 = vmatpush1.bf16.xpose.msra.mxu0 0
      %1282 = vmatprep.subr.bf16.mxu0 0
      %1283 = vmatpush1.bf16.xpose.msra.mxu0 0
      %1284 = vmatprep.subr.bf16.mxu0 0
      %1285 = vmatpush1.bf16.xpose.msra.mxu0 0
      %1286 = vmatprep.subr.bf16.mxu0 0
      %1287 = vmatpush1.bf16.xpose.msra.mxu0 0
      %1288 = vmatprep.subr.bf16.mxu0 0
      %1289 = vmatpush1.bf16.xpose.msra.mxu0 0
      %1290 = vmatprep.subr.bf16.mxu0 0
      %1291 = vmatpush1.bf16.xpose.msra.mxu0 0
      %1292 = vmatprep.subr.bf16.mxu0 0
      %1293 = vmatpush1.bf16.xpose.msra.mxu0 0
      %1294 = vmatprep.subr.bf16.mxu0 0
      %1295 = vmatpush1.bf16.xpose.msra.mxu0 0
      %1296 = vmatprep.subr.bf16.mxu0 0
      %1297 = vmatpush1.bf16.xpose.msra.mxu0 0
      %1298 = vmatprep.subr.bf16.mxu0 0
      %1299 = vmatpush1.bf16.xpose.msra.mxu0 0
      %1300 = vmatprep.subr.bf16.mxu0 0
      %1301 = vmatpush1.bf16.xpose.msra.mxu0 0
      %1302 = vmatprep.subr.bf16.mxu0 0
      %1303 = vmatpush1.bf16.xpose.msra.mxu0 0
      %1304 = vmatprep.subr.bf16.mxu0 0
      %1305 = vmatpush1.bf16.xpose.msra.mxu0 0
      %1306 = vmatprep.subr.bf16.mxu0 0
      %1307 = vmatpush1.bf16.xpose.msra.mxu0 0
      %1308 = vmatprep.subr.bf16.mxu0 0
      %1309 = vmatpush1.bf16.xpose.msra.mxu0 0
      %1310 = vmatprep.mubr.bf16.mxu0 0
      %1311 = vmatmul.mubr.bf16.gmra.mrb[0].mxu0 %v1273
      %v1312 = vpop.f32.mrb[0].mxu0
      %v1313 = vadd.f32 0.0, %v1312
      %v1314 = vpop.f32.mrb[0].mxu0
      %v1315 = vpop.f32.mrb[0].mxu0
      %v1316 = vadd.f32 0.0, %v1315
      %v1317 = vpop.f32.mrb[0].mxu0
      %1318 = vdwg.mxu0
      %1320 = vrot.lane.b32.xlu0 %v616, 124
      %v1321 = vpop.permute.xlu0 %1320
      %v1323 = vsel %vm621, %v616, 0
      %v1326 = vsel %vm621, %v1321, 0
      %1328 = vmatprep.subr.bf16.mxu0 0
      %1329 = vmatpush1.bf16.xpose.msra.mxu0 %v1326
      %1330 = vmatprep.subr.bf16.mxu0 0
      %1331 = vmatpush1.bf16.xpose.msra.mxu0 0
      %1332 = vmatprep.subr.bf16.mxu0 0
      %1333 = vmatpush1.bf16.xpose.msra.mxu0 0
      %1334 = vmatprep.subr.bf16.mxu0 0
      %1335 = vmatpush1.bf16.xpose.msra.mxu0 0
      %1336 = vmatprep.subr.bf16.mxu0 0
      %1337 = vmatpush1.bf16.xpose.msra.mxu0 0
      %1338 = vmatprep.subr.bf16.mxu0 0
      %1339 = vmatpush1.bf16.xpose.msra.mxu0 0
      %1340 = vmatprep.subr.bf16.mxu0 0
      %1341 = vmatpush1.bf16.xpose.msra.mxu0 0
      %1342 = vmatprep.subr.bf16.mxu0 0
      %1343 = vmatpush1.bf16.xpose.msra.mxu0 0
      %1344 = vmatprep.subr.bf16.mxu0 0
      %1345 = vmatpush1.bf16.xpose.msra.mxu0 0
      %1346 = vmatprep.subr.bf16.mxu0 0
      %1347 = vmatpush1.bf16.xpose.msra.mxu0 0
      %1348 = vmatprep.subr.bf16.mxu0 0
      %1349 = vmatpush1.bf16.xpose.msra.mxu0 0
      %1350 = vmatprep.subr.bf16.mxu0 0
      %1351 = vmatpush1.bf16.xpose.msra.mxu0 0
      %1352 = vmatprep.subr.bf16.mxu0 0
      %1353 = vmatpush1.bf16.xpose.msra.mxu0 0
      %1354 = vmatprep.subr.bf16.mxu0 0
      %1355 = vmatpush1.bf16.xpose.msra.mxu0 0
      %1356 = vmatprep.subr.bf16.mxu0 0
      %1357 = vmatpush1.bf16.xpose.msra.mxu0 0
      %1358 = vmatprep.subr.bf16.mxu0 0
      %1359 = vmatpush1.bf16.xpose.msra.mxu0 0
      %1360 = vmatprep.mubr.bf16.mxu0 0
      %1361 = vmatmul.mubr.bf16.gmra.mrb[0].mxu0 %v1323
      %v1362 = vpop.f32.mrb[0].mxu0
      %v1363 = vadd.f32 0.0, %v1362
      %v1364 = vpop.f32.mrb[0].mxu0
      %v1365 = vpop.f32.mrb[0].mxu0
      %v1366 = vadd.f32 0.0, %v1365
      %v1367 = vpop.f32.mrb[0].mxu0
      %1368 = vdwg.mxu0
      %1370 = vrot.lane.b32.xlu0 %v617, 124
      %v1371 = vpop.permute.xlu0 %1370
      %v1373 = vsel %vm621, %v617, 0
      %v1376 = vsel %vm621, %v1371, 0
      %1378 = vmatprep.subr.bf16.mxu0 0
      %1379 = vmatpush1.bf16.xpose.msra.mxu0 %v1376
      %1380 = vmatprep.subr.bf16.mxu0 0
      %1381 = vmatpush1.bf16.xpose.msra.mxu0 0
      %1382 = vmatprep.subr.bf16.mxu0 0
      %1383 = vmatpush1.bf16.xpose.msra.mxu0 0
      %1384 = vmatprep.subr.bf16.mxu0 0
      %1385 = vmatpush1.bf16.xpose.msra.mxu0 0
      %1386 = vmatprep.subr.bf16.mxu0 0
      %1387 = vmatpush1.bf16.xpose.msra.mxu0 0
      %1388 = vmatprep.subr.bf16.mxu0 0
      %1389 = vmatpush1.bf16.xpose.msra.mxu0 0
      %1390 = vmatprep.subr.bf16.mxu0 0
      %1391 = vmatpush1.bf16.xpose.msra.mxu0 0
      %1392 = vmatprep.subr.bf16.mxu0 0
      %1393 = vmatpush1.bf16.xpose.msra.mxu0 0
      %1394 = vmatprep.subr.bf16.mxu0 0
      %1395 = vmatpush1.bf16.xpose.msra.mxu0 0
      %1396 = vmatprep.subr.bf16.mxu0 0
      %1397 = vmatpush1.bf16.xpose.msra.mxu0 0
      %1398 = vmatprep.subr.bf16.mxu0 0
      %1399 = vmatpush1.bf16.xpose.msra.mxu0 0
      %1400 = vmatprep.subr.bf16.mxu0 0
      %1401 = vmatpush1.bf16.xpose.msra.mxu0 0
      %1402 = vmatprep.subr.bf16.mxu0 0
      %1403 = vmatpush1.bf16.xpose.msra.mxu0 0
      %1404 = vmatprep.subr.bf16.mxu0 0
      %1405 = vmatpush1.bf16.xpose.msra.mxu0 0
      %1406 = vmatprep.subr.bf16.mxu0 0
      %1407 = vmatpush1.bf16.xpose.msra.mxu0 0
      %1408 = vmatprep.subr.bf16.mxu0 0
      %1409 = vmatpush1.bf16.xpose.msra.mxu0 0
      %1410 = vmatprep.mubr.bf16.mxu0 0
      %1411 = vmatmul.mubr.bf16.gmra.mrb[0].mxu0 %v1373
      %v1412 = vpop.f32.mrb[0].mxu0
      %v1413 = vadd.f32 0.0, %v1412
      %v1414 = vpop.f32.mrb[0].mxu0
      %v1415 = vpop.f32.mrb[0].mxu0
      %v1416 = vadd.f32 0.0, %v1415
      %v1417 = vpop.f32.mrb[0].mxu0
      %1418 = vdwg.mxu0
      %vm1419 = vcmask 130048
      %v1420 = vsel %vm1419, %v663, -inf
      %1421 = vmax.xlane.f32.xlu0 %v1420
      %v1422 = vpop.xlane.xlu0 %1421
      %v1423 = vsel %vm1419, %v666, -inf
      %1424 = vmax.xlane.f32.xlu0 %v1423
      %v1425 = vpop.xlane.xlu0 %1424
      %v1426 = vsel %vm1419, %v713, -inf
      %1427 = vmax.xlane.f32.xlu0 %v1426
      %v1428 = vpop.xlane.xlu0 %1427
      %v1429 = vsel %vm1419, %v716, -inf
      %1430 = vmax.xlane.f32.xlu0 %v1429
      %v1431 = vpop.xlane.xlu0 %1430
      %v1432 = vsel %vm1419, %v763, -inf
      %1433 = vmax.xlane.f32.xlu0 %v1432
      %v1434 = vpop.xlane.xlu0 %1433
      %v1435 = vsel %vm1419, %v766, -inf
      %1436 = vmax.xlane.f32.xlu0 %v1435
      %v1437 = vpop.xlane.xlu0 %1436
      %v1438 = vsel %vm1419, %v813, -inf
      %1439 = vmax.xlane.f32.xlu0 %v1438
      %v1440 = vpop.xlane.xlu0 %1439
      %v1441 = vsel %vm1419, %v816, -inf
      %1442 = vmax.xlane.f32.xlu0 %v1441
      %v1443 = vpop.xlane.xlu0 %1442
      %v1444 = vsel %vm1419, %v863, -inf
      %1445 = vmax.xlane.f32.xlu0 %v1444
      %v1446 = vpop.xlane.xlu0 %1445
      %v1447 = vsel %vm1419, %v866, -inf
      %1448 = vmax.xlane.f32.xlu0 %v1447
      %v1449 = vpop.xlane.xlu0 %1448
      %v1450 = vsel %vm1419, %v913, -inf
      %1451 = vmax.xlane.f32.xlu0 %v1450
      %v1452 = vpop.xlane.xlu0 %1451
      %v1453 = vsel %vm1419, %v916, -inf
      %1454 = vmax.xlane.f32.xlu0 %v1453
      %v1455 = vpop.xlane.xlu0 %1454
      %v1456 = vsel %vm1419, %v963, -inf
      %1457 = vmax.xlane.f32.xlu0 %v1456
      %v1458 = vpop.xlane.xlu0 %1457
      %v1459 = vsel %vm1419, %v966, -inf
      %1460 = vmax.xlane.f32.xlu0 %v1459
      %v1461 = vpop.xlane.xlu0 %1460
      %v1462 = vsel %vm1419, %v1013, -inf
      %1463 = vmax.xlane.f32.xlu0 %v1462
      %v1464 = vpop.xlane.xlu0 %1463
      %v1465 = vsel %vm1419, %v1016, -inf
      %1466 = vmax.xlane.f32.xlu0 %v1465
      %v1467 = vpop.xlane.xlu0 %1466
      %v1468 = vsel %vm1419, %v1063, -inf
      %1469 = vmax.xlane.f32.xlu0 %v1468
      %v1470 = vpop.xlane.xlu0 %1469
      %v1471 = vsel %vm1419, %v1066, -inf
      %1472 = vmax.xlane.f32.xlu0 %v1471
      %v1473 = vpop.xlane.xlu0 %1472
      %v1474 = vsel %vm1419, %v1113, -inf
      %1475 = vmax.xlane.f32.xlu0 %v1474
      %v1476 = vpop.xlane.xlu0 %1475
      %v1477 = vsel %vm1419, %v1116, -inf
      %1478 = vmax.xlane.f32.xlu0 %v1477
      %v1479 = vpop.xlane.xlu0 %1478
      %v1480 = vsel %vm1419, %v1163, -inf
      %1481 = vmax.xlane.f32.xlu0 %v1480
      %v1482 = vpop.xlane.xlu0 %1481
      %v1483 = vsel %vm1419, %v1166, -inf
      %1484 = vmax.xlane.f32.xlu0 %v1483
      %v1485 = vpop.xlane.xlu0 %1484
      %v1486 = vsel %vm1419, %v1213, -inf
      %1487 = vmax.xlane.f32.xlu0 %v1486
      %v1488 = vpop.xlane.xlu0 %1487
      %v1489 = vsel %vm1419, %v1216, -inf
      %1490 = vmax.xlane.f32.xlu0 %v1489
      %v1491 = vpop.xlane.xlu0 %1490
      %v1492 = vsel %vm1419, %v1263, -inf
      %1493 = vmax.xlane.f32.xlu0 %v1492
      %v1494 = vpop.xlane.xlu0 %1493
      %v1495 = vsel %vm1419, %v1266, -inf
      %1496 = vmax.xlane.f32.xlu0 %v1495
      %v1497 = vpop.xlane.xlu0 %1496
      %v1498 = vsel %vm1419, %v1313, -inf
      %1499 = vmax.xlane.f32.xlu0 %v1498
      %v1500 = vpop.xlane.xlu0 %1499
      %v1501 = vsel %vm1419, %v1316, -inf
      %1502 = vmax.xlane.f32.xlu0 %v1501
      %v1503 = vpop.xlane.xlu0 %1502
      %v1504 = vsel %vm1419, %v1363, -inf
      %1505 = vmax.xlane.f32.xlu0 %v1504
      %v1506 = vpop.xlane.xlu0 %1505
      %v1507 = vsel %vm1419, %v1366, -inf
      %1508 = vmax.xlane.f32.xlu0 %v1507
      %v1509 = vpop.xlane.xlu0 %1508
      %v1510 = vsel %vm1419, %v1413, -inf
      %1511 = vmax.xlane.f32.xlu0 %v1510
      %v1512 = vpop.xlane.xlu0 %1511
      %v1513 = vsel %vm1419, %v1416, -inf
      %1514 = vmax.xlane.f32.xlu0 %v1513
      %v1515 = vpop.xlane.xlu0 %1514
      %v1516 = vsub.f32 %v663, %v1422
      %v1517 = vsub.f32 %v666, %v1425
      %v1518 = vsub.f32 %v713, %v1428
      %v1519 = vsub.f32 %v716, %v1431
      %v1520 = vsub.f32 %v763, %v1434
      %v1521 = vsub.f32 %v766, %v1437
      %v1522 = vsub.f32 %v813, %v1440
      %v1523 = vsub.f32 %v816, %v1443
      %v1524 = vsub.f32 %v863, %v1446
      %v1525 = vsub.f32 %v866, %v1449
      %v1526 = vsub.f32 %v913, %v1452
      %v1527 = vsub.f32 %v916, %v1455
      %v1528 = vsub.f32 %v963, %v1458
      %v1529 = vsub.f32 %v966, %v1461
      %v1530 = vsub.f32 %v1013, %v1464
      %v1531 = vsub.f32 %v1016, %v1467
      %v1532 = vsub.f32 %v1063, %v1470
      %v1533 = vsub.f32 %v1066, %v1473
      %v1534 = vsub.f32 %v1113, %v1476
      %v1535 = vsub.f32 %v1116, %v1479
      %v1536 = vsub.f32 %v1163, %v1482
      %v1537 = vsub.f32 %v1166, %v1485
      %v1538 = vsub.f32 %v1213, %v1488
      %v1539 = vsub.f32 %v1216, %v1491
      %v1540 = vsub.f32 %v1263, %v1494
      %v1541 = vsub.f32 %v1266, %v1497
      %v1542 = vsub.f32 %v1313, %v1500
      %v1543 = vsub.f32 %v1316, %v1503
      %v1544 = vsub.f32 %v1363, %v1506
      %v1545 = vsub.f32 %v1366, %v1509
      %v1546 = vsub.f32 %v1413, %v1512
      %v1547 = vsub.f32 %v1416, %v1515
      %v1548 = vmul.f32 %v1516, 1.442695
      %v1549 = vpow.pop %v1548
      %v1550 = vmul.f32 %v1517, 1.442695
      %v1551 = vpow.pop %v1550
      %v1552 = vmul.f32 %v1518, 1.442695
      %v1553 = vpow.pop %v1552
      %v1554 = vmul.f32 %v1519, 1.442695
      %v1555 = vpow.pop %v1554
      %v1556 = vmul.f32 %v1520, 1.442695
      %v1557 = vpow.pop %v1556
      %v1558 = vmul.f32 %v1521, 1.442695
      %v1559 = vpow.pop %v1558
      %v1560 = vmul.f32 %v1522, 1.442695
      %v1561 = vpow.pop %v1560
      %v1562 = vmul.f32 %v1523, 1.442695
      %v1563 = vpow.pop %v1562
      %v1564 = vmul.f32 %v1524, 1.442695
      %v1565 = vpow.pop %v1564
      %v1566 = vmul.f32 %v1525, 1.442695
      %v1567 = vpow.pop %v1566
      %v1568 = vmul.f32 %v1526, 1.442695
      %v1569 = vpow.pop %v1568
      %v1570 = vmul.f32 %v1527, 1.442695
      %v1571 = vpow.pop %v1570
      %v1572 = vmul.f32 %v1528, 1.442695
      %v1573 = vpow.pop %v1572
      %v1574 = vmul.f32 %v1529, 1.442695
      %v1575 = vpow.pop %v1574
      %v1576 = vmul.f32 %v1530, 1.442695
      %v1577 = vpow.pop %v1576
      %v1578 = vmul.f32 %v1531, 1.442695
      %v1579 = vpow.pop %v1578
      %v1580 = vmul.f32 %v1532, 1.442695
      %v1581 = vpow.pop %v1580
      %v1582 = vmul.f32 %v1533, 1.442695
      %v1583 = vpow.pop %v1582
      %v1584 = vmul.f32 %v1534, 1.442695
      %v1585 = vpow.pop %v1584
      %v1586 = vmul.f32 %v1535, 1.442695
      %v1587 = vpow.pop %v1586
      %v1588 = vmul.f32 %v1536, 1.442695
      %v1589 = vpow.pop %v1588
      %v1590 = vmul.f32 %v1537, 1.442695
      %v1591 = vpow.pop %v1590
      %v1592 = vmul.f32 %v1538, 1.442695
      %v1593 = vpow.pop %v1592
      %v1594 = vmul.f32 %v1539, 1.442695
      %v1595 = vpow.pop %v1594
      %v1596 = vmul.f32 %v1540, 1.442695
      %v1597 = vpow.pop %v1596
      %v1598 = vmul.f32 %v1541, 1.442695
      %v1599 = vpow.pop %v1598
      %v1600 = vmul.f32 %v1542, 1.442695
      %v1601 = vpow.pop %v1600
      %v1602 = vmul.f32 %v1543, 1.442695
      %v1603 = vpow.pop %v1602
      %v1604 = vmul.f32 %v1544, 1.442695
      %v1605 = vpow.pop %v1604
      %v1606 = vmul.f32 %v1545, 1.442695
      %v1607 = vpow.pop %v1606
      %v1608 = vmul.f32 %v1546, 1.442695
      %v1609 = vpow.pop %v1608
      %v1610 = vmul.f32 %v1547, 1.442695
      %v1611 = vpow.pop %v1610
      %v1612 = vsel %vm1419, %v1549, 0.0
      %1613 = vadd.xlane.f32.xlu0 %v1612
      %v1614 = vpop.xlane.xlu0 %1613
      %v1615 = vsel %vm1419, %v1551, 0.0
      %1616 = vadd.xlane.f32.xlu0 %v1615
      %v1617 = vpop.xlane.xlu0 %1616
      %v1618 = vsel %vm1419, %v1553, 0.0
      %1619 = vadd.xlane.f32.xlu0 %v1618
      %v1620 = vpop.xlane.xlu0 %1619
      %v1621 = vsel %vm1419, %v1555, 0.0
      %1622 = vadd.xlane.f32.xlu0 %v1621
      %v1623 = vpop.xlane.xlu0 %1622
      %v1624 = vsel %vm1419, %v1557, 0.0
      %1625 = vadd.xlane.f32.xlu0 %v1624
      %v1626 = vpop.xlane.xlu0 %1625
      %v1627 = vsel %vm1419, %v1559, 0.0
      %1628 = vadd.xlane.f32.xlu0 %v1627
      %v1629 = vpop.xlane.xlu0 %1628
      %v1630 = vsel %vm1419, %v1561, 0.0
      %1631 = vadd.xlane.f32.xlu0 %v1630
      %v1632 = vpop.xlane.xlu0 %1631
      %v1633 = vsel %vm1419, %v1563, 0.0
      %1634 = vadd.xlane.f32.xlu0 %v1633
      %v1635 = vpop.xlane.xlu0 %1634
      %v1636 = vsel %vm1419, %v1565, 0.0
      %1637 = vadd.xlane.f32.xlu0 %v1636
      %v1638 = vpop.xlane.xlu0 %1637
      %v1639 = vsel %vm1419, %v1567, 0.0
      %1640 = vadd.xlane.f32.xlu0 %v1639
      %v1641 = vpop.xlane.xlu0 %1640
      %v1642 = vsel %vm1419, %v1569, 0.0
      %1643 = vadd.xlane.f32.xlu0 %v1642
      %v1644 = vpop.xlane.xlu0 %1643
      %v1645 = vsel %vm1419, %v1571, 0.0
      %1646 = vadd.xlane.f32.xlu0 %v1645
      %v1647 = vpop.xlane.xlu0 %1646
      %v1648 = vsel %vm1419, %v1573, 0.0
      %1649 = vadd.xlane.f32.xlu0 %v1648
      %v1650 = vpop.xlane.xlu0 %1649
      %v1651 = vsel %vm1419, %v1575, 0.0
      %1652 = vadd.xlane.f32.xlu0 %v1651
      %v1653 = vpop.xlane.xlu0 %1652
      %v1654 = vsel %vm1419, %v1577, 0.0
      %1655 = vadd.xlane.f32.xlu0 %v1654
      %v1656 = vpop.xlane.xlu0 %1655
      %v1657 = vsel %vm1419, %v1579, 0.0
      %1658 = vadd.xlane.f32.xlu0 %v1657
      %v1659 = vpop.xlane.xlu0 %1658
      %v1660 = vsel %vm1419, %v1581, 0.0
      %1661 = vadd.xlane.f32.xlu0 %v1660
      %v1662 = vpop.xlane.xlu0 %1661
      %v1663 = vsel %vm1419, %v1583, 0.0
      %1664 = vadd.xlane.f32.xlu0 %v1663
      %v1665 = vpop.xlane.xlu0 %1664
      %v1666 = vsel %vm1419, %v1585, 0.0
      %1667 = vadd.xlane.f32.xlu0 %v1666
      %v1668 = vpop.xlane.xlu0 %1667
      %v1669 = vsel %vm1419, %v1587, 0.0
      %1670 = vadd.xlane.f32.xlu0 %v1669
      %v1671 = vpop.xlane.xlu0 %1670
      %v1672 = vsel %vm1419, %v1589, 0.0
      %1673 = vadd.xlane.f32.xlu0 %v1672
      %v1674 = vpop.xlane.xlu0 %1673
      %v1675 = vsel %vm1419, %v1591, 0.0
      %1676 = vadd.xlane.f32.xlu0 %v1675
      %v1677 = vpop.xlane.xlu0 %1676
      %v1678 = vsel %vm1419, %v1593, 0.0
      %1679 = vadd.xlane.f32.xlu0 %v1678
      %v1680 = vpop.xlane.xlu0 %1679
      %v1681 = vsel %vm1419, %v1595, 0.0
      %1682 = vadd.xlane.f32.xlu0 %v1681
      %v1683 = vpop.xlane.xlu0 %1682
      %v1684 = vsel %vm1419, %v1597, 0.0
      %1685 = vadd.xlane.f32.xlu0 %v1684
      %v1686 = vpop.xlane.xlu0 %1685
      %v1687 = vsel %vm1419, %v1599, 0.0
      %1688 = vadd.xlane.f32.xlu0 %v1687
      %v1689 = vpop.xlane.xlu0 %1688
      %v1690 = vsel %vm1419, %v1601, 0.0
      %1691 = vadd.xlane.f32.xlu0 %v1690
      %v1692 = vpop.xlane.xlu0 %1691
      %v1693 = vsel %vm1419, %v1603, 0.0
      %1694 = vadd.xlane.f32.xlu0 %v1693
      %v1695 = vpop.xlane.xlu0 %1694
      %v1696 = vsel %vm1419, %v1605, 0.0
      %1697 = vadd.xlane.f32.xlu0 %v1696
      %v1698 = vpop.xlane.xlu0 %1697
      %v1699 = vsel %vm1419, %v1607, 0.0
      %1700 = vadd.xlane.f32.xlu0 %v1699
      %v1701 = vpop.xlane.xlu0 %1700
      %v1702 = vsel %vm1419, %v1609, 0.0
      %1703 = vadd.xlane.f32.xlu0 %v1702
      %v1704 = vpop.xlane.xlu0 %1703
      %v1705 = vsel %vm1419, %v1611, 0.0
      %1706 = vadd.xlane.f32.xlu0 %v1705
      %v1707 = vpop.xlane.xlu0 %1706
      %v1708 = vrcp.pop %v1614
      %v1709 = vrcp.pop %v1617
      %v1710 = vrcp.pop %v1620
      %v1711 = vrcp.pop %v1623
      %v1712 = vrcp.pop %v1626
      %v1713 = vrcp.pop %v1629
      %v1714 = vrcp.pop %v1632
      %v1715 = vrcp.pop %v1635
      %v1716 = vrcp.pop %v1638
      %v1717 = vrcp.pop %v1641
      %v1718 = vrcp.pop %v1644
      %v1719 = vrcp.pop %v1647
      %v1720 = vrcp.pop %v1650
      %v1721 = vrcp.pop %v1653
      %v1722 = vrcp.pop %v1656
      %v1723 = vrcp.pop %v1659
      %v1724 = vrcp.pop %v1662
      %v1725 = vrcp.pop %v1665
      %v1726 = vrcp.pop %v1668
      %v1727 = vrcp.pop %v1671
      %v1728 = vrcp.pop %v1674
      %v1729 = vrcp.pop %v1677
      %v1730 = vrcp.pop %v1680
      %v1731 = vrcp.pop %v1683
      %v1732 = vrcp.pop %v1686
      %v1733 = vrcp.pop %v1689
      %v1734 = vrcp.pop %v1692
      %v1735 = vrcp.pop %v1695
      %v1736 = vrcp.pop %v1698
      %v1737 = vrcp.pop %v1701
      %v1738 = vrcp.pop %v1704
      %v1739 = vrcp.pop %v1707
      %v1740 = vmul.f32 %v1549, %v1708
      %v1741 = vmul.f32 %v1551, %v1709
      %v1742 = vmul.f32 %v1553, %v1710
      %v1743 = vmul.f32 %v1555, %v1711
      %v1744 = vmul.f32 %v1557, %v1712
      %v1745 = vmul.f32 %v1559, %v1713
      %v1746 = vmul.f32 %v1561, %v1714
      %v1747 = vmul.f32 %v1563, %v1715
      %v1748 = vmul.f32 %v1565, %v1716
      %v1749 = vmul.f32 %v1567, %v1717
      %v1750 = vmul.f32 %v1569, %v1718
      %v1751 = vmul.f32 %v1571, %v1719
      %v1752 = vmul.f32 %v1573, %v1720
      %v1753 = vmul.f32 %v1575, %v1721
      %v1754 = vmul.f32 %v1577, %v1722
      %v1755 = vmul.f32 %v1579, %v1723
      %v1756 = vmul.f32 %v1581, %v1724
      %v1757 = vmul.f32 %v1583, %v1725
      %v1758 = vmul.f32 %v1585, %v1726
      %v1759 = vmul.f32 %v1587, %v1727
      %v1760 = vmul.f32 %v1589, %v1728
      %v1761 = vmul.f32 %v1591, %v1729
      %v1762 = vmul.f32 %v1593, %v1730
      %v1763 = vmul.f32 %v1595, %v1731
      %v1764 = vmul.f32 %v1597, %v1732
      %v1765 = vmul.f32 %v1599, %v1733
      %v1766 = vmul.f32 %v1601, %v1734
      %v1767 = vmul.f32 %v1603, %v1735
      %v1768 = vmul.f32 %v1605, %v1736
      %v1769 = vmul.f32 %v1607, %v1737
      %v1770 = vmul.f32 %v1609, %v1738
      %v1771 = vmul.f32 %v1611, %v1739
      %v1772 = vpack.c.bf16 %v1741, %v1740
      %v1773 = vpack.c.bf16 %v1743, %v1742
      %v1774 = vpack.c.bf16 %v1745, %v1744
      %v1775 = vpack.c.bf16 %v1747, %v1746
      %v1776 = vpack.c.bf16 %v1749, %v1748
      %v1777 = vpack.c.bf16 %v1751, %v1750
      %v1778 = vpack.c.bf16 %v1753, %v1752
      %v1779 = vpack.c.bf16 %v1755, %v1754
      %v1780 = vpack.c.bf16 %v1757, %v1756
      %v1781 = vpack.c.bf16 %v1759, %v1758
      %v1782 = vpack.c.bf16 %v1761, %v1760
      %v1783 = vpack.c.bf16 %v1763, %v1762
      %v1784 = vpack.c.bf16 %v1765, %v1764
      %v1785 = vpack.c.bf16 %v1767, %v1766
      %v1786 = vpack.c.bf16 %v1769, %v1768
      %v1787 = vpack.c.bf16 %v1771, %v1770
      %1788 = vrot.lane.b32.xlu0 %v602, 120
      %v1789 = vpop.permute.xlu0 %1788
      %v1792 = vsel %vm1419, %v1772, 0
      %1794 = vmatprep.subr.bf16.mxu0 0
      %1795 = vmatpush1.bf16.msra.mxu0 %v1789
      %1796 = vmatprep.subr.bf16.mxu0 0
      %1797 = vmatpush1.bf16.msra.mxu0 0
      %1798 = vmatprep.subr.bf16.mxu0 0
      %1799 = vmatpush1.bf16.msra.mxu0 0
      %1800 = vmatprep.subr.bf16.mxu0 0
      %1801 = vmatpush1.bf16.msra.mxu0 0
      %1802 = vmatprep.subr.bf16.mxu0 0
      %1803 = vmatpush1.bf16.msra.mxu0 0
      %1804 = vmatprep.subr.bf16.mxu0 0
      %1805 = vmatpush1.bf16.msra.mxu0 0
      %1806 = vmatprep.subr.bf16.mxu0 0
      %1807 = vmatpush1.bf16.msra.mxu0 0
      %1808 = vmatprep.subr.bf16.mxu0 0
      %1809 = vmatpush1.bf16.msra.mxu0 0
      %1810 = vmatprep.subr.bf16.mxu0 0
      %1811 = vmatpush1.bf16.msra.mxu0 0
      %1812 = vmatprep.subr.bf16.mxu0 0
      %1813 = vmatpush1.bf16.msra.mxu0 0
      %1814 = vmatprep.subr.bf16.mxu0 0
      %1815 = vmatpush1.bf16.msra.mxu0 0
      %1816 = vmatprep.subr.bf16.mxu0 0
      %1817 = vmatpush1.bf16.msra.mxu0 0
      %1818 = vmatprep.subr.bf16.mxu0 0
      %1819 = vmatpush1.bf16.msra.mxu0 0
      %1820 = vmatprep.subr.bf16.mxu0 0
      %1821 = vmatpush1.bf16.msra.mxu0 0
      %1822 = vmatprep.subr.bf16.mxu0 0
      %1823 = vmatpush1.bf16.msra.mxu0 0
      %1824 = vmatprep.subr.bf16.mxu0 0
      %1825 = vmatpush1.bf16.msra.mxu0 0
      %1826 = vmatprep.mubr.bf16.mxu0 0
      %1827 = vmatmul.mubr.bf16.gmra.mrb[0].mxu0 %v1792
      %v1828 = vpop.f32.mrb[0].mxu0
      %v1829 = vadd.f32 0.0, %v1828
      %v1830 = vpop.f32.mrb[0].mxu0
      %v1831 = vpop.f32.mrb[0].mxu0
      %v1832 = vadd.f32 0.0, %v1831
      %v1833 = vpop.f32.mrb[0].mxu0
      %1834 = vdwg.mxu0
      %1835 = vrot.lane.b32.xlu0 %v603, 120
      %v1836 = vpop.permute.xlu0 %1835
      %v1839 = vsel %vm1419, %v1773, 0
      %1841 = vmatprep.subr.bf16.mxu0 0
      %1842 = vmatpush1.bf16.msra.mxu0 %v1836
      %1843 = vmatprep.subr.bf16.mxu0 0
      %1844 = vmatpush1.bf16.msra.mxu0 0
      %1845 = vmatprep.subr.bf16.mxu0 0
      %1846 = vmatpush1.bf16.msra.mxu0 0
      %1847 = vmatprep.subr.bf16.mxu0 0
      %1848 = vmatpush1.bf16.msra.mxu0 0
      %1849 = vmatprep.subr.bf16.mxu0 0
      %1850 = vmatpush1.bf16.msra.mxu0 0
      %1851 = vmatprep.subr.bf16.mxu0 0
      %1852 = vmatpush1.bf16.msra.mxu0 0
      %1853 = vmatprep.subr.bf16.mxu0 0
      %1854 = vmatpush1.bf16.msra.mxu0 0
      %1855 = vmatprep.subr.bf16.mxu0 0
      %1856 = vmatpush1.bf16.msra.mxu0 0
      %1857 = vmatprep.subr.bf16.mxu0 0
      %1858 = vmatpush1.bf16.msra.mxu0 0
      %1859 = vmatprep.subr.bf16.mxu0 0
      %1860 = vmatpush1.bf16.msra.mxu0 0
      %1861 = vmatprep.subr.bf16.mxu0 0
      %1862 = vmatpush1.bf16.msra.mxu0 0
      %1863 = vmatprep.subr.bf16.mxu0 0
      %1864 = vmatpush1.bf16.msra.mxu0 0
      %1865 = vmatprep.subr.bf16.mxu0 0
      %1866 = vmatpush1.bf16.msra.mxu0 0
      %1867 = vmatprep.subr.bf16.mxu0 0
      %1868 = vmatpush1.bf16.msra.mxu0 0
      %1869 = vmatprep.subr.bf16.mxu0 0
      %1870 = vmatpush1.bf16.msra.mxu0 0
      %1871 = vmatprep.subr.bf16.mxu0 0
      %1872 = vmatpush1.bf16.msra.mxu0 0
      %1873 = vmatprep.mubr.bf16.mxu0 0
      %1874 = vmatmul.mubr.bf16.gmra.mrb[0].mxu0 %v1839
      %v1875 = vpop.f32.mrb[0].mxu0
      %v1876 = vadd.f32 0.0, %v1875
      %v1877 = vpop.f32.mrb[0].mxu0
      %v1878 = vpop.f32.mrb[0].mxu0
      %v1879 = vadd.f32 0.0, %v1878
      %v1880 = vpop.f32.mrb[0].mxu0
      %1881 = vdwg.mxu0
      %1882 = vrot.lane.b32.xlu0 %v604, 120
      %v1883 = vpop.permute.xlu0 %1882
      %v1886 = vsel %vm1419, %v1774, 0
      %1888 = vmatprep.subr.bf16.mxu0 0
      %1889 = vmatpush1.bf16.msra.mxu0 %v1883
      %1890 = vmatprep.subr.bf16.mxu0 0
      %1891 = vmatpush1.bf16.msra.mxu0 0
      %1892 = vmatprep.subr.bf16.mxu0 0
      %1893 = vmatpush1.bf16.msra.mxu0 0
      %1894 = vmatprep.subr.bf16.mxu0 0
      %1895 = vmatpush1.bf16.msra.mxu0 0
      %1896 = vmatprep.subr.bf16.mxu0 0
      %1897 = vmatpush1.bf16.msra.mxu0 0
      %1898 = vmatprep.subr.bf16.mxu0 0
      %1899 = vmatpush1.bf16.msra.mxu0 0
      %1900 = vmatprep.subr.bf16.mxu0 0
      %1901 = vmatpush1.bf16.msra.mxu0 0
      %1902 = vmatprep.subr.bf16.mxu0 0
      %1903 = vmatpush1.bf16.msra.mxu0 0
      %1904 = vmatprep.subr.bf16.mxu0 0
      %1905 = vmatpush1.bf16.msra.mxu0 0
      %1906 = vmatprep.subr.bf16.mxu0 0
      %1907 = vmatpush1.bf16.msra.mxu0 0
      %1908 = vmatprep.subr.bf16.mxu0 0
      %1909 = vmatpush1.bf16.msra.mxu0 0
      %1910 = vmatprep.subr.bf16.mxu0 0
      %1911 = vmatpush1.bf16.msra.mxu0 0
      %1912 = vmatprep.subr.bf16.mxu0 0
      %1913 = vmatpush1.bf16.msra.mxu0 0
      %1914 = vmatprep.subr.bf16.mxu0 0
      %1915 = vmatpush1.bf16.msra.mxu0 0
      %1916 = vmatprep.subr.bf16.mxu0 0
      %1917 = vmatpush1.bf16.msra.mxu0 0
      %1918 = vmatprep.subr.bf16.mxu0 0
      %1919 = vmatpush1.bf16.msra.mxu0 0
      %1920 = vmatprep.mubr.bf16.mxu0 0
      %1921 = vmatmul.mubr.bf16.gmra.mrb[0].mxu0 %v1886
      %v1922 = vpop.f32.mrb[0].mxu0
      %v1923 = vadd.f32 0.0, %v1922
      %v1924 = vpop.f32.mrb[0].mxu0
      %v1925 = vpop.f32.mrb[0].mxu0
      %v1926 = vadd.f32 0.0, %v1925
      %v1927 = vpop.f32.mrb[0].mxu0
      %1928 = vdwg.mxu0
      %1929 = vrot.lane.b32.xlu0 %v605, 120
      %v1930 = vpop.permute.xlu0 %1929
      %v1933 = vsel %vm1419, %v1775, 0
      %1935 = vmatprep.subr.bf16.mxu0 0
      %1936 = vmatpush1.bf16.msra.mxu0 %v1930
      %1937 = vmatprep.subr.bf16.mxu0 0
      %1938 = vmatpush1.bf16.msra.mxu0 0
      %1939 = vmatprep.subr.bf16.mxu0 0
      %1940 = vmatpush1.bf16.msra.mxu0 0
      %1941 = vmatprep.subr.bf16.mxu0 0
      %1942 = vmatpush1.bf16.msra.mxu0 0
      %1943 = vmatprep.subr.bf16.mxu0 0
      %1944 = vmatpush1.bf16.msra.mxu0 0
      %1945 = vmatprep.subr.bf16.mxu0 0
      %1946 = vmatpush1.bf16.msra.mxu0 0
      %1947 = vmatprep.subr.bf16.mxu0 0
      %1948 = vmatpush1.bf16.msra.mxu0 0
      %1949 = vmatprep.subr.bf16.mxu0 0
      %1950 = vmatpush1.bf16.msra.mxu0 0
      %1951 = vmatprep.subr.bf16.mxu0 0
      %1952 = vmatpush1.bf16.msra.mxu0 0
      %1953 = vmatprep.subr.bf16.mxu0 0
      %1954 = vmatpush1.bf16.msra.mxu0 0
      %1955 = vmatprep.subr.bf16.mxu0 0
      %1956 = vmatpush1.bf16.msra.mxu0 0
      %1957 = vmatprep.subr.bf16.mxu0 0
      %1958 = vmatpush1.bf16.msra.mxu0 0
      %1959 = vmatprep.subr.bf16.mxu0 0
      %1960 = vmatpush1.bf16.msra.mxu0 0
      %1961 = vmatprep.subr.bf16.mxu0 0
      %1962 = vmatpush1.bf16.msra.mxu0 0
      %1963 = vmatprep.subr.bf16.mxu0 0
      %1964 = vmatpush1.bf16.msra.mxu0 0
      %1965 = vmatprep.subr.bf16.mxu0 0
      %1966 = vmatpush1.bf16.msra.mxu0 0
      %1967 = vmatprep.mubr.bf16.mxu0 0
      %1968 = vmatmul.mubr.bf16.gmra.mrb[0].mxu0 %v1933
      %v1969 = vpop.f32.mrb[0].mxu0
      %v1970 = vadd.f32 0.0, %v1969
      %v1971 = vpop.f32.mrb[0].mxu0
      %v1972 = vpop.f32.mrb[0].mxu0
      %v1973 = vadd.f32 0.0, %v1972
      %v1974 = vpop.f32.mrb[0].mxu0
      %1975 = vdwg.mxu0
      %1976 = vrot.lane.b32.xlu0 %v606, 120
      %v1977 = vpop.permute.xlu0 %1976
      %v1980 = vsel %vm1419, %v1776, 0
      %1982 = vmatprep.subr.bf16.mxu0 0
      %1983 = vmatpush1.bf16.msra.mxu0 %v1977
      %1984 = vmatprep.subr.bf16.mxu0 0
      %1985 = vmatpush1.bf16.msra.mxu0 0
      %1986 = vmatprep.subr.bf16.mxu0 0
      %1987 = vmatpush1.bf16.msra.mxu0 0
      %1988 = vmatprep.subr.bf16.mxu0 0
      %1989 = vmatpush1.bf16.msra.mxu0 0
      %1990 = vmatprep.subr.bf16.mxu0 0
      %1991 = vmatpush1.bf16.msra.mxu0 0
      %1992 = vmatprep.subr.bf16.mxu0 0
      %1993 = vmatpush1.bf16.msra.mxu0 0
      %1994 = vmatprep.subr.bf16.mxu0 0
      %1995 = vmatpush1.bf16.msra.mxu0 0
      %1996 = vmatprep.subr.bf16.mxu0 0
      %1997 = vmatpush1.bf16.msra.mxu0 0
      %1998 = vmatprep.subr.bf16.mxu0 0
      %1999 = vmatpush1.bf16.msra.mxu0 0
      %2000 = vmatprep.subr.bf16.mxu0 0
      %2001 = vmatpush1.bf16.msra.mxu0 0
      %2002 = vmatprep.subr.bf16.mxu0 0
      %2003 = vmatpush1.bf16.msra.mxu0 0
      %2004 = vmatprep.subr.bf16.mxu0 0
      %2005 = vmatpush1.bf16.msra.mxu0 0
      %2006 = vmatprep.subr.bf16.mxu0 0
      %2007 = vmatpush1.bf16.msra.mxu0 0
      %2008 = vmatprep.subr.bf16.mxu0 0
      %2009 = vmatpush1.bf16.msra.mxu0 0
      %2010 = vmatprep.subr.bf16.mxu0 0
      %2011 = vmatpush1.bf16.msra.mxu0 0
      %2012 = vmatprep.subr.bf16.mxu0 0
      %2013 = vmatpush1.bf16.msra.mxu0 0
      %2014 = vmatprep.mubr.bf16.mxu0 0
      %2015 = vmatmul.mubr.bf16.gmra.mrb[0].mxu0 %v1980
      %v2016 = vpop.f32.mrb[0].mxu0
      %v2017 = vadd.f32 0.0, %v2016
      %v2018 = vpop.f32.mrb[0].mxu0
      %v2019 = vpop.f32.mrb[0].mxu0
      %v2020 = vadd.f32 0.0, %v2019
      %v2021 = vpop.f32.mrb[0].mxu0
      %2022 = vdwg.mxu0
      %2023 = vrot.lane.b32.xlu0 %v607, 120
      %v2024 = vpop.permute.xlu0 %2023
      %v2027 = vsel %vm1419, %v1777, 0
      %2029 = vmatprep.subr.bf16.mxu0 0
      %2030 = vmatpush1.bf16.msra.mxu0 %v2024
      %2031 = vmatprep.subr.bf16.mxu0 0
      %2032 = vmatpush1.bf16.msra.mxu0 0
      %2033 = vmatprep.subr.bf16.mxu0 0
      %2034 = vmatpush1.bf16.msra.mxu0 0
      %2035 = vmatprep.subr.bf16.mxu0 0
      %2036 = vmatpush1.bf16.msra.mxu0 0
      %2037 = vmatprep.subr.bf16.mxu0 0
      %2038 = vmatpush1.bf16.msra.mxu0 0
      %2039 = vmatprep.subr.bf16.mxu0 0
      %2040 = vmatpush1.bf16.msra.mxu0 0
      %2041 = vmatprep.subr.bf16.mxu0 0
      %2042 = vmatpush1.bf16.msra.mxu0 0
      %2043 = vmatprep.subr.bf16.mxu0 0
      %2044 = vmatpush1.bf16.msra.mxu0 0
      %2045 = vmatprep.subr.bf16.mxu0 0
      %2046 = vmatpush1.bf16.msra.mxu0 0
      %2047 = vmatprep.subr.bf16.mxu0 0
      %2048 = vmatpush1.bf16.msra.mxu0 0
      %2049 = vmatprep.subr.bf16.mxu0 0
      %2050 = vmatpush1.bf16.msra.mxu0 0
      %2051 = vmatprep.subr.bf16.mxu0 0
      %2052 = vmatpush1.bf16.msra.mxu0 0
      %2053 = vmatprep.subr.bf16.mxu0 0
      %2054 = vmatpush1.bf16.msra.mxu0 0
      %2055 = vmatprep.subr.bf16.mxu0 0
      %2056 = vmatpush1.bf16.msra.mxu0 0
      %2057 = vmatprep.subr.bf16.mxu0 0
      %2058 = vmatpush1.bf16.msra.mxu0 0
      %2059 = vmatprep.subr.bf16.mxu0 0
      %2060 = vmatpush1.bf16.msra.mxu0 0
      %2061 = vmatprep.mubr.bf16.mxu0 0
      %2062 = vmatmul.mubr.bf16.gmra.mrb[0].mxu0 %v2027
      %v2063 = vpop.f32.mrb[0].mxu0
      %v2064 = vadd.f32 0.0, %v2063
      %v2065 = vpop.f32.mrb[0].mxu0
      %v2066 = vpop.f32.mrb[0].mxu0
      %v2067 = vadd.f32 0.0, %v2066
      %v2068 = vpop.f32.mrb[0].mxu0
      %2069 = vdwg.mxu0
      %2070 = vrot.lane.b32.xlu0 %v608, 120
      %v2071 = vpop.permute.xlu0 %2070
      %v2074 = vsel %vm1419, %v1778, 0
      %2076 = vmatprep.subr.bf16.mxu0 0
      %2077 = vmatpush1.bf16.msra.mxu0 %v2071
      %2078 = vmatprep.subr.bf16.mxu0 0
      %2079 = vmatpush1.bf16.msra.mxu0 0
      %2080 = vmatprep.subr.bf16.mxu0 0
      %2081 = vmatpush1.bf16.msra.mxu0 0
      %2082 = vmatprep.subr.bf16.mxu0 0
      %2083 = vmatpush1.bf16.msra.mxu0 0
      %2084 = vmatprep.subr.bf16.mxu0 0
      %2085 = vmatpush1.bf16.msra.mxu0 0
      %2086 = vmatprep.subr.bf16.mxu0 0
      %2087 = vmatpush1.bf16.msra.mxu0 0
      %2088 = vmatprep.subr.bf16.mxu0 0
      %2089 = vmatpush1.bf16.msra.mxu0 0
      %2090 = vmatprep.subr.bf16.mxu0 0
      %2091 = vmatpush1.bf16.msra.mxu0 0
      %2092 = vmatprep.subr.bf16.mxu0 0
      %2093 = vmatpush1.bf16.msra.mxu0 0
      %2094 = vmatprep.subr.bf16.mxu0 0
      %2095 = vmatpush1.bf16.msra.mxu0 0
      %2096 = vmatprep.subr.bf16.mxu0 0
      %2097 = vmatpush1.bf16.msra.mxu0 0
      %2098 = vmatprep.subr.bf16.mxu0 0
      %2099 = vmatpush1.bf16.msra.mxu0 0
      %2100 = vmatprep.subr.bf16.mxu0 0
      %2101 = vmatpush1.bf16.msra.mxu0 0
      %2102 = vmatprep.subr.bf16.mxu0 0
      %2103 = vmatpush1.bf16.msra.mxu0 0
      %2104 = vmatprep.subr.bf16.mxu0 0
      %2105 = vmatpush1.bf16.msra.mxu0 0
      %2106 = vmatprep.subr.bf16.mxu0 0
      %2107 = vmatpush1.bf16.msra.mxu0 0
      %2108 = vmatprep.mubr.bf16.mxu0 0
      %2109 = vmatmul.mubr.bf16.gmra.mrb[0].mxu0 %v2074
      %v2110 = vpop.f32.mrb[0].mxu0
      %v2111 = vadd.f32 0.0, %v2110
      %v2112 = vpop.f32.mrb[0].mxu0
      %v2113 = vpop.f32.mrb[0].mxu0
      %v2114 = vadd.f32 0.0, %v2113
      %v2115 = vpop.f32.mrb[0].mxu0
      %2116 = vdwg.mxu0
      %2117 = vrot.lane.b32.xlu0 %v609, 120
      %v2118 = vpop.permute.xlu0 %2117
      %v2121 = vsel %vm1419, %v1779, 0
      %2123 = vmatprep.subr.bf16.mxu0 0
      %2124 = vmatpush1.bf16.msra.mxu0 %v2118
      %2125 = vmatprep.subr.bf16.mxu0 0
      %2126 = vmatpush1.bf16.msra.mxu0 0
      %2127 = vmatprep.subr.bf16.mxu0 0
      %2128 = vmatpush1.bf16.msra.mxu0 0
      %2129 = vmatprep.subr.bf16.mxu0 0
      %2130 = vmatpush1.bf16.msra.mxu0 0
      %2131 = vmatprep.subr.bf16.mxu0 0
      %2132 = vmatpush1.bf16.msra.mxu0 0
      %2133 = vmatprep.subr.bf16.mxu0 0
      %2134 = vmatpush1.bf16.msra.mxu0 0
      %2135 = vmatprep.subr.bf16.mxu0 0
      %2136 = vmatpush1.bf16.msra.mxu0 0
      %2137 = vmatprep.subr.bf16.mxu0 0
      %2138 = vmatpush1.bf16.msra.mxu0 0
      %2139 = vmatprep.subr.bf16.mxu0 0
      %2140 = vmatpush1.bf16.msra.mxu0 0
      %2141 = vmatprep.subr.bf16.mxu0 0
      %2142 = vmatpush1.bf16.msra.mxu0 0
      %2143 = vmatprep.subr.bf16.mxu0 0
      %2144 = vmatpush1.bf16.msra.mxu0 0
      %2145 = vmatprep.subr.bf16.mxu0 0
      %2146 = vmatpush1.bf16.msra.mxu0 0
      %2147 = vmatprep.subr.bf16.mxu0 0
      %2148 = vmatpush1.bf16.msra.mxu0 0
      %2149 = vmatprep.subr.bf16.mxu0 0
      %2150 = vmatpush1.bf16.msra.mxu0 0
      %2151 = vmatprep.subr.bf16.mxu0 0
      %2152 = vmatpush1.bf16.msra.mxu0 0
      %2153 = vmatprep.subr.bf16.mxu0 0
      %2154 = vmatpush1.bf16.msra.mxu0 0
      %2155 = vmatprep.mubr.bf16.mxu0 0
      %2156 = vmatmul.mubr.bf16.gmra.mrb[0].mxu0 %v2121
      %v2157 = vpop.f32.mrb[0].mxu0
      %v2158 = vadd.f32 0.0, %v2157
      %v2159 = vpop.f32.mrb[0].mxu0
      %v2160 = vpop.f32.mrb[0].mxu0
      %v2161 = vadd.f32 0.0, %v2160
      %v2162 = vpop.f32.mrb[0].mxu0
      %2163 = vdwg.mxu0
      %2164 = vrot.lane.b32.xlu0 %v610, 120
      %v2165 = vpop.permute.xlu0 %2164
      %v2168 = vsel %vm1419, %v1780, 0
      %2170 = vmatprep.subr.bf16.mxu0 0
      %2171 = vmatpush1.bf16.msra.mxu0 %v2165
      %2172 = vmatprep.subr.bf16.mxu0 0
      %2173 = vmatpush1.bf16.msra.mxu0 0
      %2174 = vmatprep.subr.bf16.mxu0 0
      %2175 = vmatpush1.bf16.msra.mxu0 0
      %2176 = vmatprep.subr.bf16.mxu0 0
      %2177 = vmatpush1.bf16.msra.mxu0 0
      %2178 = vmatprep.subr.bf16.mxu0 0
      %2179 = vmatpush1.bf16.msra.mxu0 0
      %2180 = vmatprep.subr.bf16.mxu0 0
      %2181 = vmatpush1.bf16.msra.mxu0 0
      %2182 = vmatprep.subr.bf16.mxu0 0
      %2183 = vmatpush1.bf16.msra.mxu0 0
      %2184 = vmatprep.subr.bf16.mxu0 0
      %2185 = vmatpush1.bf16.msra.mxu0 0
      %2186 = vmatprep.subr.bf16.mxu0 0
      %2187 = vmatpush1.bf16.msra.mxu0 0
      %2188 = vmatprep.subr.bf16.mxu0 0
      %2189 = vmatpush1.bf16.msra.mxu0 0
      %2190 = vmatprep.subr.bf16.mxu0 0
      %2191 = vmatpush1.bf16.msra.mxu0 0
      %2192 = vmatprep.subr.bf16.mxu0 0
      %2193 = vmatpush1.bf16.msra.mxu0 0
      %2194 = vmatprep.subr.bf16.mxu0 0
      %2195 = vmatpush1.bf16.msra.mxu0 0
      %2196 = vmatprep.subr.bf16.mxu0 0
      %2197 = vmatpush1.bf16.msra.mxu0 0
      %2198 = vmatprep.subr.bf16.mxu0 0
      %2199 = vmatpush1.bf16.msra.mxu0 0
      %2200 = vmatprep.subr.bf16.mxu0 0
      %2201 = vmatpush1.bf16.msra.mxu0 0
      %2202 = vmatprep.mubr.bf16.mxu0 0
      %2203 = vmatmul.mubr.bf16.gmra.mrb[0].mxu0 %v2168
      %v2204 = vpop.f32.mrb[0].mxu0
      %v2205 = vadd.f32 0.0, %v2204
      %v2206 = vpop.f32.mrb[0].mxu0
      %v2207 = vpop.f32.mrb[0].mxu0
      %v2208 = vadd.f32 0.0, %v2207
      %v2209 = vpop.f32.mrb[0].mxu0
      %2210 = vdwg.mxu0
      %2211 = vrot.lane.b32.xlu0 %v611, 120
      %v2212 = vpop.permute.xlu0 %2211
      %v2215 = vsel %vm1419, %v1781, 0
      %2217 = vmatprep.subr.bf16.mxu0 0
      %2218 = vmatpush1.bf16.msra.mxu0 %v2212
      %2219 = vmatprep.subr.bf16.mxu0 0
      %2220 = vmatpush1.bf16.msra.mxu0 0
      %2221 = vmatprep.subr.bf16.mxu0 0
      %2222 = vmatpush1.bf16.msra.mxu0 0
      %2223 = vmatprep.subr.bf16.mxu0 0
      %2224 = vmatpush1.bf16.msra.mxu0 0
      %2225 = vmatprep.subr.bf16.mxu0 0
      %2226 = vmatpush1.bf16.msra.mxu0 0
      %2227 = vmatprep.subr.bf16.mxu0 0
      %2228 = vmatpush1.bf16.msra.mxu0 0
      %2229 = vmatprep.subr.bf16.mxu0 0
      %2230 = vmatpush1.bf16.msra.mxu0 0
      %2231 = vmatprep.subr.bf16.mxu0 0
      %2232 = vmatpush1.bf16.msra.mxu0 0
      %2233 = vmatprep.subr.bf16.mxu0 0
      %2234 = vmatpush1.bf16.msra.mxu0 0
      %2235 = vmatprep.subr.bf16.mxu0 0
      %2236 = vmatpush1.bf16.msra.mxu0 0
      %2237 = vmatprep.subr.bf16.mxu0 0
      %2238 = vmatpush1.bf16.msra.mxu0 0
      %2239 = vmatprep.subr.bf16.mxu0 0
      %2240 = vmatpush1.bf16.msra.mxu0 0
      %2241 = vmatprep.subr.bf16.mxu0 0
      %2242 = vmatpush1.bf16.msra.mxu0 0
      %2243 = vmatprep.subr.bf16.mxu0 0
      %2244 = vmatpush1.bf16.msra.mxu0 0
      %2245 = vmatprep.subr.bf16.mxu0 0
      %2246 = vmatpush1.bf16.msra.mxu0 0
      %2247 = vmatprep.subr.bf16.mxu0 0
      %2248 = vmatpush1.bf16.msra.mxu0 0
      %2249 = vmatprep.mubr.bf16.mxu0 0
      %2250 = vmatmul.mubr.bf16.gmra.mrb[0].mxu0 %v2215
      %v2251 = vpop.f32.mrb[0].mxu0
      %v2252 = vadd.f32 0.0, %v2251
      %v2253 = vpop.f32.mrb[0].mxu0
      %v2254 = vpop.f32.mrb[0].mxu0
      %v2255 = vadd.f32 0.0, %v2254
      %v2256 = vpop.f32.mrb[0].mxu0
      %2257 = vdwg.mxu0
      %2258 = vrot.lane.b32.xlu0 %v612, 120
      %v2259 = vpop.permute.xlu0 %2258
      %v2262 = vsel %vm1419, %v1782, 0
      %2264 = vmatprep.subr.bf16.mxu0 0
      %2265 = vmatpush1.bf16.msra.mxu0 %v2259
      %2266 = vmatprep.subr.bf16.mxu0 0
      %2267 = vmatpush1.bf16.msra.mxu0 0
      %2268 = vmatprep.subr.bf16.mxu0 0
      %2269 = vmatpush1.bf16.msra.mxu0 0
      %2270 = vmatprep.subr.bf16.mxu0 0
      %2271 = vmatpush1.bf16.msra.mxu0 0
      %2272 = vmatprep.subr.bf16.mxu0 0
      %2273 = vmatpush1.bf16.msra.mxu0 0
      %2274 = vmatprep.subr.bf16.mxu0 0
      %2275 = vmatpush1.bf16.msra.mxu0 0
      %2276 = vmatprep.subr.bf16.mxu0 0
      %2277 = vmatpush1.bf16.msra.mxu0 0
      %2278 = vmatprep.subr.bf16.mxu0 0
      %2279 = vmatpush1.bf16.msra.mxu0 0
      %2280 = vmatprep.subr.bf16.mxu0 0
      %2281 = vmatpush1.bf16.msra.mxu0 0
      %2282 = vmatprep.subr.bf16.mxu0 0
      %2283 = vmatpush1.bf16.msra.mxu0 0
      %2284 = vmatprep.subr.bf16.mxu0 0
      %2285 = vmatpush1.bf16.msra.mxu0 0
      %2286 = vmatprep.subr.bf16.mxu0 0
      %2287 = vmatpush1.bf16.msra.mxu0 0
      %2288 = vmatprep.subr.bf16.mxu0 0
      %2289 = vmatpush1.bf16.msra.mxu0 0
      %2290 = vmatprep.subr.bf16.mxu0 0
      %2291 = vmatpush1.bf16.msra.mxu0 0
      %2292 = vmatprep.subr.bf16.mxu0 0
      %2293 = vmatpush1.bf16.msra.mxu0 0
      %2294 = vmatprep.subr.bf16.mxu0 0
      %2295 = vmatpush1.bf16.msra.mxu0 0
      %2296 = vmatprep.mubr.bf16.mxu0 0
      %2297 = vmatmul.mubr.bf16.gmra.mrb[0].mxu0 %v2262
      %v2298 = vpop.f32.mrb[0].mxu0
      %v2299 = vadd.f32 0.0, %v2298
      %v2300 = vpop.f32.mrb[0].mxu0
      %v2301 = vpop.f32.mrb[0].mxu0
      %v2302 = vadd.f32 0.0, %v2301
      %v2303 = vpop.f32.mrb[0].mxu0
      %2304 = vdwg.mxu0
      %2305 = vrot.lane.b32.xlu0 %v613, 120
      %v2306 = vpop.permute.xlu0 %2305
      %v2309 = vsel %vm1419, %v1783, 0
      %2311 = vmatprep.subr.bf16.mxu0 0
      %2312 = vmatpush1.bf16.msra.mxu0 %v2306
      %2313 = vmatprep.subr.bf16.mxu0 0
      %2314 = vmatpush1.bf16.msra.mxu0 0
      %2315 = vmatprep.subr.bf16.mxu0 0
      %2316 = vmatpush1.bf16.msra.mxu0 0
      %2317 = vmatprep.subr.bf16.mxu0 0
      %2318 = vmatpush1.bf16.msra.mxu0 0
      %2319 = vmatprep.subr.bf16.mxu0 0
      %2320 = vmatpush1.bf16.msra.mxu0 0
      %2321 = vmatprep.subr.bf16.mxu0 0
      %2322 = vmatpush1.bf16.msra.mxu0 0
      %2323 = vmatprep.subr.bf16.mxu0 0
      %2324 = vmatpush1.bf16.msra.mxu0 0
      %2325 = vmatprep.subr.bf16.mxu0 0
      %2326 = vmatpush1.bf16.msra.mxu0 0
      %2327 = vmatprep.subr.bf16.mxu0 0
      %2328 = vmatpush1.bf16.msra.mxu0 0
      %2329 = vmatprep.subr.bf16.mxu0 0
      %2330 = vmatpush1.bf16.msra.mxu0 0
      %2331 = vmatprep.subr.bf16.mxu0 0
      %2332 = vmatpush1.bf16.msra.mxu0 0
      %2333 = vmatprep.subr.bf16.mxu0 0
      %2334 = vmatpush1.bf16.msra.mxu0 0
      %2335 = vmatprep.subr.bf16.mxu0 0
      %2336 = vmatpush1.bf16.msra.mxu0 0
      %2337 = vmatprep.subr.bf16.mxu0 0
      %2338 = vmatpush1.bf16.msra.mxu0 0
      %2339 = vmatprep.subr.bf16.mxu0 0
      %2340 = vmatpush1.bf16.msra.mxu0 0
      %2341 = vmatprep.subr.bf16.mxu0 0
      %2342 = vmatpush1.bf16.msra.mxu0 0
      %2343 = vmatprep.mubr.bf16.mxu0 0
      %2344 = vmatmul.mubr.bf16.gmra.mrb[0].mxu0 %v2309
      %v2345 = vpop.f32.mrb[0].mxu0
      %v2346 = vadd.f32 0.0, %v2345
      %v2347 = vpop.f32.mrb[0].mxu0
      %v2348 = vpop.f32.mrb[0].mxu0
      %v2349 = vadd.f32 0.0, %v2348
      %v2350 = vpop.f32.mrb[0].mxu0
      %2351 = vdwg.mxu0
      %2352 = vrot.lane.b32.xlu0 %v614, 120
      %v2353 = vpop.permute.xlu0 %2352
      %v2356 = vsel %vm1419, %v1784, 0
      %2358 = vmatprep.subr.bf16.mxu0 0
      %2359 = vmatpush1.bf16.msra.mxu0 %v2353
      %2360 = vmatprep.subr.bf16.mxu0 0
      %2361 = vmatpush1.bf16.msra.mxu0 0
      %2362 = vmatprep.subr.bf16.mxu0 0
      %2363 = vmatpush1.bf16.msra.mxu0 0
      %2364 = vmatprep.subr.bf16.mxu0 0
      %2365 = vmatpush1.bf16.msra.mxu0 0
      %2366 = vmatprep.subr.bf16.mxu0 0
      %2367 = vmatpush1.bf16.msra.mxu0 0
      %2368 = vmatprep.subr.bf16.mxu0 0
      %2369 = vmatpush1.bf16.msra.mxu0 0
      %2370 = vmatprep.subr.bf16.mxu0 0
      %2371 = vmatpush1.bf16.msra.mxu0 0
      %2372 = vmatprep.subr.bf16.mxu0 0
      %2373 = vmatpush1.bf16.msra.mxu0 0
      %2374 = vmatprep.subr.bf16.mxu0 0
      %2375 = vmatpush1.bf16.msra.mxu0 0
      %2376 = vmatprep.subr.bf16.mxu0 0
      %2377 = vmatpush1.bf16.msra.mxu0 0
      %2378 = vmatprep.subr.bf16.mxu0 0
      %2379 = vmatpush1.bf16.msra.mxu0 0
      %2380 = vmatprep.subr.bf16.mxu0 0
      %2381 = vmatpush1.bf16.msra.mxu0 0
      %2382 = vmatprep.subr.bf16.mxu0 0
      %2383 = vmatpush1.bf16.msra.mxu0 0
      %2384 = vmatprep.subr.bf16.mxu0 0
      %2385 = vmatpush1.bf16.msra.mxu0 0
      %2386 = vmatprep.subr.bf16.mxu0 0
      %2387 = vmatpush1.bf16.msra.mxu0 0
      %2388 = vmatprep.subr.bf16.mxu0 0
      %2389 = vmatpush1.bf16.msra.mxu0 0
      %2390 = vmatprep.mubr.bf16.mxu0 0
      %2391 = vmatmul.mubr.bf16.gmra.mrb[0].mxu0 %v2356
      %v2392 = vpop.f32.mrb[0].mxu0
      %v2393 = vadd.f32 0.0, %v2392
      %v2394 = vpop.f32.mrb[0].mxu0
      %v2395 = vpop.f32.mrb[0].mxu0
      %v2396 = vadd.f32 0.0, %v2395
      %v2397 = vpop.f32.mrb[0].mxu0
      %2398 = vdwg.mxu0
      %2399 = vrot.lane.b32.xlu0 %v615, 120
      %v2400 = vpop.permute.xlu0 %2399
      %v2403 = vsel %vm1419, %v1785, 0
      %2405 = vmatprep.subr.bf16.mxu0 0
      %2406 = vmatpush1.bf16.msra.mxu0 %v2400
      %2407 = vmatprep.subr.bf16.mxu0 0
      %2408 = vmatpush1.bf16.msra.mxu0 0
      %2409 = vmatprep.subr.bf16.mxu0 0
      %2410 = vmatpush1.bf16.msra.mxu0 0
      %2411 = vmatprep.subr.bf16.mxu0 0
      %2412 = vmatpush1.bf16.msra.mxu0 0
      %2413 = vmatprep.subr.bf16.mxu0 0
      %2414 = vmatpush1.bf16.msra.mxu0 0
      %2415 = vmatprep.subr.bf16.mxu0 0
      %2416 = vmatpush1.bf16.msra.mxu0 0
      %2417 = vmatprep.subr.bf16.mxu0 0
      %2418 = vmatpush1.bf16.msra.mxu0 0
      %2419 = vmatprep.subr.bf16.mxu0 0
      %2420 = vmatpush1.bf16.msra.mxu0 0
      %2421 = vmatprep.subr.bf16.mxu0 0
      %2422 = vmatpush1.bf16.msra.mxu0 0
      %2423 = vmatprep.subr.bf16.mxu0 0
      %2424 = vmatpush1.bf16.msra.mxu0 0
      %2425 = vmatprep.subr.bf16.mxu0 0
      %2426 = vmatpush1.bf16.msra.mxu0 0
      %2427 = vmatprep.subr.bf16.mxu0 0
      %2428 = vmatpush1.bf16.msra.mxu0 0
      %2429 = vmatprep.subr.bf16.mxu0 0
      %2430 = vmatpush1.bf16.msra.mxu0 0
      %2431 = vmatprep.subr.bf16.mxu0 0
      %2432 = vmatpush1.bf16.msra.mxu0 0
      %2433 = vmatprep.subr.bf16.mxu0 0
      %2434 = vmatpush1.bf16.msra.mxu0 0
      %2435 = vmatprep.subr.bf16.mxu0 0
      %2436 = vmatpush1.bf16.msra.mxu0 0
      %2437 = vmatprep.mubr.bf16.mxu0 0
      %2438 = vmatmul.mubr.bf16.gmra.mrb[0].mxu0 %v2403
      %v2439 = vpop.f32.mrb[0].mxu0
      %v2440 = vadd.f32 0.0, %v2439
      %v2441 = vpop.f32.mrb[0].mxu0
      %v2442 = vpop.f32.mrb[0].mxu0
      %v2443 = vadd.f32 0.0, %v2442
      %v2444 = vpop.f32.mrb[0].mxu0
      %2445 = vdwg.mxu0
      %2446 = vrot.lane.b32.xlu0 %v616, 120
      %v2447 = vpop.permute.xlu0 %2446
      %v2450 = vsel %vm1419, %v1786, 0
      %2452 = vmatprep.subr.bf16.mxu0 0
      %2453 = vmatpush1.bf16.msra.mxu0 %v2447
      %2454 = vmatprep.subr.bf16.mxu0 0
      %2455 = vmatpush1.bf16.msra.mxu0 0
      %2456 = vmatprep.subr.bf16.mxu0 0
      %2457 = vmatpush1.bf16.msra.mxu0 0
      %2458 = vmatprep.subr.bf16.mxu0 0
      %2459 = vmatpush1.bf16.msra.mxu0 0
      %2460 = vmatprep.subr.bf16.mxu0 0
      %2461 = vmatpush1.bf16.msra.mxu0 0
      %2462 = vmatprep.subr.bf16.mxu0 0
      %2463 = vmatpush1.bf16.msra.mxu0 0
      %2464 = vmatprep.subr.bf16.mxu0 0
      %2465 = vmatpush1.bf16.msra.mxu0 0
      %2466 = vmatprep.subr.bf16.mxu0 0
      %2467 = vmatpush1.bf16.msra.mxu0 0
      %2468 = vmatprep.subr.bf16.mxu0 0
      %2469 = vmatpush1.bf16.msra.mxu0 0
      %2470 = vmatprep.subr.bf16.mxu0 0
      %2471 = vmatpush1.bf16.msra.mxu0 0
      %2472 = vmatprep.subr.bf16.mxu0 0
      %2473 = vmatpush1.bf16.msra.mxu0 0
      %2474 = vmatprep.subr.bf16.mxu0 0
      %2475 = vmatpush1.bf16.msra.mxu0 0
      %2476 = vmatprep.subr.bf16.mxu0 0
      %2477 = vmatpush1.bf16.msra.mxu0 0
      %2478 = vmatprep.subr.bf16.mxu0 0
      %2479 = vmatpush1.bf16.msra.mxu0 0
      %2480 = vmatprep.subr.bf16.mxu0 0
      %2481 = vmatpush1.bf16.msra.mxu0 0
      %2482 = vmatprep.subr.bf16.mxu0 0
      %2483 = vmatpush1.bf16.msra.mxu0 0
      %2484 = vmatprep.mubr.bf16.mxu0 0
      %2485 = vmatmul.mubr.bf16.gmra.mrb[0].mxu0 %v2450
      %v2486 = vpop.f32.mrb[0].mxu0
      %v2487 = vadd.f32 0.0, %v2486
      %v2488 = vpop.f32.mrb[0].mxu0
      %v2489 = vpop.f32.mrb[0].mxu0
      %v2490 = vadd.f32 0.0, %v2489
      %v2491 = vpop.f32.mrb[0].mxu0
      %2492 = vdwg.mxu0
      %2493 = vrot.lane.b32.xlu0 %v617, 120
      %v2494 = vpop.permute.xlu0 %2493
      %v2497 = vsel %vm1419, %v1787, 0
      %2499 = vmatprep.subr.bf16.mxu0 0
      %2500 = vmatpush1.bf16.msra.mxu0 %v2494
      %2501 = vmatprep.subr.bf16.mxu0 0
      %2502 = vmatpush1.bf16.msra.mxu0 0
      %2503 = vmatprep.subr.bf16.mxu0 0
      %2504 = vmatpush1.bf16.msra.mxu0 0
      %2505 = vmatprep.subr.bf16.mxu0 0
      %2506 = vmatpush1.bf16.msra.mxu0 0
      %2507 = vmatprep.subr.bf16.mxu0 0
      %2508 = vmatpush1.bf16.msra.mxu0 0
      %2509 = vmatprep.subr.bf16.mxu0 0
      %2510 = vmatpush1.bf16.msra.mxu0 0
      %2511 = vmatprep.subr.bf16.mxu0 0
      %2512 = vmatpush1.bf16.msra.mxu0 0
      %2513 = vmatprep.subr.bf16.mxu0 0
      %2514 = vmatpush1.bf16.msra.mxu0 0
      %2515 = vmatprep.subr.bf16.mxu0 0
      %2516 = vmatpush1.bf16.msra.mxu0 0
      %2517 = vmatprep.subr.bf16.mxu0 0
      %2518 = vmatpush1.bf16.msra.mxu0 0
      %2519 = vmatprep.subr.bf16.mxu0 0
      %2520 = vmatpush1.bf16.msra.mxu0 0
      %2521 = vmatprep.subr.bf16.mxu0 0
      %2522 = vmatpush1.bf16.msra.mxu0 0
      %2523 = vmatprep.subr.bf16.mxu0 0
      %2524 = vmatpush1.bf16.msra.mxu0 0
      %2525 = vmatprep.subr.bf16.mxu0 0
      %2526 = vmatpush1.bf16.msra.mxu0 0
      %2527 = vmatprep.subr.bf16.mxu0 0
      %2528 = vmatpush1.bf16.msra.mxu0 0
      %2529 = vmatprep.subr.bf16.mxu0 0
      %2530 = vmatpush1.bf16.msra.mxu0 0
      %2531 = vmatprep.mubr.bf16.mxu0 0
      %2532 = vmatmul.mubr.bf16.gmra.mrb[0].mxu0 %v2497
      %v2533 = vpop.f32.mrb[0].mxu0
      %v2534 = vadd.f32 0.0, %v2533
      %v2535 = vpop.f32.mrb[0].mxu0
      %v2536 = vpop.f32.mrb[0].mxu0
      %v2537 = vadd.f32 0.0, %v2536
      %v2538 = vpop.f32.mrb[0].mxu0
      %2539 = vdwg.mxu0
      %v2540 = vld [vmem:[%s4] sm:$0x1]
      %v2542 = vlaneseq
      %v2543 = vshrl.u32 %v2542, 7
      %v2544 = vsub.s32 0, %v2543
      %v2545 = vrot.slane %v2540, %v2544
      %v2547 = vmul.f32 %v1829, %v2545
      %v2548 = vmul.f32 %v1832, %v2545
      %v2549 = vmul.f32 %v1876, %v2545
      %v2550 = vmul.f32 %v1879, %v2545
      %v2551 = vmul.f32 %v1923, %v2545
      %v2552 = vmul.f32 %v1926, %v2545
      %v2553 = vmul.f32 %v1970, %v2545
      %v2554 = vmul.f32 %v1973, %v2545
      %v2555 = vmul.f32 %v2017, %v2545
      %v2556 = vmul.f32 %v2020, %v2545
      %v2557 = vmul.f32 %v2064, %v2545
      %v2558 = vmul.f32 %v2067, %v2545
      %v2559 = vmul.f32 %v2111, %v2545
      %v2560 = vmul.f32 %v2114, %v2545
      %v2561 = vmul.f32 %v2158, %v2545
      %v2562 = vmul.f32 %v2161, %v2545
      %v2563 = vmul.f32 %v2205, %v2545
      %v2564 = vmul.f32 %v2208, %v2545
      %v2565 = vmul.f32 %v2252, %v2545
      %v2566 = vmul.f32 %v2255, %v2545
      %v2567 = vmul.f32 %v2299, %v2545
      %v2568 = vmul.f32 %v2302, %v2545
      %v2569 = vmul.f32 %v2346, %v2545
      %v2570 = vmul.f32 %v2349, %v2545
      %v2571 = vmul.f32 %v2393, %v2545
      %v2572 = vmul.f32 %v2396, %v2545
      %v2573 = vmul.f32 %v2440, %v2545
      %v2574 = vmul.f32 %v2443, %v2545
      %v2575 = vmul.f32 %v2487, %v2545
      %v2576 = vmul.f32 %v2490, %v2545
      %v2577 = vmul.f32 %v2534, %v2545
      %v2578 = vmul.f32 %v2537, %v2545
      %v2579 = vld [vmem:[%s5] sm:$0x1]
      %v2581 = vlaneseq
      %v2582 = vshrl.u32 %v2581, 7
      %v2583 = vsub.s32 0, %v2582
      %v2584 = vrot.slane %v2579, %v2583
      %v2586 = vadd.f32 %v2547, %v2584
      %v2587 = vadd.f32 %v2548, %v2584
      %v2588 = vadd.f32 %v2549, %v2584
      %v2589 = vadd.f32 %v2550, %v2584
      %v2590 = vadd.f32 %v2551, %v2584
      %v2591 = vadd.f32 %v2552, %v2584
      %v2592 = vadd.f32 %v2553, %v2584
      %v2593 = vadd.f32 %v2554, %v2584
      %v2594 = vadd.f32 %v2555, %v2584
      %v2595 = vadd.f32 %v2556, %v2584
      %v2596 = vadd.f32 %v2557, %v2584
      %v2597 = vadd.f32 %v2558, %v2584
      %v2598 = vadd.f32 %v2559, %v2584
      %v2599 = vadd.f32 %v2560, %v2584
      %v2600 = vadd.f32 %v2561, %v2584
      %v2601 = vadd.f32 %v2562, %v2584
      %v2602 = vadd.f32 %v2563, %v2584
      %v2603 = vadd.f32 %v2564, %v2584
      %v2604 = vadd.f32 %v2565, %v2584
      %v2605 = vadd.f32 %v2566, %v2584
      %v2606 = vadd.f32 %v2567, %v2584
      %v2607 = vadd.f32 %v2568, %v2584
      %v2608 = vadd.f32 %v2569, %v2584
      %v2609 = vadd.f32 %v2570, %v2584
      %v2610 = vadd.f32 %v2571, %v2584
      %v2611 = vadd.f32 %v2572, %v2584
      %v2612 = vadd.f32 %v2573, %v2584
      %v2613 = vadd.f32 %v2574, %v2584
      %v2614 = vadd.f32 %v2575, %v2584
      %v2615 = vadd.f32 %v2576, %v2584
      %v2616 = vadd.f32 %v2577, %v2584
      %v2617 = vadd.f32 %v2578, %v2584
      %vm2618 = vcmask 31744
      %2619 = vst.msk [vmem:[%s258] sm:$0xff] %vm2618, %v2586
      %2620 = vst.msk [vmem:[%s258 + $0x8] sm:$0xff] %vm2618, %v2587
      %2621 = vst.msk [vmem:[%s258 + $0x10] sm:$0xff] %vm2618, %v2588
      %2622 = vst.msk [vmem:[%s258 + $0x18] sm:$0xff] %vm2618, %v2589
      %2623 = vst.msk [vmem:[%s258 + $0x20] sm:$0xff] %vm2618, %v2590
      %2624 = vst.msk [vmem:[%s258 + $0x28] sm:$0xff] %vm2618, %v2591
      %2625 = vst.msk [vmem:[%s258 + $0x30] sm:$0xff] %vm2618, %v2592
      %2626 = vst.msk [vmem:[%s258 + $0x38] sm:$0xff] %vm2618, %v2593
      %2627 = vst.msk [vmem:[%s258 + $0x40] sm:$0xff] %vm2618, %v2594
      %2628 = vst.msk [vmem:[%s258 + $0x48] sm:$0xff] %vm2618, %v2595
      %2629 = vst.msk [vmem:[%s258 + $0x50] sm:$0xff] %vm2618, %v2596
      %2630 = vst.msk [vmem:[%s258 + $0x58] sm:$0xff] %vm2618, %v2597
      %2631 = vst.msk [vmem:[%s258 + $0x60] sm:$0xff] %vm2618, %v2598
      %2632 = vst.msk [vmem:[%s258 + $0x68] sm:$0xff] %vm2618, %v2599
      %2633 = vst.msk [vmem:[%s258 + $0x70] sm:$0xff] %vm2618, %v2600
      %2634 = vst.msk [vmem:[%s258 + $0x78] sm:$0xff] %vm2618, %v2601
      %2635 = vst.msk [vmem:[%s258 + $0x80] sm:$0xff] %vm2618, %v2602
      %2636 = vst.msk [vmem:[%s258 + $0x88] sm:$0xff] %vm2618, %v2603
      %2637 = vst.msk [vmem:[%s258 + $0x90] sm:$0xff] %vm2618, %v2604
      %2638 = vst.msk [vmem:[%s258 + $0x98] sm:$0xff] %vm2618, %v2605
      %2639 = vst.msk [vmem:[%s258 + $0xa0] sm:$0xff] %vm2618, %v2606
      %2640 = vst.msk [vmem:[%s258 + $0xa8] sm:$0xff] %vm2618, %v2607
      %2641 = vst.msk [vmem:[%s258 + $0xb0] sm:$0xff] %vm2618, %v2608
      %2642 = vst.msk [vmem:[%s258 + $0xb8] sm:$0xff] %vm2618, %v2609
      %2643 = vst.msk [vmem:[%s258 + $0xc0] sm:$0xff] %vm2618, %v2610
      %2644 = vst.msk [vmem:[%s258 + $0xc8] sm:$0xff] %vm2618, %v2611
      %2645 = vst.msk [vmem:[%s258 + $0xd0] sm:$0xff] %vm2618, %v2612
      %2646 = vst.msk [vmem:[%s258 + $0xd8] sm:$0xff] %vm2618, %v2613
      %2647 = vst.msk [vmem:[%s258 + $0xe0] sm:$0xff] %vm2618, %v2614
      %2648 = vst.msk [vmem:[%s258 + $0xe8] sm:$0xff] %vm2618, %v2615
      %2649 = vst.msk [vmem:[%s258 + $0xf0] sm:$0xff] %vm2618, %v2616
      %2650 = vst.msk [vmem:[%s258 + $0xf8] sm:$0xff] %vm2618, %v2617
      %2651 = vrot.lane.b32.xlu0 %v602, 126
      %v2652 = vpop.permute.xlu0 %2651
      %2653 = vrot.lane.b32.xlu0 %v602, 122
      %v2654 = vpop.permute.xlu0 %2653
      %v2656 = vsel %vm621, %v2652, 0
      %v2659 = vsel %vm621, %v2654, 0
      %2661 = vmatprep.subr.bf16.mxu0 0
      %2662 = vmatpush1.bf16.xpose.msra.mxu0 %v2659
      %2663 = vmatprep.subr.bf16.mxu0 0
      %2664 = vmatpush1.bf16.xpose.msra.mxu0 0
      %2665 = vmatprep.subr.bf16.mxu0 0
      %2666 = vmatpush1.bf16.xpose.msra.mxu0 0
      %2667 = vmatprep.subr.bf16.mxu0 0
      %2668 = vmatpush1.bf16.xpose.msra.mxu0 0
      %2669 = vmatprep.subr.bf16.mxu0 0
      %2670 = vmatpush1.bf16.xpose.msra.mxu0 0
      %2671 = vmatprep.subr.bf16.mxu0 0
      %2672 = vmatpush1.bf16.xpose.msra.mxu0 0
      %2673 = vmatprep.subr.bf16.mxu0 0
      %2674 = vmatpush1.bf16.xpose.msra.mxu0 0
      %2675 = vmatprep.subr.bf16.mxu0 0
      %2676 = vmatpush1.bf16.xpose.msra.mxu0 0
      %2677 = vmatprep.subr.bf16.mxu0 0
      %2678 = vmatpush1.bf16.xpose.msra.mxu0 0
      %2679 = vmatprep.subr.bf16.mxu0 0
      %2680 = vmatpush1.bf16.xpose.msra.mxu0 0
      %2681 = vmatprep.subr.bf16.mxu0 0
      %2682 = vmatpush1.bf16.xpose.msra.mxu0 0
      %2683 = vmatprep.subr.bf16.mxu0 0
      %2684 = vmatpush1.bf16.xpose.msra.mxu0 0
      %2685 = vmatprep.subr.bf16.mxu0 0
      %2686 = vmatpush1.bf16.xpose.msra.mxu0 0
      %2687 = vmatprep.subr.bf16.mxu0 0
      %2688 = vmatpush1.bf16.xpose.msra.mxu0 0
      %2689 = vmatprep.subr.bf16.mxu0 0
      %2690 = vmatpush1.bf16.xpose.msra.mxu0 0
      %2691 = vmatprep.subr.bf16.mxu0 0
      %2692 = vmatpush1.bf16.xpose.msra.mxu0 0
      %2693 = vmatprep.mubr.bf16.mxu0 0
      %2694 = vmatmul.mubr.bf16.gmra.mrb[0].mxu0 %v2656
      %v2695 = vpop.f32.mrb[0].mxu0
      %v2696 = vadd.f32 0.0, %v2695
      %v2697 = vpop.f32.mrb[0].mxu0
      %v2698 = vpop.f32.mrb[0].mxu0
      %v2699 = vadd.f32 0.0, %v2698
      %v2700 = vpop.f32.mrb[0].mxu0
      %2701 = vdwg.mxu0
      %2702 = vrot.lane.b32.xlu0 %v603, 126
      %v2703 = vpop.permute.xlu0 %2702
      %2704 = vrot.lane.b32.xlu0 %v603, 122
      %v2705 = vpop.permute.xlu0 %2704
      %v2707 = vsel %vm621, %v2703, 0
      %v2710 = vsel %vm621, %v2705, 0
      %2712 = vmatprep.subr.bf16.mxu0 0
      %2713 = vmatpush1.bf16.xpose.msra.mxu0 %v2710
      %2714 = vmatprep.subr.bf16.mxu0 0
      %2715 = vmatpush1.bf16.xpose.msra.mxu0 0
      %2716 = vmatprep.subr.bf16.mxu0 0
      %2717 = vmatpush1.bf16.xpose.msra.mxu0 0
      %2718 = vmatprep.subr.bf16.mxu0 0
      %2719 = vmatpush1.bf16.xpose.msra.mxu0 0
      %2720 = vmatprep.subr.bf16.mxu0 0
      %2721 = vmatpush1.bf16.xpose.msra.mxu0 0
      %2722 = vmatprep.subr.bf16.mxu0 0
      %2723 = vmatpush1.bf16.xpose.msra.mxu0 0
      %2724 = vmatprep.subr.bf16.mxu0 0
      %2725 = vmatpush1.bf16.xpose.msra.mxu0 0
      %2726 = vmatprep.subr.bf16.mxu0 0
      %2727 = vmatpush1.bf16.xpose.msra.mxu0 0
      %2728 = vmatprep.subr.bf16.mxu0 0
      %2729 = vmatpush1.bf16.xpose.msra.mxu0 0
      %2730 = vmatprep.subr.bf16.mxu0 0
      %2731 = vmatpush1.bf16.xpose.msra.mxu0 0
      %2732 = vmatprep.subr.bf16.mxu0 0
      %2733 = vmatpush1.bf16.xpose.msra.mxu0 0
      %2734 = vmatprep.subr.bf16.mxu0 0
      %2735 = vmatpush1.bf16.xpose.msra.mxu0 0
      %2736 = vmatprep.subr.bf16.mxu0 0
      %2737 = vmatpush1.bf16.xpose.msra.mxu0 0
      %2738 = vmatprep.subr.bf16.mxu0 0
      %2739 = vmatpush1.bf16.xpose.msra.mxu0 0
      %2740 = vmatprep.subr.bf16.mxu0 0
      %2741 = vmatpush1.bf16.xpose.msra.mxu0 0
      %2742 = vmatprep.subr.bf16.mxu0 0
      %2743 = vmatpush1.bf16.xpose.msra.mxu0 0
      %2744 = vmatprep.mubr.bf16.mxu0 0
      %2745 = vmatmul.mubr.bf16.gmra.mrb[0].mxu0 %v2707
      %v2746 = vpop.f32.mrb[0].mxu0
      %v2747 = vadd.f32 0.0, %v2746
      %v2748 = vpop.f32.mrb[0].mxu0
      %v2749 = vpop.f32.mrb[0].mxu0
      %v2750 = vadd.f32 0.0, %v2749
      %v2751 = vpop.f32.mrb[0].mxu0
      %2752 = vdwg.mxu0
      %2753 = vrot.lane.b32.xlu0 %v604, 126
      %v2754 = vpop.permute.xlu0 %2753
      %2755 = vrot.lane.b32.xlu0 %v604, 122
      %v2756 = vpop.permute.xlu0 %2755
      %v2758 = vsel %vm621, %v2754, 0
      %v2761 = vsel %vm621, %v2756, 0
      %2763 = vmatprep.subr.bf16.mxu0 0
      %2764 = vmatpush1.bf16.xpose.msra.mxu0 %v2761
      %2765 = vmatprep.subr.bf16.mxu0 0
      %2766 = vmatpush1.bf16.xpose.msra.mxu0 0
      %2767 = vmatprep.subr.bf16.mxu0 0
      %2768 = vmatpush1.bf16.xpose.msra.mxu0 0
      %2769 = vmatprep.subr.bf16.mxu0 0
      %2770 = vmatpush1.bf16.xpose.msra.mxu0 0
      %2771 = vmatprep.subr.bf16.mxu0 0
      %2772 = vmatpush1.bf16.xpose.msra.mxu0 0
      %2773 = vmatprep.subr.bf16.mxu0 0
      %2774 = vmatpush1.bf16.xpose.msra.mxu0 0
      %2775 = vmatprep.subr.bf16.mxu0 0
      %2776 = vmatpush1.bf16.xpose.msra.mxu0 0
      %2777 = vmatprep.subr.bf16.mxu0 0
      %2778 = vmatpush1.bf16.xpose.msra.mxu0 0
      %2779 = vmatprep.subr.bf16.mxu0 0
      %2780 = vmatpush1.bf16.xpose.msra.mxu0 0
      %2781 = vmatprep.subr.bf16.mxu0 0
      %2782 = vmatpush1.bf16.xpose.msra.mxu0 0
      %2783 = vmatprep.subr.bf16.mxu0 0
      %2784 = vmatpush1.bf16.xpose.msra.mxu0 0
      %2785 = vmatprep.subr.bf16.mxu0 0
      %2786 = vmatpush1.bf16.xpose.msra.mxu0 0
      %2787 = vmatprep.subr.bf16.mxu0 0
      %2788 = vmatpush1.bf16.xpose.msra.mxu0 0
      %2789 = vmatprep.subr.bf16.mxu0 0
      %2790 = vmatpush1.bf16.xpose.msra.mxu0 0
      %2791 = vmatprep.subr.bf16.mxu0 0
      %2792 = vmatpush1.bf16.xpose.msra.mxu0 0
      %2793 = vmatprep.subr.bf16.mxu0 0
      %2794 = vmatpush1.bf16.xpose.msra.mxu0 0
      %2795 = vmatprep.mubr.bf16.mxu0 0
      %2796 = vmatmul.mubr.bf16.gmra.mrb[0].mxu0 %v2758
      %v2797 = vpop.f32.mrb[0].mxu0
      %v2798 = vadd.f32 0.0, %v2797
      %v2799 = vpop.f32.mrb[0].mxu0
      %v2800 = vpop.f32.mrb[0].mxu0
      %v2801 = vadd.f32 0.0, %v2800
      %v2802 = vpop.f32.mrb[0].mxu0
      %2803 = vdwg.mxu0
      %2804 = vrot.lane.b32.xlu0 %v605, 126
      %v2805 = vpop.permute.xlu0 %2804
      %2806 = vrot.lane.b32.xlu0 %v605, 122
      %v2807 = vpop.permute.xlu0 %2806
      %v2809 = vsel %vm621, %v2805, 0
      %v2812 = vsel %vm621, %v2807, 0
      %2814 = vmatprep.subr.bf16.mxu0 0
      %2815 = vmatpush1.bf16.xpose.msra.mxu0 %v2812
      %2816 = vmatprep.subr.bf16.mxu0 0
      %2817 = vmatpush1.bf16.xpose.msra.mxu0 0
      %2818 = vmatprep.subr.bf16.mxu0 0
      %2819 = vmatpush1.bf16.xpose.msra.mxu0 0
      %2820 = vmatprep.subr.bf16.mxu0 0
      %2821 = vmatpush1.bf16.xpose.msra.mxu0 0
      %2822 = vmatprep.subr.bf16.mxu0 0
      %2823 = vmatpush1.bf16.xpose.msra.mxu0 0
      %2824 = vmatprep.subr.bf16.mxu0 0
      %2825 = vmatpush1.bf16.xpose.msra.mxu0 0
      %2826 = vmatprep.subr.bf16.mxu0 0
      %2827 = vmatpush1.bf16.xpose.msra.mxu0 0
      %2828 = vmatprep.subr.bf16.mxu0 0
      %2829 = vmatpush1.bf16.xpose.msra.mxu0 0
      %2830 = vmatprep.subr.bf16.mxu0 0
      %2831 = vmatpush1.bf16.xpose.msra.mxu0 0
      %2832 = vmatprep.subr.bf16.mxu0 0
      %2833 = vmatpush1.bf16.xpose.msra.mxu0 0
      %2834 = vmatprep.subr.bf16.mxu0 0
      %2835 = vmatpush1.bf16.xpose.msra.mxu0 0
      %2836 = vmatprep.subr.bf16.mxu0 0
      %2837 = vmatpush1.bf16.xpose.msra.mxu0 0
      %2838 = vmatprep.subr.bf16.mxu0 0
      %2839 = vmatpush1.bf16.xpose.msra.mxu0 0
      %2840 = vmatprep.subr.bf16.mxu0 0
      %2841 = vmatpush1.bf16.xpose.msra.mxu0 0
      %2842 = vmatprep.subr.bf16.mxu0 0
      %2843 = vmatpush1.bf16.xpose.msra.mxu0 0
      %2844 = vmatprep.subr.bf16.mxu0 0
      %2845 = vmatpush1.bf16.xpose.msra.mxu0 0
      %2846 = vmatprep.mubr.bf16.mxu0 0
      %2847 = vmatmul.mubr.bf16.gmra.mrb[0].mxu0 %v2809
      %v2848 = vpop.f32.mrb[0].mxu0
      %v2849 = vadd.f32 0.0, %v2848
      %v2850 = vpop.f32.mrb[0].mxu0
      %v2851 = vpop.f32.mrb[0].mxu0
      %v2852 = vadd.f32 0.0, %v2851
      %v2853 = vpop.f32.mrb[0].mxu0
      %2854 = vdwg.mxu0
      %2855 = vrot.lane.b32.xlu0 %v606, 126
      %v2856 = vpop.permute.xlu0 %2855
      %2857 = vrot.lane.b32.xlu0 %v606, 122
      %v2858 = vpop.permute.xlu0 %2857
      %v2860 = vsel %vm621, %v2856, 0
      %v2863 = vsel %vm621, %v2858, 0
      %2865 = vmatprep.subr.bf16.mxu0 0
      %2866 = vmatpush1.bf16.xpose.msra.mxu0 %v2863
      %2867 = vmatprep.subr.bf16.mxu0 0
      %2868 = vmatpush1.bf16.xpose.msra.mxu0 0
      %2869 = vmatprep.subr.bf16.mxu0 0
      %2870 = vmatpush1.bf16.xpose.msra.mxu0 0
      %2871 = vmatprep.subr.bf16.mxu0 0
      %2872 = vmatpush1.bf16.xpose.msra.mxu0 0
      %2873 = vmatprep.subr.bf16.mxu0 0
      %2874 = vmatpush1.bf16.xpose.msra.mxu0 0
      %2875 = vmatprep.subr.bf16.mxu0 0
      %2876 = vmatpush1.bf16.xpose.msra.mxu0 0
      %2877 = vmatprep.subr.bf16.mxu0 0
      %2878 = vmatpush1.bf16.xpose.msra.mxu0 0
      %2879 = vmatprep.subr.bf16.mxu0 0
      %2880 = vmatpush1.bf16.xpose.msra.mxu0 0
      %2881 = vmatprep.subr.bf16.mxu0 0
      %2882 = vmatpush1.bf16.xpose.msra.mxu0 0
      %2883 = vmatprep.subr.bf16.mxu0 0
      %2884 = vmatpush1.bf16.xpose.msra.mxu0 0
      %2885 = vmatprep.subr.bf16.mxu0 0
      %2886 = vmatpush1.bf16.xpose.msra.mxu0 0
      %2887 = vmatprep.subr.bf16.mxu0 0
      %2888 = vmatpush1.bf16.xpose.msra.mxu0 0
      %2889 = vmatprep.subr.bf16.mxu0 0
      %2890 = vmatpush1.bf16.xpose.msra.mxu0 0
      %2891 = vmatprep.subr.bf16.mxu0 0
      %2892 = vmatpush1.bf16.xpose.msra.mxu0 0
      %2893 = vmatprep.subr.bf16.mxu0 0
      %2894 = vmatpush1.bf16.xpose.msra.mxu0 0
      %2895 = vmatprep.subr.bf16.mxu0 0
      %2896 = vmatpush1.bf16.xpose.msra.mxu0 0
      %2897 = vmatprep.mubr.bf16.mxu0 0
      %2898 = vmatmul.mubr.bf16.gmra.mrb[0].mxu0 %v2860
      %v2899 = vpop.f32.mrb[0].mxu0
      %v2900 = vadd.f32 0.0, %v2899
      %v2901 = vpop.f32.mrb[0].mxu0
      %v2902 = vpop.f32.mrb[0].mxu0
      %v2903 = vadd.f32 0.0, %v2902
      %v2904 = vpop.f32.mrb[0].mxu0
      %2905 = vdwg.mxu0
      %2906 = vrot.lane.b32.xlu0 %v607, 126
      %v2907 = vpop.permute.xlu0 %2906
      %2908 = vrot.lane.b32.xlu0 %v607, 122
      %v2909 = vpop.permute.xlu0 %2908
      %v2911 = vsel %vm621, %v2907, 0
      %v2914 = vsel %vm621, %v2909, 0
      %2916 = vmatprep.subr.bf16.mxu0 0
      %2917 = vmatpush1.bf16.xpose.msra.mxu0 %v2914
      %2918 = vmatprep.subr.bf16.mxu0 0
      %2919 = vmatpush1.bf16.xpose.msra.mxu0 0
      %2920 = vmatprep.subr.bf16.mxu0 0
      %2921 = vmatpush1.bf16.xpose.msra.mxu0 0
      %2922 = vmatprep.subr.bf16.mxu0 0
      %2923 = vmatpush1.bf16.xpose.msra.mxu0 0
      %2924 = vmatprep.subr.bf16.mxu0 0
      %2925 = vmatpush1.bf16.xpose.msra.mxu0 0
      %2926 = vmatprep.subr.bf16.mxu0 0
      %2927 = vmatpush1.bf16.xpose.msra.mxu0 0
      %2928 = vmatprep.subr.bf16.mxu0 0
      %2929 = vmatpush1.bf16.xpose.msra.mxu0 0
      %2930 = vmatprep.subr.bf16.mxu0 0
      %2931 = vmatpush1.bf16.xpose.msra.mxu0 0
      %2932 = vmatprep.subr.bf16.mxu0 0
      %2933 = vmatpush1.bf16.xpose.msra.mxu0 0
      %2934 = vmatprep.subr.bf16.mxu0 0
      %2935 = vmatpush1.bf16.xpose.msra.mxu0 0
      %2936 = vmatprep.subr.bf16.mxu0 0
      %2937 = vmatpush1.bf16.xpose.msra.mxu0 0
      %2938 = vmatprep.subr.bf16.mxu0 0
      %2939 = vmatpush1.bf16.xpose.msra.mxu0 0
      %2940 = vmatprep.subr.bf16.mxu0 0
      %2941 = vmatpush1.bf16.xpose.msra.mxu0 0
      %2942 = vmatprep.subr.bf16.mxu0 0
      %2943 = vmatpush1.bf16.xpose.msra.mxu0 0
      %2944 = vmatprep.subr.bf16.mxu0 0
      %2945 = vmatpush1.bf16.xpose.msra.mxu0 0
      %2946 = vmatprep.subr.bf16.mxu0 0
      %2947 = vmatpush1.bf16.xpose.msra.mxu0 0
      %2948 = vmatprep.mubr.bf16.mxu0 0
      %2949 = vmatmul.mubr.bf16.gmra.mrb[0].mxu0 %v2911
      %v2950 = vpop.f32.mrb[0].mxu0
      %v2951 = vadd.f32 0.0, %v2950
      %v2952 = vpop.f32.mrb[0].mxu0
      %v2953 = vpop.f32.mrb[0].mxu0
      %v2954 = vadd.f32 0.0, %v2953
      %v2955 = vpop.f32.mrb[0].mxu0
      %2956 = vdwg.mxu0
      %2957 = vrot.lane.b32.xlu0 %v608, 126
      %v2958 = vpop.permute.xlu0 %2957
      %2959 = vrot.lane.b32.xlu0 %v608, 122
      %v2960 = vpop.permute.xlu0 %2959
      %v2962 = vsel %vm621, %v2958, 0
      %v2965 = vsel %vm621, %v2960, 0
      %2967 = vmatprep.subr.bf16.mxu0 0
      %2968 = vmatpush1.bf16.xpose.msra.mxu0 %v2965
      %2969 = vmatprep.subr.bf16.mxu0 0
      %2970 = vmatpush1.bf16.xpose.msra.mxu0 0
      %2971 = vmatprep.subr.bf16.mxu0 0
      %2972 = vmatpush1.bf16.xpose.msra.mxu0 0
      %2973 = vmatprep.subr.bf16.mxu0 0
      %2974 = vmatpush1.bf16.xpose.msra.mxu0 0
      %2975 = vmatprep.subr.bf16.mxu0 0
      %2976 = vmatpush1.bf16.xpose.msra.mxu0 0
      %2977 = vmatprep.subr.bf16.mxu0 0
      %2978 = vmatpush1.bf16.xpose.msra.mxu0 0
      %2979 = vmatprep.subr.bf16.mxu0 0
      %2980 = vmatpush1.bf16.xpose.msra.mxu0 0
      %2981 = vmatprep.subr.bf16.mxu0 0
      %2982 = vmatpush1.bf16.xpose.msra.mxu0 0
      %2983 = vmatprep.subr.bf16.mxu0 0
      %2984 = vmatpush1.bf16.xpose.msra.mxu0 0
      %2985 = vmatprep.subr.bf16.mxu0 0
      %2986 = vmatpush1.bf16.xpose.msra.mxu0 0
      %2987 = vmatprep.subr.bf16.mxu0 0
      %2988 = vmatpush1.bf16.xpose.msra.mxu0 0
      %2989 = vmatprep.subr.bf16.mxu0 0
      %2990 = vmatpush1.bf16.xpose.msra.mxu0 0
      %2991 = vmatprep.subr.bf16.mxu0 0
      %2992 = vmatpush1.bf16.xpose.msra.mxu0 0
      %2993 = vmatprep.subr.bf16.mxu0 0
      %2994 = vmatpush1.bf16.xpose.msra.mxu0 0
      %2995 = vmatprep.subr.bf16.mxu0 0
      %2996 = vmatpush1.bf16.xpose.msra.mxu0 0
      %2997 = vmatprep.subr.bf16.mxu0 0
      %2998 = vmatpush1.bf16.xpose.msra.mxu0 0
      %2999 = vmatprep.mubr.bf16.mxu0 0
      %3000 = vmatmul.mubr.bf16.gmra.mrb[0].mxu0 %v2962
      %v3001 = vpop.f32.mrb[0].mxu0
      %v3002 = vadd.f32 0.0, %v3001
      %v3003 = vpop.f32.mrb[0].mxu0
      %v3004 = vpop.f32.mrb[0].mxu0
      %v3005 = vadd.f32 0.0, %v3004
      %v3006 = vpop.f32.mrb[0].mxu0
      %3007 = vdwg.mxu0
      %3008 = vrot.lane.b32.xlu0 %v609, 126
      %v3009 = vpop.permute.xlu0 %3008
      %3010 = vrot.lane.b32.xlu0 %v609, 122
      %v3011 = vpop.permute.xlu0 %3010
      %v3013 = vsel %vm621, %v3009, 0
      %v3016 = vsel %vm621, %v3011, 0
      %3018 = vmatprep.subr.bf16.mxu0 0
      %3019 = vmatpush1.bf16.xpose.msra.mxu0 %v3016
      %3020 = vmatprep.subr.bf16.mxu0 0
      %3021 = vmatpush1.bf16.xpose.msra.mxu0 0
      %3022 = vmatprep.subr.bf16.mxu0 0
      %3023 = vmatpush1.bf16.xpose.msra.mxu0 0
      %3024 = vmatprep.subr.bf16.mxu0 0
      %3025 = vmatpush1.bf16.xpose.msra.mxu0 0
      %3026 = vmatprep.subr.bf16.mxu0 0
      %3027 = vmatpush1.bf16.xpose.msra.mxu0 0
      %3028 = vmatprep.subr.bf16.mxu0 0
      %3029 = vmatpush1.bf16.xpose.msra.mxu0 0
      %3030 = vmatprep.subr.bf16.mxu0 0
      %3031 = vmatpush1.bf16.xpose.msra.mxu0 0
      %3032 = vmatprep.subr.bf16.mxu0 0
      %3033 = vmatpush1.bf16.xpose.msra.mxu0 0
      %3034 = vmatprep.subr.bf16.mxu0 0
      %3035 = vmatpush1.bf16.xpose.msra.mxu0 0
      %3036 = vmatprep.subr.bf16.mxu0 0
      %3037 = vmatpush1.bf16.xpose.msra.mxu0 0
      %3038 = vmatprep.subr.bf16.mxu0 0
      %3039 = vmatpush1.bf16.xpose.msra.mxu0 0
      %3040 = vmatprep.subr.bf16.mxu0 0
      %3041 = vmatpush1.bf16.xpose.msra.mxu0 0
      %3042 = vmatprep.subr.bf16.mxu0 0
      %3043 = vmatpush1.bf16.xpose.msra.mxu0 0
      %3044 = vmatprep.subr.bf16.mxu0 0
      %3045 = vmatpush1.bf16.xpose.msra.mxu0 0
      %3046 = vmatprep.subr.bf16.mxu0 0
      %3047 = vmatpush1.bf16.xpose.msra.mxu0 0
      %3048 = vmatprep.subr.bf16.mxu0 0
      %3049 = vmatpush1.bf16.xpose.msra.mxu0 0
      %3050 = vmatprep.mubr.bf16.mxu0 0
      %3051 = vmatmul.mubr.bf16.gmra.mrb[0].mxu0 %v3013
      %v3052 = vpop.f32.mrb[0].mxu0
      %v3053 = vadd.f32 0.0, %v3052
      %v3054 = vpop.f32.mrb[0].mxu0
      %v3055 = vpop.f32.mrb[0].mxu0
      %v3056 = vadd.f32 0.0, %v3055
      %v3057 = vpop.f32.mrb[0].mxu0
      %3058 = vdwg.mxu0
      %3059 = vrot.lane.b32.xlu0 %v610, 126
      %v3060 = vpop.permute.xlu0 %3059
      %3061 = vrot.lane.b32.xlu0 %v610, 122
      %v3062 = vpop.permute.xlu0 %3061
      %v3064 = vsel %vm621, %v3060, 0
      %v3067 = vsel %vm621, %v3062, 0
      %3069 = vmatprep.subr.bf16.mxu0 0
      %3070 = vmatpush1.bf16.xpose.msra.mxu0 %v3067
      %3071 = vmatprep.subr.bf16.mxu0 0
      %3072 = vmatpush1.bf16.xpose.msra.mxu0 0
      %3073 = vmatprep.subr.bf16.mxu0 0
      %3074 = vmatpush1.bf16.xpose.msra.mxu0 0
      %3075 = vmatprep.subr.bf16.mxu0 0
      %3076 = vmatpush1.bf16.xpose.msra.mxu0 0
      %3077 = vmatprep.subr.bf16.mxu0 0
      %3078 = vmatpush1.bf16.xpose.msra.mxu0 0
      %3079 = vmatprep.subr.bf16.mxu0 0
      %3080 = vmatpush1.bf16.xpose.msra.mxu0 0
      %3081 = vmatprep.subr.bf16.mxu0 0
      %3082 = vmatpush1.bf16.xpose.msra.mxu0 0
      %3083 = vmatprep.subr.bf16.mxu0 0
      %3084 = vmatpush1.bf16.xpose.msra.mxu0 0
      %3085 = vmatprep.subr.bf16.mxu0 0
      %3086 = vmatpush1.bf16.xpose.msra.mxu0 0
      %3087 = vmatprep.subr.bf16.mxu0 0
      %3088 = vmatpush1.bf16.xpose.msra.mxu0 0
      %3089 = vmatprep.subr.bf16.mxu0 0
      %3090 = vmatpush1.bf16.xpose.msra.mxu0 0
      %3091 = vmatprep.subr.bf16.mxu0 0
      %3092 = vmatpush1.bf16.xpose.msra.mxu0 0
      %3093 = vmatprep.subr.bf16.mxu0 0
      %3094 = vmatpush1.bf16.xpose.msra.mxu0 0
      %3095 = vmatprep.subr.bf16.mxu0 0
      %3096 = vmatpush1.bf16.xpose.msra.mxu0 0
      %3097 = vmatprep.subr.bf16.mxu0 0
      %3098 = vmatpush1.bf16.xpose.msra.mxu0 0
      %3099 = vmatprep.subr.bf16.mxu0 0
      %3100 = vmatpush1.bf16.xpose.msra.mxu0 0
      %3101 = vmatprep.mubr.bf16.mxu0 0
      %3102 = vmatmul.mubr.bf16.gmra.mrb[0].mxu0 %v3064
      %v3103 = vpop.f32.mrb[0].mxu0
      %v3104 = vadd.f32 0.0, %v3103
      %v3105 = vpop.f32.mrb[0].mxu0
      %v3106 = vpop.f32.mrb[0].mxu0
      %v3107 = vadd.f32 0.0, %v3106
      %v3108 = vpop.f32.mrb[0].mxu0
      %3109 = vdwg.mxu0
      %3110 = vrot.lane.b32.xlu0 %v611, 126
      %v3111 = vpop.permute.xlu0 %3110
      %3112 = vrot.lane.b32.xlu0 %v611, 122
      %v3113 = vpop.permute.xlu0 %3112
      %v3115 = vsel %vm621, %v3111, 0
      %v3118 = vsel %vm621, %v3113, 0
      %3120 = vmatprep.subr.bf16.mxu0 0
      %3121 = vmatpush1.bf16.xpose.msra.mxu0 %v3118
      %3122 = vmatprep.subr.bf16.mxu0 0
      %3123 = vmatpush1.bf16.xpose.msra.mxu0 0
      %3124 = vmatprep.subr.bf16.mxu0 0
      %3125 = vmatpush1.bf16.xpose.msra.mxu0 0
      %3126 = vmatprep.subr.bf16.mxu0 0
      %3127 = vmatpush1.bf16.xpose.msra.mxu0 0
      %3128 = vmatprep.subr.bf16.mxu0 0
      %3129 = vmatpush1.bf16.xpose.msra.mxu0 0
      %3130 = vmatprep.subr.bf16.mxu0 0
      %3131 = vmatpush1.bf16.xpose.msra.mxu0 0
      %3132 = vmatprep.subr.bf16.mxu0 0
      %3133 = vmatpush1.bf16.xpose.msra.mxu0 0
      %3134 = vmatprep.subr.bf16.mxu0 0
      %3135 = vmatpush1.bf16.xpose.msra.mxu0 0
      %3136 = vmatprep.subr.bf16.mxu0 0
      %3137 = vmatpush1.bf16.xpose.msra.mxu0 0
      %3138 = vmatprep.subr.bf16.mxu0 0
      %3139 = vmatpush1.bf16.xpose.msra.mxu0 0
      %3140 = vmatprep.subr.bf16.mxu0 0
      %3141 = vmatpush1.bf16.xpose.msra.mxu0 0
      %3142 = vmatprep.subr.bf16.mxu0 0
      %3143 = vmatpush1.bf16.xpose.msra.mxu0 0
      %3144 = vmatprep.subr.bf16.mxu0 0
      %3145 = vmatpush1.bf16.xpose.msra.mxu0 0
      %3146 = vmatprep.subr.bf16.mxu0 0
      %3147 = vmatpush1.bf16.xpose.msra.mxu0 0
      %3148 = vmatprep.subr.bf16.mxu0 0
      %3149 = vmatpush1.bf16.xpose.msra.mxu0 0
      %3150 = vmatprep.subr.bf16.mxu0 0
      %3151 = vmatpush1.bf16.xpose.msra.mxu0 0
      %3152 = vmatprep.mubr.bf16.mxu0 0
      %3153 = vmatmul.mubr.bf16.gmra.mrb[0].mxu0 %v3115
      %v3154 = vpop.f32.mrb[0].mxu0
      %v3155 = vadd.f32 0.0, %v3154
      %v3156 = vpop.f32.mrb[0].mxu0
      %v3157 = vpop.f32.mrb[0].mxu0
      %v3158 = vadd.f32 0.0, %v3157
      %v3159 = vpop.f32.mrb[0].mxu0
      %3160 = vdwg.mxu0
      %3161 = vrot.lane.b32.xlu0 %v612, 126
      %v3162 = vpop.permute.xlu0 %3161
      %3163 = vrot.lane.b32.xlu0 %v612, 122
      %v3164 = vpop.permute.xlu0 %3163
      %v3166 = vsel %vm621, %v3162, 0
      %v3169 = vsel %vm621, %v3164, 0
      %3171 = vmatprep.subr.bf16.mxu0 0
      %3172 = vmatpush1.bf16.xpose.msra.mxu0 %v3169
      %3173 = vmatprep.subr.bf16.mxu0 0
      %3174 = vmatpush1.bf16.xpose.msra.mxu0 0
      %3175 = vmatprep.subr.bf16.mxu0 0
      %3176 = vmatpush1.bf16.xpose.msra.mxu0 0
      %3177 = vmatprep.subr.bf16.mxu0 0
      %3178 = vmatpush1.bf16.xpose.msra.mxu0 0
      %3179 = vmatprep.subr.bf16.mxu0 0
      %3180 = vmatpush1.bf16.xpose.msra.mxu0 0
      %3181 = vmatprep.subr.bf16.mxu0 0
      %3182 = vmatpush1.bf16.xpose.msra.mxu0 0
      %3183 = vmatprep.subr.bf16.mxu0 0
      %3184 = vmatpush1.bf16.xpose.msra.mxu0 0
      %3185 = vmatprep.subr.bf16.mxu0 0
      %3186 = vmatpush1.bf16.xpose.msra.mxu0 0
      %3187 = vmatprep.subr.bf16.mxu0 0
      %3188 = vmatpush1.bf16.xpose.msra.mxu0 0
      %3189 = vmatprep.subr.bf16.mxu0 0
      %3190 = vmatpush1.bf16.xpose.msra.mxu0 0
      %3191 = vmatprep.subr.bf16.mxu0 0
      %3192 = vmatpush1.bf16.xpose.msra.mxu0 0
      %3193 = vmatprep.subr.bf16.mxu0 0
      %3194 = vmatpush1.bf16.xpose.msra.mxu0 0
      %3195 = vmatprep.subr.bf16.mxu0 0
      %3196 = vmatpush1.bf16.xpose.msra.mxu0 0
      %3197 = vmatprep.subr.bf16.mxu0 0
      %3198 = vmatpush1.bf16.xpose.msra.mxu0 0
      %3199 = vmatprep.subr.bf16.mxu0 0
      %3200 = vmatpush1.bf16.xpose.msra.mxu0 0
      %3201 = vmatprep.subr.bf16.mxu0 0
      %3202 = vmatpush1.bf16.xpose.msra.mxu0 0
      %3203 = vmatprep.mubr.bf16.mxu0 0
      %3204 = vmatmul.mubr.bf16.gmra.mrb[0].mxu0 %v3166
      %v3205 = vpop.f32.mrb[0].mxu0
      %v3206 = vadd.f32 0.0, %v3205
      %v3207 = vpop.f32.mrb[0].mxu0
      %v3208 = vpop.f32.mrb[0].mxu0
      %v3209 = vadd.f32 0.0, %v3208
      %v3210 = vpop.f32.mrb[0].mxu0
      %3211 = vdwg.mxu0
      %3212 = vrot.lane.b32.xlu0 %v613, 126
      %v3213 = vpop.permute.xlu0 %3212
      %3214 = vrot.lane.b32.xlu0 %v613, 122
      %v3215 = vpop.permute.xlu0 %3214
      %v3217 = vsel %vm621, %v3213, 0
      %v3220 = vsel %vm621, %v3215, 0
      %3222 = vmatprep.subr.bf16.mxu0 0
      %3223 = vmatpush1.bf16.xpose.msra.mxu0 %v3220
      %3224 = vmatprep.subr.bf16.mxu0 0
      %3225 = vmatpush1.bf16.xpose.msra.mxu0 0
      %3226 = vmatprep.subr.bf16.mxu0 0
      %3227 = vmatpush1.bf16.xpose.msra.mxu0 0
      %3228 = vmatprep.subr.bf16.mxu0 0
      %3229 = vmatpush1.bf16.xpose.msra.mxu0 0
      %3230 = vmatprep.subr.bf16.mxu0 0
      %3231 = vmatpush1.bf16.xpose.msra.mxu0 0
      %3232 = vmatprep.subr.bf16.mxu0 0
      %3233 = vmatpush1.bf16.xpose.msra.mxu0 0
      %3234 = vmatprep.subr.bf16.mxu0 0
      %3235 = vmatpush1.bf16.xpose.msra.mxu0 0
      %3236 = vmatprep.subr.bf16.mxu0 0
      %3237 = vmatpush1.bf16.xpose.msra.mxu0 0
      %3238 = vmatprep.subr.bf16.mxu0 0
      %3239 = vmatpush1.bf16.xpose.msra.mxu0 0
      %3240 = vmatprep.subr.bf16.mxu0 0
      %3241 = vmatpush1.bf16.xpose.msra.mxu0 0
      %3242 = vmatprep.subr.bf16.mxu0 0
      %3243 = vmatpush1.bf16.xpose.msra.mxu0 0
      %3244 = vmatprep.subr.bf16.mxu0 0
      %3245 = vmatpush1.bf16.xpose.msra.mxu0 0
      %3246 = vmatprep.subr.bf16.mxu0 0
      %3247 = vmatpush1.bf16.xpose.msra.mxu0 0
      %3248 = vmatprep.subr.bf16.mxu0 0
      %3249 = vmatpush1.bf16.xpose.msra.mxu0 0
      %3250 = vmatprep.subr.bf16.mxu0 0
      %3251 = vmatpush1.bf16.xpose.msra.mxu0 0
      %3252 = vmatprep.subr.bf16.mxu0 0
      %3253 = vmatpush1.bf16.xpose.msra.mxu0 0
      %3254 = vmatprep.mubr.bf16.mxu0 0
      %3255 = vmatmul.mubr.bf16.gmra.mrb[0].mxu0 %v3217
      %v3256 = vpop.f32.mrb[0].mxu0
      %v3257 = vadd.f32 0.0, %v3256
      %v3258 = vpop.f32.mrb[0].mxu0
      %v3259 = vpop.f32.mrb[0].mxu0
      %v3260 = vadd.f32 0.0, %v3259
      %v3261 = vpop.f32.mrb[0].mxu0
      %3262 = vdwg.mxu0
      %3263 = vrot.lane.b32.xlu0 %v614, 126
      %v3264 = vpop.permute.xlu0 %3263
      %3265 = vrot.lane.b32.xlu0 %v614, 122
      %v3266 = vpop.permute.xlu0 %3265
      %v3268 = vsel %vm621, %v3264, 0
      %v3271 = vsel %vm621, %v3266, 0
      %3273 = vmatprep.subr.bf16.mxu0 0
      %3274 = vmatpush1.bf16.xpose.msra.mxu0 %v3271
      %3275 = vmatprep.subr.bf16.mxu0 0
      %3276 = vmatpush1.bf16.xpose.msra.mxu0 0
      %3277 = vmatprep.subr.bf16.mxu0 0
      %3278 = vmatpush1.bf16.xpose.msra.mxu0 0
      %3279 = vmatprep.subr.bf16.mxu0 0
      %3280 = vmatpush1.bf16.xpose.msra.mxu0 0
      %3281 = vmatprep.subr.bf16.mxu0 0
      %3282 = vmatpush1.bf16.xpose.msra.mxu0 0
      %3283 = vmatprep.subr.bf16.mxu0 0
      %3284 = vmatpush1.bf16.xpose.msra.mxu0 0
      %3285 = vmatprep.subr.bf16.mxu0 0
      %3286 = vmatpush1.bf16.xpose.msra.mxu0 0
      %3287 = vmatprep.subr.bf16.mxu0 0
      %3288 = vmatpush1.bf16.xpose.msra.mxu0 0
      %3289 = vmatprep.subr.bf16.mxu0 0
      %3290 = vmatpush1.bf16.xpose.msra.mxu0 0
      %3291 = vmatprep.subr.bf16.mxu0 0
      %3292 = vmatpush1.bf16.xpose.msra.mxu0 0
      %3293 = vmatprep.subr.bf16.mxu0 0
      %3294 = vmatpush1.bf16.xpose.msra.mxu0 0
      %3295 = vmatprep.subr.bf16.mxu0 0
      %3296 = vmatpush1.bf16.xpose.msra.mxu0 0
      %3297 = vmatprep.subr.bf16.mxu0 0
      %3298 = vmatpush1.bf16.xpose.msra.mxu0 0
      %3299 = vmatprep.subr.bf16.mxu0 0
      %3300 = vmatpush1.bf16.xpose.msra.mxu0 0
      %3301 = vmatprep.subr.bf16.mxu0 0
      %3302 = vmatpush1.bf16.xpose.msra.mxu0 0
      %3303 = vmatprep.subr.bf16.mxu0 0
      %3304 = vmatpush1.bf16.xpose.msra.mxu0 0
      %3305 = vmatprep.mubr.bf16.mxu0 0
      %3306 = vmatmul.mubr.bf16.gmra.mrb[0].mxu0 %v3268
      %v3307 = vpop.f32.mrb[0].mxu0
      %v3308 = vadd.f32 0.0, %v3307
      %v3309 = vpop.f32.mrb[0].mxu0
      %v3310 = vpop.f32.mrb[0].mxu0
      %v3311 = vadd.f32 0.0, %v3310
      %v3312 = vpop.f32.mrb[0].mxu0
      %3313 = vdwg.mxu0
      %3314 = vrot.lane.b32.xlu0 %v615, 126
      %v3315 = vpop.permute.xlu0 %3314
      %3316 = vrot.lane.b32.xlu0 %v615, 122
      %v3317 = vpop.permute.xlu0 %3316
      %v3319 = vsel %vm621, %v3315, 0
      %v3322 = vsel %vm621, %v3317, 0
      %3324 = vmatprep.subr.bf16.mxu0 0
      %3325 = vmatpush1.bf16.xpose.msra.mxu0 %v3322
      %3326 = vmatprep.subr.bf16.mxu0 0
      %3327 = vmatpush1.bf16.xpose.msra.mxu0 0
      %3328 = vmatprep.subr.bf16.mxu0 0
      %3329 = vmatpush1.bf16.xpose.msra.mxu0 0
      %3330 = vmatprep.subr.bf16.mxu0 0
      %3331 = vmatpush1.bf16.xpose.msra.mxu0 0
      %3332 = vmatprep.subr.bf16.mxu0 0
      %3333 = vmatpush1.bf16.xpose.msra.mxu0 0
      %3334 = vmatprep.subr.bf16.mxu0 0
      %3335 = vmatpush1.bf16.xpose.msra.mxu0 0
      %3336 = vmatprep.subr.bf16.mxu0 0
      %3337 = vmatpush1.bf16.xpose.msra.mxu0 0
      %3338 = vmatprep.subr.bf16.mxu0 0
      %3339 = vmatpush1.bf16.xpose.msra.mxu0 0
      %3340 = vmatprep.subr.bf16.mxu0 0
      %3341 = vmatpush1.bf16.xpose.msra.mxu0 0
      %3342 = vmatprep.subr.bf16.mxu0 0
      %3343 = vmatpush1.bf16.xpose.msra.mxu0 0
      %3344 = vmatprep.subr.bf16.mxu0 0
      %3345 = vmatpush1.bf16.xpose.msra.mxu0 0
      %3346 = vmatprep.subr.bf16.mxu0 0
      %3347 = vmatpush1.bf16.xpose.msra.mxu0 0
      %3348 = vmatprep.subr.bf16.mxu0 0
      %3349 = vmatpush1.bf16.xpose.msra.mxu0 0
      %3350 = vmatprep.subr.bf16.mxu0 0
      %3351 = vmatpush1.bf16.xpose.msra.mxu0 0
      %3352 = vmatprep.subr.bf16.mxu0 0
      %3353 = vmatpush1.bf16.xpose.msra.mxu0 0
      %3354 = vmatprep.subr.bf16.mxu0 0
      %3355 = vmatpush1.bf16.xpose.msra.mxu0 0
      %3356 = vmatprep.mubr.bf16.mxu0 0
      %3357 = vmatmul.mubr.bf16.gmra.mrb[0].mxu0 %v3319
      %v3358 = vpop.f32.mrb[0].mxu0
      %v3359 = vadd.f32 0.0, %v3358
      %v3360 = vpop.f32.mrb[0].mxu0
      %v3361 = vpop.f32.mrb[0].mxu0
      %v3362 = vadd.f32 0.0, %v3361
      %v3363 = vpop.f32.mrb[0].mxu0
      %3364 = vdwg.mxu0
      %3365 = vrot.lane.b32.xlu0 %v616, 126
      %v3366 = vpop.permute.xlu0 %3365
      %3367 = vrot.lane.b32.xlu0 %v616, 122
      %v3368 = vpop.permute.xlu0 %3367
      %v3370 = vsel %vm621, %v3366, 0
      %v3373 = vsel %vm621, %v3368, 0
      %3375 = vmatprep.subr.bf16.mxu0 0
      %3376 = vmatpush1.bf16.xpose.msra.mxu0 %v3373
      %3377 = vmatprep.subr.bf16.mxu0 0
      %3378 = vmatpush1.bf16.xpose.msra.mxu0 0
      %3379 = vmatprep.subr.bf16.mxu0 0
      %3380 = vmatpush1.bf16.xpose.msra.mxu0 0
      %3381 = vmatprep.subr.bf16.mxu0 0
      %3382 = vmatpush1.bf16.xpose.msra.mxu0 0
      %3383 = vmatprep.subr.bf16.mxu0 0
      %3384 = vmatpush1.bf16.xpose.msra.mxu0 0
      %3385 = vmatprep.subr.bf16.mxu0 0
      %3386 = vmatpush1.bf16.xpose.msra.mxu0 0
      %3387 = vmatprep.subr.bf16.mxu0 0
      %3388 = vmatpush1.bf16.xpose.msra.mxu0 0
      %3389 = vmatprep.subr.bf16.mxu0 0
      %3390 = vmatpush1.bf16.xpose.msra.mxu0 0
      %3391 = vmatprep.subr.bf16.mxu0 0
      %3392 = vmatpush1.bf16.xpose.msra.mxu0 0
      %3393 = vmatprep.subr.bf16.mxu0 0
      %3394 = vmatpush1.bf16.xpose.msra.mxu0 0
      %3395 = vmatprep.subr.bf16.mxu0 0
      %3396 = vmatpush1.bf16.xpose.msra.mxu0 0
      %3397 = vmatprep.subr.bf16.mxu0 0
      %3398 = vmatpush1.bf16.xpose.msra.mxu0 0
      %3399 = vmatprep.subr.bf16.mxu0 0
      %3400 = vmatpush1.bf16.xpose.msra.mxu0 0
      %3401 = vmatprep.subr.bf16.mxu0 0
      %3402 = vmatpush1.bf16.xpose.msra.mxu0 0
      %3403 = vmatprep.subr.bf16.mxu0 0
      %3404 = vmatpush1.bf16.xpose.msra.mxu0 0
      %3405 = vmatprep.subr.bf16.mxu0 0
      %3406 = vmatpush1.bf16.xpose.msra.mxu0 0
      %3407 = vmatprep.mubr.bf16.mxu0 0
      %3408 = vmatmul.mubr.bf16.gmra.mrb[0].mxu0 %v3370
      %v3409 = vpop.f32.mrb[0].mxu0
      %v3410 = vadd.f32 0.0, %v3409
      %v3411 = vpop.f32.mrb[0].mxu0
      %v3412 = vpop.f32.mrb[0].mxu0
      %v3413 = vadd.f32 0.0, %v3412
      %v3414 = vpop.f32.mrb[0].mxu0
      %3415 = vdwg.mxu0
      %3416 = vrot.lane.b32.xlu0 %v617, 126
      %v3417 = vpop.permute.xlu0 %3416
      %3418 = vrot.lane.b32.xlu0 %v617, 122
      %v3419 = vpop.permute.xlu0 %3418
      %v3421 = vsel %vm621, %v3417, 0
      %v3424 = vsel %vm621, %v3419, 0
      %3426 = vmatprep.subr.bf16.mxu0 0
      %3427 = vmatpush1.bf16.xpose.msra.mxu0 %v3424
      %3428 = vmatprep.subr.bf16.mxu0 0
      %3429 = vmatpush1.bf16.xpose.msra.mxu0 0
      %3430 = vmatprep.subr.bf16.mxu0 0
      %3431 = vmatpush1.bf16.xpose.msra.mxu0 0
      %3432 = vmatprep.subr.bf16.mxu0 0
      %3433 = vmatpush1.bf16.xpose.msra.mxu0 0
      %3434 = vmatprep.subr.bf16.mxu0 0
      %3435 = vmatpush1.bf16.xpose.msra.mxu0 0
      %3436 = vmatprep.subr.bf16.mxu0 0
      %3437 = vmatpush1.bf16.xpose.msra.mxu0 0
      %3438 = vmatprep.subr.bf16.mxu0 0
      %3439 = vmatpush1.bf16.xpose.msra.mxu0 0
      %3440 = vmatprep.subr.bf16.mxu0 0
      %3441 = vmatpush1.bf16.xpose.msra.mxu0 0
      %3442 = vmatprep.subr.bf16.mxu0 0
      %3443 = vmatpush1.bf16.xpose.msra.mxu0 0
      %3444 = vmatprep.subr.bf16.mxu0 0
      %3445 = vmatpush1.bf16.xpose.msra.mxu0 0
      %3446 = vmatprep.subr.bf16.mxu0 0
      %3447 = vmatpush1.bf16.xpose.msra.mxu0 0
      %3448 = vmatprep.subr.bf16.mxu0 0
      %3449 = vmatpush1.bf16.xpose.msra.mxu0 0
      %3450 = vmatprep.subr.bf16.mxu0 0
      %3451 = vmatpush1.bf16.xpose.msra.mxu0 0
      %3452 = vmatprep.subr.bf16.mxu0 0
      %3453 = vmatpush1.bf16.xpose.msra.mxu0 0
      %3454 = vmatprep.subr.bf16.mxu0 0
      %3455 = vmatpush1.bf16.xpose.msra.mxu0 0
      %3456 = vmatprep.subr.bf16.mxu0 0
      %3457 = vmatpush1.bf16.xpose.msra.mxu0 0
      %3458 = vmatprep.mubr.bf16.mxu0 0
      %3459 = vmatmul.mubr.bf16.gmra.mrb[0].mxu0 %v3421
      %v3460 = vpop.f32.mrb[0].mxu0
      %v3461 = vadd.f32 0.0, %v3460
      %v3462 = vpop.f32.mrb[0].mxu0
      %v3463 = vpop.f32.mrb[0].mxu0
      %v3464 = vadd.f32 0.0, %v3463
      %v3465 = vpop.f32.mrb[0].mxu0
      %3466 = vdwg.mxu0
      %v3467 = vsel %vm1419, %v2696, -inf
      %3468 = vmax.xlane.f32.xlu0 %v3467
      %v3469 = vpop.xlane.xlu0 %3468
      %v3470 = vsel %vm1419, %v2699, -inf
      %3471 = vmax.xlane.f32.xlu0 %v3470
      %v3472 = vpop.xlane.xlu0 %3471
      %v3473 = vsel %vm1419, %v2747, -inf
      %3474 = vmax.xlane.f32.xlu0 %v3473
      %v3475 = vpop.xlane.xlu0 %3474
      %v3476 = vsel %vm1419, %v2750, -inf
      %3477 = vmax.xlane.f32.xlu0 %v3476
      %v3478 = vpop.xlane.xlu0 %3477
      %v3479 = vsel %vm1419, %v2798, -inf
      %3480 = vmax.xlane.f32.xlu0 %v3479
      %v3481 = vpop.xlane.xlu0 %3480
      %v3482 = vsel %vm1419, %v2801, -inf
      %3483 = vmax.xlane.f32.xlu0 %v3482
      %v3484 = vpop.xlane.xlu0 %3483
      %v3485 = vsel %vm1419, %v2849, -inf
      %3486 = vmax.xlane.f32.xlu0 %v3485
      %v3487 = vpop.xlane.xlu0 %3486
      %v3488 = vsel %vm1419, %v2852, -inf
      %3489 = vmax.xlane.f32.xlu0 %v3488
      %v3490 = vpop.xlane.xlu0 %3489
      %v3491 = vsel %vm1419, %v2900, -inf
      %3492 = vmax.xlane.f32.xlu0 %v3491
      %v3493 = vpop.xlane.xlu0 %3492
      %v3494 = vsel %vm1419, %v2903, -inf
      %3495 = vmax.xlane.f32.xlu0 %v3494
      %v3496 = vpop.xlane.xlu0 %3495
      %v3497 = vsel %vm1419, %v2951, -inf
      %3498 = vmax.xlane.f32.xlu0 %v3497
      %v3499 = vpop.xlane.xlu0 %3498
      %v3500 = vsel %vm1419, %v2954, -inf
      %3501 = vmax.xlane.f32.xlu0 %v3500
      %v3502 = vpop.xlane.xlu0 %3501
      %v3503 = vsel %vm1419, %v3002, -inf
      %3504 = vmax.xlane.f32.xlu0 %v3503
      %v3505 = vpop.xlane.xlu0 %3504
      %v3506 = vsel %vm1419, %v3005, -inf
      %3507 = vmax.xlane.f32.xlu0 %v3506
      %v3508 = vpop.xlane.xlu0 %3507
      %v3509 = vsel %vm1419, %v3053, -inf
      %3510 = vmax.xlane.f32.xlu0 %v3509
      %v3511 = vpop.xlane.xlu0 %3510
      %v3512 = vsel %vm1419, %v3056, -inf
      %3513 = vmax.xlane.f32.xlu0 %v3512
      %v3514 = vpop.xlane.xlu0 %3513
      %v3515 = vsel %vm1419, %v3104, -inf
      %3516 = vmax.xlane.f32.xlu0 %v3515
      %v3517 = vpop.xlane.xlu0 %3516
      %v3518 = vsel %vm1419, %v3107, -inf
      %3519 = vmax.xlane.f32.xlu0 %v3518
      %v3520 = vpop.xlane.xlu0 %3519
      %v3521 = vsel %vm1419, %v3155, -inf
      %3522 = vmax.xlane.f32.xlu0 %v3521
      %v3523 = vpop.xlane.xlu0 %3522
      %v3524 = vsel %vm1419, %v3158, -inf
      %3525 = vmax.xlane.f32.xlu0 %v3524
      %v3526 = vpop.xlane.xlu0 %3525
      %v3527 = vsel %vm1419, %v3206, -inf
      %3528 = vmax.xlane.f32.xlu0 %v3527
      %v3529 = vpop.xlane.xlu0 %3528
      %v3530 = vsel %vm1419, %v3209, -inf
      %3531 = vmax.xlane.f32.xlu0 %v3530
      %v3532 = vpop.xlane.xlu0 %3531
      %v3533 = vsel %vm1419, %v3257, -inf
      %3534 = vmax.xlane.f32.xlu0 %v3533
      %v3535 = vpop.xlane.xlu0 %3534
      %v3536 = vsel %vm1419, %v3260, -inf
      %3537 = vmax.xlane.f32.xlu0 %v3536
      %v3538 = vpop.xlane.xlu0 %3537
      %v3539 = vsel %vm1419, %v3308, -inf
      %3540 = vmax.xlane.f32.xlu0 %v3539
      %v3541 = vpop.xlane.xlu0 %3540
      %v3542 = vsel %vm1419, %v3311, -inf
      %3543 = vmax.xlane.f32.xlu0 %v3542
      %v3544 = vpop.xlane.xlu0 %3543
      %v3545 = vsel %vm1419, %v3359, -inf
      %3546 = vmax.xlane.f32.xlu0 %v3545
      %v3547 = vpop.xlane.xlu0 %3546
      %v3548 = vsel %vm1419, %v3362, -inf
      %3549 = vmax.xlane.f32.xlu0 %v3548
      %v3550 = vpop.xlane.xlu0 %3549
      %v3551 = vsel %vm1419, %v3410, -inf
      %3552 = vmax.xlane.f32.xlu0 %v3551
      %v3553 = vpop.xlane.xlu0 %3552
      %v3554 = vsel %vm1419, %v3413, -inf
      %3555 = vmax.xlane.f32.xlu0 %v3554
      %v3556 = vpop.xlane.xlu0 %3555
      %v3557 = vsel %vm1419, %v3461, -inf
      %3558 = vmax.xlane.f32.xlu0 %v3557
      %v3559 = vpop.xlane.xlu0 %3558
      %v3560 = vsel %vm1419, %v3464, -inf
      %3561 = vmax.xlane.f32.xlu0 %v3560
      %v3562 = vpop.xlane.xlu0 %3561
      %v3563 = vsub.f32 %v2696, %v3469
      %v3564 = vsub.f32 %v2699, %v3472
      %v3565 = vsub.f32 %v2747, %v3475
      %v3566 = vsub.f32 %v2750, %v3478
      %v3567 = vsub.f32 %v2798, %v3481
      %v3568 = vsub.f32 %v2801, %v3484
      %v3569 = vsub.f32 %v2849, %v3487
      %v3570 = vsub.f32 %v2852, %v3490
      %v3571 = vsub.f32 %v2900, %v3493
      %v3572 = vsub.f32 %v2903, %v3496
      %v3573 = vsub.f32 %v2951, %v3499
      %v3574 = vsub.f32 %v2954, %v3502
      %v3575 = vsub.f32 %v3002, %v3505
      %v3576 = vsub.f32 %v3005, %v3508
      %v3577 = vsub.f32 %v3053, %v3511
      %v3578 = vsub.f32 %v3056, %v3514
      %v3579 = vsub.f32 %v3104, %v3517
      %v3580 = vsub.f32 %v3107, %v3520
      %v3581 = vsub.f32 %v3155, %v3523
      %v3582 = vsub.f32 %v3158, %v3526
      %v3583 = vsub.f32 %v3206, %v3529
      %v3584 = vsub.f32 %v3209, %v3532
      %v3585 = vsub.f32 %v3257, %v3535
      %v3586 = vsub.f32 %v3260, %v3538
      %v3587 = vsub.f32 %v3308, %v3541
      %v3588 = vsub.f32 %v3311, %v3544
      %v3589 = vsub.f32 %v3359, %v3547
      %v3590 = vsub.f32 %v3362, %v3550
      %v3591 = vsub.f32 %v3410, %v3553
      %v3592 = vsub.f32 %v3413, %v3556
      %v3593 = vsub.f32 %v3461, %v3559
      %v3594 = vsub.f32 %v3464, %v3562
      %v3595 = vmul.f32 %v3563, 1.442695
      %v3596 = vpow.pop %v3595
      %v3597 = vmul.f32 %v3564, 1.442695
      %v3598 = vpow.pop %v3597
      %v3599 = vmul.f32 %v3565, 1.442695
      %v3600 = vpow.pop %v3599
      %v3601 = vmul.f32 %v3566, 1.442695
      %v3602 = vpow.pop %v3601
      %v3603 = vmul.f32 %v3567, 1.442695
      %v3604 = vpow.pop %v3603
      %v3605 = vmul.f32 %v3568, 1.442695
      %v3606 = vpow.pop %v3605
      %v3607 = vmul.f32 %v3569, 1.442695
      %v3608 = vpow.pop %v3607
      %v3609 = vmul.f32 %v3570, 1.442695
      %v3610 = vpow.pop %v3609
      %v3611 = vmul.f32 %v3571, 1.442695
      %v3612 = vpow.pop %v3611
      %v3613 = vmul.f32 %v3572, 1.442695
      %v3614 = vpow.pop %v3613
      %v3615 = vmul.f32 %v3573, 1.442695
      %v3616 = vpow.pop %v3615
      %v3617 = vmul.f32 %v3574, 1.442695
      %v3618 = vpow.pop %v3617
      %v3619 = vmul.f32 %v3575, 1.442695
      %v3620 = vpow.pop %v3619
      %v3621 = vmul.f32 %v3576, 1.442695
      %v3622 = vpow.pop %v3621
      %v3623 = vmul.f32 %v3577, 1.442695
      %v3624 = vpow.pop %v3623
      %v3625 = vmul.f32 %v3578, 1.442695
      %v3626 = vpow.pop %v3625
      %v3627 = vmul.f32 %v3579, 1.442695
      %v3628 = vpow.pop %v3627
      %v3629 = vmul.f32 %v3580, 1.442695
      %v3630 = vpow.pop %v3629
      %v3631 = vmul.f32 %v3581, 1.442695
      %v3632 = vpow.pop %v3631
      %v3633 = vmul.f32 %v3582, 1.442695
      %v3634 = vpow.pop %v3633
      %v3635 = vmul.f32 %v3583, 1.442695
      %v3636 = vpow.pop %v3635
      %v3637 = vmul.f32 %v3584, 1.442695
      %v3638 = vpow.pop %v3637
      %v3639 = vmul.f32 %v3585, 1.442695
      %v3640 = vpow.pop %v3639
      %v3641 = vmul.f32 %v3586, 1.442695
      %v3642 = vpow.pop %v3641
      %v3643 = vmul.f32 %v3587, 1.442695
      %v3644 = vpow.pop %v3643
      %v3645 = vmul.f32 %v3588, 1.442695
      %v3646 = vpow.pop %v3645
      %v3647 = vmul.f32 %v3589, 1.442695
      %v3648 = vpow.pop %v3647
      %v3649 = vmul.f32 %v3590, 1.442695
      %v3650 = vpow.pop %v3649
      %v3651 = vmul.f32 %v3591, 1.442695
      %v3652 = vpow.pop %v3651
      %v3653 = vmul.f32 %v3592, 1.442695
      %v3654 = vpow.pop %v3653
      %v3655 = vmul.f32 %v3593, 1.442695
      %v3656 = vpow.pop %v3655
      %v3657 = vmul.f32 %v3594, 1.442695
      %v3658 = vpow.pop %v3657
      %v3659 = vsel %vm1419, %v3596, 0.0
      %3660 = vadd.xlane.f32.xlu0 %v3659
      %v3661 = vpop.xlane.xlu0 %3660
      %v3662 = vsel %vm1419, %v3598, 0.0
      %3663 = vadd.xlane.f32.xlu0 %v3662
      %v3664 = vpop.xlane.xlu0 %3663
      %v3665 = vsel %vm1419, %v3600, 0.0
      %3666 = vadd.xlane.f32.xlu0 %v3665
      %v3667 = vpop.xlane.xlu0 %3666
      %v3668 = vsel %vm1419, %v3602, 0.0
      %3669 = vadd.xlane.f32.xlu0 %v3668
      %v3670 = vpop.xlane.xlu0 %3669
      %v3671 = vsel %vm1419, %v3604, 0.0
      %3672 = vadd.xlane.f32.xlu0 %v3671
      %v3673 = vpop.xlane.xlu0 %3672
      %v3674 = vsel %vm1419, %v3606, 0.0
      %3675 = vadd.xlane.f32.xlu0 %v3674
      %v3676 = vpop.xlane.xlu0 %3675
      %v3677 = vsel %vm1419, %v3608, 0.0
      %3678 = vadd.xlane.f32.xlu0 %v3677
      %v3679 = vpop.xlane.xlu0 %3678
      %v3680 = vsel %vm1419, %v3610, 0.0
      %3681 = vadd.xlane.f32.xlu0 %v3680
      %v3682 = vpop.xlane.xlu0 %3681
      %v3683 = vsel %vm1419, %v3612, 0.0
      %3684 = vadd.xlane.f32.xlu0 %v3683
      %v3685 = vpop.xlane.xlu0 %3684
      %v3686 = vsel %vm1419, %v3614, 0.0
      %3687 = vadd.xlane.f32.xlu0 %v3686
      %v3688 = vpop.xlane.xlu0 %3687
      %v3689 = vsel %vm1419, %v3616, 0.0
      %3690 = vadd.xlane.f32.xlu0 %v3689
      %v3691 = vpop.xlane.xlu0 %3690
      %v3692 = vsel %vm1419, %v3618, 0.0
      %3693 = vadd.xlane.f32.xlu0 %v3692
      %v3694 = vpop.xlane.xlu0 %3693
      %v3695 = vsel %vm1419, %v3620, 0.0
      %3696 = vadd.xlane.f32.xlu0 %v3695
      %v3697 = vpop.xlane.xlu0 %3696
      %v3698 = vsel %vm1419, %v3622, 0.0
      %3699 = vadd.xlane.f32.xlu0 %v3698
      %v3700 = vpop.xlane.xlu0 %3699
      %v3701 = vsel %vm1419, %v3624, 0.0
      %3702 = vadd.xlane.f32.xlu0 %v3701
      %v3703 = vpop.xlane.xlu0 %3702
      %v3704 = vsel %vm1419, %v3626, 0.0
      %3705 = vadd.xlane.f32.xlu0 %v3704
      %v3706 = vpop.xlane.xlu0 %3705
      %v3707 = vsel %vm1419, %v3628, 0.0
      %3708 = vadd.xlane.f32.xlu0 %v3707
      %v3709 = vpop.xlane.xlu0 %3708
      %v3710 = vsel %vm1419, %v3630, 0.0
      %3711 = vadd.xlane.f32.xlu0 %v3710
      %v3712 = vpop.xlane.xlu0 %3711
      %v3713 = vsel %vm1419, %v3632, 0.0
      %3714 = vadd.xlane.f32.xlu0 %v3713
      %v3715 = vpop.xlane.xlu0 %3714
      %v3716 = vsel %vm1419, %v3634, 0.0
      %3717 = vadd.xlane.f32.xlu0 %v3716
      %v3718 = vpop.xlane.xlu0 %3717
      %v3719 = vsel %vm1419, %v3636, 0.0
      %3720 = vadd.xlane.f32.xlu0 %v3719
      %v3721 = vpop.xlane.xlu0 %3720
      %v3722 = vsel %vm1419, %v3638, 0.0
      %3723 = vadd.xlane.f32.xlu0 %v3722
      %v3724 = vpop.xlane.xlu0 %3723
      %v3725 = vsel %vm1419, %v3640, 0.0
      %3726 = vadd.xlane.f32.xlu0 %v3725
      %v3727 = vpop.xlane.xlu0 %3726
      %v3728 = vsel %vm1419, %v3642, 0.0
      %3729 = vadd.xlane.f32.xlu0 %v3728
      %v3730 = vpop.xlane.xlu0 %3729
      %v3731 = vsel %vm1419, %v3644, 0.0
      %3732 = vadd.xlane.f32.xlu0 %v3731
      %v3733 = vpop.xlane.xlu0 %3732
      %v3734 = vsel %vm1419, %v3646, 0.0
      %3735 = vadd.xlane.f32.xlu0 %v3734
      %v3736 = vpop.xlane.xlu0 %3735
      %v3737 = vsel %vm1419, %v3648, 0.0
      %3738 = vadd.xlane.f32.xlu0 %v3737
      %v3739 = vpop.xlane.xlu0 %3738
      %v3740 = vsel %vm1419, %v3650, 0.0
      %3741 = vadd.xlane.f32.xlu0 %v3740
      %v3742 = vpop.xlane.xlu0 %3741
      %v3743 = vsel %vm1419, %v3652, 0.0
      %3744 = vadd.xlane.f32.xlu0 %v3743
      %v3745 = vpop.xlane.xlu0 %3744
      %v3746 = vsel %vm1419, %v3654, 0.0
      %3747 = vadd.xlane.f32.xlu0 %v3746
      %v3748 = vpop.xlane.xlu0 %3747
      %v3749 = vsel %vm1419, %v3656, 0.0
      %3750 = vadd.xlane.f32.xlu0 %v3749
      %v3751 = vpop.xlane.xlu0 %3750
      %v3752 = vsel %vm1419, %v3658, 0.0
      %3753 = vadd.xlane.f32.xlu0 %v3752
      %v3754 = vpop.xlane.xlu0 %3753
      %v3755 = vrcp.pop %v3661
      %v3756 = vrcp.pop %v3664
      %v3757 = vrcp.pop %v3667
      %v3758 = vrcp.pop %v3670
      %v3759 = vrcp.pop %v3673
      %v3760 = vrcp.pop %v3676
      %v3761 = vrcp.pop %v3679
      %v3762 = vrcp.pop %v3682
      %v3763 = vrcp.pop %v3685
      %v3764 = vrcp.pop %v3688
      %v3765 = vrcp.pop %v3691
      %v3766 = vrcp.pop %v3694
      %v3767 = vrcp.pop %v3697
      %v3768 = vrcp.pop %v3700
      %v3769 = vrcp.pop %v3703
      %v3770 = vrcp.pop %v3706
      %v3771 = vrcp.pop %v3709
      %v3772 = vrcp.pop %v3712
      %v3773 = vrcp.pop %v3715
      %v3774 = vrcp.pop %v3718
      %v3775 = vrcp.pop %v3721
      %v3776 = vrcp.pop %v3724
      %v3777 = vrcp.pop %v3727
      %v3778 = vrcp.pop %v3730
      %v3779 = vrcp.pop %v3733
      %v3780 = vrcp.pop %v3736
      %v3781 = vrcp.pop %v3739
      %v3782 = vrcp.pop %v3742
      %v3783 = vrcp.pop %v3745
      %v3784 = vrcp.pop %v3748
      %v3785 = vrcp.pop %v3751
      %v3786 = vrcp.pop %v3754
      %v3787 = vmul.f32 %v3596, %v3755
      %v3788 = vmul.f32 %v3598, %v3756
      %v3789 = vmul.f32 %v3600, %v3757
      %v3790 = vmul.f32 %v3602, %v3758
      %v3791 = vmul.f32 %v3604, %v3759
      %v3792 = vmul.f32 %v3606, %v3760
      %v3793 = vmul.f32 %v3608, %v3761
      %v3794 = vmul.f32 %v3610, %v3762
      %v3795 = vmul.f32 %v3612, %v3763
      %v3796 = vmul.f32 %v3614, %v3764
      %v3797 = vmul.f32 %v3616, %v3765
      %v3798 = vmul.f32 %v3618, %v3766
      %v3799 = vmul.f32 %v3620, %v3767
      %v3800 = vmul.f32 %v3622, %v3768
      %v3801 = vmul.f32 %v3624, %v3769
      %v3802 = vmul.f32 %v3626, %v3770
      %v3803 = vmul.f32 %v3628, %v3771
      %v3804 = vmul.f32 %v3630, %v3772
      %v3805 = vmul.f32 %v3632, %v3773
      %v3806 = vmul.f32 %v3634, %v3774
      %v3807 = vmul.f32 %v3636, %v3775
      %v3808 = vmul.f32 %v3638, %v3776
      %v3809 = vmul.f32 %v3640, %v3777
      %v3810 = vmul.f32 %v3642, %v3778
      %v3811 = vmul.f32 %v3644, %v3779
      %v3812 = vmul.f32 %v3646, %v3780
      %v3813 = vmul.f32 %v3648, %v3781
      %v3814 = vmul.f32 %v3650, %v3782
      %v3815 = vmul.f32 %v3652, %v3783
      %v3816 = vmul.f32 %v3654, %v3784
      %v3817 = vmul.f32 %v3656, %v3785
      %v3818 = vmul.f32 %v3658, %v3786
      %v3819 = vpack.c.bf16 %v3788, %v3787
      %v3820 = vpack.c.bf16 %v3790, %v3789
      %v3821 = vpack.c.bf16 %v3792, %v3791
      %v3822 = vpack.c.bf16 %v3794, %v3793
      %v3823 = vpack.c.bf16 %v3796, %v3795
      %v3824 = vpack.c.bf16 %v3798, %v3797
      %v3825 = vpack.c.bf16 %v3800, %v3799
      %v3826 = vpack.c.bf16 %v3802, %v3801
      %v3827 = vpack.c.bf16 %v3804, %v3803
      %v3828 = vpack.c.bf16 %v3806, %v3805
      %v3829 = vpack.c.bf16 %v3808, %v3807
      %v3830 = vpack.c.bf16 %v3810, %v3809
      %v3831 = vpack.c.bf16 %v3812, %v3811
      %v3832 = vpack.c.bf16 %v3814, %v3813
      %v3833 = vpack.c.bf16 %v3816, %v3815
      %v3834 = vpack.c.bf16 %v3818, %v3817
      %3835 = vrot.lane.b32.xlu0 %v602, 116
      %v3836 = vpop.permute.xlu0 %3835
      %v3839 = vsel %vm1419, %v3819, 0
      %3841 = vmatprep.subr.bf16.mxu0 0
      %3842 = vmatpush1.bf16.msra.mxu0 %v3836
      %3843 = vmatprep.subr.bf16.mxu0 0
      %3844 = vmatpush1.bf16.msra.mxu0 0
      %3845 = vmatprep.subr.bf16.mxu0 0
      %3846 = vmatpush1.bf16.msra.mxu0 0
      %3847 = vmatprep.subr.bf16.mxu0 0
      %3848 = vmatpush1.bf16.msra.mxu0 0
      %3849 = vmatprep.subr.bf16.mxu0 0
      %3850 = vmatpush1.bf16.msra.mxu0 0
      %3851 = vmatprep.subr.bf16.mxu0 0
      %3852 = vmatpush1.bf16.msra.mxu0 0
      %3853 = vmatprep.subr.bf16.mxu0 0
      %3854 = vmatpush1.bf16.msra.mxu0 0
      %3855 = vmatprep.subr.bf16.mxu0 0
      %3856 = vmatpush1.bf16.msra.mxu0 0
      %3857 = vmatprep.subr.bf16.mxu0 0
      %3858 = vmatpush1.bf16.msra.mxu0 0
      %3859 = vmatprep.subr.bf16.mxu0 0
      %3860 = vmatpush1.bf16.msra.mxu0 0
      %3861 = vmatprep.subr.bf16.mxu0 0
      %3862 = vmatpush1.bf16.msra.mxu0 0
      %3863 = vmatprep.subr.bf16.mxu0 0
      %3864 = vmatpush1.bf16.msra.mxu0 0
      %3865 = vmatprep.subr.bf16.mxu0 0
      %3866 = vmatpush1.bf16.msra.mxu0 0
      %3867 = vmatprep.subr.bf16.mxu0 0
      %3868 = vmatpush1.bf16.msra.mxu0 0
      %3869 = vmatprep.subr.bf16.mxu0 0
      %3870 = vmatpush1.bf16.msra.mxu0 0
      %3871 = vmatprep.subr.bf16.mxu0 0
      %3872 = vmatpush1.bf16.msra.mxu0 0
      %3873 = vmatprep.mubr.bf16.mxu0 0
      %3874 = vmatmul.mubr.bf16.gmra.mrb[0].mxu0 %v3839
      %v3875 = vpop.f32.mrb[0].mxu0
      %v3876 = vadd.f32 0.0, %v3875
      %v3877 = vpop.f32.mrb[0].mxu0
      %v3878 = vpop.f32.mrb[0].mxu0
      %v3879 = vadd.f32 0.0, %v3878
      %v3880 = vpop.f32.mrb[0].mxu0
      %3881 = vdwg.mxu0
      %3882 = vrot.lane.b32.xlu0 %v603, 116
      %v3883 = vpop.permute.xlu0 %3882
      %v3886 = vsel %vm1419, %v3820, 0
      %3888 = vmatprep.subr.bf16.mxu0 0
      %3889 = vmatpush1.bf16.msra.mxu0 %v3883
      %3890 = vmatprep.subr.bf16.mxu0 0
      %3891 = vmatpush1.bf16.msra.mxu0 0
      %3892 = vmatprep.subr.bf16.mxu0 0
      %3893 = vmatpush1.bf16.msra.mxu0 0
      %3894 = vmatprep.subr.bf16.mxu0 0
      %3895 = vmatpush1.bf16.msra.mxu0 0
      %3896 = vmatprep.subr.bf16.mxu0 0
      %3897 = vmatpush1.bf16.msra.mxu0 0
      %3898 = vmatprep.subr.bf16.mxu0 0
      %3899 = vmatpush1.bf16.msra.mxu0 0
      %3900 = vmatprep.subr.bf16.mxu0 0
      %3901 = vmatpush1.bf16.msra.mxu0 0
      %3902 = vmatprep.subr.bf16.mxu0 0
      %3903 = vmatpush1.bf16.msra.mxu0 0
      %3904 = vmatprep.subr.bf16.mxu0 0
      %3905 = vmatpush1.bf16.msra.mxu0 0
      %3906 = vmatprep.subr.bf16.mxu0 0
      %3907 = vmatpush1.bf16.msra.mxu0 0
      %3908 = vmatprep.subr.bf16.mxu0 0
      %3909 = vmatpush1.bf16.msra.mxu0 0
      %3910 = vmatprep.subr.bf16.mxu0 0
      %3911 = vmatpush1.bf16.msra.mxu0 0
      %3912 = vmatprep.subr.bf16.mxu0 0
      %3913 = vmatpush1.bf16.msra.mxu0 0
      %3914 = vmatprep.subr.bf16.mxu0 0
      %3915 = vmatpush1.bf16.msra.mxu0 0
      %3916 = vmatprep.subr.bf16.mxu0 0
      %3917 = vmatpush1.bf16.msra.mxu0 0
      %3918 = vmatprep.subr.bf16.mxu0 0
      %3919 = vmatpush1.bf16.msra.mxu0 0
      %3920 = vmatprep.mubr.bf16.mxu0 0
      %3921 = vmatmul.mubr.bf16.gmra.mrb[0].mxu0 %v3886
      %v3922 = vpop.f32.mrb[0].mxu0
      %v3923 = vadd.f32 0.0, %v3922
      %v3924 = vpop.f32.mrb[0].mxu0
      %v3925 = vpop.f32.mrb[0].mxu0
      %v3926 = vadd.f32 0.0, %v3925
      %v3927 = vpop.f32.mrb[0].mxu0
      %3928 = vdwg.mxu0
      %3929 = vrot.lane.b32.xlu0 %v604, 116
      %v3930 = vpop.permute.xlu0 %3929
      %v3933 = vsel %vm1419, %v3821, 0
      %3935 = vmatprep.subr.bf16.mxu0 0
      %3936 = vmatpush1.bf16.msra.mxu0 %v3930
      %3937 = vmatprep.subr.bf16.mxu0 0
      %3938 = vmatpush1.bf16.msra.mxu0 0
      %3939 = vmatprep.subr.bf16.mxu0 0
      %3940 = vmatpush1.bf16.msra.mxu0 0
      %3941 = vmatprep.subr.bf16.mxu0 0
      %3942 = vmatpush1.bf16.msra.mxu0 0
      %3943 = vmatprep.subr.bf16.mxu0 0
      %3944 = vmatpush1.bf16.msra.mxu0 0
      %3945 = vmatprep.subr.bf16.mxu0 0
      %3946 = vmatpush1.bf16.msra.mxu0 0
      %3947 = vmatprep.subr.bf16.mxu0 0
      %3948 = vmatpush1.bf16.msra.mxu0 0
      %3949 = vmatprep.subr.bf16.mxu0 0
      %3950 = vmatpush1.bf16.msra.mxu0 0
      %3951 = vmatprep.subr.bf16.mxu0 0
      %3952 = vmatpush1.bf16.msra.mxu0 0
      %3953 = vmatprep.subr.bf16.mxu0 0
      %3954 = vmatpush1.bf16.msra.mxu0 0
      %3955 = vmatprep.subr.bf16.mxu0 0
      %3956 = vmatpush1.bf16.msra.mxu0 0
      %3957 = vmatprep.subr.bf16.mxu0 0
      %3958 = vmatpush1.bf16.msra.mxu0 0
      %3959 = vmatprep.subr.bf16.mxu0 0
      %3960 = vmatpush1.bf16.msra.mxu0 0
      %3961 = vmatprep.subr.bf16.mxu0 0
      %3962 = vmatpush1.bf16.msra.mxu0 0
      %3963 = vmatprep.subr.bf16.mxu0 0
      %3964 = vmatpush1.bf16.msra.mxu0 0
      %3965 = vmatprep.subr.bf16.mxu0 0
      %3966 = vmatpush1.bf16.msra.mxu0 0
      %3967 = vmatprep.mubr.bf16.mxu0 0
      %3968 = vmatmul.mubr.bf16.gmra.mrb[0].mxu0 %v3933
      %v3969 = vpop.f32.mrb[0].mxu0
      %v3970 = vadd.f32 0.0, %v3969
      %v3971 = vpop.f32.mrb[0].mxu0
      %v3972 = vpop.f32.mrb[0].mxu0
      %v3973 = vadd.f32 0.0, %v3972
      %v3974 = vpop.f32.mrb[0].mxu0
      %3975 = vdwg.mxu0
      %3976 = vrot.lane.b32.xlu0 %v605, 116
      %v3977 = vpop.permute.xlu0 %3976
      %v3980 = vsel %vm1419, %v3822, 0
      %3982 = vmatprep.subr.bf16.mxu0 0
      %3983 = vmatpush1.bf16.msra.mxu0 %v3977
      %3984 = vmatprep.subr.bf16.mxu0 0
      %3985 = vmatpush1.bf16.msra.mxu0 0
      %3986 = vmatprep.subr.bf16.mxu0 0
      %3987 = vmatpush1.bf16.msra.mxu0 0
      %3988 = vmatprep.subr.bf16.mxu0 0
      %3989 = vmatpush1.bf16.msra.mxu0 0
      %3990 = vmatprep.subr.bf16.mxu0 0
      %3991 = vmatpush1.bf16.msra.mxu0 0
      %3992 = vmatprep.subr.bf16.mxu0 0
      %3993 = vmatpush1.bf16.msra.mxu0 0
      %3994 = vmatprep.subr.bf16.mxu0 0
      %3995 = vmatpush1.bf16.msra.mxu0 0
      %3996 = vmatprep.subr.bf16.mxu0 0
      %3997 = vmatpush1.bf16.msra.mxu0 0
      %3998 = vmatprep.subr.bf16.mxu0 0
      %3999 = vmatpush1.bf16.msra.mxu0 0
      %4000 = vmatprep.subr.bf16.mxu0 0
      %4001 = vmatpush1.bf16.msra.mxu0 0
      %4002 = vmatprep.subr.bf16.mxu0 0
      %4003 = vmatpush1.bf16.msra.mxu0 0
      %4004 = vmatprep.subr.bf16.mxu0 0
      %4005 = vmatpush1.bf16.msra.mxu0 0
      %4006 = vmatprep.subr.bf16.mxu0 0
      %4007 = vmatpush1.bf16.msra.mxu0 0
      %4008 = vmatprep.subr.bf16.mxu0 0
      %4009 = vmatpush1.bf16.msra.mxu0 0
      %4010 = vmatprep.subr.bf16.mxu0 0
      %4011 = vmatpush1.bf16.msra.mxu0 0
      %4012 = vmatprep.subr.bf16.mxu0 0
      %4013 = vmatpush1.bf16.msra.mxu0 0
      %4014 = vmatprep.mubr.bf16.mxu0 0
      %4015 = vmatmul.mubr.bf16.gmra.mrb[0].mxu0 %v3980
      %v4016 = vpop.f32.mrb[0].mxu0
      %v4017 = vadd.f32 0.0, %v4016
      %v4018 = vpop.f32.mrb[0].mxu0
      %v4019 = vpop.f32.mrb[0].mxu0
      %v4020 = vadd.f32 0.0, %v4019
      %v4021 = vpop.f32.mrb[0].mxu0
      %4022 = vdwg.mxu0
      %4023 = vrot.lane.b32.xlu0 %v606, 116
      %v4024 = vpop.permute.xlu0 %4023
      %v4027 = vsel %vm1419, %v3823, 0
      %4029 = vmatprep.subr.bf16.mxu0 0
      %4030 = vmatpush1.bf16.msra.mxu0 %v4024
      %4031 = vmatprep.subr.bf16.mxu0 0
      %4032 = vmatpush1.bf16.msra.mxu0 0
      %4033 = vmatprep.subr.bf16.mxu0 0
      %4034 = vmatpush1.bf16.msra.mxu0 0
      %4035 = vmatprep.subr.bf16.mxu0 0
      %4036 = vmatpush1.bf16.msra.mxu0 0
      %4037 = vmatprep.subr.bf16.mxu0 0
      %4038 = vmatpush1.bf16.msra.mxu0 0
      %4039 = vmatprep.subr.bf16.mxu0 0
      %4040 = vmatpush1.bf16.msra.mxu0 0
      %4041 = vmatprep.subr.bf16.mxu0 0
      %4042 = vmatpush1.bf16.msra.mxu0 0
      %4043 = vmatprep.subr.bf16.mxu0 0
      %4044 = vmatpush1.bf16.msra.mxu0 0
      %4045 = vmatprep.subr.bf16.mxu0 0
      %4046 = vmatpush1.bf16.msra.mxu0 0
      %4047 = vmatprep.subr.bf16.mxu0 0
      %4048 = vmatpush1.bf16.msra.mxu0 0
      %4049 = vmatprep.subr.bf16.mxu0 0
      %4050 = vmatpush1.bf16.msra.mxu0 0
      %4051 = vmatprep.subr.bf16.mxu0 0
      %4052 = vmatpush1.bf16.msra.mxu0 0
      %4053 = vmatprep.subr.bf16.mxu0 0
      %4054 = vmatpush1.bf16.msra.mxu0 0
      %4055 = vmatprep.subr.bf16.mxu0 0
      %4056 = vmatpush1.bf16.msra.mxu0 0
      %4057 = vmatprep.subr.bf16.mxu0 0
      %4058 = vmatpush1.bf16.msra.mxu0 0
      %4059 = vmatprep.subr.bf16.mxu0 0
      %4060 = vmatpush1.bf16.msra.mxu0 0
      %4061 = vmatprep.mubr.bf16.mxu0 0
      %4062 = vmatmul.mubr.bf16.gmra.mrb[0].mxu0 %v4027
      %v4063 = vpop.f32.mrb[0].mxu0
      %v4064 = vadd.f32 0.0, %v4063
      %v4065 = vpop.f32.mrb[0].mxu0
      %v4066 = vpop.f32.mrb[0].mxu0
      %v4067 = vadd.f32 0.0, %v4066
      %v4068 = vpop.f32.mrb[0].mxu0
      %4069 = vdwg.mxu0
      %4070 = vrot.lane.b32.xlu0 %v607, 116
      %v4071 = vpop.permute.xlu0 %4070
      %v4074 = vsel %vm1419, %v3824, 0
      %4076 = vmatprep.subr.bf16.mxu0 0
      %4077 = vmatpush1.bf16.msra.mxu0 %v4071
      %4078 = vmatprep.subr.bf16.mxu0 0
      %4079 = vmatpush1.bf16.msra.mxu0 0
      %4080 = vmatprep.subr.bf16.mxu0 0
      %4081 = vmatpush1.bf16.msra.mxu0 0
      %4082 = vmatprep.subr.bf16.mxu0 0
      %4083 = vmatpush1.bf16.msra.mxu0 0
      %4084 = vmatprep.subr.bf16.mxu0 0
      %4085 = vmatpush1.bf16.msra.mxu0 0
      %4086 = vmatprep.subr.bf16.mxu0 0
      %4087 = vmatpush1.bf16.msra.mxu0 0
      %4088 = vmatprep.subr.bf16.mxu0 0
      %4089 = vmatpush1.bf16.msra.mxu0 0
      %4090 = vmatprep.subr.bf16.mxu0 0
      %4091 = vmatpush1.bf16.msra.mxu0 0
      %4092 = vmatprep.subr.bf16.mxu0 0
      %4093 = vmatpush1.bf16.msra.mxu0 0
      %4094 = vmatprep.subr.bf16.mxu0 0
      %4095 = vmatpush1.bf16.msra.mxu0 0
      %4096 = vmatprep.subr.bf16.mxu0 0
      %4097 = vmatpush1.bf16.msra.mxu0 0
      %4098 = vmatprep.subr.bf16.mxu0 0
      %4099 = vmatpush1.bf16.msra.mxu0 0
      %4100 = vmatprep.subr.bf16.mxu0 0
      %4101 = vmatpush1.bf16.msra.mxu0 0
      %4102 = vmatprep.subr.bf16.mxu0 0
      %4103 = vmatpush1.bf16.msra.mxu0 0
      %4104 = vmatprep.subr.bf16.mxu0 0
      %4105 = vmatpush1.bf16.msra.mxu0 0
      %4106 = vmatprep.subr.bf16.mxu0 0
      %4107 = vmatpush1.bf16.msra.mxu0 0
      %4108 = vmatprep.mubr.bf16.mxu0 0
      %4109 = vmatmul.mubr.bf16.gmra.mrb[0].mxu0 %v4074
      %v4110 = vpop.f32.mrb[0].mxu0
      %v4111 = vadd.f32 0.0, %v4110
      %v4112 = vpop.f32.mrb[0].mxu0
      %v4113 = vpop.f32.mrb[0].mxu0
      %v4114 = vadd.f32 0.0, %v4113
      %v4115 = vpop.f32.mrb[0].mxu0
      %4116 = vdwg.mxu0
      %4117 = vrot.lane.b32.xlu0 %v608, 116
      %v4118 = vpop.permute.xlu0 %4117
      %v4121 = vsel %vm1419, %v3825, 0
      %4123 = vmatprep.subr.bf16.mxu0 0
      %4124 = vmatpush1.bf16.msra.mxu0 %v4118
      %4125 = vmatprep.subr.bf16.mxu0 0
      %4126 = vmatpush1.bf16.msra.mxu0 0
      %4127 = vmatprep.subr.bf16.mxu0 0
      %4128 = vmatpush1.bf16.msra.mxu0 0
      %4129 = vmatprep.subr.bf16.mxu0 0
      %4130 = vmatpush1.bf16.msra.mxu0 0
      %4131 = vmatprep.subr.bf16.mxu0 0
      %4132 = vmatpush1.bf16.msra.mxu0 0
      %4133 = vmatprep.subr.bf16.mxu0 0
      %4134 = vmatpush1.bf16.msra.mxu0 0
      %4135 = vmatprep.subr.bf16.mxu0 0
      %4136 = vmatpush1.bf16.msra.mxu0 0
      %4137 = vmatprep.subr.bf16.mxu0 0
      %4138 = vmatpush1.bf16.msra.mxu0 0
      %4139 = vmatprep.subr.bf16.mxu0 0
      %4140 = vmatpush1.bf16.msra.mxu0 0
      %4141 = vmatprep.subr.bf16.mxu0 0
      %4142 = vmatpush1.bf16.msra.mxu0 0
      %4143 = vmatprep.subr.bf16.mxu0 0
      %4144 = vmatpush1.bf16.msra.mxu0 0
      %4145 = vmatprep.subr.bf16.mxu0 0
      %4146 = vmatpush1.bf16.msra.mxu0 0
      %4147 = vmatprep.subr.bf16.mxu0 0
      %4148 = vmatpush1.bf16.msra.mxu0 0
      %4149 = vmatprep.subr.bf16.mxu0 0
      %4150 = vmatpush1.bf16.msra.mxu0 0
      %4151 = vmatprep.subr.bf16.mxu0 0
      %4152 = vmatpush1.bf16.msra.mxu0 0
      %4153 = vmatprep.subr.bf16.mxu0 0
      %4154 = vmatpush1.bf16.msra.mxu0 0
      %4155 = vmatprep.mubr.bf16.mxu0 0
      %4156 = vmatmul.mubr.bf16.gmra.mrb[0].mxu0 %v4121
      %v4157 = vpop.f32.mrb[0].mxu0
      %v4158 = vadd.f32 0.0, %v4157
      %v4159 = vpop.f32.mrb[0].mxu0
      %v4160 = vpop.f32.mrb[0].mxu0
      %v4161 = vadd.f32 0.0, %v4160
      %v4162 = vpop.f32.mrb[0].mxu0
      %4163 = vdwg.mxu0
      %4164 = vrot.lane.b32.xlu0 %v609, 116
      %v4165 = vpop.permute.xlu0 %4164
      %v4168 = vsel %vm1419, %v3826, 0
      %4170 = vmatprep.subr.bf16.mxu0 0
      %4171 = vmatpush1.bf16.msra.mxu0 %v4165
      %4172 = vmatprep.subr.bf16.mxu0 0
      %4173 = vmatpush1.bf16.msra.mxu0 0
      %4174 = vmatprep.subr.bf16.mxu0 0
      %4175 = vmatpush1.bf16.msra.mxu0 0
      %4176 = vmatprep.subr.bf16.mxu0 0
      %4177 = vmatpush1.bf16.msra.mxu0 0
      %4178 = vmatprep.subr.bf16.mxu0 0
      %4179 = vmatpush1.bf16.msra.mxu0 0
      %4180 = vmatprep.subr.bf16.mxu0 0
      %4181 = vmatpush1.bf16.msra.mxu0 0
      %4182 = vmatprep.subr.bf16.mxu0 0
      %4183 = vmatpush1.bf16.msra.mxu0 0
      %4184 = vmatprep.subr.bf16.mxu0 0
      %4185 = vmatpush1.bf16.msra.mxu0 0
      %4186 = vmatprep.subr.bf16.mxu0 0
      %4187 = vmatpush1.bf16.msra.mxu0 0
      %4188 = vmatprep.subr.bf16.mxu0 0
      %4189 = vmatpush1.bf16.msra.mxu0 0
      %4190 = vmatprep.subr.bf16.mxu0 0
      %4191 = vmatpush1.bf16.msra.mxu0 0
      %4192 = vmatprep.subr.bf16.mxu0 0
      %4193 = vmatpush1.bf16.msra.mxu0 0
      %4194 = vmatprep.subr.bf16.mxu0 0
      %4195 = vmatpush1.bf16.msra.mxu0 0
      %4196 = vmatprep.subr.bf16.mxu0 0
      %4197 = vmatpush1.bf16.msra.mxu0 0
      %4198 = vmatprep.subr.bf16.mxu0 0
      %4199 = vmatpush1.bf16.msra.mxu0 0
      %4200 = vmatprep.subr.bf16.mxu0 0
      %4201 = vmatpush1.bf16.msra.mxu0 0
      %4202 = vmatprep.mubr.bf16.mxu0 0
      %4203 = vmatmul.mubr.bf16.gmra.mrb[0].mxu0 %v4168
      %v4204 = vpop.f32.mrb[0].mxu0
      %v4205 = vadd.f32 0.0, %v4204
      %v4206 = vpop.f32.mrb[0].mxu0
      %v4207 = vpop.f32.mrb[0].mxu0
      %v4208 = vadd.f32 0.0, %v4207
      %v4209 = vpop.f32.mrb[0].mxu0
      %4210 = vdwg.mxu0
      %4211 = vrot.lane.b32.xlu0 %v610, 116
      %v4212 = vpop.permute.xlu0 %4211
      %v4215 = vsel %vm1419, %v3827, 0
      %4217 = vmatprep.subr.bf16.mxu0 0
      %4218 = vmatpush1.bf16.msra.mxu0 %v4212
      %4219 = vmatprep.subr.bf16.mxu0 0
      %4220 = vmatpush1.bf16.msra.mxu0 0
      %4221 = vmatprep.subr.bf16.mxu0 0
      %4222 = vmatpush1.bf16.msra.mxu0 0
      %4223 = vmatprep.subr.bf16.mxu0 0
      %4224 = vmatpush1.bf16.msra.mxu0 0
      %4225 = vmatprep.subr.bf16.mxu0 0
      %4226 = vmatpush1.bf16.msra.mxu0 0
      %4227 = vmatprep.subr.bf16.mxu0 0
      %4228 = vmatpush1.bf16.msra.mxu0 0
      %4229 = vmatprep.subr.bf16.mxu0 0
      %4230 = vmatpush1.bf16.msra.mxu0 0
      %4231 = vmatprep.subr.bf16.mxu0 0
      %4232 = vmatpush1.bf16.msra.mxu0 0
      %4233 = vmatprep.subr.bf16.mxu0 0
      %4234 = vmatpush1.bf16.msra.mxu0 0
      %4235 = vmatprep.subr.bf16.mxu0 0
      %4236 = vmatpush1.bf16.msra.mxu0 0
      %4237 = vmatprep.subr.bf16.mxu0 0
      %4238 = vmatpush1.bf16.msra.mxu0 0
      %4239 = vmatprep.subr.bf16.mxu0 0
      %4240 = vmatpush1.bf16.msra.mxu0 0
      %4241 = vmatprep.subr.bf16.mxu0 0
      %4242 = vmatpush1.bf16.msra.mxu0 0
      %4243 = vmatprep.subr.bf16.mxu0 0
      %4244 = vmatpush1.bf16.msra.mxu0 0
      %4245 = vmatprep.subr.bf16.mxu0 0
      %4246 = vmatpush1.bf16.msra.mxu0 0
      %4247 = vmatprep.subr.bf16.mxu0 0
      %4248 = vmatpush1.bf16.msra.mxu0 0
      %4249 = vmatprep.mubr.bf16.mxu0 0
      %4250 = vmatmul.mubr.bf16.gmra.mrb[0].mxu0 %v4215
      %v4251 = vpop.f32.mrb[0].mxu0
      %v4252 = vadd.f32 0.0, %v4251
      %v4253 = vpop.f32.mrb[0].mxu0
      %v4254 = vpop.f32.mrb[0].mxu0
      %v4255 = vadd.f32 0.0, %v4254
      %v4256 = vpop.f32.mrb[0].mxu0
      %4257 = vdwg.mxu0
      %4258 = vrot.lane.b32.xlu0 %v611, 116
      %v4259 = vpop.permute.xlu0 %4258
      %v4262 = vsel %vm1419, %v3828, 0
      %4264 = vmatprep.subr.bf16.mxu0 0
      %4265 = vmatpush1.bf16.msra.mxu0 %v4259
      %4266 = vmatprep.subr.bf16.mxu0 0
      %4267 = vmatpush1.bf16.msra.mxu0 0
      %4268 = vmatprep.subr.bf16.mxu0 0
      %4269 = vmatpush1.bf16.msra.mxu0 0
      %4270 = vmatprep.subr.bf16.mxu0 0
      %4271 = vmatpush1.bf16.msra.mxu0 0
      %4272 = vmatprep.subr.bf16.mxu0 0
      %4273 = vmatpush1.bf16.msra.mxu0 0
      %4274 = vmatprep.subr.bf16.mxu0 0
      %4275 = vmatpush1.bf16.msra.mxu0 0
      %4276 = vmatprep.subr.bf16.mxu0 0
      %4277 = vmatpush1.bf16.msra.mxu0 0
      %4278 = vmatprep.subr.bf16.mxu0 0
      %4279 = vmatpush1.bf16.msra.mxu0 0
      %4280 = vmatprep.subr.bf16.mxu0 0
      %4281 = vmatpush1.bf16.msra.mxu0 0
      %4282 = vmatprep.subr.bf16.mxu0 0
      %4283 = vmatpush1.bf16.msra.mxu0 0
      %4284 = vmatprep.subr.bf16.mxu0 0
      %4285 = vmatpush1.bf16.msra.mxu0 0
      %4286 = vmatprep.subr.bf16.mxu0 0
      %4287 = vmatpush1.bf16.msra.mxu0 0
      %4288 = vmatprep.subr.bf16.mxu0 0
      %4289 = vmatpush1.bf16.msra.mxu0 0
      %4290 = vmatprep.subr.bf16.mxu0 0
      %4291 = vmatpush1.bf16.msra.mxu0 0
      %4292 = vmatprep.subr.bf16.mxu0 0
      %4293 = vmatpush1.bf16.msra.mxu0 0
      %4294 = vmatprep.subr.bf16.mxu0 0
      %4295 = vmatpush1.bf16.msra.mxu0 0
      %4296 = vmatprep.mubr.bf16.mxu0 0
      %4297 = vmatmul.mubr.bf16.gmra.mrb[0].mxu0 %v4262
      %v4298 = vpop.f32.mrb[0].mxu0
      %v4299 = vadd.f32 0.0, %v4298
      %v4300 = vpop.f32.mrb[0].mxu0
      %v4301 = vpop.f32.mrb[0].mxu0
      %v4302 = vadd.f32 0.0, %v4301
      %v4303 = vpop.f32.mrb[0].mxu0
      %4304 = vdwg.mxu0
      %4305 = vrot.lane.b32.xlu0 %v612, 116
      %v4306 = vpop.permute.xlu0 %4305
      %v4309 = vsel %vm1419, %v3829, 0
      %4311 = vmatprep.subr.bf16.mxu0 0
      %4312 = vmatpush1.bf16.msra.mxu0 %v4306
      %4313 = vmatprep.subr.bf16.mxu0 0
      %4314 = vmatpush1.bf16.msra.mxu0 0
      %4315 = vmatprep.subr.bf16.mxu0 0
      %4316 = vmatpush1.bf16.msra.mxu0 0
      %4317 = vmatprep.subr.bf16.mxu0 0
      %4318 = vmatpush1.bf16.msra.mxu0 0
      %4319 = vmatprep.subr.bf16.mxu0 0
      %4320 = vmatpush1.bf16.msra.mxu0 0
      %4321 = vmatprep.subr.bf16.mxu0 0
      %4322 = vmatpush1.bf16.msra.mxu0 0
      %4323 = vmatprep.subr.bf16.mxu0 0
      %4324 = vmatpush1.bf16.msra.mxu0 0
      %4325 = vmatprep.subr.bf16.mxu0 0
      %4326 = vmatpush1.bf16.msra.mxu0 0
      %4327 = vmatprep.subr.bf16.mxu0 0
      %4328 = vmatpush1.bf16.msra.mxu0 0
      %4329 = vmatprep.subr.bf16.mxu0 0
      %4330 = vmatpush1.bf16.msra.mxu0 0
      %4331 = vmatprep.subr.bf16.mxu0 0
      %4332 = vmatpush1.bf16.msra.mxu0 0
      %4333 = vmatprep.subr.bf16.mxu0 0
      %4334 = vmatpush1.bf16.msra.mxu0 0
      %4335 = vmatprep.subr.bf16.mxu0 0
      %4336 = vmatpush1.bf16.msra.mxu0 0
      %4337 = vmatprep.subr.bf16.mxu0 0
      %4338 = vmatpush1.bf16.msra.mxu0 0
      %4339 = vmatprep.subr.bf16.mxu0 0
      %4340 = vmatpush1.bf16.msra.mxu0 0
      %4341 = vmatprep.subr.bf16.mxu0 0
      %4342 = vmatpush1.bf16.msra.mxu0 0
      %4343 = vmatprep.mubr.bf16.mxu0 0
      %4344 = vmatmul.mubr.bf16.gmra.mrb[0].mxu0 %v4309
      %v4345 = vpop.f32.mrb[0].mxu0
      %v4346 = vadd.f32 0.0, %v4345
      %v4347 = vpop.f32.mrb[0].mxu0
      %v4348 = vpop.f32.mrb[0].mxu0
      %v4349 = vadd.f32 0.0, %v4348
      %v4350 = vpop.f32.mrb[0].mxu0
      %4351 = vdwg.mxu0
      %4352 = vrot.lane.b32.xlu0 %v613, 116
      %v4353 = vpop.permute.xlu0 %4352
      %v4356 = vsel %vm1419, %v3830, 0
      %4358 = vmatprep.subr.bf16.mxu0 0
      %4359 = vmatpush1.bf16.msra.mxu0 %v4353
      %4360 = vmatprep.subr.bf16.mxu0 0
      %4361 = vmatpush1.bf16.msra.mxu0 0
      %4362 = vmatprep.subr.bf16.mxu0 0
      %4363 = vmatpush1.bf16.msra.mxu0 0
      %4364 = vmatprep.subr.bf16.mxu0 0
      %4365 = vmatpush1.bf16.msra.mxu0 0
      %4366 = vmatprep.subr.bf16.mxu0 0
      %4367 = vmatpush1.bf16.msra.mxu0 0
      %4368 = vmatprep.subr.bf16.mxu0 0
      %4369 = vmatpush1.bf16.msra.mxu0 0
      %4370 = vmatprep.subr.bf16.mxu0 0
      %4371 = vmatpush1.bf16.msra.mxu0 0
      %4372 = vmatprep.subr.bf16.mxu0 0
      %4373 = vmatpush1.bf16.msra.mxu0 0
      %4374 = vmatprep.subr.bf16.mxu0 0
      %4375 = vmatpush1.bf16.msra.mxu0 0
      %4376 = vmatprep.subr.bf16.mxu0 0
      %4377 = vmatpush1.bf16.msra.mxu0 0
      %4378 = vmatprep.subr.bf16.mxu0 0
      %4379 = vmatpush1.bf16.msra.mxu0 0
      %4380 = vmatprep.subr.bf16.mxu0 0
      %4381 = vmatpush1.bf16.msra.mxu0 0
      %4382 = vmatprep.subr.bf16.mxu0 0
      %4383 = vmatpush1.bf16.msra.mxu0 0
      %4384 = vmatprep.subr.bf16.mxu0 0
      %4385 = vmatpush1.bf16.msra.mxu0 0
      %4386 = vmatprep.subr.bf16.mxu0 0
      %4387 = vmatpush1.bf16.msra.mxu0 0
      %4388 = vmatprep.subr.bf16.mxu0 0
      %4389 = vmatpush1.bf16.msra.mxu0 0
      %4390 = vmatprep.mubr.bf16.mxu0 0
      %4391 = vmatmul.mubr.bf16.gmra.mrb[0].mxu0 %v4356
      %v4392 = vpop.f32.mrb[0].mxu0
      %v4393 = vadd.f32 0.0, %v4392
      %v4394 = vpop.f32.mrb[0].mxu0
      %v4395 = vpop.f32.mrb[0].mxu0
      %v4396 = vadd.f32 0.0, %v4395
      %v4397 = vpop.f32.mrb[0].mxu0
      %4398 = vdwg.mxu0
      %4399 = vrot.lane.b32.xlu0 %v614, 116
      %v4400 = vpop.permute.xlu0 %4399
      %v4403 = vsel %vm1419, %v3831, 0
      %4405 = vmatprep.subr.bf16.mxu0 0
      %4406 = vmatpush1.bf16.msra.mxu0 %v4400
      %4407 = vmatprep.subr.bf16.mxu0 0
      %4408 = vmatpush1.bf16.msra.mxu0 0
      %4409 = vmatprep.subr.bf16.mxu0 0
      %4410 = vmatpush1.bf16.msra.mxu0 0
      %4411 = vmatprep.subr.bf16.mxu0 0
      %4412 = vmatpush1.bf16.msra.mxu0 0
      %4413 = vmatprep.subr.bf16.mxu0 0
      %4414 = vmatpush1.bf16.msra.mxu0 0
      %4415 = vmatprep.subr.bf16.mxu0 0
      %4416 = vmatpush1.bf16.msra.mxu0 0
      %4417 = vmatprep.subr.bf16.mxu0 0
      %4418 = vmatpush1.bf16.msra.mxu0 0
      %4419 = vmatprep.subr.bf16.mxu0 0
      %4420 = vmatpush1.bf16.msra.mxu0 0
      %4421 = vmatprep.subr.bf16.mxu0 0
      %4422 = vmatpush1.bf16.msra.mxu0 0
      %4423 = vmatprep.subr.bf16.mxu0 0
      %4424 = vmatpush1.bf16.msra.mxu0 0
      %4425 = vmatprep.subr.bf16.mxu0 0
      %4426 = vmatpush1.bf16.msra.mxu0 0
      %4427 = vmatprep.subr.bf16.mxu0 0
      %4428 = vmatpush1.bf16.msra.mxu0 0
      %4429 = vmatprep.subr.bf16.mxu0 0
      %4430 = vmatpush1.bf16.msra.mxu0 0
      %4431 = vmatprep.subr.bf16.mxu0 0
      %4432 = vmatpush1.bf16.msra.mxu0 0
      %4433 = vmatprep.subr.bf16.mxu0 0
      %4434 = vmatpush1.bf16.msra.mxu0 0
      %4435 = vmatprep.subr.bf16.mxu0 0
      %4436 = vmatpush1.bf16.msra.mxu0 0
      %4437 = vmatprep.mubr.bf16.mxu0 0
      %4438 = vmatmul.mubr.bf16.gmra.mrb[0].mxu0 %v4403
      %v4439 = vpop.f32.mrb[0].mxu0
      %v4440 = vadd.f32 0.0, %v4439
      %v4441 = vpop.f32.mrb[0].mxu0
      %v4442 = vpop.f32.mrb[0].mxu0
      %v4443 = vadd.f32 0.0, %v4442
      %v4444 = vpop.f32.mrb[0].mxu0
      %4445 = vdwg.mxu0
      %4446 = vrot.lane.b32.xlu0 %v615, 116
      %v4447 = vpop.permute.xlu0 %4446
      %v4450 = vsel %vm1419, %v3832, 0
      %4452 = vmatprep.subr.bf16.mxu0 0
      %4453 = vmatpush1.bf16.msra.mxu0 %v4447
      %4454 = vmatprep.subr.bf16.mxu0 0
      %4455 = vmatpush1.bf16.msra.mxu0 0
      %4456 = vmatprep.subr.bf16.mxu0 0
      %4457 = vmatpush1.bf16.msra.mxu0 0
      %4458 = vmatprep.subr.bf16.mxu0 0
      %4459 = vmatpush1.bf16.msra.mxu0 0
      %4460 = vmatprep.subr.bf16.mxu0 0
      %4461 = vmatpush1.bf16.msra.mxu0 0
      %4462 = vmatprep.subr.bf16.mxu0 0
      %4463 = vmatpush1.bf16.msra.mxu0 0
      %4464 = vmatprep.subr.bf16.mxu0 0
      %4465 = vmatpush1.bf16.msra.mxu0 0
      %4466 = vmatprep.subr.bf16.mxu0 0
      %4467 = vmatpush1.bf16.msra.mxu0 0
      %4468 = vmatprep.subr.bf16.mxu0 0
      %4469 = vmatpush1.bf16.msra.mxu0 0
      %4470 = vmatprep.subr.bf16.mxu0 0
      %4471 = vmatpush1.bf16.msra.mxu0 0
      %4472 = vmatprep.subr.bf16.mxu0 0
      %4473 = vmatpush1.bf16.msra.mxu0 0
      %4474 = vmatprep.subr.bf16.mxu0 0
      %4475 = vmatpush1.bf16.msra.mxu0 0
      %4476 = vmatprep.subr.bf16.mxu0 0
      %4477 = vmatpush1.bf16.msra.mxu0 0
      %4478 = vmatprep.subr.bf16.mxu0 0
      %4479 = vmatpush1.bf16.msra.mxu0 0
      %4480 = vmatprep.subr.bf16.mxu0 0
      %4481 = vmatpush1.bf16.msra.mxu0 0
      %4482 = vmatprep.subr.bf16.mxu0 0
      %4483 = vmatpush1.bf16.msra.mxu0 0
      %4484 = vmatprep.mubr.bf16.mxu0 0
      %4485 = vmatmul.mubr.bf16.gmra.mrb[0].mxu0 %v4450
      %v4486 = vpop.f32.mrb[0].mxu0
      %v4487 = vadd.f32 0.0, %v4486
      %v4488 = vpop.f32.mrb[0].mxu0
      %v4489 = vpop.f32.mrb[0].mxu0
      %v4490 = vadd.f32 0.0, %v4489
      %v4491 = vpop.f32.mrb[0].mxu0
      %4492 = vdwg.mxu0
      %4493 = vrot.lane.b32.xlu0 %v616, 116
      %v4494 = vpop.permute.xlu0 %4493
      %v4497 = vsel %vm1419, %v3833, 0
      %4499 = vmatprep.subr.bf16.mxu0 0
      %4500 = vmatpush1.bf16.msra.mxu0 %v4494
      %4501 = vmatprep.subr.bf16.mxu0 0
      %4502 = vmatpush1.bf16.msra.mxu0 0
      %4503 = vmatprep.subr.bf16.mxu0 0
      %4504 = vmatpush1.bf16.msra.mxu0 0
      %4505 = vmatprep.subr.bf16.mxu0 0
      %4506 = vmatpush1.bf16.msra.mxu0 0
      %4507 = vmatprep.subr.bf16.mxu0 0
      %4508 = vmatpush1.bf16.msra.mxu0 0
      %4509 = vmatprep.subr.bf16.mxu0 0
      %4510 = vmatpush1.bf16.msra.mxu0 0
      %4511 = vmatprep.subr.bf16.mxu0 0
      %4512 = vmatpush1.bf16.msra.mxu0 0
      %4513 = vmatprep.subr.bf16.mxu0 0
      %4514 = vmatpush1.bf16.msra.mxu0 0
      %4515 = vmatprep.subr.bf16.mxu0 0
      %4516 = vmatpush1.bf16.msra.mxu0 0
      %4517 = vmatprep.subr.bf16.mxu0 0
      %4518 = vmatpush1.bf16.msra.mxu0 0
      %4519 = vmatprep.subr.bf16.mxu0 0
      %4520 = vmatpush1.bf16.msra.mxu0 0
      %4521 = vmatprep.subr.bf16.mxu0 0
      %4522 = vmatpush1.bf16.msra.mxu0 0
      %4523 = vmatprep.subr.bf16.mxu0 0
      %4524 = vmatpush1.bf16.msra.mxu0 0
      %4525 = vmatprep.subr.bf16.mxu0 0
      %4526 = vmatpush1.bf16.msra.mxu0 0
      %4527 = vmatprep.subr.bf16.mxu0 0
      %4528 = vmatpush1.bf16.msra.mxu0 0
      %4529 = vmatprep.subr.bf16.mxu0 0
      %4530 = vmatpush1.bf16.msra.mxu0 0
      %4531 = vmatprep.mubr.bf16.mxu0 0
      %4532 = vmatmul.mubr.bf16.gmra.mrb[0].mxu0 %v4497
      %v4533 = vpop.f32.mrb[0].mxu0
      %v4534 = vadd.f32 0.0, %v4533
      %v4535 = vpop.f32.mrb[0].mxu0
      %v4536 = vpop.f32.mrb[0].mxu0
      %v4537 = vadd.f32 0.0, %v4536
      %v4538 = vpop.f32.mrb[0].mxu0
      %4539 = vdwg.mxu0
      %4540 = vrot.lane.b32.xlu0 %v617, 116
      %v4541 = vpop.permute.xlu0 %4540
      %v4544 = vsel %vm1419, %v3834, 0
      %4546 = vmatprep.subr.bf16.mxu0 0
      %4547 = vmatpush1.bf16.msra.mxu0 %v4541
      %4548 = vmatprep.subr.bf16.mxu0 0
      %4549 = vmatpush1.bf16.msra.mxu0 0
      %4550 = vmatprep.subr.bf16.mxu0 0
      %4551 = vmatpush1.bf16.msra.mxu0 0
      %4552 = vmatprep.subr.bf16.mxu0 0
      %4553 = vmatpush1.bf16.msra.mxu0 0
      %4554 = vmatprep.subr.bf16.mxu0 0
      %4555 = vmatpush1.bf16.msra.mxu0 0
      %4556 = vmatprep.subr.bf16.mxu0 0
      %4557 = vmatpush1.bf16.msra.mxu0 0
      %4558 = vmatprep.subr.bf16.mxu0 0
      %4559 = vmatpush1.bf16.msra.mxu0 0
      %4560 = vmatprep.subr.bf16.mxu0 0
      %4561 = vmatpush1.bf16.msra.mxu0 0
      %4562 = vmatprep.subr.bf16.mxu0 0
      %4563 = vmatpush1.bf16.msra.mxu0 0
      %4564 = vmatprep.subr.bf16.mxu0 0
      %4565 = vmatpush1.bf16.msra.mxu0 0
      %4566 = vmatprep.subr.bf16.mxu0 0
      %4567 = vmatpush1.bf16.msra.mxu0 0
      %4568 = vmatprep.subr.bf16.mxu0 0
      %4569 = vmatpush1.bf16.msra.mxu0 0
      %4570 = vmatprep.subr.bf16.mxu0 0
      %4571 = vmatpush1.bf16.msra.mxu0 0
      %4572 = vmatprep.subr.bf16.mxu0 0
      %4573 = vmatpush1.bf16.msra.mxu0 0
      %4574 = vmatprep.subr.bf16.mxu0 0
      %4575 = vmatpush1.bf16.msra.mxu0 0
      %4576 = vmatprep.subr.bf16.mxu0 0
      %4577 = vmatpush1.bf16.msra.mxu0 0
      %4578 = vmatprep.mubr.bf16.mxu0 0
      %4579 = vmatmul.mubr.bf16.gmra.mrb[0].mxu0 %v4544
      %v4580 = vpop.f32.mrb[0].mxu0
      %v4581 = vadd.f32 0.0, %v4580
      %v4582 = vpop.f32.mrb[0].mxu0
      %v4583 = vpop.f32.mrb[0].mxu0
      %v4584 = vadd.f32 0.0, %v4583
      %v4585 = vpop.f32.mrb[0].mxu0
      %4586 = vdwg.mxu0
      %v4587 = vld [vmem:[%s4] sm:$0x1]
      %v4589 = vlaneseq
      %v4590 = vshrl.u32 %v4589, 7
      %v4591 = vsub.s32 0, %v4590
      %v4592 = vrot.slane %v4587, %v4591
      %4593 = vrot.lane.b32.xlu0 %v4592, 124
      %v4594 = vpop.permute.xlu0 %4593
      %v4596 = vmul.f32 %v3876, %v4594
      %v4597 = vmul.f32 %v3879, %v4594
      %v4598 = vmul.f32 %v3923, %v4594
      %v4599 = vmul.f32 %v3926, %v4594
      %v4600 = vmul.f32 %v3970, %v4594
      %v4601 = vmul.f32 %v3973, %v4594
      %v4602 = vmul.f32 %v4017, %v4594
      %v4603 = vmul.f32 %v4020, %v4594
      %v4604 = vmul.f32 %v4064, %v4594
      %v4605 = vmul.f32 %v4067, %v4594
      %v4606 = vmul.f32 %v4111, %v4594
      %v4607 = vmul.f32 %v4114, %v4594
      %v4608 = vmul.f32 %v4158, %v4594
      %v4609 = vmul.f32 %v4161, %v4594
      %v4610 = vmul.f32 %v4205, %v4594
      %v4611 = vmul.f32 %v4208, %v4594
      %v4612 = vmul.f32 %v4252, %v4594
      %v4613 = vmul.f32 %v4255, %v4594
      %v4614 = vmul.f32 %v4299, %v4594
      %v4615 = vmul.f32 %v4302, %v4594
      %v4616 = vmul.f32 %v4346, %v4594
      %v4617 = vmul.f32 %v4349, %v4594
      %v4618 = vmul.f32 %v4393, %v4594
      %v4619 = vmul.f32 %v4396, %v4594
      %v4620 = vmul.f32 %v4440, %v4594
      %v4621 = vmul.f32 %v4443, %v4594
      %v4622 = vmul.f32 %v4487, %v4594
      %v4623 = vmul.f32 %v4490, %v4594
      %v4624 = vmul.f32 %v4534, %v4594
      %v4625 = vmul.f32 %v4537, %v4594
      %v4626 = vmul.f32 %v4581, %v4594
      %v4627 = vmul.f32 %v4584, %v4594
      %v4628 = vld [vmem:[%s5] sm:$0x1]
      %v4630 = vlaneseq
      %v4631 = vshrl.u32 %v4630, 7
      %v4632 = vsub.s32 0, %v4631
      %v4633 = vrot.slane %v4628, %v4632
      %4634 = vrot.lane.b32.xlu0 %v4633, 124
      %v4635 = vpop.permute.xlu0 %4634
      %v4637 = vadd.f32 %v4596, %v4635
      %v4638 = vadd.f32 %v4597, %v4635
      %v4639 = vadd.f32 %v4598, %v4635
      %v4640 = vadd.f32 %v4599, %v4635
      %v4641 = vadd.f32 %v4600, %v4635
      %v4642 = vadd.f32 %v4601, %v4635
      %v4643 = vadd.f32 %v4602, %v4635
      %v4644 = vadd.f32 %v4603, %v4635
      %v4645 = vadd.f32 %v4604, %v4635
      %v4646 = vadd.f32 %v4605, %v4635
      %v4647 = vadd.f32 %v4606, %v4635
      %v4648 = vadd.f32 %v4607, %v4635
      %v4649 = vadd.f32 %v4608, %v4635
      %v4650 = vadd.f32 %v4609, %v4635
      %v4651 = vadd.f32 %v4610, %v4635
      %v4652 = vadd.f32 %v4611, %v4635
      %v4653 = vadd.f32 %v4612, %v4635
      %v4654 = vadd.f32 %v4613, %v4635
      %v4655 = vadd.f32 %v4614, %v4635
      %v4656 = vadd.f32 %v4615, %v4635
      %v4657 = vadd.f32 %v4616, %v4635
      %v4658 = vadd.f32 %v4617, %v4635
      %v4659 = vadd.f32 %v4618, %v4635
      %v4660 = vadd.f32 %v4619, %v4635
      %v4661 = vadd.f32 %v4620, %v4635
      %v4662 = vadd.f32 %v4621, %v4635
      %v4663 = vadd.f32 %v4622, %v4635
      %v4664 = vadd.f32 %v4623, %v4635
      %v4665 = vadd.f32 %v4624, %v4635
      %v4666 = vadd.f32 %v4625, %v4635
      %v4667 = vadd.f32 %v4626, %v4635
      %v4668 = vadd.f32 %v4627, %v4635
      %4701 = vrot.lane.b32.xlu0 %v4637, 4
      %v4702 = vpop.permute.xlu0 %4701
      %4703 = vrot.lane.b32.xlu0 %v4638, 4
      %v4704 = vpop.permute.xlu0 %4703
      %4705 = vrot.lane.b32.xlu0 %v4639, 4
      %v4706 = vpop.permute.xlu0 %4705
      %4707 = vrot.lane.b32.xlu0 %v4640, 4
      %v4708 = vpop.permute.xlu0 %4707
      %4709 = vrot.lane.b32.xlu0 %v4641, 4
      %v4710 = vpop.permute.xlu0 %4709
      %4711 = vrot.lane.b32.xlu0 %v4642, 4
      %v4712 = vpop.permute.xlu0 %4711
      %4713 = vrot.lane.b32.xlu0 %v4643, 4
      %v4714 = vpop.permute.xlu0 %4713
      %4715 = vrot.lane.b32.xlu0 %v4644, 4
      %v4716 = vpop.permute.xlu0 %4715
      %4717 = vrot.lane.b32.xlu0 %v4645, 4
      %v4718 = vpop.permute.xlu0 %4717
      %4719 = vrot.lane.b32.xlu0 %v4646, 4
      %v4720 = vpop.permute.xlu0 %4719
      %4721 = vrot.lane.b32.xlu0 %v4647, 4
      %v4722 = vpop.permute.xlu0 %4721
      %4723 = vrot.lane.b32.xlu0 %v4648, 4
      %v4724 = vpop.permute.xlu0 %4723
      %4725 = vrot.lane.b32.xlu0 %v4649, 4
      %v4726 = vpop.permute.xlu0 %4725
      %4727 = vrot.lane.b32.xlu0 %v4650, 4
      %v4728 = vpop.permute.xlu0 %4727
      %4729 = vrot.lane.b32.xlu0 %v4651, 4
      %v4730 = vpop.permute.xlu0 %4729
      %4731 = vrot.lane.b32.xlu0 %v4652, 4
      %v4732 = vpop.permute.xlu0 %4731
      %4733 = vrot.lane.b32.xlu0 %v4653, 4
      %v4734 = vpop.permute.xlu0 %4733
      %4735 = vrot.lane.b32.xlu0 %v4654, 4
      %v4736 = vpop.permute.xlu0 %4735
      %4737 = vrot.lane.b32.xlu0 %v4655, 4
      %v4738 = vpop.permute.xlu0 %4737
      %4739 = vrot.lane.b32.xlu0 %v4656, 4
      %v4740 = vpop.permute.xlu0 %4739
      %4741 = vrot.lane.b32.xlu0 %v4657, 4
      %v4742 = vpop.permute.xlu0 %4741
      %4743 = vrot.lane.b32.xlu0 %v4658, 4
      %v4744 = vpop.permute.xlu0 %4743
      %4745 = vrot.lane.b32.xlu0 %v4659, 4
      %v4746 = vpop.permute.xlu0 %4745
      %4747 = vrot.lane.b32.xlu0 %v4660, 4
      %v4748 = vpop.permute.xlu0 %4747
      %4749 = vrot.lane.b32.xlu0 %v4661, 4
      %v4750 = vpop.permute.xlu0 %4749
      %4751 = vrot.lane.b32.xlu0 %v4662, 4
      %v4752 = vpop.permute.xlu0 %4751
      %4753 = vrot.lane.b32.xlu0 %v4663, 4
      %v4754 = vpop.permute.xlu0 %4753
      %4755 = vrot.lane.b32.xlu0 %v4664, 4
      %v4756 = vpop.permute.xlu0 %4755
      %4757 = vrot.lane.b32.xlu0 %v4665, 4
      %v4758 = vpop.permute.xlu0 %4757
      %4759 = vrot.lane.b32.xlu0 %v4666, 4
      %v4760 = vpop.permute.xlu0 %4759
      %4761 = vrot.lane.b32.xlu0 %v4667, 4
      %v4762 = vpop.permute.xlu0 %4761
      %4763 = vrot.lane.b32.xlu0 %v4668, 4
      %v4764 = vpop.permute.xlu0 %4763
      %vm4797 = vcmask 64544
      %4798 = vst.msk [vmem:[%s258] sm:$0xff] %vm4797, %v4702
      %4799 = vst.msk [vmem:[%s258 + $0x8] sm:$0xff] %vm4797, %v4704
      %4800 = vst.msk [vmem:[%s258 + $0x10] sm:$0xff] %vm4797, %v4706
      %4801 = vst.msk [vmem:[%s258 + $0x18] sm:$0xff] %vm4797, %v4708
      %4802 = vst.msk [vmem:[%s258 + $0x20] sm:$0xff] %vm4797, %v4710
      %4803 = vst.msk [vmem:[%s258 + $0x28] sm:$0xff] %vm4797, %v4712
      %4804 = vst.msk [vmem:[%s258 + $0x30] sm:$0xff] %vm4797, %v4714
      %4805 = vst.msk [vmem:[%s258 + $0x38] sm:$0xff] %vm4797, %v4716
      %4806 = vst.msk [vmem:[%s258 + $0x40] sm:$0xff] %vm4797, %v4718
      %4807 = vst.msk [vmem:[%s258 + $0x48] sm:$0xff] %vm4797, %v4720
      %4808 = vst.msk [vmem:[%s258 + $0x50] sm:$0xff] %vm4797, %v4722
      %4809 = vst.msk [vmem:[%s258 + $0x58] sm:$0xff] %vm4797, %v4724
      %4810 = vst.msk [vmem:[%s258 + $0x60] sm:$0xff] %vm4797, %v4726
      %4811 = vst.msk [vmem:[%s258 + $0x68] sm:$0xff] %vm4797, %v4728
      %4812 = vst.msk [vmem:[%s258 + $0x70] sm:$0xff] %vm4797, %v4730
      %4813 = vst.msk [vmem:[%s258 + $0x78] sm:$0xff] %vm4797, %v4732
      %4814 = vst.msk [vmem:[%s258 + $0x80] sm:$0xff] %vm4797, %v4734
      %4815 = vst.msk [vmem:[%s258 + $0x88] sm:$0xff] %vm4797, %v4736
      %4816 = vst.msk [vmem:[%s258 + $0x90] sm:$0xff] %vm4797, %v4738
      %4817 = vst.msk [vmem:[%s258 + $0x98] sm:$0xff] %vm4797, %v4740
      %4818 = vst.msk [vmem:[%s258 + $0xa0] sm:$0xff] %vm4797, %v4742
      %4819 = vst.msk [vmem:[%s258 + $0xa8] sm:$0xff] %vm4797, %v4744
      %4820 = vst.msk [vmem:[%s258 + $0xb0] sm:$0xff] %vm4797, %v4746
      %4821 = vst.msk [vmem:[%s258 + $0xb8] sm:$0xff] %vm4797, %v4748
      %4822 = vst.msk [vmem:[%s258 + $0xc0] sm:$0xff] %vm4797, %v4750
      %4823 = vst.msk [vmem:[%s258 + $0xc8] sm:$0xff] %vm4797, %v4752
      %4824 = vst.msk [vmem:[%s258 + $0xd0] sm:$0xff] %vm4797, %v4754
      %4825 = vst.msk [vmem:[%s258 + $0xd8] sm:$0xff] %vm4797, %v4756
      %4826 = vst.msk [vmem:[%s258 + $0xe0] sm:$0xff] %vm4797, %v4758
      %4827 = vst.msk [vmem:[%s258 + $0xe8] sm:$0xff] %vm4797, %v4760
      %4828 = vst.msk [vmem:[%s258 + $0xf0] sm:$0xff] %vm4797, %v4762
      %4829 = vst.msk [vmem:[%s258 + $0xf8] sm:$0xff] %vm4797, %v4764
      %s4830 = smul.u32 16, %s17
      %p4831 = scmp.lt.s32.totalorder %s4830, 31
      %s4832 = scalar_select %p4831, %s4830, 31
      %s4833 = smul.addr %s4832, 2
      %s4834 = smul.addr %s4833, 8
      %s4835 = scalar_lea.vmem %s6, %s4834
      // Predicated region
      $region45: #{axial_block_wopos_forward.5} parent=43 // pred_check
        %p4836 = pneg %p166
      $region46: #{axial_block_wopos_forward.5} parent=43 // pred_check_branch
        %4838 = sbr.rel (%p4836) target = $region48
      $region47: #{axial_block_wopos_forward.5} parent=43 // pred_region
        %s4839 = smul.u32 16, %s17
      $region48: #{axial_block_wopos_forward.5} parent=43 // pred_fallthru
        _
    $region44: #{axial_block_wopos_forward.5} parent=5 // pred_fallthru
      _
    %p4840 = scmp.le.s32.totalorder 2, %s12
    // Predicated region
    $region49: #{axial_block_wopos_forward.5} parent=5 // pred_check
      %p4841 = pneg %p4840
    $region50: #{axial_block_wopos_forward.5} parent=5 // pred_check_branch
      %4843 = sbr.rel (%p4841) target = $region52
    $region51: #{axial_block_wopos_forward.5} parent=5 // pred_region
      %s4844 = ssub.s32 %s12, 2
      // Predicated region
      $region53: #{axial_block_wopos_forward.5} parent=51 // pred_check
        %p4845 = pneg %p172
      $region54: #{axial_block_wopos_forward.5} parent=51 // pred_check_branch
        %4847 = sbr.rel (%p4845) target = $region56
      $region55: #{axial_block_wopos_forward.5} parent=51 // pred_region
        %s4848 = smul.u32 16, %s18
        %p4849 = scmp.lt.s32.totalorder %s4848, 31
        %s4850 = scalar_select %p4849, %s4848, 31
        %s4851 = smul.addr %s4850, 2
        %s4852 = smul.addr %s4851, 8
        %s4853 = scalar_lea.vmem %s6, %s4852
      $region56: #{axial_block_wopos_forward.5} parent=51 // pred_fallthru
        _
    $region52: #{axial_block_wopos_forward.5} parent=5 // pred_fallthru
      _
  $region6: #{axial_block_wopos_forward.5} parent=0 // loop_footer
    %s16 = sadd.s32 1, %s12
  $region7: #{axial_block_wopos_forward.5} parent=0 // loop_footer_branch
    %11 = sbr.rel target = $region3
  $region8: #{axial_block_wopos_forward.5} parent=0 // loop_exit
    _

</llo_original>
